<compile_context>
chip_gen: v5e
topology: v5e:2x2
jax: 0.10.0
libtpu: 0.0.40
codegen_flags: <defaults>
</compile_context>

<pallas_src>
import math

import jax
import jax.numpy as jnp
import numpy as np
from jax.experimental import pallas as pl
from jax.experimental.pallas import tpu as pltpu


def _block_diag(w, reps):
    """(A, B) -> (reps*A, reps*B) with `w` repeated on the diagonal blocks."""
    a, b = w.shape
    eye = jnp.eye(reps, dtype=w.dtype)
    return (eye[:, None, :, None] * w[None, :, None, :]).reshape(reps * a, reps * b)


def _aggregator_kernel(node_ref, persona_ref, w_node_ref, bq_ref, w_kv_ref, bkv_ref,
                       s_ref, msum_ref, expand_ref, wo_attn_ref, bo_ref, out_ref):
    f32 = jnp.float32
    cdt = node_ref.dtype                 # bf16 compute dtype for the MXU
    gke = s_ref.shape[0]                 # G*K*E

    node = node_ref[...]                 # (R, G*E)    lane-dense packed nodes
    persona = persona_ref[...]           # (R, G*K*P)  lane-dense packed personas

    # Fused node-side projection: columns = [Wq replicated over K personas | Wo_node].
    proj = jnp.dot(node, w_node_ref[...], preferred_element_type=f32)   # (R, G*K*E + G*E)
    q = proj[:, :gke] + bq_ref[...]                                     # (R, G*K*E)
    node_out = proj[:, gke:]                                            # (R, G*E)

    # Block-diagonal K/V projection of all K personas of all G packed nodes at once.
    kv = jnp.dot(persona, w_kv_ref[...], preferred_element_type=f32) + bkv_ref[...]
    keys = kv[:, :gke]                                                  # (R, G*K*E)
    values = kv[:, gke:]                                                # (R, G*K*E)

    # Per-head dot-product scores, packed lane-dense as (R, G*K*H).
    prod = (q * keys).astype(cdt)
    scores = jnp.dot(prod, s_ref[...], preferred_element_type=f32)

    # Softmax over the K personas of every (node, head).  Stabilised with the row max
    # (over the G nodes x H heads x K personas sharing this 128-lane row) -- the result
    # is mathematically identical to the per-group max subtraction.
    m = jnp.max(scores, axis=-1, keepdims=True)
    ex = jnp.exp(scores - m)
    denom = jnp.dot(ex.astype(cdt), msum_ref[...], preferred_element_type=f32)
    w = ex * pl.reciprocal(denom, approx=False)                         # (R, G*K*H)

    # Broadcast each head weight across its D value lanes, weight the values, then fold
    # the sum over the K personas and the attn half of the output projection into one
    # matmul (Wo_attn replicated K times on the block diagonal).
    w_lanes = jnp.dot(w.astype(cdt), expand_ref[...], preferred_element_type=f32)  # (R, G*K*E)
    wv = (w_lanes * values).astype(cdt)
    attn_out = jnp.dot(wv, wo_attn_ref[...], preferred_element_type=f32)           # (R, G*E)

    out_ref[...] = (node_out + attn_out + bo_ref[...]).astype(out_ref.dtype)


def multi_head_attention_aggregator(node_embeddings, persona_embeddings, params, *,
                                    num_heads, max_tile_n=1024):
    """node_embeddings: (N, E) f32; persona_embeddings: (N, K, P) f32 (fixed K per node)."""
    n, e = node_embeddings.shape
    n2, k, p = persona_embeddings.shape
    assert n2 == n
    assert e % num_heads == 0, "node_embedding_dim must be divisible by num_heads"
    d = e // num_heads

    # pack G nodes per 128-lane row so all streams / stores are lane-dense
    if e < 128:
        assert 128 % e == 0, "packed layout needs node_embedding_dim to divide 128"
        g = 128 // e
    else:
        g = 1

    wq, bq, wk, bk, wv, bv, wo, bo = params
    cdt = jnp.bfloat16
    f32 = jnp.float32

    # ---- host-side one-time weight prep (block-diagonal / replicated fusions) ----
    wo_node, wo_attn = wo[:e], wo[e:]
    w_node_g = jnp.concatenate(
        [_block_diag(jnp.tile(wq, (1, k)), g), _block_diag(wo_node, g)], axis=1).astype(cdt)
    bq_g = jnp.tile(bq, (1, g * k)).astype(f32)
    w_kv_g = jnp.concatenate(
        [_block_diag(_block_diag(wk, k), g), _block_diag(_block_diag(wv, k), g)],
        axis=1).astype(cdt)
    bkv_g = jnp.concatenate(
        [jnp.tile(bk, (1, g * k)), jnp.tile(bv, (1, g * k))], axis=1).astype(f32)

    lane_head = jnp.arange(e, dtype=jnp.int32) // d
    heads = jnp.arange(num_heads, dtype=jnp.int32)
    head_sum = (lane_head[:, None] == heads[None, :]).astype(f32)          # (E, H)
    s_g = _block_diag(_block_diag(head_sum, k), g).astype(cdt)             # (G*K*E, G*K*H)
    expand_g = _block_diag(_block_diag(head_sum.T, k), g).astype(cdt)      # (G*K*H, G*K*E)
    score_lane = jnp.arange(g * k * num_heads, dtype=jnp.int32)
    c_of = score_lane // (k * num_heads)
    h_of = score_lane % num_heads
    m_sum = ((c_of[:, None] == c_of[None, :]) &
             (h_of[:, None] == h_of[None, :])).astype(cdt)                 # (G*K*H, G*K*H)
    wo_attn_g = _block_diag(jnp.tile(wo_attn, (k, 1)), g).astype(cdt)      # (G*K*E, G*E)
    bo_g = jnp.tile(bo, (1, g)).astype(f32)

    # ---- tiling: large VMEM-friendly tiles, but keep >=2 grid steps when N allows
    #      (v7x has two TensorCores sharing the "parallel" grid axis) ----
    granule = 8 * g
    max_tile_n = max(granule, (max_tile_n // granule) * granule)
    half = math.ceil(math.ceil(n / 2) / granule) * granule
    tile_n = int(max(granule, min(max_tile_n, half)))
    n_pad = math.ceil(n / tile_n) * tile_n
    tile_r = tile_n // g
    r_pad = n_pad // g

    node = node_embeddings.astype(cdt)
    persona = persona_embeddings.astype(cdt)
    if n_pad != n:
        node = jnp.pad(node, ((0, n_pad - n), (0, 0)))
        persona = jnp.pad(persona, ((0, n_pad - n), (0, 0), (0, 0)))
    node_packed = node.reshape(r_pad, g * e)            # free row-major packing, G nodes/row
    persona_packed = persona.reshape(r_pad, g * k * p)  # free row-major packing

    grid = (r_pad // tile_r,)
    out = pl.pallas_call(
        _aggregator_kernel,
        out_shape=jax.ShapeDtypeStruct((r_pad, g * e), f32),
        grid_spec=pltpu.PrefetchScalarGridSpec(
            num_scalar_prefetch=0,
            grid=grid,
            in_specs=[
                pl.BlockSpec((tile_r, g * e), lambda i: (i, 0)),       # packed node rows
                pl.BlockSpec((tile_r, g * k * p), lambda i: (i, 0)),   # packed persona rows
                pl.BlockSpec(w_node_g.shape, lambda i: (0, 0)),        # [Wq rep | Wo_node]
                pl.BlockSpec(bq_g.shape, lambda i: (0, 0)),
                pl.BlockSpec(w_kv_g.shape, lambda i: (0, 0)),          # fused K/V block-diag
                pl.BlockSpec(bkv_g.shape, lambda i: (0, 0)),
                pl.BlockSpec(s_g.shape, lambda i: (0, 0)),             # head-sum mask
                pl.BlockSpec(m_sum.shape, lambda i: (0, 0)),           # softmax-denominator mask
                pl.BlockSpec(expand_g.shape, lambda i: (0, 0)),        # head-expand mask
                pl.BlockSpec(wo_attn_g.shape, lambda i: (0, 0)),       # Wo_attn (sum over K folded)
                pl.BlockSpec(bo_g.shape, lambda i: (0, 0)),
            ],
            out_specs=pl.BlockSpec((tile_r, g * e), lambda i: (i, 0)),
        ),
        compiler_params=pltpu.CompilerParams(
            dimension_semantics=("parallel",),
            vmem_limit_bytes=32 * 1024 * 1024),
    )(node_packed, persona_packed, w_node_g, bq_g, w_kv_g, bkv_g,
      s_g, m_sum, expand_g, wo_attn_g, bo_g)

    return out.reshape(n_pad, e)[:n]


def _reference(node_embeddings, persona_embeddings, params, *, num_heads):
    """Pure-JAX f32 reference matching the PyTorch forward (concat=True)."""
    wq, bq, wk, bk, wv, bv, wo, bo = params
    n, e = node_embeddings.shape
    d = e // num_heads

    def one(node_emb, persona_embs):
        q = (node_emb @ wq + bq[0]).reshape(num_heads, d)              # (H, D)
        kk = (persona_embs @ wk + bk[0]).reshape(-1, num_heads, d)     # (K, H, D)
        vv = (persona_embs @ wv + bv[0]).reshape(-1, num_heads, d)     # (K, H, D)
        scores = jnp.einsum('hd,khd->hk', q, kk)
        w = jax.nn.softmax(scores, axis=-1)
        attn = jnp.einsum('hk,khd->hd', w, vv).reshape(-1)             # (E,)
        combined = jnp.concatenate([node_emb, attn], axis=0)           # (2E,)
        return combined @ wo + bo[0]

    return jax.vmap(one)(node_embeddings, persona_embeddings)


if __name__ == "__main__":
    # Small shapes consistent with the module defaults: E=32 node dim, P=16 persona dim,
    # H=4 heads, K=8 personas per node, N=1024 nodes (grid gets 2 tiles of 512 nodes).
    N = 1024
    E = 32
    P = 16
    H = 4
    K = 8

    key = jax.random.PRNGKey(0)
    ks = jax.random.split(key, 10)

    node_embeddings = jax.random.normal(ks[0], (N, E), dtype=jnp.float32)
    persona_embeddings = jax.random.normal(ks[1], (N, K, P), dtype=jnp.float32)

    # nn.Linear-style params stored as (in_dim, out_dim): y = x @ W + b.
    scale = 0.1
    wq = scale * jax.random.normal(ks[2], (E, E), dtype=jnp.float32)
    bq = scale * jax.random.normal(ks[3], (1, E), dtype=jnp.float32)
    wk = scale * jax.random.normal(ks[4], (P, E), dtype=jnp.float32)
    bk = scale * jax.random.normal(ks[5], (1, E), dtype=jnp.float32)
    wv = scale * jax.random.normal(ks[6], (P, E), dtype=jnp.float32)
    bv = scale * jax.random.normal(ks[7], (1, E), dtype=jnp.float32)
    wo = scale * jax.random.normal(ks[8], (2 * E, E), dtype=jnp.float32)  # concat=True -> in = 2E
    bo = scale * jax.random.normal(ks[9], (1, E), dtype=jnp.float32)
    params = (wq, bq, wk, bk, wv, bv, wo, bo)

    ref = jax.block_until_ready(
        _reference(node_embeddings, persona_embeddings, params, num_heads=H))

    # Main check (bf16 matmuls vs f32 reference -> loosened tolerances).
    out = multi_head_attention_aggregator(node_embeddings, persona_embeddings,
                                          params, num_heads=H)
    out = jax.block_until_ready(out)
    np.testing.assert_allclose(np.asarray(out), np.asarray(ref), rtol=2e-2, atol=5e-2)

    # Ragged check: N not a multiple of the tile exercises the wrapper's padding path.
    N2 = 1000
    out2 = multi_head_attention_aggregator(node_embeddings[:N2], persona_embeddings[:N2],
                                           params, num_heads=H)
    out2 = jax.block_until_ready(out2)
    np.testing.assert_allclose(np.asarray(out2), np.asarray(ref)[:N2], rtol=2e-2, atol=5e-2)

    print("KERNEL_OK")
</pallas_src>

<mosaic_0001>
module attributes {stable_mosaic.version = 11 : i64} {
  func.func @_aggregator_kernel(%arg0: i32, %arg1: memref<128x128xbf16, #tpu.memory_space<vmem>>, %arg2: memref<128x512xbf16, #tpu.memory_space<vmem>>, %arg3: memref<128x1152xbf16, #tpu.memory_space<vmem>>, %arg4: memref<1x1024xf32, #tpu.memory_space<vmem>>, %arg5: memref<512x2048xbf16, #tpu.memory_space<vmem>>, %arg6: memref<1x2048xf32, #tpu.memory_space<vmem>>, %arg7: memref<1024x128xbf16, #tpu.memory_space<vmem>>, %arg8: memref<128x128xbf16, #tpu.memory_space<vmem>>, %arg9: memref<128x1024xbf16, #tpu.memory_space<vmem>>, %arg10: memref<1024x128xbf16, #tpu.memory_space<vmem>>, %arg11: memref<1x128xf32, #tpu.memory_space<vmem>>, %arg12: memref<128x128xf32, #tpu.memory_space<vmem>>) attributes {dimension_semantics = [#tpu.dimension_semantics<parallel>], iteration_bounds = array<i64: 2>, scalar_prefetch = 0 : i64, scratch_operands = 0 : i64, tpu.core_type = #tpu.core_type<tc>, window_params = [{transform_indices = @transform_0, window_bounds = array<i64: 128, 128>}, {transform_indices = @transform_1, window_bounds = array<i64: 128, 512>}, {pipeline_mode = #tpu.pipeline_mode<synchronous>, transform_indices = @transform_2, window_bounds = array<i64: 128, 1152>}, {pipeline_mode = #tpu.pipeline_mode<synchronous>, transform_indices = @transform_3, window_bounds = array<i64: 1, 1024>}, {pipeline_mode = #tpu.pipeline_mode<synchronous>, transform_indices = @transform_4, window_bounds = array<i64: 512, 2048>}, {pipeline_mode = #tpu.pipeline_mode<synchronous>, transform_indices = @transform_5, window_bounds = array<i64: 1, 2048>}, {pipeline_mode = #tpu.pipeline_mode<synchronous>, transform_indices = @transform_6, window_bounds = array<i64: 1024, 128>}, {pipeline_mode = #tpu.pipeline_mode<synchronous>, transform_indices = @transform_7, window_bounds = array<i64: 128, 128>}, {pipeline_mode = #tpu.pipeline_mode<synchronous>, transform_indices = @transform_8, window_bounds = array<i64: 128, 1024>}, {pipeline_mode = #tpu.pipeline_mode<synchronous>, transform_indices = @transform_9, window_bounds = array<i64: 1024, 128>}, {pipeline_mode = #tpu.pipeline_mode<synchronous>, transform_indices = @transform_10, window_bounds = array<i64: 1, 128>}, {transform_indices = @transform_11, window_bounds = array<i64: 128, 128>}]} {
    %c0 = arith.constant 0 : index
    %c0_0 = arith.constant 0 : index
    %0 = vector.load %arg1[%c0, %c0_0] : memref<128x128xbf16, #tpu.memory_space<vmem>>, vector<128x128xbf16>
    %c0_1 = arith.constant 0 : index
    %c0_2 = arith.constant 0 : index
    %1 = vector.load %arg2[%c0_1, %c0_2] : memref<128x512xbf16, #tpu.memory_space<vmem>>, vector<128x512xbf16>
    %c0_3 = arith.constant 0 : index
    %c0_4 = arith.constant 0 : index
    %2 = vector.load %arg3[%c0_3, %c0_4] : memref<128x1152xbf16, #tpu.memory_space<vmem>>, vector<128x1152xbf16>
    %cst = arith.constant dense<0.000000e+00> : vector<128x1152xf32>
    %3 = tpu.matmul %0, %2, %cst {dimension_numbers = #tpu.dot_dimension_numbers<[1], [0], [0], [1], [0, 0, 1, 1], [], []>} : vector<128x128xbf16>, vector<128x1152xbf16>, vector<128x1152xf32> -> vector<128x1152xf32>
    %4 = vector.extract_strided_slice %3 {offsets = [0, 0], sizes = [128, 1024], strides = [1, 1]} : vector<128x1152xf32> to vector<128x1024xf32>
    %c0_5 = arith.constant 0 : index
    %c0_6 = arith.constant 0 : index
    %5 = vector.load %arg4[%c0_5, %c0_6] : memref<1x1024xf32, #tpu.memory_space<vmem>>, vector<1x1024xf32>
    %6 = vector.broadcast %5 : vector<1x1024xf32> to vector<128x1024xf32>
    %7 = arith.addf %4, %6 : vector<128x1024xf32>
    %8 = vector.extract_strided_slice %3 {offsets = [0, 1024], sizes = [128, 128], strides = [1, 1]} : vector<128x1152xf32> to vector<128x128xf32>
    %c0_7 = arith.constant 0 : index
    %c0_8 = arith.constant 0 : index
    %9 = vector.load %arg5[%c0_7, %c0_8] : memref<512x2048xbf16, #tpu.memory_space<vmem>>, vector<512x2048xbf16>
    %cst_9 = arith.constant dense<0.000000e+00> : vector<128x2048xf32>
    %10 = tpu.matmul %1, %9, %cst_9 {dimension_numbers = #tpu.dot_dimension_numbers<[1], [0], [0], [1], [0, 0, 1, 1], [], []>} : vector<128x512xbf16>, vector<512x2048xbf16>, vector<128x2048xf32> -> vector<128x2048xf32>
    %c0_10 = arith.constant 0 : index
    %c0_11 = arith.constant 0 : index
    %11 = vector.load %arg6[%c0_10, %c0_11] : memref<1x2048xf32, #tpu.memory_space<vmem>>, vector<1x2048xf32>
    %12 = vector.broadcast %11 : vector<1x2048xf32> to vector<128x2048xf32>
    %13 = arith.addf %10, %12 : vector<128x2048xf32>
    %14 = vector.extract_strided_slice %13 {offsets = [0, 0], sizes = [128, 1024], strides = [1, 1]} : vector<128x2048xf32> to vector<128x1024xf32>
    %15 = vector.extract_strided_slice %13 {offsets = [0, 1024], sizes = [128, 1024], strides = [1, 1]} : vector<128x2048xf32> to vector<128x1024xf32>
    %16 = arith.mulf %7, %14 : vector<128x1024xf32>
    %17 = arith.truncf %16 : vector<128x1024xf32> to vector<128x1024xbf16>
    %c0_12 = arith.constant 0 : index
    %c0_13 = arith.constant 0 : index
    %18 = vector.load %arg7[%c0_12, %c0_13] : memref<1024x128xbf16, #tpu.memory_space<vmem>>, vector<1024x128xbf16>
    %cst_14 = arith.constant dense<0.000000e+00> : vector<128x128xf32>
    %19 = tpu.matmul %17, %18, %cst_14 {dimension_numbers = #tpu.dot_dimension_numbers<[1], [0], [0], [1], [0, 0, 1, 1], [], []>} : vector<128x1024xbf16>, vector<1024x128xbf16>, vector<128x128xf32> -> vector<128x128xf32>
    %cst_15 = arith.constant dense<0xFF800000> : vector<128xf32>
    %20 = vector.multi_reduction <maximumf>, %19, %cst_15 [1] : vector<128x128xf32> to vector<128xf32>
    %21 = vector.shape_cast %20 : vector<128xf32> to vector<128x1xf32>
    %22 = vector.broadcast %21 : vector<128x1xf32> to vector<128x128xf32>
    %23 = arith.subf %19, %22 : vector<128x128xf32>
    %24 = math.exp %23 : vector<128x128xf32>
    %25 = arith.truncf %24 : vector<128x128xf32> to vector<128x128xbf16>
    %c0_16 = arith.constant 0 : index
    %c0_17 = arith.constant 0 : index
    %26 = vector.load %arg8[%c0_16, %c0_17] : memref<128x128xbf16, #tpu.memory_space<vmem>>, vector<128x128xbf16>
    %cst_18 = arith.constant dense<0.000000e+00> : vector<128x128xf32>
    %27 = tpu.matmul %25, %26, %cst_18 {dimension_numbers = #tpu.dot_dimension_numbers<[1], [0], [0], [1], [0, 0, 1, 1], [], []>} : vector<128x128xbf16>, vector<128x128xbf16>, vector<128x128xf32> -> vector<128x128xf32>
    %28 = tpu.reciprocal %27 : vector<128x128xf32> -> vector<128x128xf32>
    %29 = arith.mulf %24, %28 : vector<128x128xf32>
    %30 = arith.truncf %29 : vector<128x128xf32> to vector<128x128xbf16>
    %c0_19 = arith.constant 0 : index
    %c0_20 = arith.constant 0 : index
    %31 = vector.load %arg9[%c0_19, %c0_20] : memref<128x1024xbf16, #tpu.memory_space<vmem>>, vector<128x1024xbf16>
    %cst_21 = arith.constant dense<0.000000e+00> : vector<128x1024xf32>
    %32 = tpu.matmul %30, %31, %cst_21 {dimension_numbers = #tpu.dot_dimension_numbers<[1], [0], [0], [1], [0, 0, 1, 1], [], []>} : vector<128x128xbf16>, vector<128x1024xbf16>, vector<128x1024xf32> -> vector<128x1024xf32>
    %33 = arith.mulf %32, %15 : vector<128x1024xf32>
    %34 = arith.truncf %33 : vector<128x1024xf32> to vector<128x1024xbf16>
    %c0_22 = arith.constant 0 : index
    %c0_23 = arith.constant 0 : index
    %35 = vector.load %arg10[%c0_22, %c0_23] : memref<1024x128xbf16, #tpu.memory_space<vmem>>, vector<1024x128xbf16>
    %cst_24 = arith.constant dense<0.000000e+00> : vector<128x128xf32>
    %36 = tpu.matmul %34, %35, %cst_24 {dimension_numbers = #tpu.dot_dimension_numbers<[1], [0], [0], [1], [0, 0, 1, 1], [], []>} : vector<128x1024xbf16>, vector<1024x128xbf16>, vector<128x128xf32> -> vector<128x128xf32>
    %37 = arith.addf %8, %36 : vector<128x128xf32>
    %c0_25 = arith.constant 0 : index
    %c0_26 = arith.constant 0 : index
    %38 = vector.load %arg11[%c0_25, %c0_26] : memref<1x128xf32, #tpu.memory_space<vmem>>, vector<1x128xf32>
    %39 = vector.broadcast %38 : vector<1x128xf32> to vector<128x128xf32>
    %40 = arith.addf %37, %39 : vector<128x128xf32>
    %c0_27 = arith.constant 0 : index
    %c0_28 = arith.constant 0 : index
    %41 = vector.load %arg12[%c0_27, %c0_28] : memref<128x128xf32, #tpu.memory_space<vmem>>, vector<128x128xf32>
    tpu.vector_store %arg12[%c0_27, %c0_28], %40 {strides = array<i32>} : memref<128x128xf32, #tpu.memory_space<vmem>>, vector<128x128xf32>,
    return
  }
  func.func @transform_0(%arg0: i32) -> (i32, i32) {
    %c0_i32 = arith.constant 0 : i32
    %c0_i32_0 = arith.constant 0 : i32
    return %arg0, %c0_i32 : i32, i32
  }
  func.func @transform_1(%arg0: i32) -> (i32, i32) {
    %c0_i32 = arith.constant 0 : i32
    %c0_i32_0 = arith.constant 0 : i32
    return %arg0, %c0_i32 : i32, i32
  }
  func.func @transform_2(%arg0: i32) -> (i32, i32) {
    %c0_i32 = arith.constant 0 : i32
    %c0_i32_0 = arith.constant 0 : i32
    %c0_i32_1 = arith.constant 0 : i32
    return %c0_i32, %c0_i32_0 : i32, i32
  }
  func.func @transform_3(%arg0: i32) -> (i32, i32) {
    %c0_i32 = arith.constant 0 : i32
    %c0_i32_0 = arith.constant 0 : i32
    %c0_i32_1 = arith.constant 0 : i32
    return %c0_i32, %c0_i32_0 : i32, i32
  }
  func.func @transform_4(%arg0: i32) -> (i32, i32) {
    %c0_i32 = arith.constant 0 : i32
    %c0_i32_0 = arith.constant 0 : i32
    %c0_i32_1 = arith.constant 0 : i32
    return %c0_i32, %c0_i32_0 : i32, i32
  }
  func.func @transform_5(%arg0: i32) -> (i32, i32) {
    %c0_i32 = arith.constant 0 : i32
    %c0_i32_0 = arith.constant 0 : i32
    %c0_i32_1 = arith.constant 0 : i32
    return %c0_i32, %c0_i32_0 : i32, i32
  }
  func.func @transform_6(%arg0: i32) -> (i32, i32) {
    %c0_i32 = arith.constant 0 : i32
    %c0_i32_0 = arith.constant 0 : i32
    %c0_i32_1 = arith.constant 0 : i32
    return %c0_i32, %c0_i32_0 : i32, i32
  }
  func.func @transform_7(%arg0: i32) -> (i32, i32) {
    %c0_i32 = arith.constant 0 : i32
    %c0_i32_0 = arith.constant 0 : i32
    %c0_i32_1 = arith.constant 0 : i32
    return %c0_i32, %c0_i32_0 : i32, i32
  }
  func.func @transform_8(%arg0: i32) -> (i32, i32) {
    %c0_i32 = arith.constant 0 : i32
    %c0_i32_0 = arith.constant 0 : i32
    %c0_i32_1 = arith.constant 0 : i32
    return %c0_i32, %c0_i32_0 : i32, i32
  }
  func.func @transform_9(%arg0: i32) -> (i32, i32) {
    %c0_i32 = arith.constant 0 : i32
    %c0_i32_0 = arith.constant 0 : i32
    %c0_i32_1 = arith.constant 0 : i32
    return %c0_i32, %c0_i32_0 : i32, i32
  }
  func.func @transform_10(%arg0: i32) -> (i32, i32) {
    %c0_i32 = arith.constant 0 : i32
    %c0_i32_0 = arith.constant 0 : i32
    %c0_i32_1 = arith.constant 0 : i32
    return %c0_i32, %c0_i32_0 : i32, i32
  }
  func.func @transform_11(%arg0: i32) -> (i32, i32) {
    %c0_i32 = arith.constant 0 : i32
    %c0_i32_0 = arith.constant 0 : i32
    return %arg0, %c0_i32 : i32, i32
  }
}

</mosaic_0001>

<llo_original>
// kernel: tpu_custom_call.1
$region0: #{tpu_custom_call.1}
  #allocation0 [shape = 'u32[]', space=smem, size = 0x4, offset = 0x4, fixed_abs, tag = 'smem constant byte address 0x4 - core index']
  #allocation1 [shape = 'u32[72,128]{1,0:T(1,128)}', space=vmem, size = 0x9000, scoped, tag = 'internal scratch']
  %s0 = inlined_call_operand.hbm [shape: bf16[256,128], index: 0, kind: input, shape index: {}]
  %s1 = inlined_call_operand.hbm [shape: bf16[256,512], index: 1, kind: input, shape index: {}]
  %s2 = inlined_call_operand.hbm [shape: bf16[128,1152], index: 2, kind: input, shape index: {}]
  %s3 = inlined_call_operand.hbm [shape: f32[1,1024], index: 3, kind: input, shape index: {}]
  %s4 = inlined_call_operand.hbm [shape: bf16[512,2048], index: 4, kind: input, shape index: {}]
  %s5 = inlined_call_operand.hbm [shape: f32[1,2048], index: 5, kind: input, shape index: {}]
  %s6 = inlined_call_operand.hbm [shape: bf16[1024,128], index: 6, kind: input, shape index: {}]
  %s7 = inlined_call_operand.hbm [shape: bf16[128,128], index: 7, kind: input, shape index: {}]
  %s8 = inlined_call_operand.hbm [shape: bf16[128,1024], index: 8, kind: input, shape index: {}]
  %s9 = inlined_call_operand.hbm [shape: bf16[1024,128], index: 9, kind: input, shape index: {}]
  %s10 = inlined_call_operand.hbm [shape: f32[1,128], index: 10, kind: input, shape index: {}]
  %s11 = inlined_call_operand.hbm [shape: f32[256,128], index: 11, kind: output, shape index: {}]
  %s12 = sld [smem:[#allocation0]]
  $region121: #{tpu_custom_call.1} parent=0
    _
  %s14 = ssub.s32 1, %s12
  %s15 = scalar_select 0, %s14, %s12
  $region1: #{tpu_custom_call.1} parent=0
    #allocation2 [shape = 'u8[65536]{0}', space=vmem, size = 0x10000, scoped, tag = 'input window, operand 0']
    #allocation3 [shape = 's32[2]{0}', space=sflag, size = 0x8, scoped, tag = 'scoped memory for tpu_custom_call.1']
    #allocation4 [shape = 's32[2]{0}', space=sflag, size = 0x8, scoped, tag = 'scoped memory for tpu_custom_call.1']
    #allocation5 [shape = 'u8[262144]{0}', space=vmem, size = 0x40000, scoped, tag = 'input window, operand 1']
    #allocation6 [shape = 's32[2]{0}', space=sflag, size = 0x8, scoped, tag = 'scoped memory for tpu_custom_call.1']
    #allocation7 [shape = 'u8[294912]{0}', space=vmem, size = 0x48000, scoped, tag = 'input window, operand 2, single buffered']
    #allocation8 [shape = 'u8[4096]{0}', space=vmem, size = 0x1000, scoped, tag = 'input window, operand 3, single buffered']
    #allocation9 [shape = 's32[1]{0}', space=sflag, size = 0x4, scoped, tag = 'scoped memory for tpu_custom_call.1']
    #allocation10 [shape = 'u8[2097152]{0}', space=vmem, size = 0x200000, scoped, tag = 'input window, operand 4, single buffered']
    #allocation11 [shape = 'u8[8192]{0}', space=vmem, size = 0x2000, scoped, tag = 'input window, operand 5, single buffered']
    #allocation12 [shape = 's32[1]{0}', space=sflag, size = 0x4, scoped, tag = 'scoped memory for tpu_custom_call.1']
    #allocation13 [shape = 'u8[262144]{0}', space=vmem, size = 0x40000, scoped, tag = 'input window, operand 6, single buffered']
    #allocation14 [shape = 'u8[32768]{0}', space=vmem, size = 0x8000, scoped, tag = 'input window, operand 7, single buffered']
    #allocation15 [shape = 's32[1]{0}', space=sflag, size = 0x4, scoped, tag = 'scoped memory for tpu_custom_call.1']
    #allocation16 [shape = 'u8[262144]{0}', space=vmem, size = 0x40000, scoped, tag = 'input window, operand 8, single buffered']
    #allocation17 [shape = 'u8[262144]{0}', space=vmem, size = 0x40000, scoped, tag = 'input window, operand 9, single buffered']
    #allocation18 [shape = 's32[1]{0}', space=sflag, size = 0x4, scoped, tag = 'scoped memory for tpu_custom_call.1']
    #allocation19 [shape = 'u8[512]{0}', space=vmem, size = 0x400, scoped, tag = 'input window, operand 10, single buffered']
    #allocation20 [shape = 'u8[131072]{0}', space=vmem, size = 0x20000, scoped, tag = 'output window, operand 0']
    %16 = vsyncpa [#allocation3], 0
    %s17 = scalar_lea.sflag [#allocation3], 1
    %18 = vsyncpa %s17, 0
    %19 = vsyncpa [#allocation6], 0
    %s20 = scalar_lea.sflag [#allocation6], 1
    %21 = vsyncpa %s20, 0
    %22 = vsyncpa [#allocation9], 0
    %23 = vsyncpa [#allocation12], 0
    %24 = vsyncpa [#allocation15], 0
    %25 = vsyncpa [#allocation18], 0
    %26 = vsyncpa [#allocation4], 0
    %s27 = scalar_lea.sflag [#allocation4], 1
    %28 = vsyncpa %s27, 0
    loop: start=0, step=1, limit=4
    $region2: #{tpu_custom_call.1} parent=1 // loop_pre_header
      _
    $region3: #{tpu_custom_call.1} parent=1 // loop_header
      %s30 = sphi 0, %s34
      %p31 = scmp.ge.s32.totalorder %s30, 4
      %s40 = sphi 0, %s42
      %s43 = sphi 0, %s40
      %s44 = sphi 0, %s43
      %s60 = sphi 0, %s44
      %s66 = sphi 0, %s68
      %s69 = sphi 0, %s66
      %s70 = sphi 0, %s69
      %s86 = sphi 0, %s70
      %s90 = sphi 0, %s90
      %s92 = sphi 0, %s90
      %s93 = sphi 0, %s92
      %s107 = sphi 0, %s93
      %s111 = sphi 0, %s111
      %s113 = sphi 0, %s111
      %s114 = sphi 0, %s113
      %s128 = sphi 0, %s114
      %s132 = sphi 0, %s132
      %s134 = sphi 0, %s132
      %s135 = sphi 0, %s134
      %s149 = sphi 0, %s135
      %s153 = sphi 0, %s153
      %s155 = sphi 0, %s153
      %s156 = sphi 0, %s155
      %s170 = sphi 0, %s156
      %s174 = sphi 0, %s174
      %s176 = sphi 0, %s174
      %s177 = sphi 0, %s176
      %s191 = sphi 0, %s177
      %s195 = sphi 0, %s195
      %s197 = sphi 0, %s195
      %s198 = sphi 0, %s197
      %s212 = sphi 0, %s198
      %s216 = sphi 0, %s216
      %s218 = sphi 0, %s216
      %s219 = sphi 0, %s218
      %s233 = sphi 0, %s219
      %s237 = sphi 0, %s237
      %s239 = sphi 0, %s237
      %s240 = sphi 0, %s239
      %s254 = sphi 0, %s240
      %s258 = sphi 0, %s258
      %s260 = sphi 0, %s258
      %s261 = sphi 0, %s260
      %s275 = sphi 0, %s261
      %s281 = sphi 0, %s283
      %s284 = sphi 0, %s281
      %s285 = sphi 0, %s284
      %s301 = sphi 0, %s285
    $region4: #{tpu_custom_call.1} parent=1 // loop_header_branch
      %33 = sbr.rel (%p31) target = $region8
    $region5: #{tpu_custom_call.1} parent=1 // loop_body
      %s35 = ssub.s32 %s30, 1
      %s36 = ssub.s32 %s30, 2
      %s37 = sadd.s32 %s30, 1
      %s38 = ssub.s32 %s30, %s37
      %p39 = scmp.eq.s32.totalorder %s38, 0
      %s41 = sadd.s32 %s40, 1
      %s42 = scalar_select %p39, %s40, %s41
      %p45 = pneg %p39
      %p46 = scmp.eq.s32.totalorder %s30, 1
      %p47 = por %p45, %p46
      %p48 = scmp.ne.s32.totalorder %s40, %s43
      %p49 = scmp.eq.s32.totalorder %s30, 0
      %p50 = por %p48, %p49
      %p51 = scmp.ne.s32.totalorder %s40, %s43
      %p52 = scmp.eq.s32.totalorder %s35, 1
      %p53 = por %p51, %p52
      %p54 = scmp.ne.s32.totalorder %s43, %s44
      %p55 = scmp.eq.s32.totalorder %s35, 0
      %p56 = por %p54, %p55
      %p57 = scmp.ne.s32.totalorder %s43, %s44
      %p58 = scmp.eq.s32.totalorder %s36, 1
      %p59 = por %p57, %p58
      %p61 = scmp.ne.s32.totalorder %s44, %s60
      %p62 = scmp.eq.s32.totalorder %s36, 0
      %p63 = por %p61, %p62
      %s64 = ssub.s32 %s30, %s37
      %p65 = scmp.eq.s32.totalorder %s64, 0
      %s67 = sadd.s32 %s66, 1
      %s68 = scalar_select %p65, %s66, %s67
      %p71 = pneg %p65
      %p72 = scmp.eq.s32.totalorder %s30, 1
      %p73 = por %p71, %p72
      %p74 = scmp.ne.s32.totalorder %s66, %s69
      %p75 = scmp.eq.s32.totalorder %s30, 0
      %p76 = por %p74, %p75
      %p77 = scmp.ne.s32.totalorder %s66, %s69
      %p78 = scmp.eq.s32.totalorder %s35, 1
      %p79 = por %p77, %p78
      %p80 = scmp.ne.s32.totalorder %s69, %s70
      %p81 = scmp.eq.s32.totalorder %s35, 0
      %p82 = por %p80, %p81
      %p83 = scmp.ne.s32.totalorder %s69, %s70
      %p84 = scmp.eq.s32.totalorder %s36, 1
      %p85 = por %p83, %p84
      %p87 = scmp.ne.s32.totalorder %s70, %s86
      %p88 = scmp.eq.s32.totalorder %s36, 0
      %p89 = por %p87, %p88
      %s91 = sadd.s32 %s90, 1
      %p94 = scmp.eq.s32.totalorder %s30, 1
      %p95 = scmp.ne.s32.totalorder %s90, %s92
      %p96 = scmp.eq.s32.totalorder %s30, 0
      %p97 = por %p95, %p96
      %p98 = scmp.ne.s32.totalorder %s90, %s92
      %p99 = scmp.eq.s32.totalorder %s35, 1
      %p100 = por %p98, %p99
      %p101 = scmp.ne.s32.totalorder %s92, %s93
      %p102 = scmp.eq.s32.totalorder %s35, 0
      %p103 = por %p101, %p102
      %p104 = scmp.ne.s32.totalorder %s92, %s93
      %p105 = scmp.eq.s32.totalorder %s36, 1
      %p106 = por %p104, %p105
      %p108 = scmp.ne.s32.totalorder %s93, %s107
      %p109 = scmp.eq.s32.totalorder %s36, 0
      %p110 = por %p108, %p109
      %s112 = sadd.s32 %s111, 1
      %p115 = scmp.eq.s32.totalorder %s30, 1
      %p116 = scmp.ne.s32.totalorder %s111, %s113
      %p117 = scmp.eq.s32.totalorder %s30, 0
      %p118 = por %p116, %p117
      %p119 = scmp.ne.s32.totalorder %s111, %s113
      %p120 = scmp.eq.s32.totalorder %s35, 1
      %p121 = por %p119, %p120
      %p122 = scmp.ne.s32.totalorder %s113, %s114
      %p123 = scmp.eq.s32.totalorder %s35, 0
      %p124 = por %p122, %p123
      %p125 = scmp.ne.s32.totalorder %s113, %s114
      %p126 = scmp.eq.s32.totalorder %s36, 1
      %p127 = por %p125, %p126
      %p129 = scmp.ne.s32.totalorder %s114, %s128
      %p130 = scmp.eq.s32.totalorder %s36, 0
      %p131 = por %p129, %p130
      %s133 = sadd.s32 %s132, 1
      %p136 = scmp.eq.s32.totalorder %s30, 1
      %p137 = scmp.ne.s32.totalorder %s132, %s134
      %p138 = scmp.eq.s32.totalorder %s30, 0
      %p139 = por %p137, %p138
      %p140 = scmp.ne.s32.totalorder %s132, %s134
      %p141 = scmp.eq.s32.totalorder %s35, 1
      %p142 = por %p140, %p141
      %p143 = scmp.ne.s32.totalorder %s134, %s135
      %p144 = scmp.eq.s32.totalorder %s35, 0
      %p145 = por %p143, %p144
      %p146 = scmp.ne.s32.totalorder %s134, %s135
      %p147 = scmp.eq.s32.totalorder %s36, 1
      %p148 = por %p146, %p147
      %p150 = scmp.ne.s32.totalorder %s135, %s149
      %p151 = scmp.eq.s32.totalorder %s36, 0
      %p152 = por %p150, %p151
      %s154 = sadd.s32 %s153, 1
      %p157 = scmp.eq.s32.totalorder %s30, 1
      %p158 = scmp.ne.s32.totalorder %s153, %s155
      %p159 = scmp.eq.s32.totalorder %s30, 0
      %p160 = por %p158, %p159
      %p161 = scmp.ne.s32.totalorder %s153, %s155
      %p162 = scmp.eq.s32.totalorder %s35, 1
      %p163 = por %p161, %p162
      %p164 = scmp.ne.s32.totalorder %s155, %s156
      %p165 = scmp.eq.s32.totalorder %s35, 0
      %p166 = por %p164, %p165
      %p167 = scmp.ne.s32.totalorder %s155, %s156
      %p168 = scmp.eq.s32.totalorder %s36, 1
      %p169 = por %p167, %p168
      %p171 = scmp.ne.s32.totalorder %s156, %s170
      %p172 = scmp.eq.s32.totalorder %s36, 0
      %p173 = por %p171, %p172
      %s175 = sadd.s32 %s174, 1
      %p178 = scmp.eq.s32.totalorder %s30, 1
      %p179 = scmp.ne.s32.totalorder %s174, %s176
      %p180 = scmp.eq.s32.totalorder %s30, 0
      %p181 = por %p179, %p180
      %p182 = scmp.ne.s32.totalorder %s174, %s176
      %p183 = scmp.eq.s32.totalorder %s35, 1
      %p184 = por %p182, %p183
      %p185 = scmp.ne.s32.totalorder %s176, %s177
      %p186 = scmp.eq.s32.totalorder %s35, 0
      %p187 = por %p185, %p186
      %p188 = scmp.ne.s32.totalorder %s176, %s177
      %p189 = scmp.eq.s32.totalorder %s36, 1
      %p190 = por %p188, %p189
      %p192 = scmp.ne.s32.totalorder %s177, %s191
      %p193 = scmp.eq.s32.totalorder %s36, 0
      %p194 = por %p192, %p193
      %s196 = sadd.s32 %s195, 1
      %p199 = scmp.eq.s32.totalorder %s30, 1
      %p200 = scmp.ne.s32.totalorder %s195, %s197
      %p201 = scmp.eq.s32.totalorder %s30, 0
      %p202 = por %p200, %p201
      %p203 = scmp.ne.s32.totalorder %s195, %s197
      %p204 = scmp.eq.s32.totalorder %s35, 1
      %p205 = por %p203, %p204
      %p206 = scmp.ne.s32.totalorder %s197, %s198
      %p207 = scmp.eq.s32.totalorder %s35, 0
      %p208 = por %p206, %p207
      %p209 = scmp.ne.s32.totalorder %s197, %s198
      %p210 = scmp.eq.s32.totalorder %s36, 1
      %p211 = por %p209, %p210
      %p213 = scmp.ne.s32.totalorder %s198, %s212
      %p214 = scmp.eq.s32.totalorder %s36, 0
      %p215 = por %p213, %p214
      %s217 = sadd.s32 %s216, 1
      %p220 = scmp.eq.s32.totalorder %s30, 1
      %p221 = scmp.ne.s32.totalorder %s216, %s218
      %p222 = scmp.eq.s32.totalorder %s30, 0
      %p223 = por %p221, %p222
      %p224 = scmp.ne.s32.totalorder %s216, %s218
      %p225 = scmp.eq.s32.totalorder %s35, 1
      %p226 = por %p224, %p225
      %p227 = scmp.ne.s32.totalorder %s218, %s219
      %p228 = scmp.eq.s32.totalorder %s35, 0
      %p229 = por %p227, %p228
      %p230 = scmp.ne.s32.totalorder %s218, %s219
      %p231 = scmp.eq.s32.totalorder %s36, 1
      %p232 = por %p230, %p231
      %p234 = scmp.ne.s32.totalorder %s219, %s233
      %p235 = scmp.eq.s32.totalorder %s36, 0
      %p236 = por %p234, %p235
      %s238 = sadd.s32 %s237, 1
      %p241 = scmp.eq.s32.totalorder %s30, 1
      %p242 = scmp.ne.s32.totalorder %s237, %s239
      %p243 = scmp.eq.s32.totalorder %s30, 0
      %p244 = por %p242, %p243
      %p245 = scmp.ne.s32.totalorder %s237, %s239
      %p246 = scmp.eq.s32.totalorder %s35, 1
      %p247 = por %p245, %p246
      %p248 = scmp.ne.s32.totalorder %s239, %s240
      %p249 = scmp.eq.s32.totalorder %s35, 0
      %p250 = por %p248, %p249
      %p251 = scmp.ne.s32.totalorder %s239, %s240
      %p252 = scmp.eq.s32.totalorder %s36, 1
      %p253 = por %p251, %p252
      %p255 = scmp.ne.s32.totalorder %s240, %s254
      %p256 = scmp.eq.s32.totalorder %s36, 0
      %p257 = por %p255, %p256
      %s259 = sadd.s32 %s258, 1
      %p262 = scmp.eq.s32.totalorder %s30, 1
      %p263 = scmp.ne.s32.totalorder %s258, %s260
      %p264 = scmp.eq.s32.totalorder %s30, 0
      %p265 = por %p263, %p264
      %p266 = scmp.ne.s32.totalorder %s258, %s260
      %p267 = scmp.eq.s32.totalorder %s35, 1
      %p268 = por %p266, %p267
      %p269 = scmp.ne.s32.totalorder %s260, %s261
      %p270 = scmp.eq.s32.totalorder %s35, 0
      %p271 = por %p269, %p270
      %p272 = scmp.ne.s32.totalorder %s260, %s261
      %p273 = scmp.eq.s32.totalorder %s36, 1
      %p274 = por %p272, %p273
      %p276 = scmp.ne.s32.totalorder %s261, %s275
      %p277 = scmp.eq.s32.totalorder %s36, 0
      %p278 = por %p276, %p277
      %s279 = ssub.s32 %s30, %s37
      %p280 = scmp.eq.s32.totalorder %s279, 0
      %s282 = sadd.s32 %s281, 1
      %s283 = scalar_select %p280, %s281, %s282
      %p286 = pneg %p280
      %p287 = scmp.eq.s32.totalorder %s30, 1
      %p288 = por %p286, %p287
      %p289 = scmp.ne.s32.totalorder %s281, %s284
      %p290 = scmp.eq.s32.totalorder %s30, 0
      %p291 = por %p289, %p290
      %p292 = scmp.ne.s32.totalorder %s281, %s284
      %p293 = scmp.eq.s32.totalorder %s35, 1
      %p294 = por %p292, %p293
      %p295 = scmp.ne.s32.totalorder %s284, %s285
      %p296 = scmp.eq.s32.totalorder %s35, 0
      %p297 = por %p295, %p296
      %p298 = scmp.ne.s32.totalorder %s284, %s285
      %p299 = scmp.eq.s32.totalorder %s36, 1
      %p300 = por %p298, %p299
      %p302 = scmp.ne.s32.totalorder %s285, %s301
      %p303 = scmp.eq.s32.totalorder %s36, 0
      %p304 = por %p302, %p303
      %p305 = scmp.le.s32.totalorder 1, %s30
      %p306 = scmp.lt.s32.totalorder %s30, 3
      %p307 = pnand %p305, %p306
      %p308 = pneg %p307
      // Predicated region
      $region9: #{tpu_custom_call.1} parent=5 // pred_check
        _
      $region10: #{tpu_custom_call.1} parent=5 // pred_check_branch
        %310 = sbr.rel (%p307) target = $region12
      $region11: #{tpu_custom_call.1} parent=5 // pred_region
        %s311 = ssub.s32 %s30, 1
        // Predicated region
        $region13: #{tpu_custom_call.1} parent=11 // pred_check
          %p312 = pneg %p103
        $region14: #{tpu_custom_call.1} parent=11 // pred_check_branch
          %314 = sbr.rel (%p312) target = $region16
        $region15: #{tpu_custom_call.1} parent=11 // pred_region
          %316 = vsyncadd [#allocation6], 0
          %s317 = sshll.u32 %s2, 4
          %s318 = int_to_ptr.hbm [resolvable:$true] %s317
          %s319 = sshll.u32 [#allocation7], 4
          %s320 = int_to_ptr.vmem [resolvable:$true] %s319
          %325 = dma.hbm_to_vmem [thread:$0]  %s318, 9216, %s320, [#allocation6], 576, 576, 36
        $region16: #{tpu_custom_call.1} parent=11 // pred_fallthru
          _
        // Predicated region
        $region17: #{tpu_custom_call.1} parent=11 // pred_check
          %p326 = pneg %p124
        $region18: #{tpu_custom_call.1} parent=11 // pred_check_branch
          %328 = sbr.rel (%p326) target = $region20
        $region19: #{tpu_custom_call.1} parent=11 // pred_region
          %330 = vsyncadd [#allocation9], 0
          %s332 = sshll.u32 %s3, 4
          %s333 = int_to_ptr.hbm [resolvable:$true] %s332
          %s334 = sshll.u32 [#allocation8], 4
          %s335 = int_to_ptr.vmem [resolvable:$true] %s334
          %337 = dma.hbm_to_vmem [thread:$0]  %s333, 128, %s335, [#allocation9]
        $region20: #{tpu_custom_call.1} parent=11 // pred_fallthru
          _
        // Predicated region
        $region21: #{tpu_custom_call.1} parent=11 // pred_check
          %p338 = pneg %p145
        $region22: #{tpu_custom_call.1} parent=11 // pred_check_branch
          %340 = sbr.rel (%p338) target = $region24
        $region23: #{tpu_custom_call.1} parent=11 // pred_region
          %342 = vsyncadd [#allocation9], 0
          %s343 = sshll.u32 %s4, 4
          %s344 = int_to_ptr.hbm [resolvable:$true] %s343
          %s345 = sshll.u32 [#allocation10], 4
          %s346 = int_to_ptr.vmem [resolvable:$true] %s345
          %351 = dma.hbm_to_vmem [thread:$0]  %s344, 65536, %s346, [#allocation9], 1024, 1024, 64
        $region24: #{tpu_custom_call.1} parent=11 // pred_fallthru
          _
        // Predicated region
        $region25: #{tpu_custom_call.1} parent=11 // pred_check
          %p352 = pneg %p166
        $region26: #{tpu_custom_call.1} parent=11 // pred_check_branch
          %354 = sbr.rel (%p352) target = $region28
        $region27: #{tpu_custom_call.1} parent=11 // pred_region
          %356 = vsyncadd [#allocation12], 0
          %s358 = sshll.u32 %s5, 4
          %s359 = int_to_ptr.hbm [resolvable:$true] %s358
          %s360 = sshll.u32 [#allocation11], 4
          %s361 = int_to_ptr.vmem [resolvable:$true] %s360
          %363 = dma.hbm_to_vmem [thread:$0]  %s359, 256, %s361, [#allocation12]
        $region28: #{tpu_custom_call.1} parent=11 // pred_fallthru
          _
        // Predicated region
        $region29: #{tpu_custom_call.1} parent=11 // pred_check
          %p364 = pneg %p187
        $region30: #{tpu_custom_call.1} parent=11 // pred_check_branch
          %366 = sbr.rel (%p364) target = $region32
        $region31: #{tpu_custom_call.1} parent=11 // pred_region
          %368 = vsyncadd [#allocation12], 0
          %s369 = sshll.u32 %s6, 4
          %s370 = int_to_ptr.hbm [resolvable:$true] %s369
          %s371 = sshll.u32 [#allocation13], 4
          %s372 = int_to_ptr.vmem [resolvable:$true] %s371
          %377 = dma.hbm_to_vmem [thread:$0]  %s370, 8192, %s372, [#allocation12], 64, 64, 4
        $region32: #{tpu_custom_call.1} parent=11 // pred_fallthru
          _
        // Predicated region
        $region33: #{tpu_custom_call.1} parent=11 // pred_check
          %p378 = pneg %p208
        $region34: #{tpu_custom_call.1} parent=11 // pred_check_branch
          %380 = sbr.rel (%p378) target = $region36
        $region35: #{tpu_custom_call.1} parent=11 // pred_region
          %382 = vsyncadd [#allocation15], 0
          %s383 = sshll.u32 %s7, 4
          %s384 = int_to_ptr.hbm [resolvable:$true] %s383
          %s385 = sshll.u32 [#allocation14], 4
          %s386 = int_to_ptr.vmem [resolvable:$true] %s385
          %391 = dma.hbm_to_vmem [thread:$0]  %s384, 1024, %s386, [#allocation15], 64, 64, 4
        $region36: #{tpu_custom_call.1} parent=11 // pred_fallthru
          _
        // Predicated region
        $region37: #{tpu_custom_call.1} parent=11 // pred_check
          %p392 = pneg %p229
        $region38: #{tpu_custom_call.1} parent=11 // pred_check_branch
          %394 = sbr.rel (%p392) target = $region40
        $region39: #{tpu_custom_call.1} parent=11 // pred_region
          %396 = vsyncadd [#allocation15], 0
          %s397 = sshll.u32 %s8, 4
          %s398 = int_to_ptr.hbm [resolvable:$true] %s397
          %s399 = sshll.u32 [#allocation16], 4
          %s400 = int_to_ptr.vmem [resolvable:$true] %s399
          %405 = dma.hbm_to_vmem [thread:$0]  %s398, 8192, %s400, [#allocation15], 512, 512, 32
        $region40: #{tpu_custom_call.1} parent=11 // pred_fallthru
          _
        // Predicated region
        $region41: #{tpu_custom_call.1} parent=11 // pred_check
          %p406 = pneg %p250
        $region42: #{tpu_custom_call.1} parent=11 // pred_check_branch
          %408 = sbr.rel (%p406) target = $region44
        $region43: #{tpu_custom_call.1} parent=11 // pred_region
          %410 = vsyncadd [#allocation18], 0
          %s411 = sshll.u32 %s9, 4
          %s412 = int_to_ptr.hbm [resolvable:$true] %s411
          %s413 = sshll.u32 [#allocation17], 4
          %s414 = int_to_ptr.vmem [resolvable:$true] %s413
          %419 = dma.hbm_to_vmem [thread:$0]  %s412, 8192, %s414, [#allocation18], 64, 64, 4
        $region44: #{tpu_custom_call.1} parent=11 // pred_fallthru
          _
        // Predicated region
        $region45: #{tpu_custom_call.1} parent=11 // pred_check
          %p420 = pneg %p271
        $region46: #{tpu_custom_call.1} parent=11 // pred_check_branch
          %422 = sbr.rel (%p420) target = $region48
        $region47: #{tpu_custom_call.1} parent=11 // pred_region
          %424 = vsyncadd [#allocation18], 0
          %s426 = sshll.u32 %s10, 4
          %s427 = int_to_ptr.hbm [resolvable:$true] %s426
          %s428 = sshll.u32 [#allocation19], 4
          %s429 = int_to_ptr.vmem [resolvable:$true] %s428
          %431 = dma.hbm_to_vmem [thread:$0]  %s427, 16, %s429, [#allocation18]
        $region48: #{tpu_custom_call.1} parent=11 // pred_fallthru
          _
      $region12: #{tpu_custom_call.1} parent=5 // pred_fallthru
        _
      %p432 = scmp.lt.s32.totalorder %s30, 2
      // Predicated region
      $region49: #{tpu_custom_call.1} parent=5 // pred_check
        %p433 = pneg %p432
      $region50: #{tpu_custom_call.1} parent=5 // pred_check_branch
        %435 = sbr.rel (%p433) target = $region52
      $region51: #{tpu_custom_call.1} parent=5 // pred_region
        // Predicated region
        $region53: #{tpu_custom_call.1} parent=51 // pred_check
          %p436 = pneg %p50
        $region54: #{tpu_custom_call.1} parent=51 // pred_check_branch
          %438 = sbr.rel (%p436) target = $region56
        $region55: #{tpu_custom_call.1} parent=51 // pred_region
          %s439 = sand.u32 %s40, 1
          %s440 = scalar_lea.sflag [#allocation3], %s439
          %s441 = sand.u32 %s40, 1
          %s442 = smul.addr %s441, 64
          %s443 = scalar_lea.vmem [#allocation2], %s442
          %s444 = smul.u32 16, %s30
          %446 = vsyncadd %s440, 0
          %s447 = smul.addr %s444, 4
          %s448 = scalar_lea.hbm %s0, %s447
          %s449 = sshll.u32 %s448, 4
          %s450 = int_to_ptr.hbm [resolvable:$true] %s449
          %s451 = sshll.u32 %s443, 4
          %s452 = int_to_ptr.vmem [resolvable:$true] %s451
          %457 = dma.hbm_to_vmem [thread:$0]  %s450, 1024, %s452, %s440, 64, 64, 4
        $region56: #{tpu_custom_call.1} parent=51 // pred_fallthru
          _
        // Predicated region
        $region57: #{tpu_custom_call.1} parent=51 // pred_check
          %p458 = pneg %p76
        $region58: #{tpu_custom_call.1} parent=51 // pred_check_branch
          %460 = sbr.rel (%p458) target = $region60
        $region59: #{tpu_custom_call.1} parent=51 // pred_region
          %s461 = sand.u32 %s30, 1
          %s462 = scalar_lea.sflag [#allocation6], %s461
          %s463 = sand.u32 %s66, 1
          %s464 = smul.addr %s463, 256
          %s465 = scalar_lea.vmem [#allocation5], %s464
          %s466 = smul.u32 16, %s30
          %468 = vsyncadd %s462, 0
          %s469 = smul.addr %s466, 4
          %s470 = smul.addr %s469, 4
          %s471 = scalar_lea.hbm %s1, %s470
          %s472 = sshll.u32 %s471, 4
          %s473 = int_to_ptr.hbm [resolvable:$true] %s472
          %s474 = sshll.u32 %s465, 4
          %s475 = int_to_ptr.vmem [resolvable:$true] %s474
          %480 = dma.hbm_to_vmem [thread:$0]  %s473, 4096, %s475, %s462, 256, 256, 16
        $region60: #{tpu_custom_call.1} parent=51 // pred_fallthru
          _
      $region52: #{tpu_custom_call.1} parent=5 // pred_fallthru
        _
      %p481 = scmp.le.s32.totalorder 1, %s30
      %p482 = scmp.lt.s32.totalorder %s30, 3
      %p483 = pnand %p481, %p482
      %p484 = pneg %p483
      // Predicated region
      $region61: #{tpu_custom_call.1} parent=5 // pred_check
        _
      $region62: #{tpu_custom_call.1} parent=5 // pred_check_branch
        %486 = sbr.rel (%p483) target = $region64
      $region63: #{tpu_custom_call.1} parent=5 // pred_region
        %s487 = ssub.s32 %s30, 1
        %s488 = sand.u32 %s43, 1
        %s489 = scalar_lea.sflag [#allocation3], %s488
        %s490 = sand.u32 %s43, 1
        %s491 = smul.addr %s490, 64
        %s492 = scalar_lea.vmem [#allocation2], %s491
        // Predicated region
        $region65: #{tpu_custom_call.1} parent=63 // pred_check
          %p493 = pneg %p56
        $region66: #{tpu_custom_call.1} parent=63 // pred_check_branch
          %495 = sbr.rel (%p493) target = $region68
        $region67: #{tpu_custom_call.1} parent=63 // pred_region
          %497 = dma.done %s489, 1024
        $region68: #{tpu_custom_call.1} parent=63 // pred_fallthru
          _
        %s498 = sand.u32 %s35, 1
        %s499 = scalar_lea.sflag [#allocation6], %s498
        %s500 = sand.u32 %s69, 1
        %s501 = smul.addr %s500, 256
        %s502 = scalar_lea.vmem [#allocation5], %s501
        // Predicated region
        $region69: #{tpu_custom_call.1} parent=63 // pred_check
          %p503 = pneg %p82
        $region70: #{tpu_custom_call.1} parent=63 // pred_check_branch
          %505 = sbr.rel (%p503) target = $region72
        $region71: #{tpu_custom_call.1} parent=63 // pred_region
          %507 = dma.done %s499, 4096
        $region72: #{tpu_custom_call.1} parent=63 // pred_fallthru
          _
        // Predicated region
        $region73: #{tpu_custom_call.1} parent=63 // pred_check
          %p508 = pneg %p103
        $region74: #{tpu_custom_call.1} parent=63 // pred_check_branch
          %510 = sbr.rel (%p508) target = $region76
        $region75: #{tpu_custom_call.1} parent=63 // pred_region
          %512 = dma.done [#allocation6], 9216
        $region76: #{tpu_custom_call.1} parent=63 // pred_fallthru
          _
        // Predicated region
        $region77: #{tpu_custom_call.1} parent=63 // pred_check
          %p513 = pneg %p124
        $region78: #{tpu_custom_call.1} parent=63 // pred_check_branch
          %515 = sbr.rel (%p513) target = $region80
        $region79: #{tpu_custom_call.1} parent=63 // pred_region
          %517 = dma.done [#allocation9], 128
        $region80: #{tpu_custom_call.1} parent=63 // pred_fallthru
          _
        // Predicated region
        $region81: #{tpu_custom_call.1} parent=63 // pred_check
          %p518 = pneg %p145
        $region82: #{tpu_custom_call.1} parent=63 // pred_check_branch
          %520 = sbr.rel (%p518) target = $region84
        $region83: #{tpu_custom_call.1} parent=63 // pred_region
          %522 = dma.done [#allocation9], 65536
        $region84: #{tpu_custom_call.1} parent=63 // pred_fallthru
          _
        // Predicated region
        $region85: #{tpu_custom_call.1} parent=63 // pred_check
          %p523 = pneg %p166
        $region86: #{tpu_custom_call.1} parent=63 // pred_check_branch
          %525 = sbr.rel (%p523) target = $region88
        $region87: #{tpu_custom_call.1} parent=63 // pred_region
          %527 = dma.done [#allocation12], 256
        $region88: #{tpu_custom_call.1} parent=63 // pred_fallthru
          _
        // Predicated region
        $region89: #{tpu_custom_call.1} parent=63 // pred_check
          %p528 = pneg %p187
        $region90: #{tpu_custom_call.1} parent=63 // pred_check_branch
          %530 = sbr.rel (%p528) target = $region92
        $region91: #{tpu_custom_call.1} parent=63 // pred_region
          %532 = dma.done [#allocation12], 8192
        $region92: #{tpu_custom_call.1} parent=63 // pred_fallthru
          _
        // Predicated region
        $region93: #{tpu_custom_call.1} parent=63 // pred_check
          %p533 = pneg %p208
        $region94: #{tpu_custom_call.1} parent=63 // pred_check_branch
          %535 = sbr.rel (%p533) target = $region96
        $region95: #{tpu_custom_call.1} parent=63 // pred_region
          %537 = dma.done [#allocation15], 1024
        $region96: #{tpu_custom_call.1} parent=63 // pred_fallthru
          _
        // Predicated region
        $region97: #{tpu_custom_call.1} parent=63 // pred_check
          %p538 = pneg %p229
        $region98: #{tpu_custom_call.1} parent=63 // pred_check_branch
          %540 = sbr.rel (%p538) target = $region100
        $region99: #{tpu_custom_call.1} parent=63 // pred_region
          %542 = dma.done [#allocation15], 8192
        $region100: #{tpu_custom_call.1} parent=63 // pred_fallthru
          _
        // Predicated region
        $region101: #{tpu_custom_call.1} parent=63 // pred_check
          %p543 = pneg %p250
        $region102: #{tpu_custom_call.1} parent=63 // pred_check_branch
          %545 = sbr.rel (%p543) target = $region104
        $region103: #{tpu_custom_call.1} parent=63 // pred_region
          %547 = dma.done [#allocation18], 8192
        $region104: #{tpu_custom_call.1} parent=63 // pred_fallthru
          _
        // Predicated region
        $region105: #{tpu_custom_call.1} parent=63 // pred_check
          %p548 = pneg %p271
        $region106: #{tpu_custom_call.1} parent=63 // pred_check_branch
          %550 = sbr.rel (%p548) target = $region108
        $region107: #{tpu_custom_call.1} parent=63 // pred_region
          %552 = dma.done [#allocation18], 16
        $region108: #{tpu_custom_call.1} parent=63 // pred_fallthru
          _
        %s553 = sand.u32 %s43, 1
        %s554 = scalar_lea.sflag [#allocation3], %s553
        %s555 = sand.u32 %s43, 1
        %s556 = smul.addr %s555, 64
        %s557 = scalar_lea.vmem [#allocation2], %s556
        %p558 = pneg %p56
        %p559 = pneg %p53
        %s560 = sand.u32 %s35, 1
        %s561 = scalar_lea.sflag [#allocation6], %s560
        %s562 = sand.u32 %s69, 1
        %s563 = smul.addr %s562, 256
        %s564 = scalar_lea.vmem [#allocation5], %s563
        %p565 = pneg %p82
        %p566 = pneg %p79
        %p567 = pneg %p103
        %p568 = pneg %p100
        %p569 = pneg %p124
        %p570 = pneg %p121
        %p571 = pneg %p145
        %p572 = pneg %p142
        %p573 = pneg %p166
        %p574 = pneg %p163
        %p575 = pneg %p187
        %p576 = pneg %p184
        %p577 = pneg %p208
        %p578 = pneg %p205
        %p579 = pneg %p229
        %p580 = pneg %p226
        %p581 = pneg %p250
        %p582 = pneg %p247
        %p583 = pneg %p271
        %p584 = pneg %p268
        %p585 = pneg %p297
        %p586 = pneg %p294
        %s587 = sand.u32 %s284, 1
        %s588 = scalar_lea.sflag [#allocation4], %s587
        %s589 = sand.u32 %s284, 1
        %s590 = smul.addr %s589, 128
        %s591 = scalar_lea.vmem [#allocation20], %s590
        %s592 = smul.u32 16, %s35
        %s593 = smul.u32 16, %s35
        %s594 = smul.u32 16, %s35
        %v595 = vld [vmem:[%s492] sm:$0xf]
        %v596 = vld [vmem:[%s492 + $0x4] sm:$0xf]
        %v597 = vld [vmem:[%s492 + $0x8] sm:$0xf]
        %v598 = vld [vmem:[%s492 + $0xc] sm:$0xf]
        %v599 = vld [vmem:[%s492 + $0x10] sm:$0xf]
        %v600 = vld [vmem:[%s492 + $0x14] sm:$0xf]
        %v601 = vld [vmem:[%s492 + $0x18] sm:$0xf]
        %v602 = vld [vmem:[%s492 + $0x1c] sm:$0xf]
        %v603 = vld [vmem:[%s492 + $0x20] sm:$0xf]
        %v604 = vld [vmem:[%s492 + $0x24] sm:$0xf]
        %v605 = vld [vmem:[%s492 + $0x28] sm:$0xf]
        %v606 = vld [vmem:[%s492 + $0x2c] sm:$0xf]
        %v607 = vld [vmem:[%s492 + $0x30] sm:$0xf]
        %v608 = vld [vmem:[%s492 + $0x34] sm:$0xf]
        %v609 = vld [vmem:[%s492 + $0x38] sm:$0xf]
        %v610 = vld [vmem:[%s492 + $0x3c] sm:$0xf]
        %v611 = vld [vmem:[%s502] sm:$0xff]
        %v612 = vld [vmem:[%s502 + $0x8] sm:$0xff]
        %v613 = vld [vmem:[%s502 + $0x10] sm:$0xff]
        %v614 = vld [vmem:[%s502 + $0x18] sm:$0xff]
        %v615 = vld [vmem:[%s502 + $0x20] sm:$0xff]
        %v616 = vld [vmem:[%s502 + $0x28] sm:$0xff]
        %v617 = vld [vmem:[%s502 + $0x30] sm:$0xff]
        %v618 = vld [vmem:[%s502 + $0x38] sm:$0xff]
        %v619 = vld [vmem:[%s502 + $0x40] sm:$0xff]
        %v620 = vld [vmem:[%s502 + $0x48] sm:$0xff]
        %v621 = vld [vmem:[%s502 + $0x50] sm:$0xff]
        %v622 = vld [vmem:[%s502 + $0x58] sm:$0xff]
        %v623 = vld [vmem:[%s502 + $0x60] sm:$0xff]
        %v624 = vld [vmem:[%s502 + $0x68] sm:$0xff]
        %v625 = vld [vmem:[%s502 + $0x70] sm:$0xff]
        %v626 = vld [vmem:[%s502 + $0x78] sm:$0xff]
        %v627 = vld [vmem:[%s502 + $0x80] sm:$0xff]
        %v628 = vld [vmem:[%s502 + $0x88] sm:$0xff]
        %v629 = vld [vmem:[%s502 + $0x90] sm:$0xff]
        %v630 = vld [vmem:[%s502 + $0x98] sm:$0xff]
        %v631 = vld [vmem:[%s502 + $0xa0] sm:$0xff]
        %v632 = vld [vmem:[%s502 + $0xa8] sm:$0xff]
        %v633 = vld [vmem:[%s502 + $0xb0] sm:$0xff]
        %v634 = vld [vmem:[%s502 + $0xb8] sm:$0xff]
        %v635 = vld [vmem:[%s502 + $0xc0] sm:$0xff]
        %v636 = vld [vmem:[%s502 + $0xc8] sm:$0xff]
        %v637 = vld [vmem:[%s502 + $0xd0] sm:$0xff]
        %v638 = vld [vmem:[%s502 + $0xd8] sm:$0xff]
        %v639 = vld [vmem:[%s502 + $0xe0] sm:$0xff]
        %v640 = vld [vmem:[%s502 + $0xe8] sm:$0xff]
        %v641 = vld [vmem:[%s502 + $0xf0] sm:$0xff]
        %v642 = vld [vmem:[%s502 + $0xf8] sm:$0xff]
        %v643 = vld [vmem:[#allocation7] sm:$0xff]
        %v644 = vld [vmem:[#allocation7 + $0x8] sm:$0xff]
        %v645 = vld [vmem:[#allocation7 + $0x10] sm:$0xff]
        %v646 = vld [vmem:[#allocation7 + $0x18] sm:$0xff]
        %v647 = vld [vmem:[#allocation7 + $0x20] sm:$0xf]
        %v648 = vld [vmem:[#allocation7 + $0x24] sm:$0xff]
        %v649 = vld [vmem:[#allocation7 + $0x2c] sm:$0xff]
        %v650 = vld [vmem:[#allocation7 + $0x34] sm:$0xff]
        %v651 = vld [vmem:[#allocation7 + $0x3c] sm:$0xff]
        %v652 = vld [vmem:[#allocation7 + $0x44] sm:$0xf]
        %v653 = vld [vmem:[#allocation7 + $0x48] sm:$0xff]
        %v654 = vld [vmem:[#allocation7 + $0x50] sm:$0xff]
        %v655 = vld [vmem:[#allocation7 + $0x58] sm:$0xff]
        %v656 = vld [vmem:[#allocation7 + $0x60] sm:$0xff]
        %v657 = vld [vmem:[#allocation7 + $0x68] sm:$0xf]
        %v658 = vld [vmem:[#allocation7 + $0x6c] sm:$0xff]
        %v659 = vld [vmem:[#allocation7 + $0x74] sm:$0xff]
        %v660 = vld [vmem:[#allocation7 + $0x7c] sm:$0xff]
        %v661 = vld [vmem:[#allocation7 + $0x84] sm:$0xff]
        %v662 = vld [vmem:[#allocation7 + $0x8c] sm:$0xf]
        %v663 = vld [vmem:[#allocation7 + $0x90] sm:$0xff]
        %v664 = vld [vmem:[#allocation7 + $0x98] sm:$0xff]
        %v665 = vld [vmem:[#allocation7 + $0xa0] sm:$0xff]
        %v666 = vld [vmem:[#allocation7 + $0xa8] sm:$0xff]
        %v667 = vld [vmem:[#allocation7 + $0xb0] sm:$0xf]
        %v668 = vld [vmem:[#allocation7 + $0xb4] sm:$0xff]
        %v669 = vld [vmem:[#allocation7 + $0xbc] sm:$0xff]
        %v670 = vld [vmem:[#allocation7 + $0xc4] sm:$0xff]
        %v671 = vld [vmem:[#allocation7 + $0xcc] sm:$0xff]
        %v672 = vld [vmem:[#allocation7 + $0xd4] sm:$0xf]
        %v673 = vld [vmem:[#allocation7 + $0xd8] sm:$0xff]
        %v674 = vld [vmem:[#allocation7 + $0xe0] sm:$0xff]
        %v675 = vld [vmem:[#allocation7 + $0xe8] sm:$0xff]
        %v676 = vld [vmem:[#allocation7 + $0xf0] sm:$0xff]
        %v677 = vld [vmem:[#allocation7 + $0xf8] sm:$0xf]
        %v678 = vld [vmem:[#allocation7 + $0xfc] sm:$0xff]
        %v679 = vld [vmem:[#allocation7 + $0x104] sm:$0xff]
        %v680 = vld [vmem:[#allocation7 + $0x10c] sm:$0xff]
        %v681 = vld [vmem:[#allocation7 + $0x114] sm:$0xff]
        %v682 = vld [vmem:[#allocation7 + $0x11c] sm:$0xf]
        %v683 = vld [vmem:[#allocation7 + $0x120] sm:$0xff]
        %v684 = vld [vmem:[#allocation7 + $0x128] sm:$0xff]
        %v685 = vld [vmem:[#allocation7 + $0x130] sm:$0xff]
        %v686 = vld [vmem:[#allocation7 + $0x138] sm:$0xff]
        %v687 = vld [vmem:[#allocation7 + $0x140] sm:$0xf]
        %v688 = vld [vmem:[#allocation7 + $0x144] sm:$0xff]
        %v689 = vld [vmem:[#allocation7 + $0x14c] sm:$0xff]
        %v690 = vld [vmem:[#allocation7 + $0x154] sm:$0xff]
        %v691 = vld [vmem:[#allocation7 + $0x15c] sm:$0xff]
        %v692 = vld [vmem:[#allocation7 + $0x164] sm:$0xf]
        %v693 = vld [vmem:[#allocation7 + $0x168] sm:$0xff]
        %v694 = vld [vmem:[#allocation7 + $0x170] sm:$0xff]
        %v695 = vld [vmem:[#allocation7 + $0x178] sm:$0xff]
        %v696 = vld [vmem:[#allocation7 + $0x180] sm:$0xff]
        %v697 = vld [vmem:[#allocation7 + $0x188] sm:$0xf]
        %v698 = vld [vmem:[#allocation7 + $0x18c] sm:$0xff]
        %v699 = vld [vmem:[#allocation7 + $0x194] sm:$0xff]
        %v700 = vld [vmem:[#allocation7 + $0x19c] sm:$0xff]
        %v701 = vld [vmem:[#allocation7 + $0x1a4] sm:$0xff]
        %v702 = vld [vmem:[#allocation7 + $0x1ac] sm:$0xf]
        %v703 = vld [vmem:[#allocation7 + $0x1b0] sm:$0xff]
        %v704 = vld [vmem:[#allocation7 + $0x1b8] sm:$0xff]
        %v705 = vld [vmem:[#allocation7 + $0x1c0] sm:$0xff]
        %v706 = vld [vmem:[#allocation7 + $0x1c8] sm:$0xff]
        %v707 = vld [vmem:[#allocation7 + $0x1d0] sm:$0xf]
        %v708 = vld [vmem:[#allocation7 + $0x1d4] sm:$0xff]
        %v709 = vld [vmem:[#allocation7 + $0x1dc] sm:$0xff]
        %v710 = vld [vmem:[#allocation7 + $0x1e4] sm:$0xff]
        %v711 = vld [vmem:[#allocation7 + $0x1ec] sm:$0xff]
        %v712 = vld [vmem:[#allocation7 + $0x1f4] sm:$0xf]
        %v713 = vld [vmem:[#allocation7 + $0x1f8] sm:$0xff]
        %v714 = vld [vmem:[#allocation7 + $0x200] sm:$0xff]
        %v715 = vld [vmem:[#allocation7 + $0x208] sm:$0xff]
        %v716 = vld [vmem:[#allocation7 + $0x210] sm:$0xff]
        %v717 = vld [vmem:[#allocation7 + $0x218] sm:$0xf]
        %v718 = vld [vmem:[#allocation7 + $0x21c] sm:$0xff]
        %v719 = vld [vmem:[#allocation7 + $0x224] sm:$0xff]
        %v720 = vld [vmem:[#allocation7 + $0x22c] sm:$0xff]
        %v721 = vld [vmem:[#allocation7 + $0x234] sm:$0xff]
        %v722 = vld [vmem:[#allocation7 + $0x23c] sm:$0xf]
        %v739 = vunpack.c.l.b16 %v595
        %v740 = vunpack.c.l.b16 %v596
        %v741 = vunpack.c.l.b16 %v597
        %v742 = vunpack.c.l.b16 %v598
        %v743 = vunpack.c.l.b16 %v599
        %v744 = vunpack.c.l.b16 %v600
        %v745 = vunpack.c.l.b16 %v601
        %v746 = vunpack.c.l.b16 %v602
        %v747 = vunpack.c.l.b16 %v603
        %v748 = vunpack.c.l.b16 %v604
        %v749 = vunpack.c.l.b16 %v605
        %v750 = vunpack.c.l.b16 %v606
        %v751 = vunpack.c.l.b16 %v607
        %v752 = vunpack.c.l.b16 %v608
        %v753 = vunpack.c.l.b16 %v609
        %v754 = vunpack.c.l.b16 %v610
        %v755 = vpack.c.b16 %v740, %v739
        %v756 = vpack.c.b16 %v742, %v741
        %v757 = vpack.c.b16 %v744, %v743
        %v758 = vpack.c.b16 %v746, %v745
        %v759 = vpack.c.b16 %v748, %v747
        %v760 = vpack.c.b16 %v750, %v749
        %v761 = vpack.c.b16 %v752, %v751
        %v762 = vpack.c.b16 %v754, %v753
        %v851 = vunpack.c.l.b16 %v643
        %v852 = vunpack.c.h.b16 %v643
        %v853 = vunpack.c.l.b16 %v644
        %v854 = vunpack.c.h.b16 %v644
        %v855 = vunpack.c.l.b16 %v645
        %v856 = vunpack.c.h.b16 %v645
        %v857 = vunpack.c.l.b16 %v646
        %v858 = vunpack.c.h.b16 %v646
        %v859 = vunpack.c.l.b16 %v647
        %v860 = vunpack.c.l.b16 %v648
        %v861 = vunpack.c.h.b16 %v648
        %v862 = vunpack.c.l.b16 %v649
        %v863 = vunpack.c.h.b16 %v649
        %v864 = vunpack.c.l.b16 %v650
        %v865 = vunpack.c.h.b16 %v650
        %v866 = vunpack.c.l.b16 %v651
        %v867 = vunpack.c.h.b16 %v651
        %v868 = vunpack.c.l.b16 %v652
        %v869 = vunpack.c.l.b16 %v653
        %v870 = vunpack.c.h.b16 %v653
        %v871 = vunpack.c.l.b16 %v654
        %v872 = vunpack.c.h.b16 %v654
        %v873 = vunpack.c.l.b16 %v655
        %v874 = vunpack.c.h.b16 %v655
        %v875 = vunpack.c.l.b16 %v656
        %v876 = vunpack.c.h.b16 %v656
        %v877 = vunpack.c.l.b16 %v657
        %v878 = vunpack.c.l.b16 %v658
        %v879 = vunpack.c.h.b16 %v658
        %v880 = vunpack.c.l.b16 %v659
        %v881 = vunpack.c.h.b16 %v659
        %v882 = vunpack.c.l.b16 %v660
        %v883 = vunpack.c.h.b16 %v660
        %v884 = vunpack.c.l.b16 %v661
        %v885 = vunpack.c.h.b16 %v661
        %v886 = vunpack.c.l.b16 %v662
        %v887 = vunpack.c.l.b16 %v663
        %v888 = vunpack.c.h.b16 %v663
        %v889 = vunpack.c.l.b16 %v664
        %v890 = vunpack.c.h.b16 %v664
        %v891 = vunpack.c.l.b16 %v665
        %v892 = vunpack.c.h.b16 %v665
        %v893 = vunpack.c.l.b16 %v666
        %v894 = vunpack.c.h.b16 %v666
        %v895 = vunpack.c.l.b16 %v667
        %v896 = vunpack.c.l.b16 %v668
        %v897 = vunpack.c.h.b16 %v668
        %v898 = vunpack.c.l.b16 %v669
        %v899 = vunpack.c.h.b16 %v669
        %v900 = vunpack.c.l.b16 %v670
        %v901 = vunpack.c.h.b16 %v670
        %v902 = vunpack.c.l.b16 %v671
        %v903 = vunpack.c.h.b16 %v671
        %v904 = vunpack.c.l.b16 %v672
        %v905 = vunpack.c.l.b16 %v673
        %v906 = vunpack.c.h.b16 %v673
        %v907 = vunpack.c.l.b16 %v674
        %v908 = vunpack.c.h.b16 %v674
        %v909 = vunpack.c.l.b16 %v675
        %v910 = vunpack.c.h.b16 %v675
        %v911 = vunpack.c.l.b16 %v676
        %v912 = vunpack.c.h.b16 %v676
        %v913 = vunpack.c.l.b16 %v677
        %v914 = vunpack.c.l.b16 %v678
        %v915 = vunpack.c.h.b16 %v678
        %v916 = vunpack.c.l.b16 %v679
        %v917 = vunpack.c.h.b16 %v679
        %v918 = vunpack.c.l.b16 %v680
        %v919 = vunpack.c.h.b16 %v680
        %v920 = vunpack.c.l.b16 %v681
        %v921 = vunpack.c.h.b16 %v681
        %v922 = vunpack.c.l.b16 %v682
        %v923 = vunpack.c.l.b16 %v683
        %v924 = vunpack.c.h.b16 %v683
        %v925 = vunpack.c.l.b16 %v684
        %v926 = vunpack.c.h.b16 %v684
        %v927 = vunpack.c.l.b16 %v685
        %v928 = vunpack.c.h.b16 %v685
        %v929 = vunpack.c.l.b16 %v686
        %v930 = vunpack.c.h.b16 %v686
        %v931 = vunpack.c.l.b16 %v687
        %v932 = vunpack.c.l.b16 %v688
        %v933 = vunpack.c.h.b16 %v688
        %v934 = vunpack.c.l.b16 %v689
        %v935 = vunpack.c.h.b16 %v689
        %v936 = vunpack.c.l.b16 %v690
        %v937 = vunpack.c.h.b16 %v690
        %v938 = vunpack.c.l.b16 %v691
        %v939 = vunpack.c.h.b16 %v691
        %v940 = vunpack.c.l.b16 %v692
        %v941 = vunpack.c.l.b16 %v693
        %v942 = vunpack.c.h.b16 %v693
        %v943 = vunpack.c.l.b16 %v694
        %v944 = vunpack.c.h.b16 %v694
        %v945 = vunpack.c.l.b16 %v695
        %v946 = vunpack.c.h.b16 %v695
        %v947 = vunpack.c.l.b16 %v696
        %v948 = vunpack.c.h.b16 %v696
        %v949 = vunpack.c.l.b16 %v697
        %v950 = vunpack.c.l.b16 %v698
        %v951 = vunpack.c.h.b16 %v698
        %v952 = vunpack.c.l.b16 %v699
        %v953 = vunpack.c.h.b16 %v699
        %v954 = vunpack.c.l.b16 %v700
        %v955 = vunpack.c.h.b16 %v700
        %v956 = vunpack.c.l.b16 %v701
        %v957 = vunpack.c.h.b16 %v701
        %v958 = vunpack.c.l.b16 %v702
        %v959 = vunpack.c.l.b16 %v703
        %v960 = vunpack.c.h.b16 %v703
        %v961 = vunpack.c.l.b16 %v704
        %v962 = vunpack.c.h.b16 %v704
        %v963 = vunpack.c.l.b16 %v705
        %v964 = vunpack.c.h.b16 %v705
        %v965 = vunpack.c.l.b16 %v706
        %v966 = vunpack.c.h.b16 %v706
        %v967 = vunpack.c.l.b16 %v707
        %v968 = vunpack.c.l.b16 %v708
        %v969 = vunpack.c.h.b16 %v708
        %v970 = vunpack.c.l.b16 %v709
        %v971 = vunpack.c.h.b16 %v709
        %v972 = vunpack.c.l.b16 %v710
        %v973 = vunpack.c.h.b16 %v710
        %v974 = vunpack.c.l.b16 %v711
        %v975 = vunpack.c.h.b16 %v711
        %v976 = vunpack.c.l.b16 %v712
        %v977 = vunpack.c.l.b16 %v713
        %v978 = vunpack.c.h.b16 %v713
        %v979 = vunpack.c.l.b16 %v714
        %v980 = vunpack.c.h.b16 %v714
        %v981 = vunpack.c.l.b16 %v715
        %v982 = vunpack.c.h.b16 %v715
        %v983 = vunpack.c.l.b16 %v716
        %v984 = vunpack.c.h.b16 %v716
        %v985 = vunpack.c.l.b16 %v717
        %v986 = vunpack.c.l.b16 %v718
        %v987 = vunpack.c.h.b16 %v718
        %v988 = vunpack.c.l.b16 %v719
        %v989 = vunpack.c.h.b16 %v719
        %v990 = vunpack.c.l.b16 %v720
        %v991 = vunpack.c.h.b16 %v720
        %v992 = vunpack.c.l.b16 %v721
        %v993 = vunpack.c.h.b16 %v721
        %v994 = vunpack.c.l.b16 %v722
        %v995 = vpack.c.b16 %v860, %v851
        %v996 = vpack.c.b16 %v861, %v852
        %v997 = vpack.c.b16 %v862, %v853
        %v998 = vpack.c.b16 %v863, %v854
        %v999 = vpack.c.b16 %v864, %v855
        %v1000 = vpack.c.b16 %v865, %v856
        %v1001 = vpack.c.b16 %v866, %v857
        %v1002 = vpack.c.b16 %v867, %v858
        %v1003 = vpack.c.b16 %v868, %v859
        %v1004 = vpack.c.b16 %v878, %v869
        %v1005 = vpack.c.b16 %v879, %v870
        %v1006 = vpack.c.b16 %v880, %v871
        %v1007 = vpack.c.b16 %v881, %v872
        %v1008 = vpack.c.b16 %v882, %v873
        %v1009 = vpack.c.b16 %v883, %v874
        %v1010 = vpack.c.b16 %v884, %v875
        %v1011 = vpack.c.b16 %v885, %v876
        %v1012 = vpack.c.b16 %v886, %v877
        %v1013 = vpack.c.b16 %v896, %v887
        %v1014 = vpack.c.b16 %v897, %v888
        %v1015 = vpack.c.b16 %v898, %v889
        %v1016 = vpack.c.b16 %v899, %v890
        %v1017 = vpack.c.b16 %v900, %v891
        %v1018 = vpack.c.b16 %v901, %v892
        %v1019 = vpack.c.b16 %v902, %v893
        %v1020 = vpack.c.b16 %v903, %v894
        %v1021 = vpack.c.b16 %v904, %v895
        %v1022 = vpack.c.b16 %v914, %v905
        %v1023 = vpack.c.b16 %v915, %v906
        %v1024 = vpack.c.b16 %v916, %v907
        %v1025 = vpack.c.b16 %v917, %v908
        %v1026 = vpack.c.b16 %v918, %v909
        %v1027 = vpack.c.b16 %v919, %v910
        %v1028 = vpack.c.b16 %v920, %v911
        %v1029 = vpack.c.b16 %v921, %v912
        %v1030 = vpack.c.b16 %v922, %v913
        %v1031 = vpack.c.b16 %v932, %v923
        %v1032 = vpack.c.b16 %v933, %v924
        %v1033 = vpack.c.b16 %v934, %v925
        %v1034 = vpack.c.b16 %v935, %v926
        %v1035 = vpack.c.b16 %v936, %v927
        %v1036 = vpack.c.b16 %v937, %v928
        %v1037 = vpack.c.b16 %v938, %v929
        %v1038 = vpack.c.b16 %v939, %v930
        %v1039 = vpack.c.b16 %v940, %v931
        %v1040 = vpack.c.b16 %v950, %v941
        %v1041 = vpack.c.b16 %v951, %v942
        %v1042 = vpack.c.b16 %v952, %v943
        %v1043 = vpack.c.b16 %v953, %v944
        %v1044 = vpack.c.b16 %v954, %v945
        %v1045 = vpack.c.b16 %v955, %v946
        %v1046 = vpack.c.b16 %v956, %v947
        %v1047 = vpack.c.b16 %v957, %v948
        %v1048 = vpack.c.b16 %v958, %v949
        %v1049 = vpack.c.b16 %v968, %v959
        %v1050 = vpack.c.b16 %v969, %v960
        %v1051 = vpack.c.b16 %v970, %v961
        %v1052 = vpack.c.b16 %v971, %v962
        %v1053 = vpack.c.b16 %v972, %v963
        %v1054 = vpack.c.b16 %v973, %v964
        %v1055 = vpack.c.b16 %v974, %v965
        %v1056 = vpack.c.b16 %v975, %v966
        %v1057 = vpack.c.b16 %v976, %v967
        %v1058 = vpack.c.b16 %v986, %v977
        %v1059 = vpack.c.b16 %v987, %v978
        %v1060 = vpack.c.b16 %v988, %v979
        %v1061 = vpack.c.b16 %v989, %v980
        %v1062 = vpack.c.b16 %v990, %v981
        %v1063 = vpack.c.b16 %v991, %v982
        %v1064 = vpack.c.b16 %v992, %v983
        %v1065 = vpack.c.b16 %v993, %v984
        %v1066 = vpack.c.b16 %v994, %v985
        %1139 = vmatpush.bf16.msra.mxu0 %v1058
        %1140 = vmatpush.bf16.msra.mxu0 %v1049
        %1141 = vmatpush.bf16.msra.mxu0 %v1040
        %1142 = vmatpush.bf16.msra.mxu0 %v1031
        %1143 = vmatpush.bf16.msra.mxu0 %v1022
        %1144 = vmatpush.bf16.msra.mxu0 %v1013
        %1145 = vmatpush.bf16.msra.mxu0 %v1004
        %1146 = vmatpush.bf16.msra.mxu0 %v995
        %1147 = vmatmul.bf16.gmra.mxu0 %v755
        %v1148 = vpop.f32.mrf.mxu0
        %v1149 = vadd.f32 0.0, %v1148
        %v1150 = vpop.f32.mrf.mxu0
        %v1151 = vadd.f32 0.0, %v1150
        %1152 = vmatmul.bf16.gmra.mxu0 %v756
        %v1153 = vpop.f32.mrf.mxu0
        %v1154 = vadd.f32 0.0, %v1153
        %v1155 = vpop.f32.mrf.mxu0
        %v1156 = vadd.f32 0.0, %v1155
        %1157 = vmatmul.bf16.gmra.mxu0 %v757
        %v1158 = vpop.f32.mrf.mxu0
        %v1159 = vadd.f32 0.0, %v1158
        %v1160 = vpop.f32.mrf.mxu0
        %v1161 = vadd.f32 0.0, %v1160
        %1162 = vmatmul.bf16.gmra.mxu0 %v758
        %v1163 = vpop.f32.mrf.mxu0
        %v1164 = vadd.f32 0.0, %v1163
        %v1165 = vpop.f32.mrf.mxu0
        %v1166 = vadd.f32 0.0, %v1165
        %1167 = vmatmul.bf16.gmra.mxu0 %v759
        %v1168 = vpop.f32.mrf.mxu0
        %v1169 = vadd.f32 0.0, %v1168
        %v1170 = vpop.f32.mrf.mxu0
        %v1171 = vadd.f32 0.0, %v1170
        %1172 = vmatmul.bf16.gmra.mxu0 %v760
        %v1173 = vpop.f32.mrf.mxu0
        %v1174 = vadd.f32 0.0, %v1173
        %v1175 = vpop.f32.mrf.mxu0
        %v1176 = vadd.f32 0.0, %v1175
        %1177 = vmatmul.bf16.gmra.mxu0 %v761
        %v1178 = vpop.f32.mrf.mxu0
        %v1179 = vadd.f32 0.0, %v1178
        %v1180 = vpop.f32.mrf.mxu0
        %v1181 = vadd.f32 0.0, %v1180
        %1182 = vmatmul.bf16.gmra.mxu0 %v762
        %v1183 = vpop.f32.mrf.mxu0
        %v1184 = vadd.f32 0.0, %v1183
        %v1185 = vpop.f32.mrf.mxu0
        %v1186 = vadd.f32 0.0, %v1185
        %1187 = vdwg.mxu0
        %1188 = vmatpush.bf16.msra.mxu0 %v1059
        %1189 = vmatpush.bf16.msra.mxu0 %v1050
        %1190 = vmatpush.bf16.msra.mxu0 %v1041
        %1191 = vmatpush.bf16.msra.mxu0 %v1032
        %1192 = vmatpush.bf16.msra.mxu0 %v1023
        %1193 = vmatpush.bf16.msra.mxu0 %v1014
        %1194 = vmatpush.bf16.msra.mxu0 %v1005
        %1195 = vmatpush.bf16.msra.mxu0 %v996
        %1196 = vmatmul.bf16.gmra.mxu0 %v755
        %v1197 = vpop.f32.mrf.mxu0
        %v1198 = vadd.f32 0.0, %v1197
        %v1199 = vpop.f32.mrf.mxu0
        %v1200 = vadd.f32 0.0, %v1199
        %1201 = vmatmul.bf16.gmra.mxu0 %v756
        %v1202 = vpop.f32.mrf.mxu0
        %v1203 = vadd.f32 0.0, %v1202
        %v1204 = vpop.f32.mrf.mxu0
        %v1205 = vadd.f32 0.0, %v1204
        %1206 = vmatmul.bf16.gmra.mxu0 %v757
        %v1207 = vpop.f32.mrf.mxu0
        %v1208 = vadd.f32 0.0, %v1207
        %v1209 = vpop.f32.mrf.mxu0
        %v1210 = vadd.f32 0.0, %v1209
        %1211 = vmatmul.bf16.gmra.mxu0 %v758
        %v1212 = vpop.f32.mrf.mxu0
        %v1213 = vadd.f32 0.0, %v1212
        %v1214 = vpop.f32.mrf.mxu0
        %v1215 = vadd.f32 0.0, %v1214
        %1216 = vmatmul.bf16.gmra.mxu0 %v759
        %v1217 = vpop.f32.mrf.mxu0
        %v1218 = vadd.f32 0.0, %v1217
        %v1219 = vpop.f32.mrf.mxu0
        %v1220 = vadd.f32 0.0, %v1219
        %1221 = vmatmul.bf16.gmra.mxu0 %v760
        %v1222 = vpop.f32.mrf.mxu0
        %v1223 = vadd.f32 0.0, %v1222
        %v1224 = vpop.f32.mrf.mxu0
        %v1225 = vadd.f32 0.0, %v1224
        %1226 = vmatmul.bf16.gmra.mxu0 %v761
        %v1227 = vpop.f32.mrf.mxu0
        %v1228 = vadd.f32 0.0, %v1227
        %v1229 = vpop.f32.mrf.mxu0
        %v1230 = vadd.f32 0.0, %v1229
        %1231 = vmatmul.bf16.gmra.mxu0 %v762
        %v1232 = vpop.f32.mrf.mxu0
        %v1233 = vadd.f32 0.0, %v1232
        %v1234 = vpop.f32.mrf.mxu0
        %v1235 = vadd.f32 0.0, %v1234
        %1236 = vdwg.mxu0
        %1237 = vmatpush.bf16.msra.mxu0 %v1060
        %1238 = vmatpush.bf16.msra.mxu0 %v1051
        %1239 = vmatpush.bf16.msra.mxu0 %v1042
        %1240 = vmatpush.bf16.msra.mxu0 %v1033
        %1241 = vmatpush.bf16.msra.mxu0 %v1024
        %1242 = vmatpush.bf16.msra.mxu0 %v1015
        %1243 = vmatpush.bf16.msra.mxu0 %v1006
        %1244 = vmatpush.bf16.msra.mxu0 %v997
        %1245 = vmatmul.bf16.gmra.mxu0 %v755
        %v1246 = vpop.f32.mrf.mxu0
        %v1247 = vadd.f32 0.0, %v1246
        %v1248 = vpop.f32.mrf.mxu0
        %v1249 = vadd.f32 0.0, %v1248
        %1250 = vmatmul.bf16.gmra.mxu0 %v756
        %v1251 = vpop.f32.mrf.mxu0
        %v1252 = vadd.f32 0.0, %v1251
        %v1253 = vpop.f32.mrf.mxu0
        %v1254 = vadd.f32 0.0, %v1253
        %1255 = vmatmul.bf16.gmra.mxu0 %v757
        %v1256 = vpop.f32.mrf.mxu0
        %v1257 = vadd.f32 0.0, %v1256
        %v1258 = vpop.f32.mrf.mxu0
        %v1259 = vadd.f32 0.0, %v1258
        %1260 = vmatmul.bf16.gmra.mxu0 %v758
        %v1261 = vpop.f32.mrf.mxu0
        %v1262 = vadd.f32 0.0, %v1261
        %v1263 = vpop.f32.mrf.mxu0
        %v1264 = vadd.f32 0.0, %v1263
        %1265 = vmatmul.bf16.gmra.mxu0 %v759
        %v1266 = vpop.f32.mrf.mxu0
        %v1267 = vadd.f32 0.0, %v1266
        %v1268 = vpop.f32.mrf.mxu0
        %v1269 = vadd.f32 0.0, %v1268
        %1270 = vmatmul.bf16.gmra.mxu0 %v760
        %v1271 = vpop.f32.mrf.mxu0
        %v1272 = vadd.f32 0.0, %v1271
        %v1273 = vpop.f32.mrf.mxu0
        %v1274 = vadd.f32 0.0, %v1273
        %1275 = vmatmul.bf16.gmra.mxu0 %v761
        %v1276 = vpop.f32.mrf.mxu0
        %v1277 = vadd.f32 0.0, %v1276
        %v1278 = vpop.f32.mrf.mxu0
        %v1279 = vadd.f32 0.0, %v1278
        %1280 = vmatmul.bf16.gmra.mxu0 %v762
        %v1281 = vpop.f32.mrf.mxu0
        %v1282 = vadd.f32 0.0, %v1281
        %v1283 = vpop.f32.mrf.mxu0
        %v1284 = vadd.f32 0.0, %v1283
        %1285 = vdwg.mxu0
        %1286 = vmatpush.bf16.msra.mxu0 %v1061
        %1287 = vmatpush.bf16.msra.mxu0 %v1052
        %1288 = vmatpush.bf16.msra.mxu0 %v1043
        %1289 = vmatpush.bf16.msra.mxu0 %v1034
        %1290 = vmatpush.bf16.msra.mxu0 %v1025
        %1291 = vmatpush.bf16.msra.mxu0 %v1016
        %1292 = vmatpush.bf16.msra.mxu0 %v1007
        %1293 = vmatpush.bf16.msra.mxu0 %v998
        %1294 = vmatmul.bf16.gmra.mxu0 %v755
        %v1295 = vpop.f32.mrf.mxu0
        %v1296 = vadd.f32 0.0, %v1295
        %v1297 = vpop.f32.mrf.mxu0
        %v1298 = vadd.f32 0.0, %v1297
        %1299 = vmatmul.bf16.gmra.mxu0 %v756
        %v1300 = vpop.f32.mrf.mxu0
        %v1301 = vadd.f32 0.0, %v1300
        %v1302 = vpop.f32.mrf.mxu0
        %v1303 = vadd.f32 0.0, %v1302
        %1304 = vmatmul.bf16.gmra.mxu0 %v757
        %v1305 = vpop.f32.mrf.mxu0
        %v1306 = vadd.f32 0.0, %v1305
        %v1307 = vpop.f32.mrf.mxu0
        %v1308 = vadd.f32 0.0, %v1307
        %1309 = vmatmul.bf16.gmra.mxu0 %v758
        %v1310 = vpop.f32.mrf.mxu0
        %v1311 = vadd.f32 0.0, %v1310
        %v1312 = vpop.f32.mrf.mxu0
        %v1313 = vadd.f32 0.0, %v1312
        %1314 = vmatmul.bf16.gmra.mxu0 %v759
        %v1315 = vpop.f32.mrf.mxu0
        %v1316 = vadd.f32 0.0, %v1315
        %v1317 = vpop.f32.mrf.mxu0
        %v1318 = vadd.f32 0.0, %v1317
        %1319 = vmatmul.bf16.gmra.mxu0 %v760
        %v1320 = vpop.f32.mrf.mxu0
        %v1321 = vadd.f32 0.0, %v1320
        %v1322 = vpop.f32.mrf.mxu0
        %v1323 = vadd.f32 0.0, %v1322
        %1324 = vmatmul.bf16.gmra.mxu0 %v761
        %v1325 = vpop.f32.mrf.mxu0
        %v1326 = vadd.f32 0.0, %v1325
        %v1327 = vpop.f32.mrf.mxu0
        %v1328 = vadd.f32 0.0, %v1327
        %1329 = vmatmul.bf16.gmra.mxu0 %v762
        %v1330 = vpop.f32.mrf.mxu0
        %v1331 = vadd.f32 0.0, %v1330
        %v1332 = vpop.f32.mrf.mxu0
        %v1333 = vadd.f32 0.0, %v1332
        %1334 = vdwg.mxu0
        %1335 = vmatpush.bf16.msra.mxu0 %v1062
        %1336 = vmatpush.bf16.msra.mxu0 %v1053
        %1337 = vmatpush.bf16.msra.mxu0 %v1044
        %1338 = vmatpush.bf16.msra.mxu0 %v1035
        %1339 = vmatpush.bf16.msra.mxu0 %v1026
        %1340 = vmatpush.bf16.msra.mxu0 %v1017
        %1341 = vmatpush.bf16.msra.mxu0 %v1008
        %1342 = vmatpush.bf16.msra.mxu0 %v999
        %1343 = vmatmul.bf16.gmra.mxu0 %v755
        %v1344 = vpop.f32.mrf.mxu0
        %v1345 = vadd.f32 0.0, %v1344
        %v1346 = vpop.f32.mrf.mxu0
        %v1347 = vadd.f32 0.0, %v1346
        %1348 = vmatmul.bf16.gmra.mxu0 %v756
        %v1349 = vpop.f32.mrf.mxu0
        %v1350 = vadd.f32 0.0, %v1349
        %v1351 = vpop.f32.mrf.mxu0
        %v1352 = vadd.f32 0.0, %v1351
        %1353 = vmatmul.bf16.gmra.mxu0 %v757
        %v1354 = vpop.f32.mrf.mxu0
        %v1355 = vadd.f32 0.0, %v1354
        %v1356 = vpop.f32.mrf.mxu0
        %v1357 = vadd.f32 0.0, %v1356
        %1358 = vmatmul.bf16.gmra.mxu0 %v758
        %v1359 = vpop.f32.mrf.mxu0
        %v1360 = vadd.f32 0.0, %v1359
        %v1361 = vpop.f32.mrf.mxu0
        %v1362 = vadd.f32 0.0, %v1361
        %1363 = vmatmul.bf16.gmra.mxu0 %v759
        %v1364 = vpop.f32.mrf.mxu0
        %v1365 = vadd.f32 0.0, %v1364
        %v1366 = vpop.f32.mrf.mxu0
        %v1367 = vadd.f32 0.0, %v1366
        %1368 = vmatmul.bf16.gmra.mxu0 %v760
        %v1369 = vpop.f32.mrf.mxu0
        %v1370 = vadd.f32 0.0, %v1369
        %v1371 = vpop.f32.mrf.mxu0
        %v1372 = vadd.f32 0.0, %v1371
        %1373 = vmatmul.bf16.gmra.mxu0 %v761
        %v1374 = vpop.f32.mrf.mxu0
        %v1375 = vadd.f32 0.0, %v1374
        %v1376 = vpop.f32.mrf.mxu0
        %v1377 = vadd.f32 0.0, %v1376
        %1378 = vmatmul.bf16.gmra.mxu0 %v762
        %v1379 = vpop.f32.mrf.mxu0
        %v1380 = vadd.f32 0.0, %v1379
        %v1381 = vpop.f32.mrf.mxu0
        %v1382 = vadd.f32 0.0, %v1381
        %1383 = vdwg.mxu0
        %1384 = vmatpush.bf16.msra.mxu0 %v1063
        %1385 = vmatpush.bf16.msra.mxu0 %v1054
        %1386 = vmatpush.bf16.msra.mxu0 %v1045
        %1387 = vmatpush.bf16.msra.mxu0 %v1036
        %1388 = vmatpush.bf16.msra.mxu0 %v1027
        %1389 = vmatpush.bf16.msra.mxu0 %v1018
        %1390 = vmatpush.bf16.msra.mxu0 %v1009
        %1391 = vmatpush.bf16.msra.mxu0 %v1000
        %1392 = vmatmul.bf16.gmra.mxu0 %v755
        %v1393 = vpop.f32.mrf.mxu0
        %v1394 = vadd.f32 0.0, %v1393
        %v1395 = vpop.f32.mrf.mxu0
        %v1396 = vadd.f32 0.0, %v1395
        %1397 = vmatmul.bf16.gmra.mxu0 %v756
        %v1398 = vpop.f32.mrf.mxu0
        %v1399 = vadd.f32 0.0, %v1398
        %v1400 = vpop.f32.mrf.mxu0
        %v1401 = vadd.f32 0.0, %v1400
        %1402 = vmatmul.bf16.gmra.mxu0 %v757
        %v1403 = vpop.f32.mrf.mxu0
        %v1404 = vadd.f32 0.0, %v1403
        %v1405 = vpop.f32.mrf.mxu0
        %v1406 = vadd.f32 0.0, %v1405
        %1407 = vmatmul.bf16.gmra.mxu0 %v758
        %v1408 = vpop.f32.mrf.mxu0
        %v1409 = vadd.f32 0.0, %v1408
        %v1410 = vpop.f32.mrf.mxu0
        %v1411 = vadd.f32 0.0, %v1410
        %1412 = vmatmul.bf16.gmra.mxu0 %v759
        %v1413 = vpop.f32.mrf.mxu0
        %v1414 = vadd.f32 0.0, %v1413
        %v1415 = vpop.f32.mrf.mxu0
        %v1416 = vadd.f32 0.0, %v1415
        %1417 = vmatmul.bf16.gmra.mxu0 %v760
        %v1418 = vpop.f32.mrf.mxu0
        %v1419 = vadd.f32 0.0, %v1418
        %v1420 = vpop.f32.mrf.mxu0
        %v1421 = vadd.f32 0.0, %v1420
        %1422 = vmatmul.bf16.gmra.mxu0 %v761
        %v1423 = vpop.f32.mrf.mxu0
        %v1424 = vadd.f32 0.0, %v1423
        %v1425 = vpop.f32.mrf.mxu0
        %v1426 = vadd.f32 0.0, %v1425
        %1427 = vmatmul.bf16.gmra.mxu0 %v762
        %v1428 = vpop.f32.mrf.mxu0
        %v1429 = vadd.f32 0.0, %v1428
        %v1430 = vpop.f32.mrf.mxu0
        %v1431 = vadd.f32 0.0, %v1430
        %1432 = vdwg.mxu0
        %1433 = vmatpush.bf16.msra.mxu0 %v1064
        %1434 = vmatpush.bf16.msra.mxu0 %v1055
        %1435 = vmatpush.bf16.msra.mxu0 %v1046
        %1436 = vmatpush.bf16.msra.mxu0 %v1037
        %1437 = vmatpush.bf16.msra.mxu0 %v1028
        %1438 = vmatpush.bf16.msra.mxu0 %v1019
        %1439 = vmatpush.bf16.msra.mxu0 %v1010
        %1440 = vmatpush.bf16.msra.mxu0 %v1001
        %1441 = vmatmul.bf16.gmra.mxu0 %v755
        %v1442 = vpop.f32.mrf.mxu0
        %v1443 = vadd.f32 0.0, %v1442
        %v1444 = vpop.f32.mrf.mxu0
        %v1445 = vadd.f32 0.0, %v1444
        %1446 = vmatmul.bf16.gmra.mxu0 %v756
        %v1447 = vpop.f32.mrf.mxu0
        %v1448 = vadd.f32 0.0, %v1447
        %v1449 = vpop.f32.mrf.mxu0
        %v1450 = vadd.f32 0.0, %v1449
        %1451 = vmatmul.bf16.gmra.mxu0 %v757
        %v1452 = vpop.f32.mrf.mxu0
        %v1453 = vadd.f32 0.0, %v1452
        %v1454 = vpop.f32.mrf.mxu0
        %v1455 = vadd.f32 0.0, %v1454
        %1456 = vmatmul.bf16.gmra.mxu0 %v758
        %v1457 = vpop.f32.mrf.mxu0
        %v1458 = vadd.f32 0.0, %v1457
        %v1459 = vpop.f32.mrf.mxu0
        %v1460 = vadd.f32 0.0, %v1459
        %1461 = vmatmul.bf16.gmra.mxu0 %v759
        %v1462 = vpop.f32.mrf.mxu0
        %v1463 = vadd.f32 0.0, %v1462
        %v1464 = vpop.f32.mrf.mxu0
        %v1465 = vadd.f32 0.0, %v1464
        %1466 = vmatmul.bf16.gmra.mxu0 %v760
        %v1467 = vpop.f32.mrf.mxu0
        %v1468 = vadd.f32 0.0, %v1467
        %v1469 = vpop.f32.mrf.mxu0
        %v1470 = vadd.f32 0.0, %v1469
        %1471 = vmatmul.bf16.gmra.mxu0 %v761
        %v1472 = vpop.f32.mrf.mxu0
        %v1473 = vadd.f32 0.0, %v1472
        %v1474 = vpop.f32.mrf.mxu0
        %v1475 = vadd.f32 0.0, %v1474
        %1476 = vmatmul.bf16.gmra.mxu0 %v762
        %v1477 = vpop.f32.mrf.mxu0
        %v1478 = vadd.f32 0.0, %v1477
        %v1479 = vpop.f32.mrf.mxu0
        %v1480 = vadd.f32 0.0, %v1479
        %1481 = vdwg.mxu0
        %1482 = vmatpush.bf16.msra.mxu0 %v1065
        %1483 = vmatpush.bf16.msra.mxu0 %v1056
        %1484 = vmatpush.bf16.msra.mxu0 %v1047
        %1485 = vmatpush.bf16.msra.mxu0 %v1038
        %1486 = vmatpush.bf16.msra.mxu0 %v1029
        %1487 = vmatpush.bf16.msra.mxu0 %v1020
        %1488 = vmatpush.bf16.msra.mxu0 %v1011
        %1489 = vmatpush.bf16.msra.mxu0 %v1002
        %1490 = vmatmul.bf16.gmra.mxu0 %v755
        %v1491 = vpop.f32.mrf.mxu0
        %v1492 = vadd.f32 0.0, %v1491
        %v1493 = vpop.f32.mrf.mxu0
        %v1494 = vadd.f32 0.0, %v1493
        %1495 = vmatmul.bf16.gmra.mxu0 %v756
        %v1496 = vpop.f32.mrf.mxu0
        %v1497 = vadd.f32 0.0, %v1496
        %v1498 = vpop.f32.mrf.mxu0
        %v1499 = vadd.f32 0.0, %v1498
        %1500 = vmatmul.bf16.gmra.mxu0 %v757
        %v1501 = vpop.f32.mrf.mxu0
        %v1502 = vadd.f32 0.0, %v1501
        %v1503 = vpop.f32.mrf.mxu0
        %v1504 = vadd.f32 0.0, %v1503
        %1505 = vmatmul.bf16.gmra.mxu0 %v758
        %v1506 = vpop.f32.mrf.mxu0
        %v1507 = vadd.f32 0.0, %v1506
        %v1508 = vpop.f32.mrf.mxu0
        %v1509 = vadd.f32 0.0, %v1508
        %1510 = vmatmul.bf16.gmra.mxu0 %v759
        %v1511 = vpop.f32.mrf.mxu0
        %v1512 = vadd.f32 0.0, %v1511
        %v1513 = vpop.f32.mrf.mxu0
        %v1514 = vadd.f32 0.0, %v1513
        %1515 = vmatmul.bf16.gmra.mxu0 %v760
        %v1516 = vpop.f32.mrf.mxu0
        %v1517 = vadd.f32 0.0, %v1516
        %v1518 = vpop.f32.mrf.mxu0
        %v1519 = vadd.f32 0.0, %v1518
        %1520 = vmatmul.bf16.gmra.mxu0 %v761
        %v1521 = vpop.f32.mrf.mxu0
        %v1522 = vadd.f32 0.0, %v1521
        %v1523 = vpop.f32.mrf.mxu0
        %v1524 = vadd.f32 0.0, %v1523
        %1525 = vmatmul.bf16.gmra.mxu0 %v762
        %v1526 = vpop.f32.mrf.mxu0
        %v1527 = vadd.f32 0.0, %v1526
        %v1528 = vpop.f32.mrf.mxu0
        %v1529 = vadd.f32 0.0, %v1528
        %1530 = vdwg.mxu0
        %1531 = vmatpush.bf16.msra.mxu0 %v1066
        %1532 = vmatpush.bf16.msra.mxu0 %v1057
        %1533 = vmatpush.bf16.msra.mxu0 %v1048
        %1534 = vmatpush.bf16.msra.mxu0 %v1039
        %1535 = vmatpush.bf16.msra.mxu0 %v1030
        %1536 = vmatpush.bf16.msra.mxu0 %v1021
        %1537 = vmatpush.bf16.msra.mxu0 %v1012
        %1538 = vmatpush.bf16.msra.mxu0 %v1003
        %1539 = vmatmul.bf16.gmra.mxu0 %v755
        %v1540 = vpop.f32.mrf.mxu0
        %v1541 = vadd.f32 0.0, %v1540
        %v1542 = vpop.f32.mrf.mxu0
        %v1543 = vadd.f32 0.0, %v1542
        %1544 = vmatmul.bf16.gmra.mxu0 %v756
        %v1545 = vpop.f32.mrf.mxu0
        %v1546 = vadd.f32 0.0, %v1545
        %v1547 = vpop.f32.mrf.mxu0
        %v1548 = vadd.f32 0.0, %v1547
        %1549 = vmatmul.bf16.gmra.mxu0 %v757
        %v1550 = vpop.f32.mrf.mxu0
        %v1551 = vadd.f32 0.0, %v1550
        %v1552 = vpop.f32.mrf.mxu0
        %v1553 = vadd.f32 0.0, %v1552
        %1554 = vmatmul.bf16.gmra.mxu0 %v758
        %v1555 = vpop.f32.mrf.mxu0
        %v1556 = vadd.f32 0.0, %v1555
        %v1557 = vpop.f32.mrf.mxu0
        %v1558 = vadd.f32 0.0, %v1557
        %1559 = vmatmul.bf16.gmra.mxu0 %v759
        %v1560 = vpop.f32.mrf.mxu0
        %v1561 = vadd.f32 0.0, %v1560
        %v1562 = vpop.f32.mrf.mxu0
        %v1563 = vadd.f32 0.0, %v1562
        %1564 = vmatmul.bf16.gmra.mxu0 %v760
        %v1565 = vpop.f32.mrf.mxu0
        %v1566 = vadd.f32 0.0, %v1565
        %v1567 = vpop.f32.mrf.mxu0
        %v1568 = vadd.f32 0.0, %v1567
        %1569 = vmatmul.bf16.gmra.mxu0 %v761
        %v1570 = vpop.f32.mrf.mxu0
        %v1571 = vadd.f32 0.0, %v1570
        %v1572 = vpop.f32.mrf.mxu0
        %v1573 = vadd.f32 0.0, %v1572
        %1574 = vmatmul.bf16.gmra.mxu0 %v762
        %v1575 = vpop.f32.mrf.mxu0
        %v1576 = vadd.f32 0.0, %v1575
        %v1577 = vpop.f32.mrf.mxu0
        %v1578 = vadd.f32 0.0, %v1577
        %1579 = vdwg.mxu0
        %v1580 = vld [vmem:[#allocation8] sm:$0xff]
        %v1582 = vperm.slane %v1580, 0
        %v1583 = vperm.slane %v1580, 1
        %v1584 = vperm.slane %v1580, 2
        %v1585 = vperm.slane %v1580, 3
        %v1586 = vperm.slane %v1580, 4
        %v1587 = vperm.slane %v1580, 5
        %v1588 = vperm.slane %v1580, 6
        %v1589 = vperm.slane %v1580, 7
        %v1598 = vadd.f32 %v1149, %v1582
        %v1599 = vadd.f32 %v1198, %v1583
        %v1600 = vadd.f32 %v1247, %v1584
        %v1601 = vadd.f32 %v1296, %v1585
        %v1602 = vadd.f32 %v1345, %v1586
        %v1603 = vadd.f32 %v1394, %v1587
        %v1604 = vadd.f32 %v1443, %v1588
        %v1605 = vadd.f32 %v1492, %v1589
        %v1606 = vadd.f32 %v1151, %v1582
        %v1607 = vadd.f32 %v1200, %v1583
        %v1608 = vadd.f32 %v1249, %v1584
        %v1609 = vadd.f32 %v1298, %v1585
        %v1610 = vadd.f32 %v1347, %v1586
        %v1611 = vadd.f32 %v1396, %v1587
        %v1612 = vadd.f32 %v1445, %v1588
        %v1613 = vadd.f32 %v1494, %v1589
        %v1614 = vadd.f32 %v1154, %v1582
        %v1615 = vadd.f32 %v1203, %v1583
        %v1616 = vadd.f32 %v1252, %v1584
        %v1617 = vadd.f32 %v1301, %v1585
        %v1618 = vadd.f32 %v1350, %v1586
        %v1619 = vadd.f32 %v1399, %v1587
        %v1620 = vadd.f32 %v1448, %v1588
        %v1621 = vadd.f32 %v1497, %v1589
        %v1622 = vadd.f32 %v1156, %v1582
        %v1623 = vadd.f32 %v1205, %v1583
        %v1624 = vadd.f32 %v1254, %v1584
        %v1625 = vadd.f32 %v1303, %v1585
        %v1626 = vadd.f32 %v1352, %v1586
        %v1627 = vadd.f32 %v1401, %v1587
        %v1628 = vadd.f32 %v1450, %v1588
        %v1629 = vadd.f32 %v1499, %v1589
        %v1630 = vadd.f32 %v1159, %v1582
        %v1631 = vadd.f32 %v1208, %v1583
        %v1632 = vadd.f32 %v1257, %v1584
        %v1633 = vadd.f32 %v1306, %v1585
        %v1634 = vadd.f32 %v1355, %v1586
        %v1635 = vadd.f32 %v1404, %v1587
        %v1636 = vadd.f32 %v1453, %v1588
        %v1637 = vadd.f32 %v1502, %v1589
        %v1638 = vadd.f32 %v1161, %v1582
        %v1639 = vadd.f32 %v1210, %v1583
        %v1640 = vadd.f32 %v1259, %v1584
        %v1641 = vadd.f32 %v1308, %v1585
        %v1642 = vadd.f32 %v1357, %v1586
        %v1643 = vadd.f32 %v1406, %v1587
        %v1644 = vadd.f32 %v1455, %v1588
        %v1645 = vadd.f32 %v1504, %v1589
        %v1646 = vadd.f32 %v1164, %v1582
        %v1647 = vadd.f32 %v1213, %v1583
        %v1648 = vadd.f32 %v1262, %v1584
        %v1649 = vadd.f32 %v1311, %v1585
        %v1650 = vadd.f32 %v1360, %v1586
        %v1651 = vadd.f32 %v1409, %v1587
        %v1652 = vadd.f32 %v1458, %v1588
        %v1653 = vadd.f32 %v1507, %v1589
        %v1654 = vadd.f32 %v1166, %v1582
        %v1655 = vadd.f32 %v1215, %v1583
        %v1656 = vadd.f32 %v1264, %v1584
        %v1657 = vadd.f32 %v1313, %v1585
        %v1658 = vadd.f32 %v1362, %v1586
        %v1659 = vadd.f32 %v1411, %v1587
        %v1660 = vadd.f32 %v1460, %v1588
        %v1661 = vadd.f32 %v1509, %v1589
        %v1662 = vadd.f32 %v1169, %v1582
        %v1663 = vadd.f32 %v1218, %v1583
        %v1664 = vadd.f32 %v1267, %v1584
        %v1665 = vadd.f32 %v1316, %v1585
        %v1666 = vadd.f32 %v1365, %v1586
        %v1667 = vadd.f32 %v1414, %v1587
        %v1668 = vadd.f32 %v1463, %v1588
        %v1669 = vadd.f32 %v1512, %v1589
        %v1670 = vadd.f32 %v1171, %v1582
        %v1671 = vadd.f32 %v1220, %v1583
        %v1672 = vadd.f32 %v1269, %v1584
        %v1673 = vadd.f32 %v1318, %v1585
        %v1674 = vadd.f32 %v1367, %v1586
        %v1675 = vadd.f32 %v1416, %v1587
        %v1676 = vadd.f32 %v1465, %v1588
        %v1677 = vadd.f32 %v1514, %v1589
        %v1678 = vadd.f32 %v1174, %v1582
        %v1679 = vadd.f32 %v1223, %v1583
        %v1680 = vadd.f32 %v1272, %v1584
        %v1681 = vadd.f32 %v1321, %v1585
        %v1682 = vadd.f32 %v1370, %v1586
        %v1683 = vadd.f32 %v1419, %v1587
        %v1684 = vadd.f32 %v1468, %v1588
        %v1685 = vadd.f32 %v1517, %v1589
        %v1686 = vadd.f32 %v1176, %v1582
        %v1687 = vadd.f32 %v1225, %v1583
        %v1688 = vadd.f32 %v1274, %v1584
        %v1689 = vadd.f32 %v1323, %v1585
        %v1690 = vadd.f32 %v1372, %v1586
        %v1691 = vadd.f32 %v1421, %v1587
        %v1692 = vadd.f32 %v1470, %v1588
        %v1693 = vadd.f32 %v1519, %v1589
        %v1694 = vadd.f32 %v1179, %v1582
        %v1695 = vadd.f32 %v1228, %v1583
        %v1696 = vadd.f32 %v1277, %v1584
        %v1697 = vadd.f32 %v1326, %v1585
        %v1698 = vadd.f32 %v1375, %v1586
        %v1699 = vadd.f32 %v1424, %v1587
        %v1700 = vadd.f32 %v1473, %v1588
        %v1701 = vadd.f32 %v1522, %v1589
        %v1702 = vadd.f32 %v1181, %v1582
        %v1703 = vadd.f32 %v1230, %v1583
        %v1704 = vadd.f32 %v1279, %v1584
        %v1705 = vadd.f32 %v1328, %v1585
        %v1706 = vadd.f32 %v1377, %v1586
        %v1707 = vadd.f32 %v1426, %v1587
        %v1708 = vadd.f32 %v1475, %v1588
        %v1709 = vadd.f32 %v1524, %v1589
        %v1710 = vadd.f32 %v1184, %v1582
        %v1711 = vadd.f32 %v1233, %v1583
        %v1712 = vadd.f32 %v1282, %v1584
        %v1713 = vadd.f32 %v1331, %v1585
        %v1714 = vadd.f32 %v1380, %v1586
        %v1715 = vadd.f32 %v1429, %v1587
        %v1716 = vadd.f32 %v1478, %v1588
        %v1717 = vadd.f32 %v1527, %v1589
        %v1718 = vadd.f32 %v1186, %v1582
        %v1719 = vadd.f32 %v1235, %v1583
        %v1720 = vadd.f32 %v1284, %v1584
        %v1721 = vadd.f32 %v1333, %v1585
        %v1722 = vadd.f32 %v1382, %v1586
        %v1723 = vadd.f32 %v1431, %v1587
        %v1724 = vadd.f32 %v1480, %v1588
        %v1725 = vadd.f32 %v1529, %v1589
        %v1726 = vld [vmem:[#allocation10] sm:$0xff]
        %v1727 = vld [vmem:[#allocation10 + $0x8] sm:$0xff]
        %v1728 = vld [vmem:[#allocation10 + $0x10] sm:$0xff]
        %v1729 = vld [vmem:[#allocation10 + $0x18] sm:$0xff]
        %v1730 = vld [vmem:[#allocation10 + $0x20] sm:$0xff]
        %v1731 = vld [vmem:[#allocation10 + $0x28] sm:$0xff]
        %v1732 = vld [vmem:[#allocation10 + $0x30] sm:$0xff]
        %v1733 = vld [vmem:[#allocation10 + $0x38] sm:$0xff]
        %v1734 = vld [vmem:[#allocation10 + $0x40] sm:$0xff]
        %v1735 = vld [vmem:[#allocation10 + $0x48] sm:$0xff]
        %v1736 = vld [vmem:[#allocation10 + $0x50] sm:$0xff]
        %v1737 = vld [vmem:[#allocation10 + $0x58] sm:$0xff]
        %v1738 = vld [vmem:[#allocation10 + $0x60] sm:$0xff]
        %v1739 = vld [vmem:[#allocation10 + $0x68] sm:$0xff]
        %v1740 = vld [vmem:[#allocation10 + $0x70] sm:$0xff]
        %v1741 = vld [vmem:[#allocation10 + $0x78] sm:$0xff]
        %v1742 = vld [vmem:[#allocation10 + $0x80] sm:$0xff]
        %v1743 = vld [vmem:[#allocation10 + $0x88] sm:$0xff]
        %v1744 = vld [vmem:[#allocation10 + $0x90] sm:$0xff]
        %v1745 = vld [vmem:[#allocation10 + $0x98] sm:$0xff]
        %v1746 = vld [vmem:[#allocation10 + $0xa0] sm:$0xff]
        %v1747 = vld [vmem:[#allocation10 + $0xa8] sm:$0xff]
        %v1748 = vld [vmem:[#allocation10 + $0xb0] sm:$0xff]
        %v1749 = vld [vmem:[#allocation10 + $0xb8] sm:$0xff]
        %v1750 = vld [vmem:[#allocation10 + $0xc0] sm:$0xff]
        %v1751 = vld [vmem:[#allocation10 + $0xc8] sm:$0xff]
        %v1752 = vld [vmem:[#allocation10 + $0xd0] sm:$0xff]
        %v1753 = vld [vmem:[#allocation10 + $0xd8] sm:$0xff]
        %v1754 = vld [vmem:[#allocation10 + $0xe0] sm:$0xff]
        %v1755 = vld [vmem:[#allocation10 + $0xe8] sm:$0xff]
        %v1756 = vld [vmem:[#allocation10 + $0xf0] sm:$0xff]
        %v1757 = vld [vmem:[#allocation10 + $0xf8] sm:$0xff]
        %v1758 = vld [vmem:[#allocation10 + $0x100] sm:$0xff]
        %v1759 = vld [vmem:[#allocation10 + $0x108] sm:$0xff]
        %v1760 = vld [vmem:[#allocation10 + $0x110] sm:$0xff]
        %v1761 = vld [vmem:[#allocation10 + $0x118] sm:$0xff]
        %v1762 = vld [vmem:[#allocation10 + $0x120] sm:$0xff]
        %v1763 = vld [vmem:[#allocation10 + $0x128] sm:$0xff]
        %v1764 = vld [vmem:[#allocation10 + $0x130] sm:$0xff]
        %v1765 = vld [vmem:[#allocation10 + $0x138] sm:$0xff]
        %v1766 = vld [vmem:[#allocation10 + $0x140] sm:$0xff]
        %v1767 = vld [vmem:[#allocation10 + $0x148] sm:$0xff]
        %v1768 = vld [vmem:[#allocation10 + $0x150] sm:$0xff]
        %v1769 = vld [vmem:[#allocation10 + $0x158] sm:$0xff]
        %v1770 = vld [vmem:[#allocation10 + $0x160] sm:$0xff]
        %v1771 = vld [vmem:[#allocation10 + $0x168] sm:$0xff]
        %v1772 = vld [vmem:[#allocation10 + $0x170] sm:$0xff]
        %v1773 = vld [vmem:[#allocation10 + $0x178] sm:$0xff]
        %v1774 = vld [vmem:[#allocation10 + $0x180] sm:$0xff]
        %v1775 = vld [vmem:[#allocation10 + $0x188] sm:$0xff]
        %v1776 = vld [vmem:[#allocation10 + $0x190] sm:$0xff]
        %v1777 = vld [vmem:[#allocation10 + $0x198] sm:$0xff]
        %v1778 = vld [vmem:[#allocation10 + $0x1a0] sm:$0xff]
        %v1779 = vld [vmem:[#allocation10 + $0x1a8] sm:$0xff]
        %v1780 = vld [vmem:[#allocation10 + $0x1b0] sm:$0xff]
        %v1781 = vld [vmem:[#allocation10 + $0x1b8] sm:$0xff]
        %v1782 = vld [vmem:[#allocation10 + $0x1c0] sm:$0xff]
        %v1783 = vld [vmem:[#allocation10 + $0x1c8] sm:$0xff]
        %v1784 = vld [vmem:[#allocation10 + $0x1d0] sm:$0xff]
        %v1785 = vld [vmem:[#allocation10 + $0x1d8] sm:$0xff]
        %v1786 = vld [vmem:[#allocation10 + $0x1e0] sm:$0xff]
        %v1787 = vld [vmem:[#allocation10 + $0x1e8] sm:$0xff]
        %v1788 = vld [vmem:[#allocation10 + $0x1f0] sm:$0xff]
        %v1789 = vld [vmem:[#allocation10 + $0x1f8] sm:$0xff]
        %v1790 = vld [vmem:[#allocation10 + $0x200] sm:$0xff]
        %v1791 = vld [vmem:[#allocation10 + $0x208] sm:$0xff]
        %v1792 = vld [vmem:[#allocation10 + $0x210] sm:$0xff]
        %v1793 = vld [vmem:[#allocation10 + $0x218] sm:$0xff]
        %v1794 = vld [vmem:[#allocation10 + $0x220] sm:$0xff]
        %v1795 = vld [vmem:[#allocation10 + $0x228] sm:$0xff]
        %v1796 = vld [vmem:[#allocation10 + $0x230] sm:$0xff]
        %v1797 = vld [vmem:[#allocation10 + $0x238] sm:$0xff]
        %v1798 = vld [vmem:[#allocation10 + $0x240] sm:$0xff]
        %v1799 = vld [vmem:[#allocation10 + $0x248] sm:$0xff]
        %v1800 = vld [vmem:[#allocation10 + $0x250] sm:$0xff]
        %v1801 = vld [vmem:[#allocation10 + $0x258] sm:$0xff]
        %v1802 = vld [vmem:[#allocation10 + $0x260] sm:$0xff]
        %v1803 = vld [vmem:[#allocation10 + $0x268] sm:$0xff]
        %v1804 = vld [vmem:[#allocation10 + $0x270] sm:$0xff]
        %v1805 = vld [vmem:[#allocation10 + $0x278] sm:$0xff]
        %v1806 = vld [vmem:[#allocation10 + $0x280] sm:$0xff]
        %v1807 = vld [vmem:[#allocation10 + $0x288] sm:$0xff]
        %v1808 = vld [vmem:[#allocation10 + $0x290] sm:$0xff]
        %v1809 = vld [vmem:[#allocation10 + $0x298] sm:$0xff]
        %v1810 = vld [vmem:[#allocation10 + $0x2a0] sm:$0xff]
        %v1811 = vld [vmem:[#allocation10 + $0x2a8] sm:$0xff]
        %v1812 = vld [vmem:[#allocation10 + $0x2b0] sm:$0xff]
        %v1813 = vld [vmem:[#allocation10 + $0x2b8] sm:$0xff]
        %v1814 = vld [vmem:[#allocation10 + $0x2c0] sm:$0xff]
        %v1815 = vld [vmem:[#allocation10 + $0x2c8] sm:$0xff]
        %v1816 = vld [vmem:[#allocation10 + $0x2d0] sm:$0xff]
        %v1817 = vld [vmem:[#allocation10 + $0x2d8] sm:$0xff]
        %v1818 = vld [vmem:[#allocation10 + $0x2e0] sm:$0xff]
        %v1819 = vld [vmem:[#allocation10 + $0x2e8] sm:$0xff]
        %v1820 = vld [vmem:[#allocation10 + $0x2f0] sm:$0xff]
        %v1821 = vld [vmem:[#allocation10 + $0x2f8] sm:$0xff]
        %v1822 = vld [vmem:[#allocation10 + $0x300] sm:$0xff]
        %v1823 = vld [vmem:[#allocation10 + $0x308] sm:$0xff]
        %v1824 = vld [vmem:[#allocation10 + $0x310] sm:$0xff]
        %v1825 = vld [vmem:[#allocation10 + $0x318] sm:$0xff]
        %v1826 = vld [vmem:[#allocation10 + $0x320] sm:$0xff]
        %v1827 = vld [vmem:[#allocation10 + $0x328] sm:$0xff]
        %v1828 = vld [vmem:[#allocation10 + $0x330] sm:$0xff]
        %v1829 = vld [vmem:[#allocation10 + $0x338] sm:$0xff]
        %v1830 = vld [vmem:[#allocation10 + $0x340] sm:$0xff]
        %v1831 = vld [vmem:[#allocation10 + $0x348] sm:$0xff]
        %v1832 = vld [vmem:[#allocation10 + $0x350] sm:$0xff]
        %v1833 = vld [vmem:[#allocation10 + $0x358] sm:$0xff]
        %v1834 = vld [vmem:[#allocation10 + $0x360] sm:$0xff]
        %v1835 = vld [vmem:[#allocation10 + $0x368] sm:$0xff]
        %v1836 = vld [vmem:[#allocation10 + $0x370] sm:$0xff]
        %v1837 = vld [vmem:[#allocation10 + $0x378] sm:$0xff]
        %v1838 = vld [vmem:[#allocation10 + $0x380] sm:$0xff]
        %v1839 = vld [vmem:[#allocation10 + $0x388] sm:$0xff]
        %v1840 = vld [vmem:[#allocation10 + $0x390] sm:$0xff]
        %v1841 = vld [vmem:[#allocation10 + $0x398] sm:$0xff]
        %v1842 = vld [vmem:[#allocation10 + $0x3a0] sm:$0xff]
        %v1843 = vld [vmem:[#allocation10 + $0x3a8] sm:$0xff]
        %v1844 = vld [vmem:[#allocation10 + $0x3b0] sm:$0xff]
        %v1845 = vld [vmem:[#allocation10 + $0x3b8] sm:$0xff]
        %v1846 = vld [vmem:[#allocation10 + $0x3c0] sm:$0xff]
        %v1847 = vld [vmem:[#allocation10 + $0x3c8] sm:$0xff]
        %v1848 = vld [vmem:[#allocation10 + $0x3d0] sm:$0xff]
        %v1849 = vld [vmem:[#allocation10 + $0x3d8] sm:$0xff]
        %v1850 = vld [vmem:[#allocation10 + $0x3e0] sm:$0xff]
        %v1851 = vld [vmem:[#allocation10 + $0x3e8] sm:$0xff]
        %v1852 = vld [vmem:[#allocation10 + $0x3f0] sm:$0xff]
        %v1853 = vld [vmem:[#allocation10 + $0x3f8] sm:$0xff]
        %v1854 = vld [vmem:[#allocation10 + $0x400] sm:$0xff]
        %v1855 = vld [vmem:[#allocation10 + $0x408] sm:$0xff]
        %v1856 = vld [vmem:[#allocation10 + $0x410] sm:$0xff]
        %v1857 = vld [vmem:[#allocation10 + $0x418] sm:$0xff]
        %v1858 = vld [vmem:[#allocation10 + $0x420] sm:$0xff]
        %v1859 = vld [vmem:[#allocation10 + $0x428] sm:$0xff]
        %v1860 = vld [vmem:[#allocation10 + $0x430] sm:$0xff]
        %v1861 = vld [vmem:[#allocation10 + $0x438] sm:$0xff]
        %v1862 = vld [vmem:[#allocation10 + $0x440] sm:$0xff]
        %v1863 = vld [vmem:[#allocation10 + $0x448] sm:$0xff]
        %v1864 = vld [vmem:[#allocation10 + $0x450] sm:$0xff]
        %v1865 = vld [vmem:[#allocation10 + $0x458] sm:$0xff]
        %v1866 = vld [vmem:[#allocation10 + $0x460] sm:$0xff]
        %v1867 = vld [vmem:[#allocation10 + $0x468] sm:$0xff]
        %v1868 = vld [vmem:[#allocation10 + $0x470] sm:$0xff]
        %v1869 = vld [vmem:[#allocation10 + $0x478] sm:$0xff]
        %v1870 = vld [vmem:[#allocation10 + $0x480] sm:$0xff]
        %v1871 = vld [vmem:[#allocation10 + $0x488] sm:$0xff]
        %v1872 = vld [vmem:[#allocation10 + $0x490] sm:$0xff]
        %v1873 = vld [vmem:[#allocation10 + $0x498] sm:$0xff]
        %v1874 = vld [vmem:[#allocation10 + $0x4a0] sm:$0xff]
        %v1875 = vld [vmem:[#allocation10 + $0x4a8] sm:$0xff]
        %v1876 = vld [vmem:[#allocation10 + $0x4b0] sm:$0xff]
        %v1877 = vld [vmem:[#allocation10 + $0x4b8] sm:$0xff]
        %v1878 = vld [vmem:[#allocation10 + $0x4c0] sm:$0xff]
        %v1879 = vld [vmem:[#allocation10 + $0x4c8] sm:$0xff]
        %v1880 = vld [vmem:[#allocation10 + $0x4d0] sm:$0xff]
        %v1881 = vld [vmem:[#allocation10 + $0x4d8] sm:$0xff]
        %v1882 = vld [vmem:[#allocation10 + $0x4e0] sm:$0xff]
        %v1883 = vld [vmem:[#allocation10 + $0x4e8] sm:$0xff]
        %v1884 = vld [vmem:[#allocation10 + $0x4f0] sm:$0xff]
        %v1885 = vld [vmem:[#allocation10 + $0x4f8] sm:$0xff]
        %v1886 = vld [vmem:[#allocation10 + $0x500] sm:$0xff]
        %v1887 = vld [vmem:[#allocation10 + $0x508] sm:$0xff]
        %v1888 = vld [vmem:[#allocation10 + $0x510] sm:$0xff]
        %v1889 = vld [vmem:[#allocation10 + $0x518] sm:$0xff]
        %v1890 = vld [vmem:[#allocation10 + $0x520] sm:$0xff]
        %v1891 = vld [vmem:[#allocation10 + $0x528] sm:$0xff]
        %v1892 = vld [vmem:[#allocation10 + $0x530] sm:$0xff]
        %v1893 = vld [vmem:[#allocation10 + $0x538] sm:$0xff]
        %v1894 = vld [vmem:[#allocation10 + $0x540] sm:$0xff]
        %v1895 = vld [vmem:[#allocation10 + $0x548] sm:$0xff]
        %v1896 = vld [vmem:[#allocation10 + $0x550] sm:$0xff]
        %v1897 = vld [vmem:[#allocation10 + $0x558] sm:$0xff]
        %v1898 = vld [vmem:[#allocation10 + $0x560] sm:$0xff]
        %v1899 = vld [vmem:[#allocation10 + $0x568] sm:$0xff]
        %v1900 = vld [vmem:[#allocation10 + $0x570] sm:$0xff]
        %v1901 = vld [vmem:[#allocation10 + $0x578] sm:$0xff]
        %v1902 = vld [vmem:[#allocation10 + $0x580] sm:$0xff]
        %v1903 = vld [vmem:[#allocation10 + $0x588] sm:$0xff]
        %v1904 = vld [vmem:[#allocation10 + $0x590] sm:$0xff]
        %v1905 = vld [vmem:[#allocation10 + $0x598] sm:$0xff]
        %v1906 = vld [vmem:[#allocation10 + $0x5a0] sm:$0xff]
        %v1907 = vld [vmem:[#allocation10 + $0x5a8] sm:$0xff]
        %v1908 = vld [vmem:[#allocation10 + $0x5b0] sm:$0xff]
        %v1909 = vld [vmem:[#allocation10 + $0x5b8] sm:$0xff]
        %v1910 = vld [vmem:[#allocation10 + $0x5c0] sm:$0xff]
        %v1911 = vld [vmem:[#allocation10 + $0x5c8] sm:$0xff]
        %v1912 = vld [vmem:[#allocation10 + $0x5d0] sm:$0xff]
        %v1913 = vld [vmem:[#allocation10 + $0x5d8] sm:$0xff]
        %v1914 = vld [vmem:[#allocation10 + $0x5e0] sm:$0xff]
        %v1915 = vld [vmem:[#allocation10 + $0x5e8] sm:$0xff]
        %v1916 = vld [vmem:[#allocation10 + $0x5f0] sm:$0xff]
        %v1917 = vld [vmem:[#allocation10 + $0x5f8] sm:$0xff]
        %v1918 = vld [vmem:[#allocation10 + $0x600] sm:$0xff]
        %v1919 = vld [vmem:[#allocation10 + $0x608] sm:$0xff]
        %v1920 = vld [vmem:[#allocation10 + $0x610] sm:$0xff]
        %v1921 = vld [vmem:[#allocation10 + $0x618] sm:$0xff]
        %v1922 = vld [vmem:[#allocation10 + $0x620] sm:$0xff]
        %v1923 = vld [vmem:[#allocation10 + $0x628] sm:$0xff]
        %v1924 = vld [vmem:[#allocation10 + $0x630] sm:$0xff]
        %v1925 = vld [vmem:[#allocation10 + $0x638] sm:$0xff]
        %v1926 = vld [vmem:[#allocation10 + $0x640] sm:$0xff]
        %v1927 = vld [vmem:[#allocation10 + $0x648] sm:$0xff]
        %v1928 = vld [vmem:[#allocation10 + $0x650] sm:$0xff]
        %v1929 = vld [vmem:[#allocation10 + $0x658] sm:$0xff]
        %v1930 = vld [vmem:[#allocation10 + $0x660] sm:$0xff]
        %v1931 = vld [vmem:[#allocation10 + $0x668] sm:$0xff]
        %v1932 = vld [vmem:[#allocation10 + $0x670] sm:$0xff]
        %v1933 = vld [vmem:[#allocation10 + $0x678] sm:$0xff]
        %v1934 = vld [vmem:[#allocation10 + $0x680] sm:$0xff]
        %v1935 = vld [vmem:[#allocation10 + $0x688] sm:$0xff]
        %v1936 = vld [vmem:[#allocation10 + $0x690] sm:$0xff]
        %v1937 = vld [vmem:[#allocation10 + $0x698] sm:$0xff]
        %v1938 = vld [vmem:[#allocation10 + $0x6a0] sm:$0xff]
        %v1939 = vld [vmem:[#allocation10 + $0x6a8] sm:$0xff]
        %v1940 = vld [vmem:[#allocation10 + $0x6b0] sm:$0xff]
        %v1941 = vld [vmem:[#allocation10 + $0x6b8] sm:$0xff]
        %v1942 = vld [vmem:[#allocation10 + $0x6c0] sm:$0xff]
        %v1943 = vld [vmem:[#allocation10 + $0x6c8] sm:$0xff]
        %v1944 = vld [vmem:[#allocation10 + $0x6d0] sm:$0xff]
        %v1945 = vld [vmem:[#allocation10 + $0x6d8] sm:$0xff]
        %v1946 = vld [vmem:[#allocation10 + $0x6e0] sm:$0xff]
        %v1947 = vld [vmem:[#allocation10 + $0x6e8] sm:$0xff]
        %v1948 = vld [vmem:[#allocation10 + $0x6f0] sm:$0xff]
        %v1949 = vld [vmem:[#allocation10 + $0x6f8] sm:$0xff]
        %v1950 = vld [vmem:[#allocation10 + $0x700] sm:$0xff]
        %v1951 = vld [vmem:[#allocation10 + $0x708] sm:$0xff]
        %v1952 = vld [vmem:[#allocation10 + $0x710] sm:$0xff]
        %v1953 = vld [vmem:[#allocation10 + $0x718] sm:$0xff]
        %v1954 = vld [vmem:[#allocation10 + $0x720] sm:$0xff]
        %v1955 = vld [vmem:[#allocation10 + $0x728] sm:$0xff]
        %v1956 = vld [vmem:[#allocation10 + $0x730] sm:$0xff]
        %v1957 = vld [vmem:[#allocation10 + $0x738] sm:$0xff]
        %v1958 = vld [vmem:[#allocation10 + $0x740] sm:$0xff]
        %v1959 = vld [vmem:[#allocation10 + $0x748] sm:$0xff]
        %v1960 = vld [vmem:[#allocation10 + $0x750] sm:$0xff]
        %v1961 = vld [vmem:[#allocation10 + $0x758] sm:$0xff]
        %v1962 = vld [vmem:[#allocation10 + $0x760] sm:$0xff]
        %v1963 = vld [vmem:[#allocation10 + $0x768] sm:$0xff]
        %v1964 = vld [vmem:[#allocation10 + $0x770] sm:$0xff]
        %v1965 = vld [vmem:[#allocation10 + $0x778] sm:$0xff]
        %v1966 = vld [vmem:[#allocation10 + $0x780] sm:$0xff]
        %v1967 = vld [vmem:[#allocation10 + $0x788] sm:$0xff]
        %v1968 = vld [vmem:[#allocation10 + $0x790] sm:$0xff]
        %v1969 = vld [vmem:[#allocation10 + $0x798] sm:$0xff]
        %v1970 = vld [vmem:[#allocation10 + $0x7a0] sm:$0xff]
        %v1971 = vld [vmem:[#allocation10 + $0x7a8] sm:$0xff]
        %v1972 = vld [vmem:[#allocation10 + $0x7b0] sm:$0xff]
        %v1973 = vld [vmem:[#allocation10 + $0x7b8] sm:$0xff]
        %v1974 = vld [vmem:[#allocation10 + $0x7c0] sm:$0xff]
        %v1975 = vld [vmem:[#allocation10 + $0x7c8] sm:$0xff]
        %v1976 = vld [vmem:[#allocation10 + $0x7d0] sm:$0xff]
        %v1977 = vld [vmem:[#allocation10 + $0x7d8] sm:$0xff]
        %v1978 = vld [vmem:[#allocation10 + $0x7e0] sm:$0xff]
        %v1979 = vld [vmem:[#allocation10 + $0x7e8] sm:$0xff]
        %v1980 = vld [vmem:[#allocation10 + $0x7f0] sm:$0xff]
        %v1981 = vld [vmem:[#allocation10 + $0x7f8] sm:$0xff]
        %v1982 = vld [vmem:[#allocation10 + $0x800] sm:$0xff]
        %v1983 = vld [vmem:[#allocation10 + $0x808] sm:$0xff]
        %v1984 = vld [vmem:[#allocation10 + $0x810] sm:$0xff]
        %v1985 = vld [vmem:[#allocation10 + $0x818] sm:$0xff]
        %v1986 = vld [vmem:[#allocation10 + $0x820] sm:$0xff]
        %v1987 = vld [vmem:[#allocation10 + $0x828] sm:$0xff]
        %v1988 = vld [vmem:[#allocation10 + $0x830] sm:$0xff]
        %v1989 = vld [vmem:[#allocation10 + $0x838] sm:$0xff]
        %v1990 = vld [vmem:[#allocation10 + $0x840] sm:$0xff]
        %v1991 = vld [vmem:[#allocation10 + $0x848] sm:$0xff]
        %v1992 = vld [vmem:[#allocation10 + $0x850] sm:$0xff]
        %v1993 = vld [vmem:[#allocation10 + $0x858] sm:$0xff]
        %v1994 = vld [vmem:[#allocation10 + $0x860] sm:$0xff]
        %v1995 = vld [vmem:[#allocation10 + $0x868] sm:$0xff]
        %v1996 = vld [vmem:[#allocation10 + $0x870] sm:$0xff]
        %v1997 = vld [vmem:[#allocation10 + $0x878] sm:$0xff]
        %v1998 = vld [vmem:[#allocation10 + $0x880] sm:$0xff]
        %v1999 = vld [vmem:[#allocation10 + $0x888] sm:$0xff]
        %v2000 = vld [vmem:[#allocation10 + $0x890] sm:$0xff]
        %v2001 = vld [vmem:[#allocation10 + $0x898] sm:$0xff]
        %v2002 = vld [vmem:[#allocation10 + $0x8a0] sm:$0xff]
        %v2003 = vld [vmem:[#allocation10 + $0x8a8] sm:$0xff]
        %v2004 = vld [vmem:[#allocation10 + $0x8b0] sm:$0xff]
        %v2005 = vld [vmem:[#allocation10 + $0x8b8] sm:$0xff]
        %v2006 = vld [vmem:[#allocation10 + $0x8c0] sm:$0xff]
        %v2007 = vld [vmem:[#allocation10 + $0x8c8] sm:$0xff]
        %v2008 = vld [vmem:[#allocation10 + $0x8d0] sm:$0xff]
        %v2009 = vld [vmem:[#allocation10 + $0x8d8] sm:$0xff]
        %v2010 = vld [vmem:[#allocation10 + $0x8e0] sm:$0xff]
        %v2011 = vld [vmem:[#allocation10 + $0x8e8] sm:$0xff]
        %v2012 = vld [vmem:[#allocation10 + $0x8f0] sm:$0xff]
        %v2013 = vld [vmem:[#allocation10 + $0x8f8] sm:$0xff]
        %v2014 = vld [vmem:[#allocation10 + $0x900] sm:$0xff]
        %v2015 = vld [vmem:[#allocation10 + $0x908] sm:$0xff]
        %v2016 = vld [vmem:[#allocation10 + $0x910] sm:$0xff]
        %v2017 = vld [vmem:[#allocation10 + $0x918] sm:$0xff]
        %v2018 = vld [vmem:[#allocation10 + $0x920] sm:$0xff]
        %v2019 = vld [vmem:[#allocation10 + $0x928] sm:$0xff]
        %v2020 = vld [vmem:[#allocation10 + $0x930] sm:$0xff]
        %v2021 = vld [vmem:[#allocation10 + $0x938] sm:$0xff]
        %v2022 = vld [vmem:[#allocation10 + $0x940] sm:$0xff]
        %v2023 = vld [vmem:[#allocation10 + $0x948] sm:$0xff]
        %v2024 = vld [vmem:[#allocation10 + $0x950] sm:$0xff]
        %v2025 = vld [vmem:[#allocation10 + $0x958] sm:$0xff]
        %v2026 = vld [vmem:[#allocation10 + $0x960] sm:$0xff]
        %v2027 = vld [vmem:[#allocation10 + $0x968] sm:$0xff]
        %v2028 = vld [vmem:[#allocation10 + $0x970] sm:$0xff]
        %v2029 = vld [vmem:[#allocation10 + $0x978] sm:$0xff]
        %v2030 = vld [vmem:[#allocation10 + $0x980] sm:$0xff]
        %v2031 = vld [vmem:[#allocation10 + $0x988] sm:$0xff]
        %v2032 = vld [vmem:[#allocation10 + $0x990] sm:$0xff]
        %v2033 = vld [vmem:[#allocation10 + $0x998] sm:$0xff]
        %v2034 = vld [vmem:[#allocation10 + $0x9a0] sm:$0xff]
        %v2035 = vld [vmem:[#allocation10 + $0x9a8] sm:$0xff]
        %v2036 = vld [vmem:[#allocation10 + $0x9b0] sm:$0xff]
        %v2037 = vld [vmem:[#allocation10 + $0x9b8] sm:$0xff]
        %v2038 = vld [vmem:[#allocation10 + $0x9c0] sm:$0xff]
        %v2039 = vld [vmem:[#allocation10 + $0x9c8] sm:$0xff]
        %v2040 = vld [vmem:[#allocation10 + $0x9d0] sm:$0xff]
        %v2041 = vld [vmem:[#allocation10 + $0x9d8] sm:$0xff]
        %v2042 = vld [vmem:[#allocation10 + $0x9e0] sm:$0xff]
        %v2043 = vld [vmem:[#allocation10 + $0x9e8] sm:$0xff]
        %v2044 = vld [vmem:[#allocation10 + $0x9f0] sm:$0xff]
        %v2045 = vld [vmem:[#allocation10 + $0x9f8] sm:$0xff]
        %v2046 = vld [vmem:[#allocation10 + $0xa00] sm:$0xff]
        %v2047 = vld [vmem:[#allocation10 + $0xa08] sm:$0xff]
        %v2048 = vld [vmem:[#allocation10 + $0xa10] sm:$0xff]
        %v2049 = vld [vmem:[#allocation10 + $0xa18] sm:$0xff]
        %v2050 = vld [vmem:[#allocation10 + $0xa20] sm:$0xff]
        %v2051 = vld [vmem:[#allocation10 + $0xa28] sm:$0xff]
        %v2052 = vld [vmem:[#allocation10 + $0xa30] sm:$0xff]
        %v2053 = vld [vmem:[#allocation10 + $0xa38] sm:$0xff]
        %v2054 = vld [vmem:[#allocation10 + $0xa40] sm:$0xff]
        %v2055 = vld [vmem:[#allocation10 + $0xa48] sm:$0xff]
        %v2056 = vld [vmem:[#allocation10 + $0xa50] sm:$0xff]
        %v2057 = vld [vmem:[#allocation10 + $0xa58] sm:$0xff]
        %v2058 = vld [vmem:[#allocation10 + $0xa60] sm:$0xff]
        %v2059 = vld [vmem:[#allocation10 + $0xa68] sm:$0xff]
        %v2060 = vld [vmem:[#allocation10 + $0xa70] sm:$0xff]
        %v2061 = vld [vmem:[#allocation10 + $0xa78] sm:$0xff]
        %v2062 = vld [vmem:[#allocation10 + $0xa80] sm:$0xff]
        %v2063 = vld [vmem:[#allocation10 + $0xa88] sm:$0xff]
        %v2064 = vld [vmem:[#allocation10 + $0xa90] sm:$0xff]
        %v2065 = vld [vmem:[#allocation10 + $0xa98] sm:$0xff]
        %v2066 = vld [vmem:[#allocation10 + $0xaa0] sm:$0xff]
        %v2067 = vld [vmem:[#allocation10 + $0xaa8] sm:$0xff]
        %v2068 = vld [vmem:[#allocation10 + $0xab0] sm:$0xff]
        %v2069 = vld [vmem:[#allocation10 + $0xab8] sm:$0xff]
        %v2070 = vld [vmem:[#allocation10 + $0xac0] sm:$0xff]
        %v2071 = vld [vmem:[#allocation10 + $0xac8] sm:$0xff]
        %v2072 = vld [vmem:[#allocation10 + $0xad0] sm:$0xff]
        %v2073 = vld [vmem:[#allocation10 + $0xad8] sm:$0xff]
        %v2074 = vld [vmem:[#allocation10 + $0xae0] sm:$0xff]
        %v2075 = vld [vmem:[#allocation10 + $0xae8] sm:$0xff]
        %v2076 = vld [vmem:[#allocation10 + $0xaf0] sm:$0xff]
        %v2077 = vld [vmem:[#allocation10 + $0xaf8] sm:$0xff]
        %v2078 = vld [vmem:[#allocation10 + $0xb00] sm:$0xff]
        %v2079 = vld [vmem:[#allocation10 + $0xb08] sm:$0xff]
        %v2080 = vld [vmem:[#allocation10 + $0xb10] sm:$0xff]
        %v2081 = vld [vmem:[#allocation10 + $0xb18] sm:$0xff]
        %v2082 = vld [vmem:[#allocation10 + $0xb20] sm:$0xff]
        %v2083 = vld [vmem:[#allocation10 + $0xb28] sm:$0xff]
        %v2084 = vld [vmem:[#allocation10 + $0xb30] sm:$0xff]
        %v2085 = vld [vmem:[#allocation10 + $0xb38] sm:$0xff]
        %v2086 = vld [vmem:[#allocation10 + $0xb40] sm:$0xff]
        %v2087 = vld [vmem:[#allocation10 + $0xb48] sm:$0xff]
        %v2088 = vld [vmem:[#allocation10 + $0xb50] sm:$0xff]
        %v2089 = vld [vmem:[#allocation10 + $0xb58] sm:$0xff]
        %v2090 = vld [vmem:[#allocation10 + $0xb60] sm:$0xff]
        %v2091 = vld [vmem:[#allocation10 + $0xb68] sm:$0xff]
        %v2092 = vld [vmem:[#allocation10 + $0xb70] sm:$0xff]
        %v2093 = vld [vmem:[#allocation10 + $0xb78] sm:$0xff]
        %v2094 = vld [vmem:[#allocation10 + $0xb80] sm:$0xff]
        %v2095 = vld [vmem:[#allocation10 + $0xb88] sm:$0xff]
        %v2096 = vld [vmem:[#allocation10 + $0xb90] sm:$0xff]
        %v2097 = vld [vmem:[#allocation10 + $0xb98] sm:$0xff]
        %v2098 = vld [vmem:[#allocation10 + $0xba0] sm:$0xff]
        %v2099 = vld [vmem:[#allocation10 + $0xba8] sm:$0xff]
        %v2100 = vld [vmem:[#allocation10 + $0xbb0] sm:$0xff]
        %v2101 = vld [vmem:[#allocation10 + $0xbb8] sm:$0xff]
        %v2102 = vld [vmem:[#allocation10 + $0xbc0] sm:$0xff]
        %v2103 = vld [vmem:[#allocation10 + $0xbc8] sm:$0xff]
        %v2104 = vld [vmem:[#allocation10 + $0xbd0] sm:$0xff]
        %v2105 = vld [vmem:[#allocation10 + $0xbd8] sm:$0xff]
        %v2106 = vld [vmem:[#allocation10 + $0xbe0] sm:$0xff]
        %v2107 = vld [vmem:[#allocation10 + $0xbe8] sm:$0xff]
        %v2108 = vld [vmem:[#allocation10 + $0xbf0] sm:$0xff]
        %v2109 = vld [vmem:[#allocation10 + $0xbf8] sm:$0xff]
        %v2110 = vld [vmem:[#allocation10 + $0xc00] sm:$0xff]
        %v2111 = vld [vmem:[#allocation10 + $0xc08] sm:$0xff]
        %v2112 = vld [vmem:[#allocation10 + $0xc10] sm:$0xff]
        %v2113 = vld [vmem:[#allocation10 + $0xc18] sm:$0xff]
        %v2114 = vld [vmem:[#allocation10 + $0xc20] sm:$0xff]
        %v2115 = vld [vmem:[#allocation10 + $0xc28] sm:$0xff]
        %v2116 = vld [vmem:[#allocation10 + $0xc30] sm:$0xff]
        %v2117 = vld [vmem:[#allocation10 + $0xc38] sm:$0xff]
        %v2118 = vld [vmem:[#allocation10 + $0xc40] sm:$0xff]
        %v2119 = vld [vmem:[#allocation10 + $0xc48] sm:$0xff]
        %v2120 = vld [vmem:[#allocation10 + $0xc50] sm:$0xff]
        %v2121 = vld [vmem:[#allocation10 + $0xc58] sm:$0xff]
        %v2122 = vld [vmem:[#allocation10 + $0xc60] sm:$0xff]
        %v2123 = vld [vmem:[#allocation10 + $0xc68] sm:$0xff]
        %v2124 = vld [vmem:[#allocation10 + $0xc70] sm:$0xff]
        %v2125 = vld [vmem:[#allocation10 + $0xc78] sm:$0xff]
        %v2126 = vld [vmem:[#allocation10 + $0xc80] sm:$0xff]
        %v2127 = vld [vmem:[#allocation10 + $0xc88] sm:$0xff]
        %v2128 = vld [vmem:[#allocation10 + $0xc90] sm:$0xff]
        %v2129 = vld [vmem:[#allocation10 + $0xc98] sm:$0xff]
        %v2130 = vld [vmem:[#allocation10 + $0xca0] sm:$0xff]
        %v2131 = vld [vmem:[#allocation10 + $0xca8] sm:$0xff]
        %v2132 = vld [vmem:[#allocation10 + $0xcb0] sm:$0xff]
        %v2133 = vld [vmem:[#allocation10 + $0xcb8] sm:$0xff]
        %v2134 = vld [vmem:[#allocation10 + $0xcc0] sm:$0xff]
        %v2135 = vld [vmem:[#allocation10 + $0xcc8] sm:$0xff]
        %v2136 = vld [vmem:[#allocation10 + $0xcd0] sm:$0xff]
        %v2137 = vld [vmem:[#allocation10 + $0xcd8] sm:$0xff]
        %v2138 = vld [vmem:[#allocation10 + $0xce0] sm:$0xff]
        %v2139 = vld [vmem:[#allocation10 + $0xce8] sm:$0xff]
        %v2140 = vld [vmem:[#allocation10 + $0xcf0] sm:$0xff]
        %v2141 = vld [vmem:[#allocation10 + $0xcf8] sm:$0xff]
        %v2142 = vld [vmem:[#allocation10 + $0xd00] sm:$0xff]
        %v2143 = vld [vmem:[#allocation10 + $0xd08] sm:$0xff]
        %v2144 = vld [vmem:[#allocation10 + $0xd10] sm:$0xff]
        %v2145 = vld [vmem:[#allocation10 + $0xd18] sm:$0xff]
        %v2146 = vld [vmem:[#allocation10 + $0xd20] sm:$0xff]
        %v2147 = vld [vmem:[#allocation10 + $0xd28] sm:$0xff]
        %v2148 = vld [vmem:[#allocation10 + $0xd30] sm:$0xff]
        %v2149 = vld [vmem:[#allocation10 + $0xd38] sm:$0xff]
        %v2150 = vld [vmem:[#allocation10 + $0xd40] sm:$0xff]
        %v2151 = vld [vmem:[#allocation10 + $0xd48] sm:$0xff]
        %v2152 = vld [vmem:[#allocation10 + $0xd50] sm:$0xff]
        %v2153 = vld [vmem:[#allocation10 + $0xd58] sm:$0xff]
        %v2154 = vld [vmem:[#allocation10 + $0xd60] sm:$0xff]
        %v2155 = vld [vmem:[#allocation10 + $0xd68] sm:$0xff]
        %v2156 = vld [vmem:[#allocation10 + $0xd70] sm:$0xff]
        %v2157 = vld [vmem:[#allocation10 + $0xd78] sm:$0xff]
        %v2158 = vld [vmem:[#allocation10 + $0xd80] sm:$0xff]
        %v2159 = vld [vmem:[#allocation10 + $0xd88] sm:$0xff]
        %v2160 = vld [vmem:[#allocation10 + $0xd90] sm:$0xff]
        %v2161 = vld [vmem:[#allocation10 + $0xd98] sm:$0xff]
        %v2162 = vld [vmem:[#allocation10 + $0xda0] sm:$0xff]
        %v2163 = vld [vmem:[#allocation10 + $0xda8] sm:$0xff]
        %v2164 = vld [vmem:[#allocation10 + $0xdb0] sm:$0xff]
        %v2165 = vld [vmem:[#allocation10 + $0xdb8] sm:$0xff]
        %v2166 = vld [vmem:[#allocation10 + $0xdc0] sm:$0xff]
        %v2167 = vld [vmem:[#allocation10 + $0xdc8] sm:$0xff]
        %v2168 = vld [vmem:[#allocation10 + $0xdd0] sm:$0xff]
        %v2169 = vld [vmem:[#allocation10 + $0xdd8] sm:$0xff]
        %v2170 = vld [vmem:[#allocation10 + $0xde0] sm:$0xff]
        %v2171 = vld [vmem:[#allocation10 + $0xde8] sm:$0xff]
        %v2172 = vld [vmem:[#allocation10 + $0xdf0] sm:$0xff]
        %v2173 = vld [vmem:[#allocation10 + $0xdf8] sm:$0xff]
        %v2174 = vld [vmem:[#allocation10 + $0xe00] sm:$0xff]
        %v2175 = vld [vmem:[#allocation10 + $0xe08] sm:$0xff]
        %v2176 = vld [vmem:[#allocation10 + $0xe10] sm:$0xff]
        %v2177 = vld [vmem:[#allocation10 + $0xe18] sm:$0xff]
        %v2178 = vld [vmem:[#allocation10 + $0xe20] sm:$0xff]
        %v2179 = vld [vmem:[#allocation10 + $0xe28] sm:$0xff]
        %v2180 = vld [vmem:[#allocation10 + $0xe30] sm:$0xff]
        %v2181 = vld [vmem:[#allocation10 + $0xe38] sm:$0xff]
        %v2182 = vld [vmem:[#allocation10 + $0xe40] sm:$0xff]
        %v2183 = vld [vmem:[#allocation10 + $0xe48] sm:$0xff]
        %v2184 = vld [vmem:[#allocation10 + $0xe50] sm:$0xff]
        %v2185 = vld [vmem:[#allocation10 + $0xe58] sm:$0xff]
        %v2186 = vld [vmem:[#allocation10 + $0xe60] sm:$0xff]
        %v2187 = vld [vmem:[#allocation10 + $0xe68] sm:$0xff]
        %v2188 = vld [vmem:[#allocation10 + $0xe70] sm:$0xff]
        %v2189 = vld [vmem:[#allocation10 + $0xe78] sm:$0xff]
        %v2190 = vld [vmem:[#allocation10 + $0xe80] sm:$0xff]
        %v2191 = vld [vmem:[#allocation10 + $0xe88] sm:$0xff]
        %v2192 = vld [vmem:[#allocation10 + $0xe90] sm:$0xff]
        %v2193 = vld [vmem:[#allocation10 + $0xe98] sm:$0xff]
        %v2194 = vld [vmem:[#allocation10 + $0xea0] sm:$0xff]
        %v2195 = vld [vmem:[#allocation10 + $0xea8] sm:$0xff]
        %v2196 = vld [vmem:[#allocation10 + $0xeb0] sm:$0xff]
        %v2197 = vld [vmem:[#allocation10 + $0xeb8] sm:$0xff]
        %v2198 = vld [vmem:[#allocation10 + $0xec0] sm:$0xff]
        %v2199 = vld [vmem:[#allocation10 + $0xec8] sm:$0xff]
        %v2200 = vld [vmem:[#allocation10 + $0xed0] sm:$0xff]
        %v2201 = vld [vmem:[#allocation10 + $0xed8] sm:$0xff]
        %v2202 = vld [vmem:[#allocation10 + $0xee0] sm:$0xff]
        %v2203 = vld [vmem:[#allocation10 + $0xee8] sm:$0xff]
        %v2204 = vld [vmem:[#allocation10 + $0xef0] sm:$0xff]
        %v2205 = vld [vmem:[#allocation10 + $0xef8] sm:$0xff]
        %v2206 = vld [vmem:[#allocation10 + $0xf00] sm:$0xff]
        %v2207 = vld [vmem:[#allocation10 + $0xf08] sm:$0xff]
        %v2208 = vld [vmem:[#allocation10 + $0xf10] sm:$0xff]
        %v2209 = vld [vmem:[#allocation10 + $0xf18] sm:$0xff]
        %v2210 = vld [vmem:[#allocation10 + $0xf20] sm:$0xff]
        %v2211 = vld [vmem:[#allocation10 + $0xf28] sm:$0xff]
        %v2212 = vld [vmem:[#allocation10 + $0xf30] sm:$0xff]
        %v2213 = vld [vmem:[#allocation10 + $0xf38] sm:$0xff]
        %v2214 = vld [vmem:[#allocation10 + $0xf40] sm:$0xff]
        %v2215 = vld [vmem:[#allocation10 + $0xf48] sm:$0xff]
        %v2216 = vld [vmem:[#allocation10 + $0xf50] sm:$0xff]
        %v2217 = vld [vmem:[#allocation10 + $0xf58] sm:$0xff]
        %v2218 = vld [vmem:[#allocation10 + $0xf60] sm:$0xff]
        %v2219 = vld [vmem:[#allocation10 + $0xf68] sm:$0xff]
        %v2220 = vld [vmem:[#allocation10 + $0xf70] sm:$0xff]
        %v2221 = vld [vmem:[#allocation10 + $0xf78] sm:$0xff]
        %v2222 = vld [vmem:[#allocation10 + $0xf80] sm:$0xff]
        %v2223 = vld [vmem:[#allocation10 + $0xf88] sm:$0xff]
        %v2224 = vld [vmem:[#allocation10 + $0xf90] sm:$0xff]
        %v2225 = vld [vmem:[#allocation10 + $0xf98] sm:$0xff]
        %v2226 = vld [vmem:[#allocation10 + $0xfa0] sm:$0xff]
        %v2227 = vld [vmem:[#allocation10 + $0xfa8] sm:$0xff]
        %v2228 = vld [vmem:[#allocation10 + $0xfb0] sm:$0xff]
        %v2229 = vld [vmem:[#allocation10 + $0xfb8] sm:$0xff]
        %v2230 = vld [vmem:[#allocation10 + $0xfc0] sm:$0xff]
        %v2231 = vld [vmem:[#allocation10 + $0xfc8] sm:$0xff]
        %v2232 = vld [vmem:[#allocation10 + $0xfd0] sm:$0xff]
        %v2233 = vld [vmem:[#allocation10 + $0xfd8] sm:$0xff]
        %v2234 = vld [vmem:[#allocation10 + $0xfe0] sm:$0xff]
        %v2235 = vld [vmem:[#allocation10 + $0xfe8] sm:$0xff]
        %v2236 = vld [vmem:[#allocation10 + $0xff0] sm:$0xff]
        %v2237 = vld [vmem:[#allocation10 + $0xff8] sm:$0xff]
        %v2238 = vld [vmem:[#allocation11] sm:$0xff]
        %v2239 = vld [vmem:[#allocation11 + $0x8] sm:$0xff]
        %v2242 = vperm.slane %v2238, 0
        %v2243 = vperm.slane %v2238, 1
        %v2244 = vperm.slane %v2238, 2
        %v2245 = vperm.slane %v2238, 3
        %v2246 = vperm.slane %v2238, 4
        %v2247 = vperm.slane %v2238, 5
        %v2248 = vperm.slane %v2238, 6
        %v2249 = vperm.slane %v2238, 7
        %v2250 = vperm.slane %v2239, 0
        %v2251 = vperm.slane %v2239, 1
        %v2252 = vperm.slane %v2239, 2
        %v2253 = vperm.slane %v2239, 3
        %v2254 = vperm.slane %v2239, 4
        %v2255 = vperm.slane %v2239, 5
        %v2256 = vperm.slane %v2239, 6
        %v2257 = vperm.slane %v2239, 7
        %v2306 = vunpack.c.l.b16 %v611
        %v2307 = vunpack.c.h.b16 %v611
        %v2308 = vunpack.c.l.b16 %v612
        %v2309 = vunpack.c.h.b16 %v612
        %v2310 = vunpack.c.l.b16 %v613
        %v2311 = vunpack.c.h.b16 %v613
        %v2312 = vunpack.c.l.b16 %v614
        %v2313 = vunpack.c.h.b16 %v614
        %v2314 = vunpack.c.l.b16 %v615
        %v2315 = vunpack.c.h.b16 %v615
        %v2316 = vunpack.c.l.b16 %v616
        %v2317 = vunpack.c.h.b16 %v616
        %v2318 = vunpack.c.l.b16 %v617
        %v2319 = vunpack.c.h.b16 %v617
        %v2320 = vunpack.c.l.b16 %v618
        %v2321 = vunpack.c.h.b16 %v618
        %v2322 = vunpack.c.l.b16 %v619
        %v2323 = vunpack.c.h.b16 %v619
        %v2324 = vunpack.c.l.b16 %v620
        %v2325 = vunpack.c.h.b16 %v620
        %v2326 = vunpack.c.l.b16 %v621
        %v2327 = vunpack.c.h.b16 %v621
        %v2328 = vunpack.c.l.b16 %v622
        %v2329 = vunpack.c.h.b16 %v622
        %v2330 = vunpack.c.l.b16 %v623
        %v2331 = vunpack.c.h.b16 %v623
        %v2332 = vunpack.c.l.b16 %v624
        %v2333 = vunpack.c.h.b16 %v624
        %v2334 = vunpack.c.l.b16 %v625
        %v2335 = vunpack.c.h.b16 %v625
        %v2336 = vunpack.c.l.b16 %v626
        %v2337 = vunpack.c.h.b16 %v626
        %v2338 = vunpack.c.l.b16 %v627
        %v2339 = vunpack.c.h.b16 %v627
        %v2340 = vunpack.c.l.b16 %v628
        %v2341 = vunpack.c.h.b16 %v628
        %v2342 = vunpack.c.l.b16 %v629
        %v2343 = vunpack.c.h.b16 %v629
        %v2344 = vunpack.c.l.b16 %v630
        %v2345 = vunpack.c.h.b16 %v630
        %v2346 = vunpack.c.l.b16 %v631
        %v2347 = vunpack.c.h.b16 %v631
        %v2348 = vunpack.c.l.b16 %v632
        %v2349 = vunpack.c.h.b16 %v632
        %v2350 = vunpack.c.l.b16 %v633
        %v2351 = vunpack.c.h.b16 %v633
        %v2352 = vunpack.c.l.b16 %v634
        %v2353 = vunpack.c.h.b16 %v634
        %v2354 = vunpack.c.l.b16 %v635
        %v2355 = vunpack.c.h.b16 %v635
        %v2356 = vunpack.c.l.b16 %v636
        %v2357 = vunpack.c.h.b16 %v636
        %v2358 = vunpack.c.l.b16 %v637
        %v2359 = vunpack.c.h.b16 %v637
        %v2360 = vunpack.c.l.b16 %v638
        %v2361 = vunpack.c.h.b16 %v638
        %v2362 = vunpack.c.l.b16 %v639
        %v2363 = vunpack.c.h.b16 %v639
        %v2364 = vunpack.c.l.b16 %v640
        %v2365 = vunpack.c.h.b16 %v640
        %v2366 = vunpack.c.l.b16 %v641
        %v2367 = vunpack.c.h.b16 %v641
        %v2368 = vunpack.c.l.b16 %v642
        %v2369 = vunpack.c.h.b16 %v642
        %v2370 = vpack.c.b16 %v2310, %v2306
        %v2371 = vpack.c.b16 %v2311, %v2307
        %v2372 = vpack.c.b16 %v2312, %v2308
        %v2373 = vpack.c.b16 %v2313, %v2309
        %v2374 = vpack.c.b16 %v2318, %v2314
        %v2375 = vpack.c.b16 %v2319, %v2315
        %v2376 = vpack.c.b16 %v2320, %v2316
        %v2377 = vpack.c.b16 %v2321, %v2317
        %v2378 = vpack.c.b16 %v2326, %v2322
        %v2379 = vpack.c.b16 %v2327, %v2323
        %v2380 = vpack.c.b16 %v2328, %v2324
        %v2381 = vpack.c.b16 %v2329, %v2325
        %v2382 = vpack.c.b16 %v2334, %v2330
        %v2383 = vpack.c.b16 %v2335, %v2331
        %v2384 = vpack.c.b16 %v2336, %v2332
        %v2385 = vpack.c.b16 %v2337, %v2333
        %v2386 = vpack.c.b16 %v2342, %v2338
        %v2387 = vpack.c.b16 %v2343, %v2339
        %v2388 = vpack.c.b16 %v2344, %v2340
        %v2389 = vpack.c.b16 %v2345, %v2341
        %v2390 = vpack.c.b16 %v2350, %v2346
        %v2391 = vpack.c.b16 %v2351, %v2347
        %v2392 = vpack.c.b16 %v2352, %v2348
        %v2393 = vpack.c.b16 %v2353, %v2349
        %v2394 = vpack.c.b16 %v2358, %v2354
        %v2395 = vpack.c.b16 %v2359, %v2355
        %v2396 = vpack.c.b16 %v2360, %v2356
        %v2397 = vpack.c.b16 %v2361, %v2357
        %v2398 = vpack.c.b16 %v2366, %v2362
        %v2399 = vpack.c.b16 %v2367, %v2363
        %v2400 = vpack.c.b16 %v2368, %v2364
        %v2401 = vpack.c.b16 %v2369, %v2365
        %v2946 = vunpack.c.l.b16 %v1726
        %v2947 = vunpack.c.h.b16 %v1726
        %v2948 = vunpack.c.l.b16 %v1727
        %v2949 = vunpack.c.h.b16 %v1727
        %v2950 = vunpack.c.l.b16 %v1728
        %v2951 = vunpack.c.h.b16 %v1728
        %v2952 = vunpack.c.l.b16 %v1729
        %v2953 = vunpack.c.h.b16 %v1729
        %v2954 = vunpack.c.l.b16 %v1730
        %v2955 = vunpack.c.h.b16 %v1730
        %v2956 = vunpack.c.l.b16 %v1731
        %v2957 = vunpack.c.h.b16 %v1731
        %v2958 = vunpack.c.l.b16 %v1732
        %v2959 = vunpack.c.h.b16 %v1732
        %v2960 = vunpack.c.l.b16 %v1733
        %v2961 = vunpack.c.h.b16 %v1733
        %v2962 = vunpack.c.l.b16 %v1734
        %v2963 = vunpack.c.h.b16 %v1734
        %v2964 = vunpack.c.l.b16 %v1735
        %v2965 = vunpack.c.h.b16 %v1735
        %v2966 = vunpack.c.l.b16 %v1736
        %v2967 = vunpack.c.h.b16 %v1736
        %v2968 = vunpack.c.l.b16 %v1737
        %v2969 = vunpack.c.h.b16 %v1737
        %v2970 = vunpack.c.l.b16 %v1738
        %v2971 = vunpack.c.h.b16 %v1738
        %v2972 = vunpack.c.l.b16 %v1739
        %v2973 = vunpack.c.h.b16 %v1739
        %v2974 = vunpack.c.l.b16 %v1740
        %v2975 = vunpack.c.h.b16 %v1740
        %v2976 = vunpack.c.l.b16 %v1741
        %v2977 = vunpack.c.h.b16 %v1741
        %v2978 = vunpack.c.l.b16 %v1742
        %v2979 = vunpack.c.h.b16 %v1742
        %v2980 = vunpack.c.l.b16 %v1743
        %v2981 = vunpack.c.h.b16 %v1743
        %v2982 = vunpack.c.l.b16 %v1744
        %v2983 = vunpack.c.h.b16 %v1744
        %v2984 = vunpack.c.l.b16 %v1745
        %v2985 = vunpack.c.h.b16 %v1745
        %v2986 = vunpack.c.l.b16 %v1746
        %v2987 = vunpack.c.h.b16 %v1746
        %v2988 = vunpack.c.l.b16 %v1747
        %v2989 = vunpack.c.h.b16 %v1747
        %v2990 = vunpack.c.l.b16 %v1748
        %v2991 = vunpack.c.h.b16 %v1748
        %v2992 = vunpack.c.l.b16 %v1749
        %v2993 = vunpack.c.h.b16 %v1749
        %v2994 = vunpack.c.l.b16 %v1750
        %v2995 = vunpack.c.h.b16 %v1750
        %v2996 = vunpack.c.l.b16 %v1751
        %v2997 = vunpack.c.h.b16 %v1751
        %v2998 = vunpack.c.l.b16 %v1752
        %v2999 = vunpack.c.h.b16 %v1752
        %v3000 = vunpack.c.l.b16 %v1753
        %v3001 = vunpack.c.h.b16 %v1753
        %v3002 = vunpack.c.l.b16 %v1754
        %v3003 = vunpack.c.h.b16 %v1754
        %v3004 = vunpack.c.l.b16 %v1755
        %v3005 = vunpack.c.h.b16 %v1755
        %v3006 = vunpack.c.l.b16 %v1756
        %v3007 = vunpack.c.h.b16 %v1756
        %v3008 = vunpack.c.l.b16 %v1757
        %v3009 = vunpack.c.h.b16 %v1757
        %v3010 = vunpack.c.l.b16 %v1758
        %v3011 = vunpack.c.h.b16 %v1758
        %v3012 = vunpack.c.l.b16 %v1759
        %v3013 = vunpack.c.h.b16 %v1759
        %v3014 = vunpack.c.l.b16 %v1760
        %v3015 = vunpack.c.h.b16 %v1760
        %v3016 = vunpack.c.l.b16 %v1761
        %v3017 = vunpack.c.h.b16 %v1761
        %v3018 = vunpack.c.l.b16 %v1762
        %v3019 = vunpack.c.h.b16 %v1762
        %v3020 = vunpack.c.l.b16 %v1763
        %v3021 = vunpack.c.h.b16 %v1763
        %v3022 = vunpack.c.l.b16 %v1764
        %v3023 = vunpack.c.h.b16 %v1764
        %v3024 = vunpack.c.l.b16 %v1765
        %v3025 = vunpack.c.h.b16 %v1765
        %v3026 = vunpack.c.l.b16 %v1766
        %v3027 = vunpack.c.h.b16 %v1766
        %v3028 = vunpack.c.l.b16 %v1767
        %v3029 = vunpack.c.h.b16 %v1767
        %v3030 = vunpack.c.l.b16 %v1768
        %v3031 = vunpack.c.h.b16 %v1768
        %v3032 = vunpack.c.l.b16 %v1769
        %v3033 = vunpack.c.h.b16 %v1769
        %v3034 = vunpack.c.l.b16 %v1770
        %v3035 = vunpack.c.h.b16 %v1770
        %v3036 = vunpack.c.l.b16 %v1771
        %v3037 = vunpack.c.h.b16 %v1771
        %v3038 = vunpack.c.l.b16 %v1772
        %v3039 = vunpack.c.h.b16 %v1772
        %v3040 = vunpack.c.l.b16 %v1773
        %v3041 = vunpack.c.h.b16 %v1773
        %v3042 = vunpack.c.l.b16 %v1774
        %v3043 = vunpack.c.h.b16 %v1774
        %v3044 = vunpack.c.l.b16 %v1775
        %v3045 = vunpack.c.h.b16 %v1775
        %v3046 = vunpack.c.l.b16 %v1776
        %v3047 = vunpack.c.h.b16 %v1776
        %v3048 = vunpack.c.l.b16 %v1777
        %v3049 = vunpack.c.h.b16 %v1777
        %v3050 = vunpack.c.l.b16 %v1778
        %v3051 = vunpack.c.h.b16 %v1778
        %v3052 = vunpack.c.l.b16 %v1779
        %v3053 = vunpack.c.h.b16 %v1779
        %v3054 = vunpack.c.l.b16 %v1780
        %v3055 = vunpack.c.h.b16 %v1780
        %v3056 = vunpack.c.l.b16 %v1781
        %v3057 = vunpack.c.h.b16 %v1781
        %v3058 = vunpack.c.l.b16 %v1782
        %v3059 = vunpack.c.h.b16 %v1782
        %v3060 = vunpack.c.l.b16 %v1783
        %v3061 = vunpack.c.h.b16 %v1783
        %v3062 = vunpack.c.l.b16 %v1784
        %v3063 = vunpack.c.h.b16 %v1784
        %v3064 = vunpack.c.l.b16 %v1785
        %v3065 = vunpack.c.h.b16 %v1785
        %v3066 = vunpack.c.l.b16 %v1786
        %v3067 = vunpack.c.h.b16 %v1786
        %v3068 = vunpack.c.l.b16 %v1787
        %v3069 = vunpack.c.h.b16 %v1787
        %v3070 = vunpack.c.l.b16 %v1788
        %v3071 = vunpack.c.h.b16 %v1788
        %v3072 = vunpack.c.l.b16 %v1789
        %v3073 = vunpack.c.h.b16 %v1789
        %v3074 = vunpack.c.l.b16 %v1790
        %v3075 = vunpack.c.h.b16 %v1790
        %v3076 = vunpack.c.l.b16 %v1791
        %v3077 = vunpack.c.h.b16 %v1791
        %v3078 = vunpack.c.l.b16 %v1792
        %v3079 = vunpack.c.h.b16 %v1792
        %v3080 = vunpack.c.l.b16 %v1793
        %v3081 = vunpack.c.h.b16 %v1793
        %v3082 = vunpack.c.l.b16 %v1794
        %v3083 = vunpack.c.h.b16 %v1794
        %v3084 = vunpack.c.l.b16 %v1795
        %v3085 = vunpack.c.h.b16 %v1795
        %v3086 = vunpack.c.l.b16 %v1796
        %v3087 = vunpack.c.h.b16 %v1796
        %v3088 = vunpack.c.l.b16 %v1797
        %v3089 = vunpack.c.h.b16 %v1797
        %v3090 = vunpack.c.l.b16 %v1798
        %v3091 = vunpack.c.h.b16 %v1798
        %v3092 = vunpack.c.l.b16 %v1799
        %v3093 = vunpack.c.h.b16 %v1799
        %v3094 = vunpack.c.l.b16 %v1800
        %v3095 = vunpack.c.h.b16 %v1800
        %v3096 = vunpack.c.l.b16 %v1801
        %v3097 = vunpack.c.h.b16 %v1801
        %v3098 = vunpack.c.l.b16 %v1802
        %v3099 = vunpack.c.h.b16 %v1802
        %v3100 = vunpack.c.l.b16 %v1803
        %v3101 = vunpack.c.h.b16 %v1803
        %v3102 = vunpack.c.l.b16 %v1804
        %v3103 = vunpack.c.h.b16 %v1804
        %v3104 = vunpack.c.l.b16 %v1805
        %v3105 = vunpack.c.h.b16 %v1805
        %v3106 = vunpack.c.l.b16 %v1806
        %v3107 = vunpack.c.h.b16 %v1806
        %v3108 = vunpack.c.l.b16 %v1807
        %v3109 = vunpack.c.h.b16 %v1807
        %v3110 = vunpack.c.l.b16 %v1808
        %v3111 = vunpack.c.h.b16 %v1808
        %v3112 = vunpack.c.l.b16 %v1809
        %v3113 = vunpack.c.h.b16 %v1809
        %v3114 = vunpack.c.l.b16 %v1810
        %v3115 = vunpack.c.h.b16 %v1810
        %v3116 = vunpack.c.l.b16 %v1811
        %v3117 = vunpack.c.h.b16 %v1811
        %v3118 = vunpack.c.l.b16 %v1812
        %v3119 = vunpack.c.h.b16 %v1812
        %v3120 = vunpack.c.l.b16 %v1813
        %v3121 = vunpack.c.h.b16 %v1813
        %v3122 = vunpack.c.l.b16 %v1814
        %v3123 = vunpack.c.h.b16 %v1814
        %v3124 = vunpack.c.l.b16 %v1815
        %v3125 = vunpack.c.h.b16 %v1815
        %v3126 = vunpack.c.l.b16 %v1816
        %v3127 = vunpack.c.h.b16 %v1816
        %v3128 = vunpack.c.l.b16 %v1817
        %v3129 = vunpack.c.h.b16 %v1817
        %v3130 = vunpack.c.l.b16 %v1818
        %v3131 = vunpack.c.h.b16 %v1818
        %v3132 = vunpack.c.l.b16 %v1819
        %v3133 = vunpack.c.h.b16 %v1819
        %v3134 = vunpack.c.l.b16 %v1820
        %v3135 = vunpack.c.h.b16 %v1820
        %v3136 = vunpack.c.l.b16 %v1821
        %v3137 = vunpack.c.h.b16 %v1821
        %v3138 = vunpack.c.l.b16 %v1822
        %v3139 = vunpack.c.h.b16 %v1822
        %v3140 = vunpack.c.l.b16 %v1823
        %v3141 = vunpack.c.h.b16 %v1823
        %v3142 = vunpack.c.l.b16 %v1824
        %v3143 = vunpack.c.h.b16 %v1824
        %v3144 = vunpack.c.l.b16 %v1825
        %v3145 = vunpack.c.h.b16 %v1825
        %v3146 = vunpack.c.l.b16 %v1826
        %v3147 = vunpack.c.h.b16 %v1826
        %v3148 = vunpack.c.l.b16 %v1827
        %v3149 = vunpack.c.h.b16 %v1827
        %v3150 = vunpack.c.l.b16 %v1828
        %v3151 = vunpack.c.h.b16 %v1828
        %v3152 = vunpack.c.l.b16 %v1829
        %v3153 = vunpack.c.h.b16 %v1829
        %v3154 = vunpack.c.l.b16 %v1830
        %v3155 = vunpack.c.h.b16 %v1830
        %v3156 = vunpack.c.l.b16 %v1831
        %v3157 = vunpack.c.h.b16 %v1831
        %v3158 = vunpack.c.l.b16 %v1832
        %v3159 = vunpack.c.h.b16 %v1832
        %v3160 = vunpack.c.l.b16 %v1833
        %v3161 = vunpack.c.h.b16 %v1833
        %v3162 = vunpack.c.l.b16 %v1834
        %v3163 = vunpack.c.h.b16 %v1834
        %v3164 = vunpack.c.l.b16 %v1835
        %v3165 = vunpack.c.h.b16 %v1835
        %v3166 = vunpack.c.l.b16 %v1836
        %v3167 = vunpack.c.h.b16 %v1836
        %v3168 = vunpack.c.l.b16 %v1837
        %v3169 = vunpack.c.h.b16 %v1837
        %v3170 = vunpack.c.l.b16 %v1838
        %v3171 = vunpack.c.h.b16 %v1838
        %v3172 = vunpack.c.l.b16 %v1839
        %v3173 = vunpack.c.h.b16 %v1839
        %v3174 = vunpack.c.l.b16 %v1840
        %v3175 = vunpack.c.h.b16 %v1840
        %v3176 = vunpack.c.l.b16 %v1841
        %v3177 = vunpack.c.h.b16 %v1841
        %v3178 = vunpack.c.l.b16 %v1842
        %v3179 = vunpack.c.h.b16 %v1842
        %v3180 = vunpack.c.l.b16 %v1843
        %v3181 = vunpack.c.h.b16 %v1843
        %v3182 = vunpack.c.l.b16 %v1844
        %v3183 = vunpack.c.h.b16 %v1844
        %v3184 = vunpack.c.l.b16 %v1845
        %v3185 = vunpack.c.h.b16 %v1845
        %v3186 = vunpack.c.l.b16 %v1846
        %v3187 = vunpack.c.h.b16 %v1846
        %v3188 = vunpack.c.l.b16 %v1847
        %v3189 = vunpack.c.h.b16 %v1847
        %v3190 = vunpack.c.l.b16 %v1848
        %v3191 = vunpack.c.h.b16 %v1848
        %v3192 = vunpack.c.l.b16 %v1849
        %v3193 = vunpack.c.h.b16 %v1849
        %v3194 = vunpack.c.l.b16 %v1850
        %v3195 = vunpack.c.h.b16 %v1850
        %v3196 = vunpack.c.l.b16 %v1851
        %v3197 = vunpack.c.h.b16 %v1851
        %v3198 = vunpack.c.l.b16 %v1852
        %v3199 = vunpack.c.h.b16 %v1852
        %v3200 = vunpack.c.l.b16 %v1853
        %v3201 = vunpack.c.h.b16 %v1853
        %v3202 = vunpack.c.l.b16 %v1854
        %v3203 = vunpack.c.h.b16 %v1854
        %v3204 = vunpack.c.l.b16 %v1855
        %v3205 = vunpack.c.h.b16 %v1855
        %v3206 = vunpack.c.l.b16 %v1856
        %v3207 = vunpack.c.h.b16 %v1856
        %v3208 = vunpack.c.l.b16 %v1857
        %v3209 = vunpack.c.h.b16 %v1857
        %v3210 = vunpack.c.l.b16 %v1858
        %v3211 = vunpack.c.h.b16 %v1858
        %v3212 = vunpack.c.l.b16 %v1859
        %v3213 = vunpack.c.h.b16 %v1859
        %v3214 = vunpack.c.l.b16 %v1860
        %v3215 = vunpack.c.h.b16 %v1860
        %v3216 = vunpack.c.l.b16 %v1861
        %v3217 = vunpack.c.h.b16 %v1861
        %v3218 = vunpack.c.l.b16 %v1862
        %v3219 = vunpack.c.h.b16 %v1862
        %v3220 = vunpack.c.l.b16 %v1863
        %v3221 = vunpack.c.h.b16 %v1863
        %v3222 = vunpack.c.l.b16 %v1864
        %v3223 = vunpack.c.h.b16 %v1864
        %v3224 = vunpack.c.l.b16 %v1865
        %v3225 = vunpack.c.h.b16 %v1865
        %v3226 = vunpack.c.l.b16 %v1866
        %v3227 = vunpack.c.h.b16 %v1866
        %v3228 = vunpack.c.l.b16 %v1867
        %v3229 = vunpack.c.h.b16 %v1867
        %v3230 = vunpack.c.l.b16 %v1868
        %v3231 = vunpack.c.h.b16 %v1868
        %v3232 = vunpack.c.l.b16 %v1869
        %v3233 = vunpack.c.h.b16 %v1869
        %v3234 = vunpack.c.l.b16 %v1870
        %v3235 = vunpack.c.h.b16 %v1870
        %v3236 = vunpack.c.l.b16 %v1871
        %v3237 = vunpack.c.h.b16 %v1871
        %v3238 = vunpack.c.l.b16 %v1872
        %v3239 = vunpack.c.h.b16 %v1872
        %v3240 = vunpack.c.l.b16 %v1873
        %v3241 = vunpack.c.h.b16 %v1873
        %v3242 = vunpack.c.l.b16 %v1874
        %v3243 = vunpack.c.h.b16 %v1874
        %v3244 = vunpack.c.l.b16 %v1875
        %v3245 = vunpack.c.h.b16 %v1875
        %v3246 = vunpack.c.l.b16 %v1876
        %v3247 = vunpack.c.h.b16 %v1876
        %v3248 = vunpack.c.l.b16 %v1877
        %v3249 = vunpack.c.h.b16 %v1877
        %v3250 = vunpack.c.l.b16 %v1878
        %v3251 = vunpack.c.h.b16 %v1878
        %v3252 = vunpack.c.l.b16 %v1879
        %v3253 = vunpack.c.h.b16 %v1879
        %v3254 = vunpack.c.l.b16 %v1880
        %v3255 = vunpack.c.h.b16 %v1880
        %v3256 = vunpack.c.l.b16 %v1881
        %v3257 = vunpack.c.h.b16 %v1881
        %v3258 = vunpack.c.l.b16 %v1882
        %v3259 = vunpack.c.h.b16 %v1882
        %v3260 = vunpack.c.l.b16 %v1883
        %v3261 = vunpack.c.h.b16 %v1883
        %v3262 = vunpack.c.l.b16 %v1884
        %v3263 = vunpack.c.h.b16 %v1884
        %v3264 = vunpack.c.l.b16 %v1885
        %v3265 = vunpack.c.h.b16 %v1885
        %v3266 = vunpack.c.l.b16 %v1886
        %v3267 = vunpack.c.h.b16 %v1886
        %v3268 = vunpack.c.l.b16 %v1887
        %v3269 = vunpack.c.h.b16 %v1887
        %v3270 = vunpack.c.l.b16 %v1888
        %v3271 = vunpack.c.h.b16 %v1888
        %v3272 = vunpack.c.l.b16 %v1889
        %v3273 = vunpack.c.h.b16 %v1889
        %v3274 = vunpack.c.l.b16 %v1890
        %v3275 = vunpack.c.h.b16 %v1890
        %v3276 = vunpack.c.l.b16 %v1891
        %v3277 = vunpack.c.h.b16 %v1891
        %v3278 = vunpack.c.l.b16 %v1892
        %v3279 = vunpack.c.h.b16 %v1892
        %v3280 = vunpack.c.l.b16 %v1893
        %v3281 = vunpack.c.h.b16 %v1893
        %v3282 = vunpack.c.l.b16 %v1894
        %v3283 = vunpack.c.h.b16 %v1894
        %v3284 = vunpack.c.l.b16 %v1895
        %v3285 = vunpack.c.h.b16 %v1895
        %v3286 = vunpack.c.l.b16 %v1896
        %v3287 = vunpack.c.h.b16 %v1896
        %v3288 = vunpack.c.l.b16 %v1897
        %v3289 = vunpack.c.h.b16 %v1897
        %v3290 = vunpack.c.l.b16 %v1898
        %v3291 = vunpack.c.h.b16 %v1898
        %v3292 = vunpack.c.l.b16 %v1899
        %v3293 = vunpack.c.h.b16 %v1899
        %v3294 = vunpack.c.l.b16 %v1900
        %v3295 = vunpack.c.h.b16 %v1900
        %v3296 = vunpack.c.l.b16 %v1901
        %v3297 = vunpack.c.h.b16 %v1901
        %v3298 = vunpack.c.l.b16 %v1902
        %v3299 = vunpack.c.h.b16 %v1902
        %v3300 = vunpack.c.l.b16 %v1903
        %v3301 = vunpack.c.h.b16 %v1903
        %v3302 = vunpack.c.l.b16 %v1904
        %v3303 = vunpack.c.h.b16 %v1904
        %v3304 = vunpack.c.l.b16 %v1905
        %v3305 = vunpack.c.h.b16 %v1905
        %v3306 = vunpack.c.l.b16 %v1906
        %v3307 = vunpack.c.h.b16 %v1906
        %v3308 = vunpack.c.l.b16 %v1907
        %v3309 = vunpack.c.h.b16 %v1907
        %v3310 = vunpack.c.l.b16 %v1908
        %v3311 = vunpack.c.h.b16 %v1908
        %v3312 = vunpack.c.l.b16 %v1909
        %v3313 = vunpack.c.h.b16 %v1909
        %v3314 = vunpack.c.l.b16 %v1910
        %v3315 = vunpack.c.h.b16 %v1910
        %v3316 = vunpack.c.l.b16 %v1911
        %v3317 = vunpack.c.h.b16 %v1911
        %v3318 = vunpack.c.l.b16 %v1912
        %v3319 = vunpack.c.h.b16 %v1912
        %v3320 = vunpack.c.l.b16 %v1913
        %v3321 = vunpack.c.h.b16 %v1913
        %v3322 = vunpack.c.l.b16 %v1914
        %v3323 = vunpack.c.h.b16 %v1914
        %v3324 = vunpack.c.l.b16 %v1915
        %v3325 = vunpack.c.h.b16 %v1915
        %v3326 = vunpack.c.l.b16 %v1916
        %v3327 = vunpack.c.h.b16 %v1916
        %v3328 = vunpack.c.l.b16 %v1917
        %v3329 = vunpack.c.h.b16 %v1917
        %v3330 = vunpack.c.l.b16 %v1918
        %v3331 = vunpack.c.h.b16 %v1918
        %v3332 = vunpack.c.l.b16 %v1919
        %v3333 = vunpack.c.h.b16 %v1919
        %v3334 = vunpack.c.l.b16 %v1920
        %v3335 = vunpack.c.h.b16 %v1920
        %v3336 = vunpack.c.l.b16 %v1921
        %v3337 = vunpack.c.h.b16 %v1921
        %v3338 = vunpack.c.l.b16 %v1922
        %v3339 = vunpack.c.h.b16 %v1922
        %v3340 = vunpack.c.l.b16 %v1923
        %v3341 = vunpack.c.h.b16 %v1923
        %v3342 = vunpack.c.l.b16 %v1924
        %v3343 = vunpack.c.h.b16 %v1924
        %v3344 = vunpack.c.l.b16 %v1925
        %v3345 = vunpack.c.h.b16 %v1925
        %v3346 = vunpack.c.l.b16 %v1926
        %v3347 = vunpack.c.h.b16 %v1926
        %v3348 = vunpack.c.l.b16 %v1927
        %v3349 = vunpack.c.h.b16 %v1927
        %v3350 = vunpack.c.l.b16 %v1928
        %v3351 = vunpack.c.h.b16 %v1928
        %v3352 = vunpack.c.l.b16 %v1929
        %v3353 = vunpack.c.h.b16 %v1929
        %v3354 = vunpack.c.l.b16 %v1930
        %v3355 = vunpack.c.h.b16 %v1930
        %v3356 = vunpack.c.l.b16 %v1931
        %v3357 = vunpack.c.h.b16 %v1931
        %v3358 = vunpack.c.l.b16 %v1932
        %v3359 = vunpack.c.h.b16 %v1932
        %v3360 = vunpack.c.l.b16 %v1933
        %v3361 = vunpack.c.h.b16 %v1933
        %v3362 = vunpack.c.l.b16 %v1934
        %v3363 = vunpack.c.h.b16 %v1934
        %v3364 = vunpack.c.l.b16 %v1935
        %v3365 = vunpack.c.h.b16 %v1935
        %v3366 = vunpack.c.l.b16 %v1936
        %v3367 = vunpack.c.h.b16 %v1936
        %v3368 = vunpack.c.l.b16 %v1937
        %v3369 = vunpack.c.h.b16 %v1937
        %v3370 = vunpack.c.l.b16 %v1938
        %v3371 = vunpack.c.h.b16 %v1938
        %v3372 = vunpack.c.l.b16 %v1939
        %v3373 = vunpack.c.h.b16 %v1939
        %v3374 = vunpack.c.l.b16 %v1940
        %v3375 = vunpack.c.h.b16 %v1940
        %v3376 = vunpack.c.l.b16 %v1941
        %v3377 = vunpack.c.h.b16 %v1941
        %v3378 = vunpack.c.l.b16 %v1942
        %v3379 = vunpack.c.h.b16 %v1942
        %v3380 = vunpack.c.l.b16 %v1943
        %v3381 = vunpack.c.h.b16 %v1943
        %v3382 = vunpack.c.l.b16 %v1944
        %v3383 = vunpack.c.h.b16 %v1944
        %v3384 = vunpack.c.l.b16 %v1945
        %v3385 = vunpack.c.h.b16 %v1945
        %v3386 = vunpack.c.l.b16 %v1946
        %v3387 = vunpack.c.h.b16 %v1946
        %v3388 = vunpack.c.l.b16 %v1947
        %v3389 = vunpack.c.h.b16 %v1947
        %v3390 = vunpack.c.l.b16 %v1948
        %v3391 = vunpack.c.h.b16 %v1948
        %v3392 = vunpack.c.l.b16 %v1949
        %v3393 = vunpack.c.h.b16 %v1949
        %v3394 = vunpack.c.l.b16 %v1950
        %v3395 = vunpack.c.h.b16 %v1950
        %v3396 = vunpack.c.l.b16 %v1951
        %v3397 = vunpack.c.h.b16 %v1951
        %v3398 = vunpack.c.l.b16 %v1952
        %v3399 = vunpack.c.h.b16 %v1952
        %v3400 = vunpack.c.l.b16 %v1953
        %v3401 = vunpack.c.h.b16 %v1953
        %v3402 = vunpack.c.l.b16 %v1954
        %v3403 = vunpack.c.h.b16 %v1954
        %v3404 = vunpack.c.l.b16 %v1955
        %v3405 = vunpack.c.h.b16 %v1955
        %v3406 = vunpack.c.l.b16 %v1956
        %v3407 = vunpack.c.h.b16 %v1956
        %v3408 = vunpack.c.l.b16 %v1957
        %v3409 = vunpack.c.h.b16 %v1957
        %v3410 = vunpack.c.l.b16 %v1958
        %v3411 = vunpack.c.h.b16 %v1958
        %v3412 = vunpack.c.l.b16 %v1959
        %v3413 = vunpack.c.h.b16 %v1959
        %v3414 = vunpack.c.l.b16 %v1960
        %v3415 = vunpack.c.h.b16 %v1960
        %v3416 = vunpack.c.l.b16 %v1961
        %v3417 = vunpack.c.h.b16 %v1961
        %v3418 = vunpack.c.l.b16 %v1962
        %v3419 = vunpack.c.h.b16 %v1962
        %v3420 = vunpack.c.l.b16 %v1963
        %v3421 = vunpack.c.h.b16 %v1963
        %v3422 = vunpack.c.l.b16 %v1964
        %v3423 = vunpack.c.h.b16 %v1964
        %v3424 = vunpack.c.l.b16 %v1965
        %v3425 = vunpack.c.h.b16 %v1965
        %v3426 = vunpack.c.l.b16 %v1966
        %v3427 = vunpack.c.h.b16 %v1966
        %v3428 = vunpack.c.l.b16 %v1967
        %v3429 = vunpack.c.h.b16 %v1967
        %v3430 = vunpack.c.l.b16 %v1968
        %v3431 = vunpack.c.h.b16 %v1968
        %v3432 = vunpack.c.l.b16 %v1969
        %v3433 = vunpack.c.h.b16 %v1969
        %v3434 = vunpack.c.l.b16 %v1970
        %v3435 = vunpack.c.h.b16 %v1970
        %v3436 = vunpack.c.l.b16 %v1971
        %v3437 = vunpack.c.h.b16 %v1971
        %v3438 = vunpack.c.l.b16 %v1972
        %v3439 = vunpack.c.h.b16 %v1972
        %v3440 = vunpack.c.l.b16 %v1973
        %v3441 = vunpack.c.h.b16 %v1973
        %v3442 = vunpack.c.l.b16 %v1974
        %v3443 = vunpack.c.h.b16 %v1974
        %v3444 = vunpack.c.l.b16 %v1975
        %v3445 = vunpack.c.h.b16 %v1975
        %v3446 = vunpack.c.l.b16 %v1976
        %v3447 = vunpack.c.h.b16 %v1976
        %v3448 = vunpack.c.l.b16 %v1977
        %v3449 = vunpack.c.h.b16 %v1977
        %v3450 = vunpack.c.l.b16 %v1978
        %v3451 = vunpack.c.h.b16 %v1978
        %v3452 = vunpack.c.l.b16 %v1979
        %v3453 = vunpack.c.h.b16 %v1979
        %v3454 = vunpack.c.l.b16 %v1980
        %v3455 = vunpack.c.h.b16 %v1980
        %v3456 = vunpack.c.l.b16 %v1981
        %v3457 = vunpack.c.h.b16 %v1981
        %v3458 = vunpack.c.l.b16 %v1982
        %v3459 = vunpack.c.h.b16 %v1982
        %v3460 = vunpack.c.l.b16 %v1983
        %v3461 = vunpack.c.h.b16 %v1983
        %v3462 = vunpack.c.l.b16 %v1984
        %v3463 = vunpack.c.h.b16 %v1984
        %v3464 = vunpack.c.l.b16 %v1985
        %v3465 = vunpack.c.h.b16 %v1985
        %v3466 = vunpack.c.l.b16 %v1986
        %v3467 = vunpack.c.h.b16 %v1986
        %v3468 = vunpack.c.l.b16 %v1987
        %v3469 = vunpack.c.h.b16 %v1987
        %v3470 = vunpack.c.l.b16 %v1988
        %v3471 = vunpack.c.h.b16 %v1988
        %v3472 = vunpack.c.l.b16 %v1989
        %v3473 = vunpack.c.h.b16 %v1989
        %v3474 = vunpack.c.l.b16 %v1990
        %v3475 = vunpack.c.h.b16 %v1990
        %v3476 = vunpack.c.l.b16 %v1991
        %v3477 = vunpack.c.h.b16 %v1991
        %v3478 = vunpack.c.l.b16 %v1992
        %v3479 = vunpack.c.h.b16 %v1992
        %v3480 = vunpack.c.l.b16 %v1993
        %v3481 = vunpack.c.h.b16 %v1993
        %v3482 = vunpack.c.l.b16 %v1994
        %v3483 = vunpack.c.h.b16 %v1994
        %v3484 = vunpack.c.l.b16 %v1995
        %v3485 = vunpack.c.h.b16 %v1995
        %v3486 = vunpack.c.l.b16 %v1996
        %v3487 = vunpack.c.h.b16 %v1996
        %v3488 = vunpack.c.l.b16 %v1997
        %v3489 = vunpack.c.h.b16 %v1997
        %v3490 = vunpack.c.l.b16 %v1998
        %v3491 = vunpack.c.h.b16 %v1998
        %v3492 = vunpack.c.l.b16 %v1999
        %v3493 = vunpack.c.h.b16 %v1999
        %v3494 = vunpack.c.l.b16 %v2000
        %v3495 = vunpack.c.h.b16 %v2000
        %v3496 = vunpack.c.l.b16 %v2001
        %v3497 = vunpack.c.h.b16 %v2001
        %v3498 = vunpack.c.l.b16 %v2002
        %v3499 = vunpack.c.h.b16 %v2002
        %v3500 = vunpack.c.l.b16 %v2003
        %v3501 = vunpack.c.h.b16 %v2003
        %v3502 = vunpack.c.l.b16 %v2004
        %v3503 = vunpack.c.h.b16 %v2004
        %v3504 = vunpack.c.l.b16 %v2005
        %v3505 = vunpack.c.h.b16 %v2005
        %v3506 = vunpack.c.l.b16 %v2006
        %v3507 = vunpack.c.h.b16 %v2006
        %v3508 = vunpack.c.l.b16 %v2007
        %v3509 = vunpack.c.h.b16 %v2007
        %v3510 = vunpack.c.l.b16 %v2008
        %v3511 = vunpack.c.h.b16 %v2008
        %v3512 = vunpack.c.l.b16 %v2009
        %v3513 = vunpack.c.h.b16 %v2009
        %v3514 = vunpack.c.l.b16 %v2010
        %v3515 = vunpack.c.h.b16 %v2010
        %v3516 = vunpack.c.l.b16 %v2011
        %v3517 = vunpack.c.h.b16 %v2011
        %v3518 = vunpack.c.l.b16 %v2012
        %v3519 = vunpack.c.h.b16 %v2012
        %v3520 = vunpack.c.l.b16 %v2013
        %v3521 = vunpack.c.h.b16 %v2013
        %v3522 = vunpack.c.l.b16 %v2014
        %v3523 = vunpack.c.h.b16 %v2014
        %v3524 = vunpack.c.l.b16 %v2015
        %v3525 = vunpack.c.h.b16 %v2015
        %v3526 = vunpack.c.l.b16 %v2016
        %v3527 = vunpack.c.h.b16 %v2016
        %v3528 = vunpack.c.l.b16 %v2017
        %v3529 = vunpack.c.h.b16 %v2017
        %v3530 = vunpack.c.l.b16 %v2018
        %v3531 = vunpack.c.h.b16 %v2018
        %v3532 = vunpack.c.l.b16 %v2019
        %v3533 = vunpack.c.h.b16 %v2019
        %v3534 = vunpack.c.l.b16 %v2020
        %v3535 = vunpack.c.h.b16 %v2020
        %v3536 = vunpack.c.l.b16 %v2021
        %v3537 = vunpack.c.h.b16 %v2021
        %v3538 = vunpack.c.l.b16 %v2022
        %v3539 = vunpack.c.h.b16 %v2022
        %v3540 = vunpack.c.l.b16 %v2023
        %v3541 = vunpack.c.h.b16 %v2023
        %v3542 = vunpack.c.l.b16 %v2024
        %v3543 = vunpack.c.h.b16 %v2024
        %v3544 = vunpack.c.l.b16 %v2025
        %v3545 = vunpack.c.h.b16 %v2025
        %v3546 = vunpack.c.l.b16 %v2026
        %v3547 = vunpack.c.h.b16 %v2026
        %v3548 = vunpack.c.l.b16 %v2027
        %v3549 = vunpack.c.h.b16 %v2027
        %v3550 = vunpack.c.l.b16 %v2028
        %v3551 = vunpack.c.h.b16 %v2028
        %v3552 = vunpack.c.l.b16 %v2029
        %v3553 = vunpack.c.h.b16 %v2029
        %v3554 = vunpack.c.l.b16 %v2030
        %v3555 = vunpack.c.h.b16 %v2030
        %v3556 = vunpack.c.l.b16 %v2031
        %v3557 = vunpack.c.h.b16 %v2031
        %v3558 = vunpack.c.l.b16 %v2032
        %v3559 = vunpack.c.h.b16 %v2032
        %v3560 = vunpack.c.l.b16 %v2033
        %v3561 = vunpack.c.h.b16 %v2033
        %v3562 = vunpack.c.l.b16 %v2034
        %v3563 = vunpack.c.h.b16 %v2034
        %v3564 = vunpack.c.l.b16 %v2035
        %v3565 = vunpack.c.h.b16 %v2035
        %v3566 = vunpack.c.l.b16 %v2036
        %v3567 = vunpack.c.h.b16 %v2036
        %v3568 = vunpack.c.l.b16 %v2037
        %v3569 = vunpack.c.h.b16 %v2037
        %v3570 = vunpack.c.l.b16 %v2038
        %v3571 = vunpack.c.h.b16 %v2038
        %v3572 = vunpack.c.l.b16 %v2039
        %v3573 = vunpack.c.h.b16 %v2039
        %v3574 = vunpack.c.l.b16 %v2040
        %v3575 = vunpack.c.h.b16 %v2040
        %v3576 = vunpack.c.l.b16 %v2041
        %v3577 = vunpack.c.h.b16 %v2041
        %v3578 = vunpack.c.l.b16 %v2042
        %v3579 = vunpack.c.h.b16 %v2042
        %v3580 = vunpack.c.l.b16 %v2043
        %v3581 = vunpack.c.h.b16 %v2043
        %v3582 = vunpack.c.l.b16 %v2044
        %v3583 = vunpack.c.h.b16 %v2044
        %v3584 = vunpack.c.l.b16 %v2045
        %v3585 = vunpack.c.h.b16 %v2045
        %v3586 = vunpack.c.l.b16 %v2046
        %v3587 = vunpack.c.h.b16 %v2046
        %v3588 = vunpack.c.l.b16 %v2047
        %v3589 = vunpack.c.h.b16 %v2047
        %v3590 = vunpack.c.l.b16 %v2048
        %v3591 = vunpack.c.h.b16 %v2048
        %v3592 = vunpack.c.l.b16 %v2049
        %v3593 = vunpack.c.h.b16 %v2049
        %v3594 = vunpack.c.l.b16 %v2050
        %v3595 = vunpack.c.h.b16 %v2050
        %v3596 = vunpack.c.l.b16 %v2051
        %v3597 = vunpack.c.h.b16 %v2051
        %v3598 = vunpack.c.l.b16 %v2052
        %v3599 = vunpack.c.h.b16 %v2052
        %v3600 = vunpack.c.l.b16 %v2053
        %v3601 = vunpack.c.h.b16 %v2053
        %v3602 = vunpack.c.l.b16 %v2054
        %v3603 = vunpack.c.h.b16 %v2054
        %v3604 = vunpack.c.l.b16 %v2055
        %v3605 = vunpack.c.h.b16 %v2055
        %v3606 = vunpack.c.l.b16 %v2056
        %v3607 = vunpack.c.h.b16 %v2056
        %v3608 = vunpack.c.l.b16 %v2057
        %v3609 = vunpack.c.h.b16 %v2057
        %v3610 = vunpack.c.l.b16 %v2058
        %v3611 = vunpack.c.h.b16 %v2058
        %v3612 = vunpack.c.l.b16 %v2059
        %v3613 = vunpack.c.h.b16 %v2059
        %v3614 = vunpack.c.l.b16 %v2060
        %v3615 = vunpack.c.h.b16 %v2060
        %v3616 = vunpack.c.l.b16 %v2061
        %v3617 = vunpack.c.h.b16 %v2061
        %v3618 = vunpack.c.l.b16 %v2062
        %v3619 = vunpack.c.h.b16 %v2062
        %v3620 = vunpack.c.l.b16 %v2063
        %v3621 = vunpack.c.h.b16 %v2063
        %v3622 = vunpack.c.l.b16 %v2064
        %v3623 = vunpack.c.h.b16 %v2064
        %v3624 = vunpack.c.l.b16 %v2065
        %v3625 = vunpack.c.h.b16 %v2065
        %v3626 = vunpack.c.l.b16 %v2066
        %v3627 = vunpack.c.h.b16 %v2066
        %v3628 = vunpack.c.l.b16 %v2067
        %v3629 = vunpack.c.h.b16 %v2067
        %v3630 = vunpack.c.l.b16 %v2068
        %v3631 = vunpack.c.h.b16 %v2068
        %v3632 = vunpack.c.l.b16 %v2069
        %v3633 = vunpack.c.h.b16 %v2069
        %v3634 = vunpack.c.l.b16 %v2070
        %v3635 = vunpack.c.h.b16 %v2070
        %v3636 = vunpack.c.l.b16 %v2071
        %v3637 = vunpack.c.h.b16 %v2071
        %v3638 = vunpack.c.l.b16 %v2072
        %v3639 = vunpack.c.h.b16 %v2072
        %v3640 = vunpack.c.l.b16 %v2073
        %v3641 = vunpack.c.h.b16 %v2073
        %v3642 = vunpack.c.l.b16 %v2074
        %v3643 = vunpack.c.h.b16 %v2074
        %v3644 = vunpack.c.l.b16 %v2075
        %v3645 = vunpack.c.h.b16 %v2075
        %v3646 = vunpack.c.l.b16 %v2076
        %v3647 = vunpack.c.h.b16 %v2076
        %v3648 = vunpack.c.l.b16 %v2077
        %v3649 = vunpack.c.h.b16 %v2077
        %v3650 = vunpack.c.l.b16 %v2078
        %v3651 = vunpack.c.h.b16 %v2078
        %v3652 = vunpack.c.l.b16 %v2079
        %v3653 = vunpack.c.h.b16 %v2079
        %v3654 = vunpack.c.l.b16 %v2080
        %v3655 = vunpack.c.h.b16 %v2080
        %v3656 = vunpack.c.l.b16 %v2081
        %v3657 = vunpack.c.h.b16 %v2081
        %v3658 = vunpack.c.l.b16 %v2082
        %v3659 = vunpack.c.h.b16 %v2082
        %v3660 = vunpack.c.l.b16 %v2083
        %v3661 = vunpack.c.h.b16 %v2083
        %v3662 = vunpack.c.l.b16 %v2084
        %v3663 = vunpack.c.h.b16 %v2084
        %v3664 = vunpack.c.l.b16 %v2085
        %v3665 = vunpack.c.h.b16 %v2085
        %v3666 = vunpack.c.l.b16 %v2086
        %v3667 = vunpack.c.h.b16 %v2086
        %v3668 = vunpack.c.l.b16 %v2087
        %v3669 = vunpack.c.h.b16 %v2087
        %v3670 = vunpack.c.l.b16 %v2088
        %v3671 = vunpack.c.h.b16 %v2088
        %v3672 = vunpack.c.l.b16 %v2089
        %v3673 = vunpack.c.h.b16 %v2089
        %v3674 = vunpack.c.l.b16 %v2090
        %v3675 = vunpack.c.h.b16 %v2090
        %v3676 = vunpack.c.l.b16 %v2091
        %v3677 = vunpack.c.h.b16 %v2091
        %v3678 = vunpack.c.l.b16 %v2092
        %v3679 = vunpack.c.h.b16 %v2092
        %v3680 = vunpack.c.l.b16 %v2093
        %v3681 = vunpack.c.h.b16 %v2093
        %v3682 = vunpack.c.l.b16 %v2094
        %v3683 = vunpack.c.h.b16 %v2094
        %v3684 = vunpack.c.l.b16 %v2095
        %v3685 = vunpack.c.h.b16 %v2095
        %v3686 = vunpack.c.l.b16 %v2096
        %v3687 = vunpack.c.h.b16 %v2096
        %v3688 = vunpack.c.l.b16 %v2097
        %v3689 = vunpack.c.h.b16 %v2097
        %v3690 = vunpack.c.l.b16 %v2098
        %v3691 = vunpack.c.h.b16 %v2098
        %v3692 = vunpack.c.l.b16 %v2099
        %v3693 = vunpack.c.h.b16 %v2099
        %v3694 = vunpack.c.l.b16 %v2100
        %v3695 = vunpack.c.h.b16 %v2100
        %v3696 = vunpack.c.l.b16 %v2101
        %v3697 = vunpack.c.h.b16 %v2101
        %v3698 = vunpack.c.l.b16 %v2102
        %v3699 = vunpack.c.h.b16 %v2102
        %v3700 = vunpack.c.l.b16 %v2103
        %v3701 = vunpack.c.h.b16 %v2103
        %v3702 = vunpack.c.l.b16 %v2104
        %v3703 = vunpack.c.h.b16 %v2104
        %v3704 = vunpack.c.l.b16 %v2105
        %v3705 = vunpack.c.h.b16 %v2105
        %v3706 = vunpack.c.l.b16 %v2106
        %v3707 = vunpack.c.h.b16 %v2106
        %v3708 = vunpack.c.l.b16 %v2107
        %v3709 = vunpack.c.h.b16 %v2107
        %v3710 = vunpack.c.l.b16 %v2108
        %v3711 = vunpack.c.h.b16 %v2108
        %v3712 = vunpack.c.l.b16 %v2109
        %v3713 = vunpack.c.h.b16 %v2109
        %v3714 = vunpack.c.l.b16 %v2110
        %v3715 = vunpack.c.h.b16 %v2110
        %v3716 = vunpack.c.l.b16 %v2111
        %v3717 = vunpack.c.h.b16 %v2111
        %v3718 = vunpack.c.l.b16 %v2112
        %v3719 = vunpack.c.h.b16 %v2112
        %v3720 = vunpack.c.l.b16 %v2113
        %v3721 = vunpack.c.h.b16 %v2113
        %v3722 = vunpack.c.l.b16 %v2114
        %v3723 = vunpack.c.h.b16 %v2114
        %v3724 = vunpack.c.l.b16 %v2115
        %v3725 = vunpack.c.h.b16 %v2115
        %v3726 = vunpack.c.l.b16 %v2116
        %v3727 = vunpack.c.h.b16 %v2116
        %v3728 = vunpack.c.l.b16 %v2117
        %v3729 = vunpack.c.h.b16 %v2117
        %v3730 = vunpack.c.l.b16 %v2118
        %v3731 = vunpack.c.h.b16 %v2118
        %v3732 = vunpack.c.l.b16 %v2119
        %v3733 = vunpack.c.h.b16 %v2119
        %v3734 = vunpack.c.l.b16 %v2120
        %v3735 = vunpack.c.h.b16 %v2120
        %v3736 = vunpack.c.l.b16 %v2121
        %v3737 = vunpack.c.h.b16 %v2121
        %v3738 = vunpack.c.l.b16 %v2122
        %v3739 = vunpack.c.h.b16 %v2122
        %v3740 = vunpack.c.l.b16 %v2123
        %v3741 = vunpack.c.h.b16 %v2123
        %v3742 = vunpack.c.l.b16 %v2124
        %v3743 = vunpack.c.h.b16 %v2124
        %v3744 = vunpack.c.l.b16 %v2125
        %v3745 = vunpack.c.h.b16 %v2125
        %v3746 = vunpack.c.l.b16 %v2126
        %v3747 = vunpack.c.h.b16 %v2126
        %v3748 = vunpack.c.l.b16 %v2127
        %v3749 = vunpack.c.h.b16 %v2127
        %v3750 = vunpack.c.l.b16 %v2128
        %v3751 = vunpack.c.h.b16 %v2128
        %v3752 = vunpack.c.l.b16 %v2129
        %v3753 = vunpack.c.h.b16 %v2129
        %v3754 = vunpack.c.l.b16 %v2130
        %v3755 = vunpack.c.h.b16 %v2130
        %v3756 = vunpack.c.l.b16 %v2131
        %v3757 = vunpack.c.h.b16 %v2131
        %v3758 = vunpack.c.l.b16 %v2132
        %v3759 = vunpack.c.h.b16 %v2132
        %v3760 = vunpack.c.l.b16 %v2133
        %v3761 = vunpack.c.h.b16 %v2133
        %v3762 = vunpack.c.l.b16 %v2134
        %v3763 = vunpack.c.h.b16 %v2134
        %v3764 = vunpack.c.l.b16 %v2135
        %v3765 = vunpack.c.h.b16 %v2135
        %v3766 = vunpack.c.l.b16 %v2136
        %v3767 = vunpack.c.h.b16 %v2136
        %v3768 = vunpack.c.l.b16 %v2137
        %v3769 = vunpack.c.h.b16 %v2137
        %v3770 = vunpack.c.l.b16 %v2138
        %v3771 = vunpack.c.h.b16 %v2138
        %v3772 = vunpack.c.l.b16 %v2139
        %v3773 = vunpack.c.h.b16 %v2139
        %v3774 = vunpack.c.l.b16 %v2140
        %v3775 = vunpack.c.h.b16 %v2140
        %v3776 = vunpack.c.l.b16 %v2141
        %v3777 = vunpack.c.h.b16 %v2141
        %v3778 = vunpack.c.l.b16 %v2142
        %v3779 = vunpack.c.h.b16 %v2142
        %v3780 = vunpack.c.l.b16 %v2143
        %v3781 = vunpack.c.h.b16 %v2143
        %v3782 = vunpack.c.l.b16 %v2144
        %v3783 = vunpack.c.h.b16 %v2144
        %v3784 = vunpack.c.l.b16 %v2145
        %v3785 = vunpack.c.h.b16 %v2145
        %v3786 = vunpack.c.l.b16 %v2146
        %v3787 = vunpack.c.h.b16 %v2146
        %v3788 = vunpack.c.l.b16 %v2147
        %v3789 = vunpack.c.h.b16 %v2147
        %v3790 = vunpack.c.l.b16 %v2148
        %v3791 = vunpack.c.h.b16 %v2148
        %v3792 = vunpack.c.l.b16 %v2149
        %v3793 = vunpack.c.h.b16 %v2149
        %v3794 = vunpack.c.l.b16 %v2150
        %v3795 = vunpack.c.h.b16 %v2150
        %v3796 = vunpack.c.l.b16 %v2151
        %v3797 = vunpack.c.h.b16 %v2151
        %v3798 = vunpack.c.l.b16 %v2152
        %v3799 = vunpack.c.h.b16 %v2152
        %v3800 = vunpack.c.l.b16 %v2153
        %v3801 = vunpack.c.h.b16 %v2153
        %v3802 = vunpack.c.l.b16 %v2154
        %v3803 = vunpack.c.h.b16 %v2154
        %v3804 = vunpack.c.l.b16 %v2155
        %v3805 = vunpack.c.h.b16 %v2155
        %v3806 = vunpack.c.l.b16 %v2156
        %v3807 = vunpack.c.h.b16 %v2156
        %v3808 = vunpack.c.l.b16 %v2157
        %v3809 = vunpack.c.h.b16 %v2157
        %v3810 = vunpack.c.l.b16 %v2158
        %v3811 = vunpack.c.h.b16 %v2158
        %v3812 = vunpack.c.l.b16 %v2159
        %v3813 = vunpack.c.h.b16 %v2159
        %v3814 = vunpack.c.l.b16 %v2160
        %v3815 = vunpack.c.h.b16 %v2160
        %v3816 = vunpack.c.l.b16 %v2161
        %v3817 = vunpack.c.h.b16 %v2161
        %v3818 = vunpack.c.l.b16 %v2162
        %v3819 = vunpack.c.h.b16 %v2162
        %v3820 = vunpack.c.l.b16 %v2163
        %v3821 = vunpack.c.h.b16 %v2163
        %v3822 = vunpack.c.l.b16 %v2164
        %v3823 = vunpack.c.h.b16 %v2164
        %v3824 = vunpack.c.l.b16 %v2165
        %v3825 = vunpack.c.h.b16 %v2165
        %v3826 = vunpack.c.l.b16 %v2166
        %v3827 = vunpack.c.h.b16 %v2166
        %v3828 = vunpack.c.l.b16 %v2167
        %v3829 = vunpack.c.h.b16 %v2167
        %v3830 = vunpack.c.l.b16 %v2168
        %v3831 = vunpack.c.h.b16 %v2168
        %v3832 = vunpack.c.l.b16 %v2169
        %v3833 = vunpack.c.h.b16 %v2169
        %v3834 = vunpack.c.l.b16 %v2170
        %v3835 = vunpack.c.h.b16 %v2170
        %v3836 = vunpack.c.l.b16 %v2171
        %v3837 = vunpack.c.h.b16 %v2171
        %v3838 = vunpack.c.l.b16 %v2172
        %v3839 = vunpack.c.h.b16 %v2172
        %v3840 = vunpack.c.l.b16 %v2173
        %v3841 = vunpack.c.h.b16 %v2173
        %v3842 = vunpack.c.l.b16 %v2174
        %v3843 = vunpack.c.h.b16 %v2174
        %v3844 = vunpack.c.l.b16 %v2175
        %v3845 = vunpack.c.h.b16 %v2175
        %v3846 = vunpack.c.l.b16 %v2176
        %v3847 = vunpack.c.h.b16 %v2176
        %v3848 = vunpack.c.l.b16 %v2177
        %v3849 = vunpack.c.h.b16 %v2177
        %v3850 = vunpack.c.l.b16 %v2178
        %v3851 = vunpack.c.h.b16 %v2178
        %v3852 = vunpack.c.l.b16 %v2179
        %v3853 = vunpack.c.h.b16 %v2179
        %v3854 = vunpack.c.l.b16 %v2180
        %v3855 = vunpack.c.h.b16 %v2180
        %v3856 = vunpack.c.l.b16 %v2181
        %v3857 = vunpack.c.h.b16 %v2181
        %v3858 = vunpack.c.l.b16 %v2182
        %v3859 = vunpack.c.h.b16 %v2182
        %v3860 = vunpack.c.l.b16 %v2183
        %v3861 = vunpack.c.h.b16 %v2183
        %v3862 = vunpack.c.l.b16 %v2184
        %v3863 = vunpack.c.h.b16 %v2184
        %v3864 = vunpack.c.l.b16 %v2185
        %v3865 = vunpack.c.h.b16 %v2185
        %v3866 = vunpack.c.l.b16 %v2186
        %v3867 = vunpack.c.h.b16 %v2186
        %v3868 = vunpack.c.l.b16 %v2187
        %v3869 = vunpack.c.h.b16 %v2187
        %v3870 = vunpack.c.l.b16 %v2188
        %v3871 = vunpack.c.h.b16 %v2188
        %v3872 = vunpack.c.l.b16 %v2189
        %v3873 = vunpack.c.h.b16 %v2189
        %v3874 = vunpack.c.l.b16 %v2190
        %v3875 = vunpack.c.h.b16 %v2190
        %v3876 = vunpack.c.l.b16 %v2191
        %v3877 = vunpack.c.h.b16 %v2191
        %v3878 = vunpack.c.l.b16 %v2192
        %v3879 = vunpack.c.h.b16 %v2192
        %v3880 = vunpack.c.l.b16 %v2193
        %v3881 = vunpack.c.h.b16 %v2193
        %v3882 = vunpack.c.l.b16 %v2194
        %v3883 = vunpack.c.h.b16 %v2194
        %v3884 = vunpack.c.l.b16 %v2195
        %v3885 = vunpack.c.h.b16 %v2195
        %v3886 = vunpack.c.l.b16 %v2196
        %v3887 = vunpack.c.h.b16 %v2196
        %v3888 = vunpack.c.l.b16 %v2197
        %v3889 = vunpack.c.h.b16 %v2197
        %v3890 = vunpack.c.l.b16 %v2198
        %v3891 = vunpack.c.h.b16 %v2198
        %v3892 = vunpack.c.l.b16 %v2199
        %v3893 = vunpack.c.h.b16 %v2199
        %v3894 = vunpack.c.l.b16 %v2200
        %v3895 = vunpack.c.h.b16 %v2200
        %v3896 = vunpack.c.l.b16 %v2201
        %v3897 = vunpack.c.h.b16 %v2201
        %v3898 = vunpack.c.l.b16 %v2202
        %v3899 = vunpack.c.h.b16 %v2202
        %v3900 = vunpack.c.l.b16 %v2203
        %v3901 = vunpack.c.h.b16 %v2203
        %v3902 = vunpack.c.l.b16 %v2204
        %v3903 = vunpack.c.h.b16 %v2204
        %v3904 = vunpack.c.l.b16 %v2205
        %v3905 = vunpack.c.h.b16 %v2205
        %v3906 = vunpack.c.l.b16 %v2206
        %v3907 = vunpack.c.h.b16 %v2206
        %v3908 = vunpack.c.l.b16 %v2207
        %v3909 = vunpack.c.h.b16 %v2207
        %v3910 = vunpack.c.l.b16 %v2208
        %v3911 = vunpack.c.h.b16 %v2208
        %v3912 = vunpack.c.l.b16 %v2209
        %v3913 = vunpack.c.h.b16 %v2209
        %v3914 = vunpack.c.l.b16 %v2210
        %v3915 = vunpack.c.h.b16 %v2210
        %v3916 = vunpack.c.l.b16 %v2211
        %v3917 = vunpack.c.h.b16 %v2211
        %v3918 = vunpack.c.l.b16 %v2212
        %v3919 = vunpack.c.h.b16 %v2212
        %v3920 = vunpack.c.l.b16 %v2213
        %v3921 = vunpack.c.h.b16 %v2213
        %v3922 = vunpack.c.l.b16 %v2214
        %v3923 = vunpack.c.h.b16 %v2214
        %v3924 = vunpack.c.l.b16 %v2215
        %v3925 = vunpack.c.h.b16 %v2215
        %v3926 = vunpack.c.l.b16 %v2216
        %v3927 = vunpack.c.h.b16 %v2216
        %v3928 = vunpack.c.l.b16 %v2217
        %v3929 = vunpack.c.h.b16 %v2217
        %v3930 = vunpack.c.l.b16 %v2218
        %v3931 = vunpack.c.h.b16 %v2218
        %v3932 = vunpack.c.l.b16 %v2219
        %v3933 = vunpack.c.h.b16 %v2219
        %v3934 = vunpack.c.l.b16 %v2220
        %v3935 = vunpack.c.h.b16 %v2220
        %v3936 = vunpack.c.l.b16 %v2221
        %v3937 = vunpack.c.h.b16 %v2221
        %v3938 = vunpack.c.l.b16 %v2222
        %v3939 = vunpack.c.h.b16 %v2222
        %v3940 = vunpack.c.l.b16 %v2223
        %v3941 = vunpack.c.h.b16 %v2223
        %v3942 = vunpack.c.l.b16 %v2224
        %v3943 = vunpack.c.h.b16 %v2224
        %v3944 = vunpack.c.l.b16 %v2225
        %v3945 = vunpack.c.h.b16 %v2225
        %v3946 = vunpack.c.l.b16 %v2226
        %v3947 = vunpack.c.h.b16 %v2226
        %v3948 = vunpack.c.l.b16 %v2227
        %v3949 = vunpack.c.h.b16 %v2227
        %v3950 = vunpack.c.l.b16 %v2228
        %v3951 = vunpack.c.h.b16 %v2228
        %v3952 = vunpack.c.l.b16 %v2229
        %v3953 = vunpack.c.h.b16 %v2229
        %v3954 = vunpack.c.l.b16 %v2230
        %v3955 = vunpack.c.h.b16 %v2230
        %v3956 = vunpack.c.l.b16 %v2231
        %v3957 = vunpack.c.h.b16 %v2231
        %v3958 = vunpack.c.l.b16 %v2232
        %v3959 = vunpack.c.h.b16 %v2232
        %v3960 = vunpack.c.l.b16 %v2233
        %v3961 = vunpack.c.h.b16 %v2233
        %v3962 = vunpack.c.l.b16 %v2234
        %v3963 = vunpack.c.h.b16 %v2234
        %v3964 = vunpack.c.l.b16 %v2235
        %v3965 = vunpack.c.h.b16 %v2235
        %v3966 = vunpack.c.l.b16 %v2236
        %v3967 = vunpack.c.h.b16 %v2236
        %v3968 = vunpack.c.l.b16 %v2237
        %v3969 = vunpack.c.h.b16 %v2237
        %v3970 = vpack.c.b16 %v2962, %v2946
        %v3971 = vpack.c.b16 %v2963, %v2947
        %v3972 = vpack.c.b16 %v2964, %v2948
        %v3973 = vpack.c.b16 %v2965, %v2949
        %v3974 = vpack.c.b16 %v2966, %v2950
        %v3975 = vpack.c.b16 %v2967, %v2951
        %v3976 = vpack.c.b16 %v2968, %v2952
        %v3977 = vpack.c.b16 %v2969, %v2953
        %v3978 = vpack.c.b16 %v2970, %v2954
        %v3979 = vpack.c.b16 %v2971, %v2955
        %v3980 = vpack.c.b16 %v2972, %v2956
        %v3981 = vpack.c.b16 %v2973, %v2957
        %v3982 = vpack.c.b16 %v2974, %v2958
        %v3983 = vpack.c.b16 %v2975, %v2959
        %v3984 = vpack.c.b16 %v2976, %v2960
        %v3985 = vpack.c.b16 %v2977, %v2961
        %v3986 = vpack.c.b16 %v2994, %v2978
        %v3987 = vpack.c.b16 %v2995, %v2979
        %v3988 = vpack.c.b16 %v2996, %v2980
        %v3989 = vpack.c.b16 %v2997, %v2981
        %v3990 = vpack.c.b16 %v2998, %v2982
        %v3991 = vpack.c.b16 %v2999, %v2983
        %v3992 = vpack.c.b16 %v3000, %v2984
        %v3993 = vpack.c.b16 %v3001, %v2985
        %v3994 = vpack.c.b16 %v3002, %v2986
        %v3995 = vpack.c.b16 %v3003, %v2987
        %v3996 = vpack.c.b16 %v3004, %v2988
        %v3997 = vpack.c.b16 %v3005, %v2989
        %v3998 = vpack.c.b16 %v3006, %v2990
        %v3999 = vpack.c.b16 %v3007, %v2991
        %v4000 = vpack.c.b16 %v3008, %v2992
        %v4001 = vpack.c.b16 %v3009, %v2993
        %v4002 = vpack.c.b16 %v3026, %v3010
        %v4003 = vpack.c.b16 %v3027, %v3011
        %v4004 = vpack.c.b16 %v3028, %v3012
        %v4005 = vpack.c.b16 %v3029, %v3013
        %v4006 = vpack.c.b16 %v3030, %v3014
        %v4007 = vpack.c.b16 %v3031, %v3015
        %v4008 = vpack.c.b16 %v3032, %v3016
        %v4009 = vpack.c.b16 %v3033, %v3017
        %v4010 = vpack.c.b16 %v3034, %v3018
        %v4011 = vpack.c.b16 %v3035, %v3019
        %v4012 = vpack.c.b16 %v3036, %v3020
        %v4013 = vpack.c.b16 %v3037, %v3021
        %v4014 = vpack.c.b16 %v3038, %v3022
        %v4015 = vpack.c.b16 %v3039, %v3023
        %v4016 = vpack.c.b16 %v3040, %v3024
        %v4017 = vpack.c.b16 %v3041, %v3025
        %v4018 = vpack.c.b16 %v3058, %v3042
        %v4019 = vpack.c.b16 %v3059, %v3043
        %v4020 = vpack.c.b16 %v3060, %v3044
        %v4021 = vpack.c.b16 %v3061, %v3045
        %v4022 = vpack.c.b16 %v3062, %v3046
        %v4023 = vpack.c.b16 %v3063, %v3047
        %v4024 = vpack.c.b16 %v3064, %v3048
        %v4025 = vpack.c.b16 %v3065, %v3049
        %v4026 = vpack.c.b16 %v3066, %v3050
        %v4027 = vpack.c.b16 %v3067, %v3051
        %v4028 = vpack.c.b16 %v3068, %v3052
        %v4029 = vpack.c.b16 %v3069, %v3053
        %v4030 = vpack.c.b16 %v3070, %v3054
        %v4031 = vpack.c.b16 %v3071, %v3055
        %v4032 = vpack.c.b16 %v3072, %v3056
        %v4033 = vpack.c.b16 %v3073, %v3057
        %v4034 = vpack.c.b16 %v3090, %v3074
        %v4035 = vpack.c.b16 %v3091, %v3075
        %v4036 = vpack.c.b16 %v3092, %v3076
        %v4037 = vpack.c.b16 %v3093, %v3077
        %v4038 = vpack.c.b16 %v3094, %v3078
        %v4039 = vpack.c.b16 %v3095, %v3079
        %v4040 = vpack.c.b16 %v3096, %v3080
        %v4041 = vpack.c.b16 %v3097, %v3081
        %v4042 = vpack.c.b16 %v3098, %v3082
        %v4043 = vpack.c.b16 %v3099, %v3083
        %v4044 = vpack.c.b16 %v3100, %v3084
        %v4045 = vpack.c.b16 %v3101, %v3085
        %v4046 = vpack.c.b16 %v3102, %v3086
        %v4047 = vpack.c.b16 %v3103, %v3087
        %v4048 = vpack.c.b16 %v3104, %v3088
        %v4049 = vpack.c.b16 %v3105, %v3089
        %v4050 = vpack.c.b16 %v3122, %v3106
        %v4051 = vpack.c.b16 %v3123, %v3107
        %v4052 = vpack.c.b16 %v3124, %v3108
        %v4053 = vpack.c.b16 %v3125, %v3109
        %v4054 = vpack.c.b16 %v3126, %v3110
        %v4055 = vpack.c.b16 %v3127, %v3111
        %v4056 = vpack.c.b16 %v3128, %v3112
        %v4057 = vpack.c.b16 %v3129, %v3113
        %v4058 = vpack.c.b16 %v3130, %v3114
        %v4059 = vpack.c.b16 %v3131, %v3115
        %v4060 = vpack.c.b16 %v3132, %v3116
        %v4061 = vpack.c.b16 %v3133, %v3117
        %v4062 = vpack.c.b16 %v3134, %v3118
        %v4063 = vpack.c.b16 %v3135, %v3119
        %v4064 = vpack.c.b16 %v3136, %v3120
        %v4065 = vpack.c.b16 %v3137, %v3121
        %v4066 = vpack.c.b16 %v3154, %v3138
        %v4067 = vpack.c.b16 %v3155, %v3139
        %v4068 = vpack.c.b16 %v3156, %v3140
        %v4069 = vpack.c.b16 %v3157, %v3141
        %v4070 = vpack.c.b16 %v3158, %v3142
        %v4071 = vpack.c.b16 %v3159, %v3143
        %v4072 = vpack.c.b16 %v3160, %v3144
        %v4073 = vpack.c.b16 %v3161, %v3145
        %v4074 = vpack.c.b16 %v3162, %v3146
        %v4075 = vpack.c.b16 %v3163, %v3147
        %v4076 = vpack.c.b16 %v3164, %v3148
        %v4077 = vpack.c.b16 %v3165, %v3149
        %v4078 = vpack.c.b16 %v3166, %v3150
        %v4079 = vpack.c.b16 %v3167, %v3151
        %v4080 = vpack.c.b16 %v3168, %v3152
        %v4081 = vpack.c.b16 %v3169, %v3153
        %v4082 = vpack.c.b16 %v3186, %v3170
        %v4083 = vpack.c.b16 %v3187, %v3171
        %v4084 = vpack.c.b16 %v3188, %v3172
        %v4085 = vpack.c.b16 %v3189, %v3173
        %v4086 = vpack.c.b16 %v3190, %v3174
        %v4087 = vpack.c.b16 %v3191, %v3175
        %v4088 = vpack.c.b16 %v3192, %v3176
        %v4089 = vpack.c.b16 %v3193, %v3177
        %v4090 = vpack.c.b16 %v3194, %v3178
        %v4091 = vpack.c.b16 %v3195, %v3179
        %v4092 = vpack.c.b16 %v3196, %v3180
        %v4093 = vpack.c.b16 %v3197, %v3181
        %v4094 = vpack.c.b16 %v3198, %v3182
        %v4095 = vpack.c.b16 %v3199, %v3183
        %v4096 = vpack.c.b16 %v3200, %v3184
        %v4097 = vpack.c.b16 %v3201, %v3185
        %v4098 = vpack.c.b16 %v3218, %v3202
        %v4099 = vpack.c.b16 %v3219, %v3203
        %v4100 = vpack.c.b16 %v3220, %v3204
        %v4101 = vpack.c.b16 %v3221, %v3205
        %v4102 = vpack.c.b16 %v3222, %v3206
        %v4103 = vpack.c.b16 %v3223, %v3207
        %v4104 = vpack.c.b16 %v3224, %v3208
        %v4105 = vpack.c.b16 %v3225, %v3209
        %v4106 = vpack.c.b16 %v3226, %v3210
        %v4107 = vpack.c.b16 %v3227, %v3211
        %v4108 = vpack.c.b16 %v3228, %v3212
        %v4109 = vpack.c.b16 %v3229, %v3213
        %v4110 = vpack.c.b16 %v3230, %v3214
        %v4111 = vpack.c.b16 %v3231, %v3215
        %v4112 = vpack.c.b16 %v3232, %v3216
        %v4113 = vpack.c.b16 %v3233, %v3217
        %v4114 = vpack.c.b16 %v3250, %v3234
        %v4115 = vpack.c.b16 %v3251, %v3235
        %v4116 = vpack.c.b16 %v3252, %v3236
        %v4117 = vpack.c.b16 %v3253, %v3237
        %v4118 = vpack.c.b16 %v3254, %v3238
        %v4119 = vpack.c.b16 %v3255, %v3239
        %v4120 = vpack.c.b16 %v3256, %v3240
        %v4121 = vpack.c.b16 %v3257, %v3241
        %v4122 = vpack.c.b16 %v3258, %v3242
        %v4123 = vpack.c.b16 %v3259, %v3243
        %v4124 = vpack.c.b16 %v3260, %v3244
        %v4125 = vpack.c.b16 %v3261, %v3245
        %v4126 = vpack.c.b16 %v3262, %v3246
        %v4127 = vpack.c.b16 %v3263, %v3247
        %v4128 = vpack.c.b16 %v3264, %v3248
        %v4129 = vpack.c.b16 %v3265, %v3249
        %v4130 = vpack.c.b16 %v3282, %v3266
        %v4131 = vpack.c.b16 %v3283, %v3267
        %v4132 = vpack.c.b16 %v3284, %v3268
        %v4133 = vpack.c.b16 %v3285, %v3269
        %v4134 = vpack.c.b16 %v3286, %v3270
        %v4135 = vpack.c.b16 %v3287, %v3271
        %v4136 = vpack.c.b16 %v3288, %v3272
        %v4137 = vpack.c.b16 %v3289, %v3273
        %v4138 = vpack.c.b16 %v3290, %v3274
        %v4139 = vpack.c.b16 %v3291, %v3275
        %v4140 = vpack.c.b16 %v3292, %v3276
        %v4141 = vpack.c.b16 %v3293, %v3277
        %v4142 = vpack.c.b16 %v3294, %v3278
        %v4143 = vpack.c.b16 %v3295, %v3279
        %v4144 = vpack.c.b16 %v3296, %v3280
        %v4145 = vpack.c.b16 %v3297, %v3281
        %v4146 = vpack.c.b16 %v3314, %v3298
        %v4147 = vpack.c.b16 %v3315, %v3299
        %v4148 = vpack.c.b16 %v3316, %v3300
        %v4149 = vpack.c.b16 %v3317, %v3301
        %v4150 = vpack.c.b16 %v3318, %v3302
        %v4151 = vpack.c.b16 %v3319, %v3303
        %v4152 = vpack.c.b16 %v3320, %v3304
        %v4153 = vpack.c.b16 %v3321, %v3305
        %v4154 = vpack.c.b16 %v3322, %v3306
        %v4155 = vpack.c.b16 %v3323, %v3307
        %v4156 = vpack.c.b16 %v3324, %v3308
        %v4157 = vpack.c.b16 %v3325, %v3309
        %v4158 = vpack.c.b16 %v3326, %v3310
        %v4159 = vpack.c.b16 %v3327, %v3311
        %v4160 = vpack.c.b16 %v3328, %v3312
        %v4161 = vpack.c.b16 %v3329, %v3313
        %v4162 = vpack.c.b16 %v3346, %v3330
        %v4163 = vpack.c.b16 %v3347, %v3331
        %v4164 = vpack.c.b16 %v3348, %v3332
        %v4165 = vpack.c.b16 %v3349, %v3333
        %v4166 = vpack.c.b16 %v3350, %v3334
        %v4167 = vpack.c.b16 %v3351, %v3335
        %v4168 = vpack.c.b16 %v3352, %v3336
        %v4169 = vpack.c.b16 %v3353, %v3337
        %v4170 = vpack.c.b16 %v3354, %v3338
        %v4171 = vpack.c.b16 %v3355, %v3339
        %v4172 = vpack.c.b16 %v3356, %v3340
        %v4173 = vpack.c.b16 %v3357, %v3341
        %v4174 = vpack.c.b16 %v3358, %v3342
        %v4175 = vpack.c.b16 %v3359, %v3343
        %v4176 = vpack.c.b16 %v3360, %v3344
        %v4177 = vpack.c.b16 %v3361, %v3345
        %v4178 = vpack.c.b16 %v3378, %v3362
        %v4179 = vpack.c.b16 %v3379, %v3363
        %v4180 = vpack.c.b16 %v3380, %v3364
        %v4181 = vpack.c.b16 %v3381, %v3365
        %v4182 = vpack.c.b16 %v3382, %v3366
        %v4183 = vpack.c.b16 %v3383, %v3367
        %v4184 = vpack.c.b16 %v3384, %v3368
        %v4185 = vpack.c.b16 %v3385, %v3369
        %v4186 = vpack.c.b16 %v3386, %v3370
        %v4187 = vpack.c.b16 %v3387, %v3371
        %v4188 = vpack.c.b16 %v3388, %v3372
        %v4189 = vpack.c.b16 %v3389, %v3373
        %v4190 = vpack.c.b16 %v3390, %v3374
        %v4191 = vpack.c.b16 %v3391, %v3375
        %v4192 = vpack.c.b16 %v3392, %v3376
        %v4193 = vpack.c.b16 %v3393, %v3377
        %v4194 = vpack.c.b16 %v3410, %v3394
        %v4195 = vpack.c.b16 %v3411, %v3395
        %v4196 = vpack.c.b16 %v3412, %v3396
        %v4197 = vpack.c.b16 %v3413, %v3397
        %v4198 = vpack.c.b16 %v3414, %v3398
        %v4199 = vpack.c.b16 %v3415, %v3399
        %v4200 = vpack.c.b16 %v3416, %v3400
        %v4201 = vpack.c.b16 %v3417, %v3401
        %v4202 = vpack.c.b16 %v3418, %v3402
        %v4203 = vpack.c.b16 %v3419, %v3403
        %v4204 = vpack.c.b16 %v3420, %v3404
        %v4205 = vpack.c.b16 %v3421, %v3405
        %v4206 = vpack.c.b16 %v3422, %v3406
        %v4207 = vpack.c.b16 %v3423, %v3407
        %v4208 = vpack.c.b16 %v3424, %v3408
        %v4209 = vpack.c.b16 %v3425, %v3409
        %v4210 = vpack.c.b16 %v3442, %v3426
        %v4211 = vpack.c.b16 %v3443, %v3427
        %v4212 = vpack.c.b16 %v3444, %v3428
        %v4213 = vpack.c.b16 %v3445, %v3429
        %v4214 = vpack.c.b16 %v3446, %v3430
        %v4215 = vpack.c.b16 %v3447, %v3431
        %v4216 = vpack.c.b16 %v3448, %v3432
        %v4217 = vpack.c.b16 %v3449, %v3433
        %v4218 = vpack.c.b16 %v3450, %v3434
        %v4219 = vpack.c.b16 %v3451, %v3435
        %v4220 = vpack.c.b16 %v3452, %v3436
        %v4221 = vpack.c.b16 %v3453, %v3437
        %v4222 = vpack.c.b16 %v3454, %v3438
        %v4223 = vpack.c.b16 %v3455, %v3439
        %v4224 = vpack.c.b16 %v3456, %v3440
        %v4225 = vpack.c.b16 %v3457, %v3441
        %v4226 = vpack.c.b16 %v3474, %v3458
        %v4227 = vpack.c.b16 %v3475, %v3459
        %v4228 = vpack.c.b16 %v3476, %v3460
        %v4229 = vpack.c.b16 %v3477, %v3461
        %v4230 = vpack.c.b16 %v3478, %v3462
        %v4231 = vpack.c.b16 %v3479, %v3463
        %v4232 = vpack.c.b16 %v3480, %v3464
        %v4233 = vpack.c.b16 %v3481, %v3465
        %v4234 = vpack.c.b16 %v3482, %v3466
        %v4235 = vpack.c.b16 %v3483, %v3467
        %v4236 = vpack.c.b16 %v3484, %v3468
        %v4237 = vpack.c.b16 %v3485, %v3469
        %v4238 = vpack.c.b16 %v3486, %v3470
        %v4239 = vpack.c.b16 %v3487, %v3471
        %v4240 = vpack.c.b16 %v3488, %v3472
        %v4241 = vpack.c.b16 %v3489, %v3473
        %v4242 = vpack.c.b16 %v3506, %v3490
        %v4243 = vpack.c.b16 %v3507, %v3491
        %v4244 = vpack.c.b16 %v3508, %v3492
        %v4245 = vpack.c.b16 %v3509, %v3493
        %v4246 = vpack.c.b16 %v3510, %v3494
        %v4247 = vpack.c.b16 %v3511, %v3495
        %v4248 = vpack.c.b16 %v3512, %v3496
        %v4249 = vpack.c.b16 %v3513, %v3497
        %v4250 = vpack.c.b16 %v3514, %v3498
        %v4251 = vpack.c.b16 %v3515, %v3499
        %v4252 = vpack.c.b16 %v3516, %v3500
        %v4253 = vpack.c.b16 %v3517, %v3501
        %v4254 = vpack.c.b16 %v3518, %v3502
        %v4255 = vpack.c.b16 %v3519, %v3503
        %v4256 = vpack.c.b16 %v3520, %v3504
        %v4257 = vpack.c.b16 %v3521, %v3505
        %v4258 = vpack.c.b16 %v3538, %v3522
        %v4259 = vpack.c.b16 %v3539, %v3523
        %v4260 = vpack.c.b16 %v3540, %v3524
        %v4261 = vpack.c.b16 %v3541, %v3525
        %v4262 = vpack.c.b16 %v3542, %v3526
        %v4263 = vpack.c.b16 %v3543, %v3527
        %v4264 = vpack.c.b16 %v3544, %v3528
        %v4265 = vpack.c.b16 %v3545, %v3529
        %v4266 = vpack.c.b16 %v3546, %v3530
        %v4267 = vpack.c.b16 %v3547, %v3531
        %v4268 = vpack.c.b16 %v3548, %v3532
        %v4269 = vpack.c.b16 %v3549, %v3533
        %v4270 = vpack.c.b16 %v3550, %v3534
        %v4271 = vpack.c.b16 %v3551, %v3535
        %v4272 = vpack.c.b16 %v3552, %v3536
        %v4273 = vpack.c.b16 %v3553, %v3537
        %v4274 = vpack.c.b16 %v3570, %v3554
        %v4275 = vpack.c.b16 %v3571, %v3555
        %v4276 = vpack.c.b16 %v3572, %v3556
        %v4277 = vpack.c.b16 %v3573, %v3557
        %v4278 = vpack.c.b16 %v3574, %v3558
        %v4279 = vpack.c.b16 %v3575, %v3559
        %v4280 = vpack.c.b16 %v3576, %v3560
        %v4281 = vpack.c.b16 %v3577, %v3561
        %v4282 = vpack.c.b16 %v3578, %v3562
        %v4283 = vpack.c.b16 %v3579, %v3563
        %v4284 = vpack.c.b16 %v3580, %v3564
        %v4285 = vpack.c.b16 %v3581, %v3565
        %v4286 = vpack.c.b16 %v3582, %v3566
        %v4287 = vpack.c.b16 %v3583, %v3567
        %v4288 = vpack.c.b16 %v3584, %v3568
        %v4289 = vpack.c.b16 %v3585, %v3569
        %v4290 = vpack.c.b16 %v3602, %v3586
        %v4291 = vpack.c.b16 %v3603, %v3587
        %v4292 = vpack.c.b16 %v3604, %v3588
        %v4293 = vpack.c.b16 %v3605, %v3589
        %v4294 = vpack.c.b16 %v3606, %v3590
        %v4295 = vpack.c.b16 %v3607, %v3591
        %v4296 = vpack.c.b16 %v3608, %v3592
        %v4297 = vpack.c.b16 %v3609, %v3593
        %v4298 = vpack.c.b16 %v3610, %v3594
        %v4299 = vpack.c.b16 %v3611, %v3595
        %v4300 = vpack.c.b16 %v3612, %v3596
        %v4301 = vpack.c.b16 %v3613, %v3597
        %v4302 = vpack.c.b16 %v3614, %v3598
        %v4303 = vpack.c.b16 %v3615, %v3599
        %v4304 = vpack.c.b16 %v3616, %v3600
        %v4305 = vpack.c.b16 %v3617, %v3601
        %v4306 = vpack.c.b16 %v3634, %v3618
        %v4307 = vpack.c.b16 %v3635, %v3619
        %v4308 = vpack.c.b16 %v3636, %v3620
        %v4309 = vpack.c.b16 %v3637, %v3621
        %v4310 = vpack.c.b16 %v3638, %v3622
        %v4311 = vpack.c.b16 %v3639, %v3623
        %v4312 = vpack.c.b16 %v3640, %v3624
        %v4313 = vpack.c.b16 %v3641, %v3625
        %v4314 = vpack.c.b16 %v3642, %v3626
        %v4315 = vpack.c.b16 %v3643, %v3627
        %v4316 = vpack.c.b16 %v3644, %v3628
        %v4317 = vpack.c.b16 %v3645, %v3629
        %v4318 = vpack.c.b16 %v3646, %v3630
        %v4319 = vpack.c.b16 %v3647, %v3631
        %v4320 = vpack.c.b16 %v3648, %v3632
        %v4321 = vpack.c.b16 %v3649, %v3633
        %v4322 = vpack.c.b16 %v3666, %v3650
        %v4323 = vpack.c.b16 %v3667, %v3651
        %v4324 = vpack.c.b16 %v3668, %v3652
        %v4325 = vpack.c.b16 %v3669, %v3653
        %v4326 = vpack.c.b16 %v3670, %v3654
        %v4327 = vpack.c.b16 %v3671, %v3655
        %v4328 = vpack.c.b16 %v3672, %v3656
        %v4329 = vpack.c.b16 %v3673, %v3657
        %v4330 = vpack.c.b16 %v3674, %v3658
        %v4331 = vpack.c.b16 %v3675, %v3659
        %v4332 = vpack.c.b16 %v3676, %v3660
        %v4333 = vpack.c.b16 %v3677, %v3661
        %v4334 = vpack.c.b16 %v3678, %v3662
        %v4335 = vpack.c.b16 %v3679, %v3663
        %v4336 = vpack.c.b16 %v3680, %v3664
        %v4337 = vpack.c.b16 %v3681, %v3665
        %v4338 = vpack.c.b16 %v3698, %v3682
        %v4339 = vpack.c.b16 %v3699, %v3683
        %v4340 = vpack.c.b16 %v3700, %v3684
        %v4341 = vpack.c.b16 %v3701, %v3685
        %v4342 = vpack.c.b16 %v3702, %v3686
        %v4343 = vpack.c.b16 %v3703, %v3687
        %v4344 = vpack.c.b16 %v3704, %v3688
        %v4345 = vpack.c.b16 %v3705, %v3689
        %v4346 = vpack.c.b16 %v3706, %v3690
        %v4347 = vpack.c.b16 %v3707, %v3691
        %v4348 = vpack.c.b16 %v3708, %v3692
        %v4349 = vpack.c.b16 %v3709, %v3693
        %v4350 = vpack.c.b16 %v3710, %v3694
        %v4351 = vpack.c.b16 %v3711, %v3695
        %v4352 = vpack.c.b16 %v3712, %v3696
        %v4353 = vpack.c.b16 %v3713, %v3697
        %v4354 = vpack.c.b16 %v3730, %v3714
        %v4355 = vpack.c.b16 %v3731, %v3715
        %v4356 = vpack.c.b16 %v3732, %v3716
        %v4357 = vpack.c.b16 %v3733, %v3717
        %v4358 = vpack.c.b16 %v3734, %v3718
        %v4359 = vpack.c.b16 %v3735, %v3719
        %v4360 = vpack.c.b16 %v3736, %v3720
        %v4361 = vpack.c.b16 %v3737, %v3721
        %v4362 = vpack.c.b16 %v3738, %v3722
        %v4363 = vpack.c.b16 %v3739, %v3723
        %v4364 = vpack.c.b16 %v3740, %v3724
        %v4365 = vpack.c.b16 %v3741, %v3725
        %v4366 = vpack.c.b16 %v3742, %v3726
        %v4367 = vpack.c.b16 %v3743, %v3727
        %v4368 = vpack.c.b16 %v3744, %v3728
        %v4369 = vpack.c.b16 %v3745, %v3729
        %v4370 = vpack.c.b16 %v3762, %v3746
        %v4371 = vpack.c.b16 %v3763, %v3747
        %v4372 = vpack.c.b16 %v3764, %v3748
        %v4373 = vpack.c.b16 %v3765, %v3749
        %v4374 = vpack.c.b16 %v3766, %v3750
        %v4375 = vpack.c.b16 %v3767, %v3751
        %v4376 = vpack.c.b16 %v3768, %v3752
        %v4377 = vpack.c.b16 %v3769, %v3753
        %v4378 = vpack.c.b16 %v3770, %v3754
        %v4379 = vpack.c.b16 %v3771, %v3755
        %v4380 = vpack.c.b16 %v3772, %v3756
        %v4381 = vpack.c.b16 %v3773, %v3757
        %v4382 = vpack.c.b16 %v3774, %v3758
        %v4383 = vpack.c.b16 %v3775, %v3759
        %v4384 = vpack.c.b16 %v3776, %v3760
        %v4385 = vpack.c.b16 %v3777, %v3761
        %v4386 = vpack.c.b16 %v3794, %v3778
        %v4387 = vpack.c.b16 %v3795, %v3779
        %v4388 = vpack.c.b16 %v3796, %v3780
        %v4389 = vpack.c.b16 %v3797, %v3781
        %v4390 = vpack.c.b16 %v3798, %v3782
        %v4391 = vpack.c.b16 %v3799, %v3783
        %v4392 = vpack.c.b16 %v3800, %v3784
        %v4393 = vpack.c.b16 %v3801, %v3785
        %v4394 = vpack.c.b16 %v3802, %v3786
        %v4395 = vpack.c.b16 %v3803, %v3787
        %v4396 = vpack.c.b16 %v3804, %v3788
        %v4397 = vpack.c.b16 %v3805, %v3789
        %v4398 = vpack.c.b16 %v3806, %v3790
        %v4399 = vpack.c.b16 %v3807, %v3791
        %v4400 = vpack.c.b16 %v3808, %v3792
        %v4401 = vpack.c.b16 %v3809, %v3793
        %v4402 = vpack.c.b16 %v3826, %v3810
        %v4403 = vpack.c.b16 %v3827, %v3811
        %v4404 = vpack.c.b16 %v3828, %v3812
        %v4405 = vpack.c.b16 %v3829, %v3813
        %v4406 = vpack.c.b16 %v3830, %v3814
        %v4407 = vpack.c.b16 %v3831, %v3815
        %v4408 = vpack.c.b16 %v3832, %v3816
        %v4409 = vpack.c.b16 %v3833, %v3817
        %v4410 = vpack.c.b16 %v3834, %v3818
        %v4411 = vpack.c.b16 %v3835, %v3819
        %v4412 = vpack.c.b16 %v3836, %v3820
        %v4413 = vpack.c.b16 %v3837, %v3821
        %v4414 = vpack.c.b16 %v3838, %v3822
        %v4415 = vpack.c.b16 %v3839, %v3823
        %v4416 = vpack.c.b16 %v3840, %v3824
        %v4417 = vpack.c.b16 %v3841, %v3825
        %v4418 = vpack.c.b16 %v3858, %v3842
        %v4419 = vpack.c.b16 %v3859, %v3843
        %v4420 = vpack.c.b16 %v3860, %v3844
        %v4421 = vpack.c.b16 %v3861, %v3845
        %v4422 = vpack.c.b16 %v3862, %v3846
        %v4423 = vpack.c.b16 %v3863, %v3847
        %v4424 = vpack.c.b16 %v3864, %v3848
        %v4425 = vpack.c.b16 %v3865, %v3849
        %v4426 = vpack.c.b16 %v3866, %v3850
        %v4427 = vpack.c.b16 %v3867, %v3851
        %v4428 = vpack.c.b16 %v3868, %v3852
        %v4429 = vpack.c.b16 %v3869, %v3853
        %v4430 = vpack.c.b16 %v3870, %v3854
        %v4431 = vpack.c.b16 %v3871, %v3855
        %v4432 = vpack.c.b16 %v3872, %v3856
        %v4433 = vpack.c.b16 %v3873, %v3857
        %v4434 = vpack.c.b16 %v3890, %v3874
        %v4435 = vpack.c.b16 %v3891, %v3875
        %v4436 = vpack.c.b16 %v3892, %v3876
        %v4437 = vpack.c.b16 %v3893, %v3877
        %v4438 = vpack.c.b16 %v3894, %v3878
        %v4439 = vpack.c.b16 %v3895, %v3879
        %v4440 = vpack.c.b16 %v3896, %v3880
        %v4441 = vpack.c.b16 %v3897, %v3881
        %v4442 = vpack.c.b16 %v3898, %v3882
        %v4443 = vpack.c.b16 %v3899, %v3883
        %v4444 = vpack.c.b16 %v3900, %v3884
        %v4445 = vpack.c.b16 %v3901, %v3885
        %v4446 = vpack.c.b16 %v3902, %v3886
        %v4447 = vpack.c.b16 %v3903, %v3887
        %v4448 = vpack.c.b16 %v3904, %v3888
        %v4449 = vpack.c.b16 %v3905, %v3889
        %v4450 = vpack.c.b16 %v3922, %v3906
        %v4451 = vpack.c.b16 %v3923, %v3907
        %v4452 = vpack.c.b16 %v3924, %v3908
        %v4453 = vpack.c.b16 %v3925, %v3909
        %v4454 = vpack.c.b16 %v3926, %v3910
        %v4455 = vpack.c.b16 %v3927, %v3911
        %v4456 = vpack.c.b16 %v3928, %v3912
        %v4457 = vpack.c.b16 %v3929, %v3913
        %v4458 = vpack.c.b16 %v3930, %v3914
        %v4459 = vpack.c.b16 %v3931, %v3915
        %v4460 = vpack.c.b16 %v3932, %v3916
        %v4461 = vpack.c.b16 %v3933, %v3917
        %v4462 = vpack.c.b16 %v3934, %v3918
        %v4463 = vpack.c.b16 %v3935, %v3919
        %v4464 = vpack.c.b16 %v3936, %v3920
        %v4465 = vpack.c.b16 %v3937, %v3921
        %v4466 = vpack.c.b16 %v3954, %v3938
        %v4467 = vpack.c.b16 %v3955, %v3939
        %v4468 = vpack.c.b16 %v3956, %v3940
        %v4469 = vpack.c.b16 %v3957, %v3941
        %v4470 = vpack.c.b16 %v3958, %v3942
        %v4471 = vpack.c.b16 %v3959, %v3943
        %v4472 = vpack.c.b16 %v3960, %v3944
        %v4473 = vpack.c.b16 %v3961, %v3945
        %v4474 = vpack.c.b16 %v3962, %v3946
        %v4475 = vpack.c.b16 %v3963, %v3947
        %v4476 = vpack.c.b16 %v3964, %v3948
        %v4477 = vpack.c.b16 %v3965, %v3949
        %v4478 = vpack.c.b16 %v3966, %v3950
        %v4479 = vpack.c.b16 %v3967, %v3951
        %v4480 = vpack.c.b16 %v3968, %v3952
        %v4481 = vpack.c.b16 %v3969, %v3953
        %4994 = vmatpush.bf16.msra.mxu0 %v4082
        %4995 = vmatpush.bf16.msra.mxu0 %v4066
        %4996 = vmatpush.bf16.msra.mxu0 %v4050
        %4997 = vmatpush.bf16.msra.mxu0 %v4034
        %4998 = vmatpush.bf16.msra.mxu0 %v4018
        %4999 = vmatpush.bf16.msra.mxu0 %v4002
        %5000 = vmatpush.bf16.msra.mxu0 %v3986
        %5001 = vmatpush.bf16.msra.mxu0 %v3970
        %5002 = vmatmul.bf16.gmra.mxu0 %v2370
        %v5003 = vpop.f32.mrf.mxu0
        %v5004 = vadd.f32 %v2242, %v5003
        %v5005 = vpop.f32.mrf.mxu0
        %v5006 = vadd.f32 %v2242, %v5005
        %5007 = vmatmul.bf16.gmra.mxu0 %v2374
        %v5008 = vpop.f32.mrf.mxu0
        %v5009 = vadd.f32 %v2242, %v5008
        %v5010 = vpop.f32.mrf.mxu0
        %v5011 = vadd.f32 %v2242, %v5010
        %5012 = vmatmul.bf16.gmra.mxu0 %v2378
        %v5013 = vpop.f32.mrf.mxu0
        %v5014 = vadd.f32 %v2242, %v5013
        %v5015 = vpop.f32.mrf.mxu0
        %v5016 = vadd.f32 %v2242, %v5015
        %5017 = vmatmul.bf16.gmra.mxu0 %v2382
        %v5018 = vpop.f32.mrf.mxu0
        %v5019 = vadd.f32 %v2242, %v5018
        %v5020 = vpop.f32.mrf.mxu0
        %v5021 = vadd.f32 %v2242, %v5020
        %5022 = vmatmul.bf16.gmra.mxu0 %v2386
        %v5023 = vpop.f32.mrf.mxu0
        %v5024 = vadd.f32 %v2242, %v5023
        %v5025 = vpop.f32.mrf.mxu0
        %v5026 = vadd.f32 %v2242, %v5025
        %5027 = vmatmul.bf16.gmra.mxu0 %v2390
        %v5028 = vpop.f32.mrf.mxu0
        %v5029 = vadd.f32 %v2242, %v5028
        %v5030 = vpop.f32.mrf.mxu0
        %v5031 = vadd.f32 %v2242, %v5030
        %5032 = vmatmul.bf16.gmra.mxu0 %v2394
        %v5033 = vpop.f32.mrf.mxu0
        %v5034 = vadd.f32 %v2242, %v5033
        %v5035 = vpop.f32.mrf.mxu0
        %v5036 = vadd.f32 %v2242, %v5035
        %5037 = vmatmul.bf16.gmra.mxu0 %v2398
        %v5038 = vpop.f32.mrf.mxu0
        %v5039 = vadd.f32 %v2242, %v5038
        %v5040 = vpop.f32.mrf.mxu0
        %v5041 = vadd.f32 %v2242, %v5040
        %5042 = vdwg.mxu0
        %5043 = vmatpush.bf16.msra.mxu0 %v4210
        %5044 = vmatpush.bf16.msra.mxu0 %v4194
        %5045 = vmatpush.bf16.msra.mxu0 %v4178
        %5046 = vmatpush.bf16.msra.mxu0 %v4162
        %5047 = vmatpush.bf16.msra.mxu0 %v4146
        %5048 = vmatpush.bf16.msra.mxu0 %v4130
        %5049 = vmatpush.bf16.msra.mxu0 %v4114
        %5050 = vmatpush.bf16.msra.mxu0 %v4098
        %5051 = vmatmul.bf16.gmra.mxu0 %v2371
        %v5052 = vpop.f32.mrf.mxu0
        %v5053 = vadd.f32 %v5004, %v5052
        %v5054 = vpop.f32.mrf.mxu0
        %v5055 = vadd.f32 %v5006, %v5054
        %5056 = vmatmul.bf16.gmra.mxu0 %v2375
        %v5057 = vpop.f32.mrf.mxu0
        %v5058 = vadd.f32 %v5009, %v5057
        %v5059 = vpop.f32.mrf.mxu0
        %v5060 = vadd.f32 %v5011, %v5059
        %5061 = vmatmul.bf16.gmra.mxu0 %v2379
        %v5062 = vpop.f32.mrf.mxu0
        %v5063 = vadd.f32 %v5014, %v5062
        %v5064 = vpop.f32.mrf.mxu0
        %v5065 = vadd.f32 %v5016, %v5064
        %5066 = vmatmul.bf16.gmra.mxu0 %v2383
        %v5067 = vpop.f32.mrf.mxu0
        %v5068 = vadd.f32 %v5019, %v5067
        %v5069 = vpop.f32.mrf.mxu0
        %v5070 = vadd.f32 %v5021, %v5069
        %5071 = vmatmul.bf16.gmra.mxu0 %v2387
        %v5072 = vpop.f32.mrf.mxu0
        %v5073 = vadd.f32 %v5024, %v5072
        %v5074 = vpop.f32.mrf.mxu0
        %v5075 = vadd.f32 %v5026, %v5074
        %5076 = vmatmul.bf16.gmra.mxu0 %v2391
        %v5077 = vpop.f32.mrf.mxu0
        %v5078 = vadd.f32 %v5029, %v5077
        %v5079 = vpop.f32.mrf.mxu0
        %v5080 = vadd.f32 %v5031, %v5079
        %5081 = vmatmul.bf16.gmra.mxu0 %v2395
        %v5082 = vpop.f32.mrf.mxu0
        %v5083 = vadd.f32 %v5034, %v5082
        %v5084 = vpop.f32.mrf.mxu0
        %v5085 = vadd.f32 %v5036, %v5084
        %5086 = vmatmul.bf16.gmra.mxu0 %v2399
        %v5087 = vpop.f32.mrf.mxu0
        %v5088 = vadd.f32 %v5039, %v5087
        %v5089 = vpop.f32.mrf.mxu0
        %v5090 = vadd.f32 %v5041, %v5089
        %5091 = vdwg.mxu0
        %5092 = vmatpush.bf16.msra.mxu0 %v4338
        %5093 = vmatpush.bf16.msra.mxu0 %v4322
        %5094 = vmatpush.bf16.msra.mxu0 %v4306
        %5095 = vmatpush.bf16.msra.mxu0 %v4290
        %5096 = vmatpush.bf16.msra.mxu0 %v4274
        %5097 = vmatpush.bf16.msra.mxu0 %v4258
        %5098 = vmatpush.bf16.msra.mxu0 %v4242
        %5099 = vmatpush.bf16.msra.mxu0 %v4226
        %5100 = vmatmul.bf16.gmra.mxu0 %v2372
        %v5101 = vpop.f32.mrf.mxu0
        %v5102 = vadd.f32 %v5053, %v5101
        %v5103 = vpop.f32.mrf.mxu0
        %v5104 = vadd.f32 %v5055, %v5103
        %5105 = vmatmul.bf16.gmra.mxu0 %v2376
        %v5106 = vpop.f32.mrf.mxu0
        %v5107 = vadd.f32 %v5058, %v5106
        %v5108 = vpop.f32.mrf.mxu0
        %v5109 = vadd.f32 %v5060, %v5108
        %5110 = vmatmul.bf16.gmra.mxu0 %v2380
        %v5111 = vpop.f32.mrf.mxu0
        %v5112 = vadd.f32 %v5063, %v5111
        %v5113 = vpop.f32.mrf.mxu0
        %v5114 = vadd.f32 %v5065, %v5113
        %5115 = vmatmul.bf16.gmra.mxu0 %v2384
        %v5116 = vpop.f32.mrf.mxu0
        %v5117 = vadd.f32 %v5068, %v5116
        %v5118 = vpop.f32.mrf.mxu0
        %v5119 = vadd.f32 %v5070, %v5118
        %5120 = vmatmul.bf16.gmra.mxu0 %v2388
        %v5121 = vpop.f32.mrf.mxu0
        %v5122 = vadd.f32 %v5073, %v5121
        %v5123 = vpop.f32.mrf.mxu0
        %v5124 = vadd.f32 %v5075, %v5123
        %5125 = vmatmul.bf16.gmra.mxu0 %v2392
        %v5126 = vpop.f32.mrf.mxu0
        %v5127 = vadd.f32 %v5078, %v5126
        %v5128 = vpop.f32.mrf.mxu0
        %v5129 = vadd.f32 %v5080, %v5128
        %5130 = vmatmul.bf16.gmra.mxu0 %v2396
        %v5131 = vpop.f32.mrf.mxu0
        %v5132 = vadd.f32 %v5083, %v5131
        %v5133 = vpop.f32.mrf.mxu0
        %v5134 = vadd.f32 %v5085, %v5133
        %5135 = vmatmul.bf16.gmra.mxu0 %v2400
        %v5136 = vpop.f32.mrf.mxu0
        %v5137 = vadd.f32 %v5088, %v5136
        %v5138 = vpop.f32.mrf.mxu0
        %v5139 = vadd.f32 %v5090, %v5138
        %5140 = vdwg.mxu0
        %5141 = vmatpush.bf16.msra.mxu0 %v4466
        %5142 = vmatpush.bf16.msra.mxu0 %v4450
        %5143 = vmatpush.bf16.msra.mxu0 %v4434
        %5144 = vmatpush.bf16.msra.mxu0 %v4418
        %5145 = vmatpush.bf16.msra.mxu0 %v4402
        %5146 = vmatpush.bf16.msra.mxu0 %v4386
        %5147 = vmatpush.bf16.msra.mxu0 %v4370
        %5148 = vmatpush.bf16.msra.mxu0 %v4354
        %5149 = vmatmul.bf16.gmra.mxu0 %v2373
        %v5150 = vpop.f32.mrf.mxu0
        %v5151 = vadd.f32 %v5102, %v5150
        %v5152 = vpop.f32.mrf.mxu0
        %v5153 = vadd.f32 %v5104, %v5152
        %5154 = vmatmul.bf16.gmra.mxu0 %v2377
        %v5155 = vpop.f32.mrf.mxu0
        %v5156 = vadd.f32 %v5107, %v5155
        %v5157 = vpop.f32.mrf.mxu0
        %v5158 = vadd.f32 %v5109, %v5157
        %5159 = vmatmul.bf16.gmra.mxu0 %v2381
        %v5160 = vpop.f32.mrf.mxu0
        %v5161 = vadd.f32 %v5112, %v5160
        %v5162 = vpop.f32.mrf.mxu0
        %v5163 = vadd.f32 %v5114, %v5162
        %5164 = vmatmul.bf16.gmra.mxu0 %v2385
        %v5165 = vpop.f32.mrf.mxu0
        %v5166 = vadd.f32 %v5117, %v5165
        %v5167 = vpop.f32.mrf.mxu0
        %v5168 = vadd.f32 %v5119, %v5167
        %5169 = vmatmul.bf16.gmra.mxu0 %v2389
        %v5170 = vpop.f32.mrf.mxu0
        %v5171 = vadd.f32 %v5122, %v5170
        %v5172 = vpop.f32.mrf.mxu0
        %v5173 = vadd.f32 %v5124, %v5172
        %5174 = vmatmul.bf16.gmra.mxu0 %v2393
        %v5175 = vpop.f32.mrf.mxu0
        %v5176 = vadd.f32 %v5127, %v5175
        %v5177 = vpop.f32.mrf.mxu0
        %v5178 = vadd.f32 %v5129, %v5177
        %5179 = vmatmul.bf16.gmra.mxu0 %v2397
        %v5180 = vpop.f32.mrf.mxu0
        %v5181 = vadd.f32 %v5132, %v5180
        %v5182 = vpop.f32.mrf.mxu0
        %v5183 = vadd.f32 %v5134, %v5182
        %5184 = vmatmul.bf16.gmra.mxu0 %v2401
        %v5185 = vpop.f32.mrf.mxu0
        %v5186 = vadd.f32 %v5137, %v5185
        %v5187 = vpop.f32.mrf.mxu0
        %v5188 = vadd.f32 %v5139, %v5187
        %5189 = vdwg.mxu0
        %5190 = vmatpush.bf16.msra.mxu0 %v4083
        %5191 = vmatpush.bf16.msra.mxu0 %v4067
        %5192 = vmatpush.bf16.msra.mxu0 %v4051
        %5193 = vmatpush.bf16.msra.mxu0 %v4035
        %5194 = vmatpush.bf16.msra.mxu0 %v4019
        %5195 = vmatpush.bf16.msra.mxu0 %v4003
        %5196 = vmatpush.bf16.msra.mxu0 %v3987
        %5197 = vmatpush.bf16.msra.mxu0 %v3971
        %5198 = vmatmul.bf16.gmra.mxu0 %v2370
        %v5199 = vpop.f32.mrf.mxu0
        %v5200 = vadd.f32 %v2243, %v5199
        %v5201 = vpop.f32.mrf.mxu0
        %v5202 = vadd.f32 %v2243, %v5201
        %5203 = vmatmul.bf16.gmra.mxu0 %v2374
        %v5204 = vpop.f32.mrf.mxu0
        %v5205 = vadd.f32 %v2243, %v5204
        %v5206 = vpop.f32.mrf.mxu0
        %v5207 = vadd.f32 %v2243, %v5206
        %5208 = vmatmul.bf16.gmra.mxu0 %v2378
        %v5209 = vpop.f32.mrf.mxu0
        %v5210 = vadd.f32 %v2243, %v5209
        %v5211 = vpop.f32.mrf.mxu0
        %v5212 = vadd.f32 %v2243, %v5211
        %5213 = vmatmul.bf16.gmra.mxu0 %v2382
        %v5214 = vpop.f32.mrf.mxu0
        %v5215 = vadd.f32 %v2243, %v5214
        %v5216 = vpop.f32.mrf.mxu0
        %v5217 = vadd.f32 %v2243, %v5216
        %5218 = vmatmul.bf16.gmra.mxu0 %v2386
        %v5219 = vpop.f32.mrf.mxu0
        %v5220 = vadd.f32 %v2243, %v5219
        %v5221 = vpop.f32.mrf.mxu0
        %v5222 = vadd.f32 %v2243, %v5221
        %5223 = vmatmul.bf16.gmra.mxu0 %v2390
        %v5224 = vpop.f32.mrf.mxu0
        %v5225 = vadd.f32 %v2243, %v5224
        %v5226 = vpop.f32.mrf.mxu0
        %v5227 = vadd.f32 %v2243, %v5226
        %5228 = vmatmul.bf16.gmra.mxu0 %v2394
        %v5229 = vpop.f32.mrf.mxu0
        %v5230 = vadd.f32 %v2243, %v5229
        %v5231 = vpop.f32.mrf.mxu0
        %v5232 = vadd.f32 %v2243, %v5231
        %5233 = vmatmul.bf16.gmra.mxu0 %v2398
        %v5234 = vpop.f32.mrf.mxu0
        %v5235 = vadd.f32 %v2243, %v5234
        %v5236 = vpop.f32.mrf.mxu0
        %v5237 = vadd.f32 %v2243, %v5236
        %5238 = vdwg.mxu0
        %5239 = vmatpush.bf16.msra.mxu0 %v4211
        %5240 = vmatpush.bf16.msra.mxu0 %v4195
        %5241 = vmatpush.bf16.msra.mxu0 %v4179
        %5242 = vmatpush.bf16.msra.mxu0 %v4163
        %5243 = vmatpush.bf16.msra.mxu0 %v4147
        %5244 = vmatpush.bf16.msra.mxu0 %v4131
        %5245 = vmatpush.bf16.msra.mxu0 %v4115
        %5246 = vmatpush.bf16.msra.mxu0 %v4099
        %5247 = vmatmul.bf16.gmra.mxu0 %v2371
        %v5248 = vpop.f32.mrf.mxu0
        %v5249 = vadd.f32 %v5200, %v5248
        %v5250 = vpop.f32.mrf.mxu0
        %v5251 = vadd.f32 %v5202, %v5250
        %5252 = vmatmul.bf16.gmra.mxu0 %v2375
        %v5253 = vpop.f32.mrf.mxu0
        %v5254 = vadd.f32 %v5205, %v5253
        %v5255 = vpop.f32.mrf.mxu0
        %v5256 = vadd.f32 %v5207, %v5255
        %5257 = vmatmul.bf16.gmra.mxu0 %v2379
        %v5258 = vpop.f32.mrf.mxu0
        %v5259 = vadd.f32 %v5210, %v5258
        %v5260 = vpop.f32.mrf.mxu0
        %v5261 = vadd.f32 %v5212, %v5260
        %5262 = vmatmul.bf16.gmra.mxu0 %v2383
        %v5263 = vpop.f32.mrf.mxu0
        %v5264 = vadd.f32 %v5215, %v5263
        %v5265 = vpop.f32.mrf.mxu0
        %v5266 = vadd.f32 %v5217, %v5265
        %5267 = vmatmul.bf16.gmra.mxu0 %v2387
        %v5268 = vpop.f32.mrf.mxu0
        %v5269 = vadd.f32 %v5220, %v5268
        %v5270 = vpop.f32.mrf.mxu0
        %v5271 = vadd.f32 %v5222, %v5270
        %5272 = vmatmul.bf16.gmra.mxu0 %v2391
        %v5273 = vpop.f32.mrf.mxu0
        %v5274 = vadd.f32 %v5225, %v5273
        %v5275 = vpop.f32.mrf.mxu0
        %v5276 = vadd.f32 %v5227, %v5275
        %5277 = vmatmul.bf16.gmra.mxu0 %v2395
        %v5278 = vpop.f32.mrf.mxu0
        %v5279 = vadd.f32 %v5230, %v5278
        %v5280 = vpop.f32.mrf.mxu0
        %v5281 = vadd.f32 %v5232, %v5280
        %5282 = vmatmul.bf16.gmra.mxu0 %v2399
        %v5283 = vpop.f32.mrf.mxu0
        %v5284 = vadd.f32 %v5235, %v5283
        %v5285 = vpop.f32.mrf.mxu0
        %v5286 = vadd.f32 %v5237, %v5285
        %5287 = vdwg.mxu0
        %5288 = vmatpush.bf16.msra.mxu0 %v4339
        %5289 = vmatpush.bf16.msra.mxu0 %v4323
        %5290 = vmatpush.bf16.msra.mxu0 %v4307
        %5291 = vmatpush.bf16.msra.mxu0 %v4291
        %5292 = vmatpush.bf16.msra.mxu0 %v4275
        %5293 = vmatpush.bf16.msra.mxu0 %v4259
        %5294 = vmatpush.bf16.msra.mxu0 %v4243
        %5295 = vmatpush.bf16.msra.mxu0 %v4227
        %5296 = vmatmul.bf16.gmra.mxu0 %v2372
        %v5297 = vpop.f32.mrf.mxu0
        %v5298 = vadd.f32 %v5249, %v5297
        %v5299 = vpop.f32.mrf.mxu0
        %v5300 = vadd.f32 %v5251, %v5299
        %5301 = vmatmul.bf16.gmra.mxu0 %v2376
        %v5302 = vpop.f32.mrf.mxu0
        %v5303 = vadd.f32 %v5254, %v5302
        %v5304 = vpop.f32.mrf.mxu0
        %v5305 = vadd.f32 %v5256, %v5304
        %5306 = vmatmul.bf16.gmra.mxu0 %v2380
        %v5307 = vpop.f32.mrf.mxu0
        %v5308 = vadd.f32 %v5259, %v5307
        %v5309 = vpop.f32.mrf.mxu0
        %v5310 = vadd.f32 %v5261, %v5309
        %5311 = vmatmul.bf16.gmra.mxu0 %v2384
        %v5312 = vpop.f32.mrf.mxu0
        %v5313 = vadd.f32 %v5264, %v5312
        %v5314 = vpop.f32.mrf.mxu0
        %v5315 = vadd.f32 %v5266, %v5314
        %5316 = vmatmul.bf16.gmra.mxu0 %v2388
        %v5317 = vpop.f32.mrf.mxu0
        %v5318 = vadd.f32 %v5269, %v5317
        %v5319 = vpop.f32.mrf.mxu0
        %v5320 = vadd.f32 %v5271, %v5319
        %5321 = vmatmul.bf16.gmra.mxu0 %v2392
        %v5322 = vpop.f32.mrf.mxu0
        %v5323 = vadd.f32 %v5274, %v5322
        %v5324 = vpop.f32.mrf.mxu0
        %v5325 = vadd.f32 %v5276, %v5324
        %5326 = vmatmul.bf16.gmra.mxu0 %v2396
        %v5327 = vpop.f32.mrf.mxu0
        %v5328 = vadd.f32 %v5279, %v5327
        %v5329 = vpop.f32.mrf.mxu0
        %v5330 = vadd.f32 %v5281, %v5329
        %5331 = vmatmul.bf16.gmra.mxu0 %v2400
        %v5332 = vpop.f32.mrf.mxu0
        %v5333 = vadd.f32 %v5284, %v5332
        %v5334 = vpop.f32.mrf.mxu0
        %v5335 = vadd.f32 %v5286, %v5334
        %5336 = vdwg.mxu0
        %5337 = vmatpush.bf16.msra.mxu0 %v4467
        %5338 = vmatpush.bf16.msra.mxu0 %v4451
        %5339 = vmatpush.bf16.msra.mxu0 %v4435
        %5340 = vmatpush.bf16.msra.mxu0 %v4419
        %5341 = vmatpush.bf16.msra.mxu0 %v4403
        %5342 = vmatpush.bf16.msra.mxu0 %v4387
        %5343 = vmatpush.bf16.msra.mxu0 %v4371
        %5344 = vmatpush.bf16.msra.mxu0 %v4355
        %5345 = vmatmul.bf16.gmra.mxu0 %v2373
        %v5346 = vpop.f32.mrf.mxu0
        %v5347 = vadd.f32 %v5298, %v5346
        %v5348 = vpop.f32.mrf.mxu0
        %v5349 = vadd.f32 %v5300, %v5348
        %5350 = vmatmul.bf16.gmra.mxu0 %v2377
        %v5351 = vpop.f32.mrf.mxu0
        %v5352 = vadd.f32 %v5303, %v5351
        %v5353 = vpop.f32.mrf.mxu0
        %v5354 = vadd.f32 %v5305, %v5353
        %5355 = vmatmul.bf16.gmra.mxu0 %v2381
        %v5356 = vpop.f32.mrf.mxu0
        %v5357 = vadd.f32 %v5308, %v5356
        %v5358 = vpop.f32.mrf.mxu0
        %v5359 = vadd.f32 %v5310, %v5358
        %5360 = vmatmul.bf16.gmra.mxu0 %v2385
        %v5361 = vpop.f32.mrf.mxu0
        %v5362 = vadd.f32 %v5313, %v5361
        %v5363 = vpop.f32.mrf.mxu0
        %v5364 = vadd.f32 %v5315, %v5363
        %5365 = vmatmul.bf16.gmra.mxu0 %v2389
        %v5366 = vpop.f32.mrf.mxu0
        %v5367 = vadd.f32 %v5318, %v5366
        %v5368 = vpop.f32.mrf.mxu0
        %v5369 = vadd.f32 %v5320, %v5368
        %5370 = vmatmul.bf16.gmra.mxu0 %v2393
        %v5371 = vpop.f32.mrf.mxu0
        %v5372 = vadd.f32 %v5323, %v5371
        %v5373 = vpop.f32.mrf.mxu0
        %v5374 = vadd.f32 %v5325, %v5373
        %5375 = vmatmul.bf16.gmra.mxu0 %v2397
        %v5376 = vpop.f32.mrf.mxu0
        %v5377 = vadd.f32 %v5328, %v5376
        %v5378 = vpop.f32.mrf.mxu0
        %v5379 = vadd.f32 %v5330, %v5378
        %5380 = vmatmul.bf16.gmra.mxu0 %v2401
        %v5381 = vpop.f32.mrf.mxu0
        %v5382 = vadd.f32 %v5333, %v5381
        %v5383 = vpop.f32.mrf.mxu0
        %v5384 = vadd.f32 %v5335, %v5383
        %5385 = vdwg.mxu0
        %5386 = vmatpush.bf16.msra.mxu0 %v4084
        %5387 = vmatpush.bf16.msra.mxu0 %v4068
        %5388 = vmatpush.bf16.msra.mxu0 %v4052
        %5389 = vmatpush.bf16.msra.mxu0 %v4036
        %5390 = vmatpush.bf16.msra.mxu0 %v4020
        %5391 = vmatpush.bf16.msra.mxu0 %v4004
        %5392 = vmatpush.bf16.msra.mxu0 %v3988
        %5393 = vmatpush.bf16.msra.mxu0 %v3972
        %5394 = vmatmul.bf16.gmra.mxu0 %v2370
        %v5395 = vpop.f32.mrf.mxu0
        %v5396 = vadd.f32 %v2244, %v5395
        %v5397 = vpop.f32.mrf.mxu0
        %v5398 = vadd.f32 %v2244, %v5397
        %5399 = vmatmul.bf16.gmra.mxu0 %v2374
        %v5400 = vpop.f32.mrf.mxu0
        %v5401 = vadd.f32 %v2244, %v5400
        %v5402 = vpop.f32.mrf.mxu0
        %v5403 = vadd.f32 %v2244, %v5402
        %5404 = vmatmul.bf16.gmra.mxu0 %v2378
        %v5405 = vpop.f32.mrf.mxu0
        %v5406 = vadd.f32 %v2244, %v5405
        %v5407 = vpop.f32.mrf.mxu0
        %v5408 = vadd.f32 %v2244, %v5407
        %5409 = vmatmul.bf16.gmra.mxu0 %v2382
        %v5410 = vpop.f32.mrf.mxu0
        %v5411 = vadd.f32 %v2244, %v5410
        %v5412 = vpop.f32.mrf.mxu0
        %v5413 = vadd.f32 %v2244, %v5412
        %5414 = vmatmul.bf16.gmra.mxu0 %v2386
        %v5415 = vpop.f32.mrf.mxu0
        %v5416 = vadd.f32 %v2244, %v5415
        %v5417 = vpop.f32.mrf.mxu0
        %v5418 = vadd.f32 %v2244, %v5417
        %5419 = vmatmul.bf16.gmra.mxu0 %v2390
        %v5420 = vpop.f32.mrf.mxu0
        %v5421 = vadd.f32 %v2244, %v5420
        %v5422 = vpop.f32.mrf.mxu0
        %v5423 = vadd.f32 %v2244, %v5422
        %5424 = vmatmul.bf16.gmra.mxu0 %v2394
        %v5425 = vpop.f32.mrf.mxu0
        %v5426 = vadd.f32 %v2244, %v5425
        %v5427 = vpop.f32.mrf.mxu0
        %v5428 = vadd.f32 %v2244, %v5427
        %5429 = vmatmul.bf16.gmra.mxu0 %v2398
        %v5430 = vpop.f32.mrf.mxu0
        %v5431 = vadd.f32 %v2244, %v5430
        %v5432 = vpop.f32.mrf.mxu0
        %v5433 = vadd.f32 %v2244, %v5432
        %5434 = vdwg.mxu0
        %5435 = vmatpush.bf16.msra.mxu0 %v4212
        %5436 = vmatpush.bf16.msra.mxu0 %v4196
        %5437 = vmatpush.bf16.msra.mxu0 %v4180
        %5438 = vmatpush.bf16.msra.mxu0 %v4164
        %5439 = vmatpush.bf16.msra.mxu0 %v4148
        %5440 = vmatpush.bf16.msra.mxu0 %v4132
        %5441 = vmatpush.bf16.msra.mxu0 %v4116
        %5442 = vmatpush.bf16.msra.mxu0 %v4100
        %5443 = vmatmul.bf16.gmra.mxu0 %v2371
        %v5444 = vpop.f32.mrf.mxu0
        %v5445 = vadd.f32 %v5396, %v5444
        %v5446 = vpop.f32.mrf.mxu0
        %v5447 = vadd.f32 %v5398, %v5446
        %5448 = vmatmul.bf16.gmra.mxu0 %v2375
        %v5449 = vpop.f32.mrf.mxu0
        %v5450 = vadd.f32 %v5401, %v5449
        %v5451 = vpop.f32.mrf.mxu0
        %v5452 = vadd.f32 %v5403, %v5451
        %5453 = vmatmul.bf16.gmra.mxu0 %v2379
        %v5454 = vpop.f32.mrf.mxu0
        %v5455 = vadd.f32 %v5406, %v5454
        %v5456 = vpop.f32.mrf.mxu0
        %v5457 = vadd.f32 %v5408, %v5456
        %5458 = vmatmul.bf16.gmra.mxu0 %v2383
        %v5459 = vpop.f32.mrf.mxu0
        %v5460 = vadd.f32 %v5411, %v5459
        %v5461 = vpop.f32.mrf.mxu0
        %v5462 = vadd.f32 %v5413, %v5461
        %5463 = vmatmul.bf16.gmra.mxu0 %v2387
        %v5464 = vpop.f32.mrf.mxu0
        %v5465 = vadd.f32 %v5416, %v5464
        %v5466 = vpop.f32.mrf.mxu0
        %v5467 = vadd.f32 %v5418, %v5466
        %5468 = vmatmul.bf16.gmra.mxu0 %v2391
        %v5469 = vpop.f32.mrf.mxu0
        %v5470 = vadd.f32 %v5421, %v5469
        %v5471 = vpop.f32.mrf.mxu0
        %v5472 = vadd.f32 %v5423, %v5471
        %5473 = vmatmul.bf16.gmra.mxu0 %v2395
        %v5474 = vpop.f32.mrf.mxu0
        %v5475 = vadd.f32 %v5426, %v5474
        %v5476 = vpop.f32.mrf.mxu0
        %v5477 = vadd.f32 %v5428, %v5476
        %5478 = vmatmul.bf16.gmra.mxu0 %v2399
        %v5479 = vpop.f32.mrf.mxu0
        %v5480 = vadd.f32 %v5431, %v5479
        %v5481 = vpop.f32.mrf.mxu0
        %v5482 = vadd.f32 %v5433, %v5481
        %5483 = vdwg.mxu0
        %5484 = vmatpush.bf16.msra.mxu0 %v4340
        %5485 = vmatpush.bf16.msra.mxu0 %v4324
        %5486 = vmatpush.bf16.msra.mxu0 %v4308
        %5487 = vmatpush.bf16.msra.mxu0 %v4292
        %5488 = vmatpush.bf16.msra.mxu0 %v4276
        %5489 = vmatpush.bf16.msra.mxu0 %v4260
        %5490 = vmatpush.bf16.msra.mxu0 %v4244
        %5491 = vmatpush.bf16.msra.mxu0 %v4228
        %5492 = vmatmul.bf16.gmra.mxu0 %v2372
        %v5493 = vpop.f32.mrf.mxu0
        %v5494 = vadd.f32 %v5445, %v5493
        %v5495 = vpop.f32.mrf.mxu0
        %v5496 = vadd.f32 %v5447, %v5495
        %5497 = vmatmul.bf16.gmra.mxu0 %v2376
        %v5498 = vpop.f32.mrf.mxu0
        %v5499 = vadd.f32 %v5450, %v5498
        %v5500 = vpop.f32.mrf.mxu0
        %v5501 = vadd.f32 %v5452, %v5500
        %5502 = vmatmul.bf16.gmra.mxu0 %v2380
        %v5503 = vpop.f32.mrf.mxu0
        %v5504 = vadd.f32 %v5455, %v5503
        %v5505 = vpop.f32.mrf.mxu0
        %v5506 = vadd.f32 %v5457, %v5505
        %5507 = vmatmul.bf16.gmra.mxu0 %v2384
        %v5508 = vpop.f32.mrf.mxu0
        %v5509 = vadd.f32 %v5460, %v5508
        %v5510 = vpop.f32.mrf.mxu0
        %v5511 = vadd.f32 %v5462, %v5510
        %5512 = vmatmul.bf16.gmra.mxu0 %v2388
        %v5513 = vpop.f32.mrf.mxu0
        %v5514 = vadd.f32 %v5465, %v5513
        %v5515 = vpop.f32.mrf.mxu0
        %v5516 = vadd.f32 %v5467, %v5515
        %5517 = vmatmul.bf16.gmra.mxu0 %v2392
        %v5518 = vpop.f32.mrf.mxu0
        %v5519 = vadd.f32 %v5470, %v5518
        %v5520 = vpop.f32.mrf.mxu0
        %v5521 = vadd.f32 %v5472, %v5520
        %5522 = vmatmul.bf16.gmra.mxu0 %v2396
        %v5523 = vpop.f32.mrf.mxu0
        %v5524 = vadd.f32 %v5475, %v5523
        %v5525 = vpop.f32.mrf.mxu0
        %v5526 = vadd.f32 %v5477, %v5525
        %5527 = vmatmul.bf16.gmra.mxu0 %v2400
        %v5528 = vpop.f32.mrf.mxu0
        %v5529 = vadd.f32 %v5480, %v5528
        %v5530 = vpop.f32.mrf.mxu0
        %v5531 = vadd.f32 %v5482, %v5530
        %5532 = vdwg.mxu0
        %5533 = vmatpush.bf16.msra.mxu0 %v4468
        %5534 = vmatpush.bf16.msra.mxu0 %v4452
        %5535 = vmatpush.bf16.msra.mxu0 %v4436
        %5536 = vmatpush.bf16.msra.mxu0 %v4420
        %5537 = vmatpush.bf16.msra.mxu0 %v4404
        %5538 = vmatpush.bf16.msra.mxu0 %v4388
        %5539 = vmatpush.bf16.msra.mxu0 %v4372
        %5540 = vmatpush.bf16.msra.mxu0 %v4356
        %5541 = vmatmul.bf16.gmra.mxu0 %v2373
        %v5542 = vpop.f32.mrf.mxu0
        %v5543 = vadd.f32 %v5494, %v5542
        %v5544 = vpop.f32.mrf.mxu0
        %v5545 = vadd.f32 %v5496, %v5544
        %5546 = vmatmul.bf16.gmra.mxu0 %v2377
        %v5547 = vpop.f32.mrf.mxu0
        %v5548 = vadd.f32 %v5499, %v5547
        %v5549 = vpop.f32.mrf.mxu0
        %v5550 = vadd.f32 %v5501, %v5549
        %5551 = vmatmul.bf16.gmra.mxu0 %v2381
        %v5552 = vpop.f32.mrf.mxu0
        %v5553 = vadd.f32 %v5504, %v5552
        %v5554 = vpop.f32.mrf.mxu0
        %v5555 = vadd.f32 %v5506, %v5554
        %5556 = vmatmul.bf16.gmra.mxu0 %v2385
        %v5557 = vpop.f32.mrf.mxu0
        %v5558 = vadd.f32 %v5509, %v5557
        %v5559 = vpop.f32.mrf.mxu0
        %v5560 = vadd.f32 %v5511, %v5559
        %5561 = vmatmul.bf16.gmra.mxu0 %v2389
        %v5562 = vpop.f32.mrf.mxu0
        %v5563 = vadd.f32 %v5514, %v5562
        %v5564 = vpop.f32.mrf.mxu0
        %v5565 = vadd.f32 %v5516, %v5564
        %5566 = vmatmul.bf16.gmra.mxu0 %v2393
        %v5567 = vpop.f32.mrf.mxu0
        %v5568 = vadd.f32 %v5519, %v5567
        %v5569 = vpop.f32.mrf.mxu0
        %v5570 = vadd.f32 %v5521, %v5569
        %5571 = vmatmul.bf16.gmra.mxu0 %v2397
        %v5572 = vpop.f32.mrf.mxu0
        %v5573 = vadd.f32 %v5524, %v5572
        %v5574 = vpop.f32.mrf.mxu0
        %v5575 = vadd.f32 %v5526, %v5574
        %5576 = vmatmul.bf16.gmra.mxu0 %v2401
        %v5577 = vpop.f32.mrf.mxu0
        %v5578 = vadd.f32 %v5529, %v5577
        %v5579 = vpop.f32.mrf.mxu0
        %v5580 = vadd.f32 %v5531, %v5579
        %5581 = vdwg.mxu0
        %5582 = vmatpush.bf16.msra.mxu0 %v4085
        %5583 = vmatpush.bf16.msra.mxu0 %v4069
        %5584 = vmatpush.bf16.msra.mxu0 %v4053
        %5585 = vmatpush.bf16.msra.mxu0 %v4037
        %5586 = vmatpush.bf16.msra.mxu0 %v4021
        %5587 = vmatpush.bf16.msra.mxu0 %v4005
        %5588 = vmatpush.bf16.msra.mxu0 %v3989
        %5589 = vmatpush.bf16.msra.mxu0 %v3973
        %5590 = vmatmul.bf16.gmra.mxu0 %v2370
        %v5591 = vpop.f32.mrf.mxu0
        %v5592 = vadd.f32 %v2245, %v5591
        %v5593 = vpop.f32.mrf.mxu0
        %v5594 = vadd.f32 %v2245, %v5593
        %5595 = vmatmul.bf16.gmra.mxu0 %v2374
        %v5596 = vpop.f32.mrf.mxu0
        %v5597 = vadd.f32 %v2245, %v5596
        %v5598 = vpop.f32.mrf.mxu0
        %v5599 = vadd.f32 %v2245, %v5598
        %5600 = vmatmul.bf16.gmra.mxu0 %v2378
        %v5601 = vpop.f32.mrf.mxu0
        %v5602 = vadd.f32 %v2245, %v5601
        %v5603 = vpop.f32.mrf.mxu0
        %v5604 = vadd.f32 %v2245, %v5603
        %5605 = vmatmul.bf16.gmra.mxu0 %v2382
        %v5606 = vpop.f32.mrf.mxu0
        %v5607 = vadd.f32 %v2245, %v5606
        %v5608 = vpop.f32.mrf.mxu0
        %v5609 = vadd.f32 %v2245, %v5608
        %5610 = vmatmul.bf16.gmra.mxu0 %v2386
        %v5611 = vpop.f32.mrf.mxu0
        %v5612 = vadd.f32 %v2245, %v5611
        %v5613 = vpop.f32.mrf.mxu0
        %v5614 = vadd.f32 %v2245, %v5613
        %5615 = vmatmul.bf16.gmra.mxu0 %v2390
        %v5616 = vpop.f32.mrf.mxu0
        %v5617 = vadd.f32 %v2245, %v5616
        %v5618 = vpop.f32.mrf.mxu0
        %v5619 = vadd.f32 %v2245, %v5618
        %5620 = vmatmul.bf16.gmra.mxu0 %v2394
        %v5621 = vpop.f32.mrf.mxu0
        %v5622 = vadd.f32 %v2245, %v5621
        %v5623 = vpop.f32.mrf.mxu0
        %v5624 = vadd.f32 %v2245, %v5623
        %5625 = vmatmul.bf16.gmra.mxu0 %v2398
        %v5626 = vpop.f32.mrf.mxu0
        %v5627 = vadd.f32 %v2245, %v5626
        %v5628 = vpop.f32.mrf.mxu0
        %v5629 = vadd.f32 %v2245, %v5628
        %5630 = vdwg.mxu0
        %5631 = vmatpush.bf16.msra.mxu0 %v4213
        %5632 = vmatpush.bf16.msra.mxu0 %v4197
        %5633 = vmatpush.bf16.msra.mxu0 %v4181
        %5634 = vmatpush.bf16.msra.mxu0 %v4165
        %5635 = vmatpush.bf16.msra.mxu0 %v4149
        %5636 = vmatpush.bf16.msra.mxu0 %v4133
        %5637 = vmatpush.bf16.msra.mxu0 %v4117
        %5638 = vmatpush.bf16.msra.mxu0 %v4101
        %5639 = vmatmul.bf16.gmra.mxu0 %v2371
        %v5640 = vpop.f32.mrf.mxu0
        %v5641 = vadd.f32 %v5592, %v5640
        %v5642 = vpop.f32.mrf.mxu0
        %v5643 = vadd.f32 %v5594, %v5642
        %5644 = vmatmul.bf16.gmra.mxu0 %v2375
        %v5645 = vpop.f32.mrf.mxu0
        %v5646 = vadd.f32 %v5597, %v5645
        %v5647 = vpop.f32.mrf.mxu0
        %v5648 = vadd.f32 %v5599, %v5647
        %5649 = vmatmul.bf16.gmra.mxu0 %v2379
        %v5650 = vpop.f32.mrf.mxu0
        %v5651 = vadd.f32 %v5602, %v5650
        %v5652 = vpop.f32.mrf.mxu0
        %v5653 = vadd.f32 %v5604, %v5652
        %5654 = vmatmul.bf16.gmra.mxu0 %v2383
        %v5655 = vpop.f32.mrf.mxu0
        %v5656 = vadd.f32 %v5607, %v5655
        %v5657 = vpop.f32.mrf.mxu0
        %v5658 = vadd.f32 %v5609, %v5657
        %5659 = vmatmul.bf16.gmra.mxu0 %v2387
        %v5660 = vpop.f32.mrf.mxu0
        %v5661 = vadd.f32 %v5612, %v5660
        %v5662 = vpop.f32.mrf.mxu0
        %v5663 = vadd.f32 %v5614, %v5662
        %5664 = vmatmul.bf16.gmra.mxu0 %v2391
        %v5665 = vpop.f32.mrf.mxu0
        %v5666 = vadd.f32 %v5617, %v5665
        %v5667 = vpop.f32.mrf.mxu0
        %v5668 = vadd.f32 %v5619, %v5667
        %5669 = vmatmul.bf16.gmra.mxu0 %v2395
        %v5670 = vpop.f32.mrf.mxu0
        %v5671 = vadd.f32 %v5622, %v5670
        %v5672 = vpop.f32.mrf.mxu0
        %v5673 = vadd.f32 %v5624, %v5672
        %5674 = vmatmul.bf16.gmra.mxu0 %v2399
        %v5675 = vpop.f32.mrf.mxu0
        %v5676 = vadd.f32 %v5627, %v5675
        %v5677 = vpop.f32.mrf.mxu0
        %v5678 = vadd.f32 %v5629, %v5677
        %5679 = vdwg.mxu0
        %5680 = vmatpush.bf16.msra.mxu0 %v4341
        %5681 = vmatpush.bf16.msra.mxu0 %v4325
        %5682 = vmatpush.bf16.msra.mxu0 %v4309
        %5683 = vmatpush.bf16.msra.mxu0 %v4293
        %5684 = vmatpush.bf16.msra.mxu0 %v4277
        %5685 = vmatpush.bf16.msra.mxu0 %v4261
        %5686 = vmatpush.bf16.msra.mxu0 %v4245
        %5687 = vmatpush.bf16.msra.mxu0 %v4229
        %5688 = vmatmul.bf16.gmra.mxu0 %v2372
        %v5689 = vpop.f32.mrf.mxu0
        %v5690 = vadd.f32 %v5641, %v5689
        %v5691 = vpop.f32.mrf.mxu0
        %v5692 = vadd.f32 %v5643, %v5691
        %5693 = vmatmul.bf16.gmra.mxu0 %v2376
        %v5694 = vpop.f32.mrf.mxu0
        %v5695 = vadd.f32 %v5646, %v5694
        %v5696 = vpop.f32.mrf.mxu0
        %v5697 = vadd.f32 %v5648, %v5696
        %5698 = vmatmul.bf16.gmra.mxu0 %v2380
        %v5699 = vpop.f32.mrf.mxu0
        %v5700 = vadd.f32 %v5651, %v5699
        %v5701 = vpop.f32.mrf.mxu0
        %v5702 = vadd.f32 %v5653, %v5701
        %5703 = vmatmul.bf16.gmra.mxu0 %v2384
        %v5704 = vpop.f32.mrf.mxu0
        %v5705 = vadd.f32 %v5656, %v5704
        %v5706 = vpop.f32.mrf.mxu0
        %v5707 = vadd.f32 %v5658, %v5706
        %5708 = vmatmul.bf16.gmra.mxu0 %v2388
        %v5709 = vpop.f32.mrf.mxu0
        %v5710 = vadd.f32 %v5661, %v5709
        %v5711 = vpop.f32.mrf.mxu0
        %v5712 = vadd.f32 %v5663, %v5711
        %5713 = vmatmul.bf16.gmra.mxu0 %v2392
        %v5714 = vpop.f32.mrf.mxu0
        %v5715 = vadd.f32 %v5666, %v5714
        %v5716 = vpop.f32.mrf.mxu0
        %v5717 = vadd.f32 %v5668, %v5716
        %5718 = vmatmul.bf16.gmra.mxu0 %v2396
        %v5719 = vpop.f32.mrf.mxu0
        %v5720 = vadd.f32 %v5671, %v5719
        %v5721 = vpop.f32.mrf.mxu0
        %v5722 = vadd.f32 %v5673, %v5721
        %5723 = vmatmul.bf16.gmra.mxu0 %v2400
        %v5724 = vpop.f32.mrf.mxu0
        %v5725 = vadd.f32 %v5676, %v5724
        %v5726 = vpop.f32.mrf.mxu0
        %v5727 = vadd.f32 %v5678, %v5726
        %5728 = vdwg.mxu0
        %5729 = vmatpush.bf16.msra.mxu0 %v4469
        %5730 = vmatpush.bf16.msra.mxu0 %v4453
        %5731 = vmatpush.bf16.msra.mxu0 %v4437
        %5732 = vmatpush.bf16.msra.mxu0 %v4421
        %5733 = vmatpush.bf16.msra.mxu0 %v4405
        %5734 = vmatpush.bf16.msra.mxu0 %v4389
        %5735 = vmatpush.bf16.msra.mxu0 %v4373
        %5736 = vmatpush.bf16.msra.mxu0 %v4357
        %5737 = vmatmul.bf16.gmra.mxu0 %v2373
        %v5738 = vpop.f32.mrf.mxu0
        %v5739 = vadd.f32 %v5690, %v5738
        %v5740 = vpop.f32.mrf.mxu0
        %v5741 = vadd.f32 %v5692, %v5740
        %5742 = vmatmul.bf16.gmra.mxu0 %v2377
        %v5743 = vpop.f32.mrf.mxu0
        %v5744 = vadd.f32 %v5695, %v5743
        %v5745 = vpop.f32.mrf.mxu0
        %v5746 = vadd.f32 %v5697, %v5745
        %5747 = vmatmul.bf16.gmra.mxu0 %v2381
        %v5748 = vpop.f32.mrf.mxu0
        %v5749 = vadd.f32 %v5700, %v5748
        %v5750 = vpop.f32.mrf.mxu0
        %v5751 = vadd.f32 %v5702, %v5750
        %5752 = vmatmul.bf16.gmra.mxu0 %v2385
        %v5753 = vpop.f32.mrf.mxu0
        %v5754 = vadd.f32 %v5705, %v5753
        %v5755 = vpop.f32.mrf.mxu0
        %v5756 = vadd.f32 %v5707, %v5755
        %5757 = vmatmul.bf16.gmra.mxu0 %v2389
        %v5758 = vpop.f32.mrf.mxu0
        %v5759 = vadd.f32 %v5710, %v5758
        %v5760 = vpop.f32.mrf.mxu0
        %v5761 = vadd.f32 %v5712, %v5760
        %5762 = vmatmul.bf16.gmra.mxu0 %v2393
        %v5763 = vpop.f32.mrf.mxu0
        %v5764 = vadd.f32 %v5715, %v5763
        %v5765 = vpop.f32.mrf.mxu0
        %v5766 = vadd.f32 %v5717, %v5765
        %5767 = vmatmul.bf16.gmra.mxu0 %v2397
        %v5768 = vpop.f32.mrf.mxu0
        %v5769 = vadd.f32 %v5720, %v5768
        %v5770 = vpop.f32.mrf.mxu0
        %v5771 = vadd.f32 %v5722, %v5770
        %5772 = vmatmul.bf16.gmra.mxu0 %v2401
        %v5773 = vpop.f32.mrf.mxu0
        %v5774 = vadd.f32 %v5725, %v5773
        %v5775 = vpop.f32.mrf.mxu0
        %v5776 = vadd.f32 %v5727, %v5775
        %5777 = vdwg.mxu0
        %5778 = vmatpush.bf16.msra.mxu0 %v4086
        %5779 = vmatpush.bf16.msra.mxu0 %v4070
        %5780 = vmatpush.bf16.msra.mxu0 %v4054
        %5781 = vmatpush.bf16.msra.mxu0 %v4038
        %5782 = vmatpush.bf16.msra.mxu0 %v4022
        %5783 = vmatpush.bf16.msra.mxu0 %v4006
        %5784 = vmatpush.bf16.msra.mxu0 %v3990
        %5785 = vmatpush.bf16.msra.mxu0 %v3974
        %5786 = vmatmul.bf16.gmra.mxu0 %v2370
        %v5787 = vpop.f32.mrf.mxu0
        %v5788 = vadd.f32 %v2246, %v5787
        %v5789 = vpop.f32.mrf.mxu0
        %v5790 = vadd.f32 %v2246, %v5789
        %5791 = vmatmul.bf16.gmra.mxu0 %v2374
        %v5792 = vpop.f32.mrf.mxu0
        %v5793 = vadd.f32 %v2246, %v5792
        %v5794 = vpop.f32.mrf.mxu0
        %v5795 = vadd.f32 %v2246, %v5794
        %5796 = vmatmul.bf16.gmra.mxu0 %v2378
        %v5797 = vpop.f32.mrf.mxu0
        %v5798 = vadd.f32 %v2246, %v5797
        %v5799 = vpop.f32.mrf.mxu0
        %v5800 = vadd.f32 %v2246, %v5799
        %5801 = vmatmul.bf16.gmra.mxu0 %v2382
        %v5802 = vpop.f32.mrf.mxu0
        %v5803 = vadd.f32 %v2246, %v5802
        %v5804 = vpop.f32.mrf.mxu0
        %v5805 = vadd.f32 %v2246, %v5804
        %5806 = vmatmul.bf16.gmra.mxu0 %v2386
        %v5807 = vpop.f32.mrf.mxu0
        %v5808 = vadd.f32 %v2246, %v5807
        %v5809 = vpop.f32.mrf.mxu0
        %v5810 = vadd.f32 %v2246, %v5809
        %5811 = vmatmul.bf16.gmra.mxu0 %v2390
        %v5812 = vpop.f32.mrf.mxu0
        %v5813 = vadd.f32 %v2246, %v5812
        %v5814 = vpop.f32.mrf.mxu0
        %v5815 = vadd.f32 %v2246, %v5814
        %5816 = vmatmul.bf16.gmra.mxu0 %v2394
        %v5817 = vpop.f32.mrf.mxu0
        %v5818 = vadd.f32 %v2246, %v5817
        %v5819 = vpop.f32.mrf.mxu0
        %v5820 = vadd.f32 %v2246, %v5819
        %5821 = vmatmul.bf16.gmra.mxu0 %v2398
        %v5822 = vpop.f32.mrf.mxu0
        %v5823 = vadd.f32 %v2246, %v5822
        %v5824 = vpop.f32.mrf.mxu0
        %v5825 = vadd.f32 %v2246, %v5824
        %5826 = vdwg.mxu0
        %5827 = vmatpush.bf16.msra.mxu0 %v4214
        %5828 = vmatpush.bf16.msra.mxu0 %v4198
        %5829 = vmatpush.bf16.msra.mxu0 %v4182
        %5830 = vmatpush.bf16.msra.mxu0 %v4166
        %5831 = vmatpush.bf16.msra.mxu0 %v4150
        %5832 = vmatpush.bf16.msra.mxu0 %v4134
        %5833 = vmatpush.bf16.msra.mxu0 %v4118
        %5834 = vmatpush.bf16.msra.mxu0 %v4102
        %5835 = vmatmul.bf16.gmra.mxu0 %v2371
        %v5836 = vpop.f32.mrf.mxu0
        %v5837 = vadd.f32 %v5788, %v5836
        %v5838 = vpop.f32.mrf.mxu0
        %v5839 = vadd.f32 %v5790, %v5838
        %5840 = vmatmul.bf16.gmra.mxu0 %v2375
        %v5841 = vpop.f32.mrf.mxu0
        %v5842 = vadd.f32 %v5793, %v5841
        %v5843 = vpop.f32.mrf.mxu0
        %v5844 = vadd.f32 %v5795, %v5843
        %5845 = vmatmul.bf16.gmra.mxu0 %v2379
        %v5846 = vpop.f32.mrf.mxu0
        %v5847 = vadd.f32 %v5798, %v5846
        %v5848 = vpop.f32.mrf.mxu0
        %v5849 = vadd.f32 %v5800, %v5848
        %5850 = vmatmul.bf16.gmra.mxu0 %v2383
        %v5851 = vpop.f32.mrf.mxu0
        %v5852 = vadd.f32 %v5803, %v5851
        %v5853 = vpop.f32.mrf.mxu0
        %v5854 = vadd.f32 %v5805, %v5853
        %5855 = vmatmul.bf16.gmra.mxu0 %v2387
        %v5856 = vpop.f32.mrf.mxu0
        %v5857 = vadd.f32 %v5808, %v5856
        %v5858 = vpop.f32.mrf.mxu0
        %v5859 = vadd.f32 %v5810, %v5858
        %5860 = vmatmul.bf16.gmra.mxu0 %v2391
        %v5861 = vpop.f32.mrf.mxu0
        %v5862 = vadd.f32 %v5813, %v5861
        %v5863 = vpop.f32.mrf.mxu0
        %v5864 = vadd.f32 %v5815, %v5863
        %5865 = vmatmul.bf16.gmra.mxu0 %v2395
        %v5866 = vpop.f32.mrf.mxu0
        %v5867 = vadd.f32 %v5818, %v5866
        %v5868 = vpop.f32.mrf.mxu0
        %v5869 = vadd.f32 %v5820, %v5868
        %5870 = vmatmul.bf16.gmra.mxu0 %v2399
        %v5871 = vpop.f32.mrf.mxu0
        %v5872 = vadd.f32 %v5823, %v5871
        %v5873 = vpop.f32.mrf.mxu0
        %v5874 = vadd.f32 %v5825, %v5873
        %5875 = vdwg.mxu0
        %5876 = vmatpush.bf16.msra.mxu0 %v4342
        %5877 = vmatpush.bf16.msra.mxu0 %v4326
        %5878 = vmatpush.bf16.msra.mxu0 %v4310
        %5879 = vmatpush.bf16.msra.mxu0 %v4294
        %5880 = vmatpush.bf16.msra.mxu0 %v4278
        %5881 = vmatpush.bf16.msra.mxu0 %v4262
        %5882 = vmatpush.bf16.msra.mxu0 %v4246
        %5883 = vmatpush.bf16.msra.mxu0 %v4230
        %5884 = vmatmul.bf16.gmra.mxu0 %v2372
        %v5885 = vpop.f32.mrf.mxu0
        %v5886 = vadd.f32 %v5837, %v5885
        %v5887 = vpop.f32.mrf.mxu0
        %v5888 = vadd.f32 %v5839, %v5887
        %5889 = vmatmul.bf16.gmra.mxu0 %v2376
        %v5890 = vpop.f32.mrf.mxu0
        %v5891 = vadd.f32 %v5842, %v5890
        %v5892 = vpop.f32.mrf.mxu0
        %v5893 = vadd.f32 %v5844, %v5892
        %5894 = vmatmul.bf16.gmra.mxu0 %v2380
        %v5895 = vpop.f32.mrf.mxu0
        %v5896 = vadd.f32 %v5847, %v5895
        %v5897 = vpop.f32.mrf.mxu0
        %v5898 = vadd.f32 %v5849, %v5897
        %5899 = vmatmul.bf16.gmra.mxu0 %v2384
        %v5900 = vpop.f32.mrf.mxu0
        %v5901 = vadd.f32 %v5852, %v5900
        %v5902 = vpop.f32.mrf.mxu0
        %v5903 = vadd.f32 %v5854, %v5902
        %5904 = vmatmul.bf16.gmra.mxu0 %v2388
        %v5905 = vpop.f32.mrf.mxu0
        %v5906 = vadd.f32 %v5857, %v5905
        %v5907 = vpop.f32.mrf.mxu0
        %v5908 = vadd.f32 %v5859, %v5907
        %5909 = vmatmul.bf16.gmra.mxu0 %v2392
        %v5910 = vpop.f32.mrf.mxu0
        %v5911 = vadd.f32 %v5862, %v5910
        %v5912 = vpop.f32.mrf.mxu0
        %v5913 = vadd.f32 %v5864, %v5912
        %5914 = vmatmul.bf16.gmra.mxu0 %v2396
        %v5915 = vpop.f32.mrf.mxu0
        %v5916 = vadd.f32 %v5867, %v5915
        %v5917 = vpop.f32.mrf.mxu0
        %v5918 = vadd.f32 %v5869, %v5917
        %5919 = vmatmul.bf16.gmra.mxu0 %v2400
        %v5920 = vpop.f32.mrf.mxu0
        %v5921 = vadd.f32 %v5872, %v5920
        %v5922 = vpop.f32.mrf.mxu0
        %v5923 = vadd.f32 %v5874, %v5922
        %5924 = vdwg.mxu0
        %5925 = vmatpush.bf16.msra.mxu0 %v4470
        %5926 = vmatpush.bf16.msra.mxu0 %v4454
        %5927 = vmatpush.bf16.msra.mxu0 %v4438
        %5928 = vmatpush.bf16.msra.mxu0 %v4422
        %5929 = vmatpush.bf16.msra.mxu0 %v4406
        %5930 = vmatpush.bf16.msra.mxu0 %v4390
        %5931 = vmatpush.bf16.msra.mxu0 %v4374
        %5932 = vmatpush.bf16.msra.mxu0 %v4358
        %5933 = vmatmul.bf16.gmra.mxu0 %v2373
        %v5934 = vpop.f32.mrf.mxu0
        %v5935 = vadd.f32 %v5886, %v5934
        %v5936 = vpop.f32.mrf.mxu0
        %v5937 = vadd.f32 %v5888, %v5936
        %5938 = vmatmul.bf16.gmra.mxu0 %v2377
        %v5939 = vpop.f32.mrf.mxu0
        %v5940 = vadd.f32 %v5891, %v5939
        %v5941 = vpop.f32.mrf.mxu0
        %v5942 = vadd.f32 %v5893, %v5941
        %5943 = vmatmul.bf16.gmra.mxu0 %v2381
        %v5944 = vpop.f32.mrf.mxu0
        %v5945 = vadd.f32 %v5896, %v5944
        %v5946 = vpop.f32.mrf.mxu0
        %v5947 = vadd.f32 %v5898, %v5946
        %5948 = vmatmul.bf16.gmra.mxu0 %v2385
        %v5949 = vpop.f32.mrf.mxu0
        %v5950 = vadd.f32 %v5901, %v5949
        %v5951 = vpop.f32.mrf.mxu0
        %v5952 = vadd.f32 %v5903, %v5951
        %5953 = vmatmul.bf16.gmra.mxu0 %v2389
        %v5954 = vpop.f32.mrf.mxu0
        %v5955 = vadd.f32 %v5906, %v5954
        %v5956 = vpop.f32.mrf.mxu0
        %v5957 = vadd.f32 %v5908, %v5956
        %5958 = vmatmul.bf16.gmra.mxu0 %v2393
        %v5959 = vpop.f32.mrf.mxu0
        %v5960 = vadd.f32 %v5911, %v5959
        %v5961 = vpop.f32.mrf.mxu0
        %v5962 = vadd.f32 %v5913, %v5961
        %5963 = vmatmul.bf16.gmra.mxu0 %v2397
        %v5964 = vpop.f32.mrf.mxu0
        %v5965 = vadd.f32 %v5916, %v5964
        %v5966 = vpop.f32.mrf.mxu0
        %v5967 = vadd.f32 %v5918, %v5966
        %5968 = vmatmul.bf16.gmra.mxu0 %v2401
        %v5969 = vpop.f32.mrf.mxu0
        %v5970 = vadd.f32 %v5921, %v5969
        %v5971 = vpop.f32.mrf.mxu0
        %v5972 = vadd.f32 %v5923, %v5971
        %5973 = vdwg.mxu0
        %5974 = vmatpush.bf16.msra.mxu0 %v4087
        %5975 = vmatpush.bf16.msra.mxu0 %v4071
        %5976 = vmatpush.bf16.msra.mxu0 %v4055
        %5977 = vmatpush.bf16.msra.mxu0 %v4039
        %5978 = vmatpush.bf16.msra.mxu0 %v4023
        %5979 = vmatpush.bf16.msra.mxu0 %v4007
        %5980 = vmatpush.bf16.msra.mxu0 %v3991
        %5981 = vmatpush.bf16.msra.mxu0 %v3975
        %5982 = vmatmul.bf16.gmra.mxu0 %v2370
        %v5983 = vpop.f32.mrf.mxu0
        %v5984 = vadd.f32 %v2247, %v5983
        %v5985 = vpop.f32.mrf.mxu0
        %v5986 = vadd.f32 %v2247, %v5985
        %5987 = vmatmul.bf16.gmra.mxu0 %v2374
        %v5988 = vpop.f32.mrf.mxu0
        %v5989 = vadd.f32 %v2247, %v5988
        %v5990 = vpop.f32.mrf.mxu0
        %v5991 = vadd.f32 %v2247, %v5990
        %5992 = vmatmul.bf16.gmra.mxu0 %v2378
        %v5993 = vpop.f32.mrf.mxu0
        %v5994 = vadd.f32 %v2247, %v5993
        %v5995 = vpop.f32.mrf.mxu0
        %v5996 = vadd.f32 %v2247, %v5995
        %5997 = vmatmul.bf16.gmra.mxu0 %v2382
        %v5998 = vpop.f32.mrf.mxu0
        %v5999 = vadd.f32 %v2247, %v5998
        %v6000 = vpop.f32.mrf.mxu0
        %v6001 = vadd.f32 %v2247, %v6000
        %6002 = vmatmul.bf16.gmra.mxu0 %v2386
        %v6003 = vpop.f32.mrf.mxu0
        %v6004 = vadd.f32 %v2247, %v6003
        %v6005 = vpop.f32.mrf.mxu0
        %v6006 = vadd.f32 %v2247, %v6005
        %6007 = vmatmul.bf16.gmra.mxu0 %v2390
        %v6008 = vpop.f32.mrf.mxu0
        %v6009 = vadd.f32 %v2247, %v6008
        %v6010 = vpop.f32.mrf.mxu0
        %v6011 = vadd.f32 %v2247, %v6010
        %6012 = vmatmul.bf16.gmra.mxu0 %v2394
        %v6013 = vpop.f32.mrf.mxu0
        %v6014 = vadd.f32 %v2247, %v6013
        %v6015 = vpop.f32.mrf.mxu0
        %v6016 = vadd.f32 %v2247, %v6015
        %6017 = vmatmul.bf16.gmra.mxu0 %v2398
        %v6018 = vpop.f32.mrf.mxu0
        %v6019 = vadd.f32 %v2247, %v6018
        %v6020 = vpop.f32.mrf.mxu0
        %v6021 = vadd.f32 %v2247, %v6020
        %6022 = vdwg.mxu0
        %6023 = vmatpush.bf16.msra.mxu0 %v4215
        %6024 = vmatpush.bf16.msra.mxu0 %v4199
        %6025 = vmatpush.bf16.msra.mxu0 %v4183
        %6026 = vmatpush.bf16.msra.mxu0 %v4167
        %6027 = vmatpush.bf16.msra.mxu0 %v4151
        %6028 = vmatpush.bf16.msra.mxu0 %v4135
        %6029 = vmatpush.bf16.msra.mxu0 %v4119
        %6030 = vmatpush.bf16.msra.mxu0 %v4103
        %6031 = vmatmul.bf16.gmra.mxu0 %v2371
        %v6032 = vpop.f32.mrf.mxu0
        %v6033 = vadd.f32 %v5984, %v6032
        %v6034 = vpop.f32.mrf.mxu0
        %v6035 = vadd.f32 %v5986, %v6034
        %6036 = vmatmul.bf16.gmra.mxu0 %v2375
        %v6037 = vpop.f32.mrf.mxu0
        %v6038 = vadd.f32 %v5989, %v6037
        %v6039 = vpop.f32.mrf.mxu0
        %v6040 = vadd.f32 %v5991, %v6039
        %6041 = vmatmul.bf16.gmra.mxu0 %v2379
        %v6042 = vpop.f32.mrf.mxu0
        %v6043 = vadd.f32 %v5994, %v6042
        %v6044 = vpop.f32.mrf.mxu0
        %v6045 = vadd.f32 %v5996, %v6044
        %6046 = vmatmul.bf16.gmra.mxu0 %v2383
        %v6047 = vpop.f32.mrf.mxu0
        %v6048 = vadd.f32 %v5999, %v6047
        %v6049 = vpop.f32.mrf.mxu0
        %v6050 = vadd.f32 %v6001, %v6049
        %6051 = vmatmul.bf16.gmra.mxu0 %v2387
        %v6052 = vpop.f32.mrf.mxu0
        %v6053 = vadd.f32 %v6004, %v6052
        %v6054 = vpop.f32.mrf.mxu0
        %v6055 = vadd.f32 %v6006, %v6054
        %6056 = vmatmul.bf16.gmra.mxu0 %v2391
        %v6057 = vpop.f32.mrf.mxu0
        %v6058 = vadd.f32 %v6009, %v6057
        %v6059 = vpop.f32.mrf.mxu0
        %v6060 = vadd.f32 %v6011, %v6059
        %6061 = vmatmul.bf16.gmra.mxu0 %v2395
        %v6062 = vpop.f32.mrf.mxu0
        %v6063 = vadd.f32 %v6014, %v6062
        %v6064 = vpop.f32.mrf.mxu0
        %v6065 = vadd.f32 %v6016, %v6064
        %6066 = vmatmul.bf16.gmra.mxu0 %v2399
        %v6067 = vpop.f32.mrf.mxu0
        %v6068 = vadd.f32 %v6019, %v6067
        %v6069 = vpop.f32.mrf.mxu0
        %v6070 = vadd.f32 %v6021, %v6069
        %6071 = vdwg.mxu0
        %6072 = vmatpush.bf16.msra.mxu0 %v4343
        %6073 = vmatpush.bf16.msra.mxu0 %v4327
        %6074 = vmatpush.bf16.msra.mxu0 %v4311
        %6075 = vmatpush.bf16.msra.mxu0 %v4295
        %6076 = vmatpush.bf16.msra.mxu0 %v4279
        %6077 = vmatpush.bf16.msra.mxu0 %v4263
        %6078 = vmatpush.bf16.msra.mxu0 %v4247
        %6079 = vmatpush.bf16.msra.mxu0 %v4231
        %6080 = vmatmul.bf16.gmra.mxu0 %v2372
        %v6081 = vpop.f32.mrf.mxu0
        %v6082 = vadd.f32 %v6033, %v6081
        %v6083 = vpop.f32.mrf.mxu0
        %v6084 = vadd.f32 %v6035, %v6083
        %6085 = vmatmul.bf16.gmra.mxu0 %v2376
        %v6086 = vpop.f32.mrf.mxu0
        %v6087 = vadd.f32 %v6038, %v6086
        %v6088 = vpop.f32.mrf.mxu0
        %v6089 = vadd.f32 %v6040, %v6088
        %6090 = vmatmul.bf16.gmra.mxu0 %v2380
        %v6091 = vpop.f32.mrf.mxu0
        %v6092 = vadd.f32 %v6043, %v6091
        %v6093 = vpop.f32.mrf.mxu0
        %v6094 = vadd.f32 %v6045, %v6093
        %6095 = vmatmul.bf16.gmra.mxu0 %v2384
        %v6096 = vpop.f32.mrf.mxu0
        %v6097 = vadd.f32 %v6048, %v6096
        %v6098 = vpop.f32.mrf.mxu0
        %v6099 = vadd.f32 %v6050, %v6098
        %6100 = vmatmul.bf16.gmra.mxu0 %v2388
        %v6101 = vpop.f32.mrf.mxu0
        %v6102 = vadd.f32 %v6053, %v6101
        %v6103 = vpop.f32.mrf.mxu0
        %v6104 = vadd.f32 %v6055, %v6103
        %6105 = vmatmul.bf16.gmra.mxu0 %v2392
        %v6106 = vpop.f32.mrf.mxu0
        %v6107 = vadd.f32 %v6058, %v6106
        %v6108 = vpop.f32.mrf.mxu0
        %v6109 = vadd.f32 %v6060, %v6108
        %6110 = vmatmul.bf16.gmra.mxu0 %v2396
        %v6111 = vpop.f32.mrf.mxu0
        %v6112 = vadd.f32 %v6063, %v6111
        %v6113 = vpop.f32.mrf.mxu0
        %v6114 = vadd.f32 %v6065, %v6113
        %6115 = vmatmul.bf16.gmra.mxu0 %v2400
        %v6116 = vpop.f32.mrf.mxu0
        %v6117 = vadd.f32 %v6068, %v6116
        %v6118 = vpop.f32.mrf.mxu0
        %v6119 = vadd.f32 %v6070, %v6118
        %6120 = vdwg.mxu0
        %6121 = vmatpush.bf16.msra.mxu0 %v4471
        %6122 = vmatpush.bf16.msra.mxu0 %v4455
        %6123 = vmatpush.bf16.msra.mxu0 %v4439
        %6124 = vmatpush.bf16.msra.mxu0 %v4423
        %6125 = vmatpush.bf16.msra.mxu0 %v4407
        %6126 = vmatpush.bf16.msra.mxu0 %v4391
        %6127 = vmatpush.bf16.msra.mxu0 %v4375
        %6128 = vmatpush.bf16.msra.mxu0 %v4359
        %6129 = vmatmul.bf16.gmra.mxu0 %v2373
        %v6130 = vpop.f32.mrf.mxu0
        %v6131 = vadd.f32 %v6082, %v6130
        %v6132 = vpop.f32.mrf.mxu0
        %v6133 = vadd.f32 %v6084, %v6132
        %6134 = vmatmul.bf16.gmra.mxu0 %v2377
        %v6135 = vpop.f32.mrf.mxu0
        %v6136 = vadd.f32 %v6087, %v6135
        %v6137 = vpop.f32.mrf.mxu0
        %v6138 = vadd.f32 %v6089, %v6137
        %6139 = vmatmul.bf16.gmra.mxu0 %v2381
        %v6140 = vpop.f32.mrf.mxu0
        %v6141 = vadd.f32 %v6092, %v6140
        %v6142 = vpop.f32.mrf.mxu0
        %v6143 = vadd.f32 %v6094, %v6142
        %6144 = vmatmul.bf16.gmra.mxu0 %v2385
        %v6145 = vpop.f32.mrf.mxu0
        %v6146 = vadd.f32 %v6097, %v6145
        %v6147 = vpop.f32.mrf.mxu0
        %v6148 = vadd.f32 %v6099, %v6147
        %6149 = vmatmul.bf16.gmra.mxu0 %v2389
        %v6150 = vpop.f32.mrf.mxu0
        %v6151 = vadd.f32 %v6102, %v6150
        %v6152 = vpop.f32.mrf.mxu0
        %v6153 = vadd.f32 %v6104, %v6152
        %6154 = vmatmul.bf16.gmra.mxu0 %v2393
        %v6155 = vpop.f32.mrf.mxu0
        %v6156 = vadd.f32 %v6107, %v6155
        %v6157 = vpop.f32.mrf.mxu0
        %v6158 = vadd.f32 %v6109, %v6157
        %6159 = vmatmul.bf16.gmra.mxu0 %v2397
        %v6160 = vpop.f32.mrf.mxu0
        %v6161 = vadd.f32 %v6112, %v6160
        %v6162 = vpop.f32.mrf.mxu0
        %v6163 = vadd.f32 %v6114, %v6162
        %6164 = vmatmul.bf16.gmra.mxu0 %v2401
        %v6165 = vpop.f32.mrf.mxu0
        %v6166 = vadd.f32 %v6117, %v6165
        %v6167 = vpop.f32.mrf.mxu0
        %v6168 = vadd.f32 %v6119, %v6167
        %6169 = vdwg.mxu0
        %6170 = vmatpush.bf16.msra.mxu0 %v4088
        %6171 = vmatpush.bf16.msra.mxu0 %v4072
        %6172 = vmatpush.bf16.msra.mxu0 %v4056
        %6173 = vmatpush.bf16.msra.mxu0 %v4040
        %6174 = vmatpush.bf16.msra.mxu0 %v4024
        %6175 = vmatpush.bf16.msra.mxu0 %v4008
        %6176 = vmatpush.bf16.msra.mxu0 %v3992
        %6177 = vmatpush.bf16.msra.mxu0 %v3976
        %6178 = vmatmul.bf16.gmra.mxu0 %v2370
        %v6179 = vpop.f32.mrf.mxu0
        %v6180 = vadd.f32 %v2248, %v6179
        %v6181 = vpop.f32.mrf.mxu0
        %v6182 = vadd.f32 %v2248, %v6181
        %6183 = vmatmul.bf16.gmra.mxu0 %v2374
        %v6184 = vpop.f32.mrf.mxu0
        %v6185 = vadd.f32 %v2248, %v6184
        %v6186 = vpop.f32.mrf.mxu0
        %v6187 = vadd.f32 %v2248, %v6186
        %6188 = vmatmul.bf16.gmra.mxu0 %v2378
        %v6189 = vpop.f32.mrf.mxu0
        %v6190 = vadd.f32 %v2248, %v6189
        %v6191 = vpop.f32.mrf.mxu0
        %v6192 = vadd.f32 %v2248, %v6191
        %6193 = vmatmul.bf16.gmra.mxu0 %v2382
        %v6194 = vpop.f32.mrf.mxu0
        %v6195 = vadd.f32 %v2248, %v6194
        %v6196 = vpop.f32.mrf.mxu0
        %v6197 = vadd.f32 %v2248, %v6196
        %6198 = vmatmul.bf16.gmra.mxu0 %v2386
        %v6199 = vpop.f32.mrf.mxu0
        %v6200 = vadd.f32 %v2248, %v6199
        %v6201 = vpop.f32.mrf.mxu0
        %v6202 = vadd.f32 %v2248, %v6201
        %6203 = vmatmul.bf16.gmra.mxu0 %v2390
        %v6204 = vpop.f32.mrf.mxu0
        %v6205 = vadd.f32 %v2248, %v6204
        %v6206 = vpop.f32.mrf.mxu0
        %v6207 = vadd.f32 %v2248, %v6206
        %6208 = vmatmul.bf16.gmra.mxu0 %v2394
        %v6209 = vpop.f32.mrf.mxu0
        %v6210 = vadd.f32 %v2248, %v6209
        %v6211 = vpop.f32.mrf.mxu0
        %v6212 = vadd.f32 %v2248, %v6211
        %6213 = vmatmul.bf16.gmra.mxu0 %v2398
        %v6214 = vpop.f32.mrf.mxu0
        %v6215 = vadd.f32 %v2248, %v6214
        %v6216 = vpop.f32.mrf.mxu0
        %v6217 = vadd.f32 %v2248, %v6216
        %6218 = vdwg.mxu0
        %6219 = vmatpush.bf16.msra.mxu0 %v4216
        %6220 = vmatpush.bf16.msra.mxu0 %v4200
        %6221 = vmatpush.bf16.msra.mxu0 %v4184
        %6222 = vmatpush.bf16.msra.mxu0 %v4168
        %6223 = vmatpush.bf16.msra.mxu0 %v4152
        %6224 = vmatpush.bf16.msra.mxu0 %v4136
        %6225 = vmatpush.bf16.msra.mxu0 %v4120
        %6226 = vmatpush.bf16.msra.mxu0 %v4104
        %6227 = vmatmul.bf16.gmra.mxu0 %v2371
        %v6228 = vpop.f32.mrf.mxu0
        %v6229 = vadd.f32 %v6180, %v6228
        %v6230 = vpop.f32.mrf.mxu0
        %v6231 = vadd.f32 %v6182, %v6230
        %6232 = vmatmul.bf16.gmra.mxu0 %v2375
        %v6233 = vpop.f32.mrf.mxu0
        %v6234 = vadd.f32 %v6185, %v6233
        %v6235 = vpop.f32.mrf.mxu0
        %v6236 = vadd.f32 %v6187, %v6235
        %6237 = vmatmul.bf16.gmra.mxu0 %v2379
        %v6238 = vpop.f32.mrf.mxu0
        %v6239 = vadd.f32 %v6190, %v6238
        %v6240 = vpop.f32.mrf.mxu0
        %v6241 = vadd.f32 %v6192, %v6240
        %6242 = vmatmul.bf16.gmra.mxu0 %v2383
        %v6243 = vpop.f32.mrf.mxu0
        %v6244 = vadd.f32 %v6195, %v6243
        %v6245 = vpop.f32.mrf.mxu0
        %v6246 = vadd.f32 %v6197, %v6245
        %6247 = vmatmul.bf16.gmra.mxu0 %v2387
        %v6248 = vpop.f32.mrf.mxu0
        %v6249 = vadd.f32 %v6200, %v6248
        %v6250 = vpop.f32.mrf.mxu0
        %v6251 = vadd.f32 %v6202, %v6250
        %6252 = vmatmul.bf16.gmra.mxu0 %v2391
        %v6253 = vpop.f32.mrf.mxu0
        %v6254 = vadd.f32 %v6205, %v6253
        %v6255 = vpop.f32.mrf.mxu0
        %v6256 = vadd.f32 %v6207, %v6255
        %6257 = vmatmul.bf16.gmra.mxu0 %v2395
        %v6258 = vpop.f32.mrf.mxu0
        %v6259 = vadd.f32 %v6210, %v6258
        %v6260 = vpop.f32.mrf.mxu0
        %v6261 = vadd.f32 %v6212, %v6260
        %6262 = vmatmul.bf16.gmra.mxu0 %v2399
        %v6263 = vpop.f32.mrf.mxu0
        %v6264 = vadd.f32 %v6215, %v6263
        %v6265 = vpop.f32.mrf.mxu0
        %v6266 = vadd.f32 %v6217, %v6265
        %6267 = vdwg.mxu0
        %6268 = vmatpush.bf16.msra.mxu0 %v4344
        %6269 = vmatpush.bf16.msra.mxu0 %v4328
        %6270 = vmatpush.bf16.msra.mxu0 %v4312
        %6271 = vmatpush.bf16.msra.mxu0 %v4296
        %6272 = vmatpush.bf16.msra.mxu0 %v4280
        %6273 = vmatpush.bf16.msra.mxu0 %v4264
        %6274 = vmatpush.bf16.msra.mxu0 %v4248
        %6275 = vmatpush.bf16.msra.mxu0 %v4232
        %6276 = vmatmul.bf16.gmra.mxu0 %v2372
        %v6277 = vpop.f32.mrf.mxu0
        %v6278 = vadd.f32 %v6229, %v6277
        %v6279 = vpop.f32.mrf.mxu0
        %v6280 = vadd.f32 %v6231, %v6279
        %6281 = vmatmul.bf16.gmra.mxu0 %v2376
        %v6282 = vpop.f32.mrf.mxu0
        %v6283 = vadd.f32 %v6234, %v6282
        %v6284 = vpop.f32.mrf.mxu0
        %v6285 = vadd.f32 %v6236, %v6284
        %6286 = vmatmul.bf16.gmra.mxu0 %v2380
        %v6287 = vpop.f32.mrf.mxu0
        %v6288 = vadd.f32 %v6239, %v6287
        %v6289 = vpop.f32.mrf.mxu0
        %v6290 = vadd.f32 %v6241, %v6289
        %6291 = vmatmul.bf16.gmra.mxu0 %v2384
        %v6292 = vpop.f32.mrf.mxu0
        %v6293 = vadd.f32 %v6244, %v6292
        %v6294 = vpop.f32.mrf.mxu0
        %v6295 = vadd.f32 %v6246, %v6294
        %6296 = vmatmul.bf16.gmra.mxu0 %v2388
        %v6297 = vpop.f32.mrf.mxu0
        %v6298 = vadd.f32 %v6249, %v6297
        %v6299 = vpop.f32.mrf.mxu0
        %v6300 = vadd.f32 %v6251, %v6299
        %6301 = vmatmul.bf16.gmra.mxu0 %v2392
        %v6302 = vpop.f32.mrf.mxu0
        %v6303 = vadd.f32 %v6254, %v6302
        %v6304 = vpop.f32.mrf.mxu0
        %v6305 = vadd.f32 %v6256, %v6304
        %6306 = vmatmul.bf16.gmra.mxu0 %v2396
        %v6307 = vpop.f32.mrf.mxu0
        %v6308 = vadd.f32 %v6259, %v6307
        %v6309 = vpop.f32.mrf.mxu0
        %v6310 = vadd.f32 %v6261, %v6309
        %6311 = vmatmul.bf16.gmra.mxu0 %v2400
        %v6312 = vpop.f32.mrf.mxu0
        %v6313 = vadd.f32 %v6264, %v6312
        %v6314 = vpop.f32.mrf.mxu0
        %v6315 = vadd.f32 %v6266, %v6314
        %6316 = vdwg.mxu0
        %6317 = vmatpush.bf16.msra.mxu0 %v4472
        %6318 = vmatpush.bf16.msra.mxu0 %v4456
        %6319 = vmatpush.bf16.msra.mxu0 %v4440
        %6320 = vmatpush.bf16.msra.mxu0 %v4424
        %6321 = vmatpush.bf16.msra.mxu0 %v4408
        %6322 = vmatpush.bf16.msra.mxu0 %v4392
        %6323 = vmatpush.bf16.msra.mxu0 %v4376
        %6324 = vmatpush.bf16.msra.mxu0 %v4360
        %6325 = vmatmul.bf16.gmra.mxu0 %v2373
        %v6326 = vpop.f32.mrf.mxu0
        %v6327 = vadd.f32 %v6278, %v6326
        %v6328 = vpop.f32.mrf.mxu0
        %v6329 = vadd.f32 %v6280, %v6328
        %6330 = vmatmul.bf16.gmra.mxu0 %v2377
        %v6331 = vpop.f32.mrf.mxu0
        %v6332 = vadd.f32 %v6283, %v6331
        %v6333 = vpop.f32.mrf.mxu0
        %v6334 = vadd.f32 %v6285, %v6333
        %6335 = vmatmul.bf16.gmra.mxu0 %v2381
        %v6336 = vpop.f32.mrf.mxu0
        %v6337 = vadd.f32 %v6288, %v6336
        %v6338 = vpop.f32.mrf.mxu0
        %v6339 = vadd.f32 %v6290, %v6338
        %6340 = vmatmul.bf16.gmra.mxu0 %v2385
        %v6341 = vpop.f32.mrf.mxu0
        %v6342 = vadd.f32 %v6293, %v6341
        %v6343 = vpop.f32.mrf.mxu0
        %v6344 = vadd.f32 %v6295, %v6343
        %6345 = vmatmul.bf16.gmra.mxu0 %v2389
        %v6346 = vpop.f32.mrf.mxu0
        %v6347 = vadd.f32 %v6298, %v6346
        %v6348 = vpop.f32.mrf.mxu0
        %v6349 = vadd.f32 %v6300, %v6348
        %6350 = vmatmul.bf16.gmra.mxu0 %v2393
        %v6351 = vpop.f32.mrf.mxu0
        %v6352 = vadd.f32 %v6303, %v6351
        %v6353 = vpop.f32.mrf.mxu0
        %v6354 = vadd.f32 %v6305, %v6353
        %6355 = vmatmul.bf16.gmra.mxu0 %v2397
        %v6356 = vpop.f32.mrf.mxu0
        %v6357 = vadd.f32 %v6308, %v6356
        %v6358 = vpop.f32.mrf.mxu0
        %v6359 = vadd.f32 %v6310, %v6358
        %6360 = vmatmul.bf16.gmra.mxu0 %v2401
        %v6361 = vpop.f32.mrf.mxu0
        %v6362 = vadd.f32 %v6313, %v6361
        %v6363 = vpop.f32.mrf.mxu0
        %v6364 = vadd.f32 %v6315, %v6363
        %6365 = vdwg.mxu0
        %6366 = vmatpush.bf16.msra.mxu0 %v4089
        %6367 = vmatpush.bf16.msra.mxu0 %v4073
        %6368 = vmatpush.bf16.msra.mxu0 %v4057
        %6369 = vmatpush.bf16.msra.mxu0 %v4041
        %6370 = vmatpush.bf16.msra.mxu0 %v4025
        %6371 = vmatpush.bf16.msra.mxu0 %v4009
        %6372 = vmatpush.bf16.msra.mxu0 %v3993
        %6373 = vmatpush.bf16.msra.mxu0 %v3977
        %6374 = vmatmul.bf16.gmra.mxu0 %v2370
        %v6375 = vpop.f32.mrf.mxu0
        %v6376 = vadd.f32 %v2249, %v6375
        %v6377 = vpop.f32.mrf.mxu0
        %v6378 = vadd.f32 %v2249, %v6377
        %6379 = vmatmul.bf16.gmra.mxu0 %v2374
        %v6380 = vpop.f32.mrf.mxu0
        %v6381 = vadd.f32 %v2249, %v6380
        %v6382 = vpop.f32.mrf.mxu0
        %v6383 = vadd.f32 %v2249, %v6382
        %6384 = vmatmul.bf16.gmra.mxu0 %v2378
        %v6385 = vpop.f32.mrf.mxu0
        %v6386 = vadd.f32 %v2249, %v6385
        %v6387 = vpop.f32.mrf.mxu0
        %v6388 = vadd.f32 %v2249, %v6387
        %6389 = vmatmul.bf16.gmra.mxu0 %v2382
        %v6390 = vpop.f32.mrf.mxu0
        %v6391 = vadd.f32 %v2249, %v6390
        %v6392 = vpop.f32.mrf.mxu0
        %v6393 = vadd.f32 %v2249, %v6392
        %6394 = vmatmul.bf16.gmra.mxu0 %v2386
        %v6395 = vpop.f32.mrf.mxu0
        %v6396 = vadd.f32 %v2249, %v6395
        %v6397 = vpop.f32.mrf.mxu0
        %v6398 = vadd.f32 %v2249, %v6397
        %6399 = vmatmul.bf16.gmra.mxu0 %v2390
        %v6400 = vpop.f32.mrf.mxu0
        %v6401 = vadd.f32 %v2249, %v6400
        %v6402 = vpop.f32.mrf.mxu0
        %v6403 = vadd.f32 %v2249, %v6402
        %6404 = vmatmul.bf16.gmra.mxu0 %v2394
        %v6405 = vpop.f32.mrf.mxu0
        %v6406 = vadd.f32 %v2249, %v6405
        %v6407 = vpop.f32.mrf.mxu0
        %v6408 = vadd.f32 %v2249, %v6407
        %6409 = vmatmul.bf16.gmra.mxu0 %v2398
        %v6410 = vpop.f32.mrf.mxu0
        %v6411 = vadd.f32 %v2249, %v6410
        %v6412 = vpop.f32.mrf.mxu0
        %v6413 = vadd.f32 %v2249, %v6412
        %6414 = vdwg.mxu0
        %6415 = vmatpush.bf16.msra.mxu0 %v4217
        %6416 = vmatpush.bf16.msra.mxu0 %v4201
        %6417 = vmatpush.bf16.msra.mxu0 %v4185
        %6418 = vmatpush.bf16.msra.mxu0 %v4169
        %6419 = vmatpush.bf16.msra.mxu0 %v4153
        %6420 = vmatpush.bf16.msra.mxu0 %v4137
        %6421 = vmatpush.bf16.msra.mxu0 %v4121
        %6422 = vmatpush.bf16.msra.mxu0 %v4105
        %6423 = vmatmul.bf16.gmra.mxu0 %v2371
        %v6424 = vpop.f32.mrf.mxu0
        %v6425 = vadd.f32 %v6376, %v6424
        %v6426 = vpop.f32.mrf.mxu0
        %v6427 = vadd.f32 %v6378, %v6426
        %6428 = vmatmul.bf16.gmra.mxu0 %v2375
        %v6429 = vpop.f32.mrf.mxu0
        %v6430 = vadd.f32 %v6381, %v6429
        %v6431 = vpop.f32.mrf.mxu0
        %v6432 = vadd.f32 %v6383, %v6431
        %6433 = vmatmul.bf16.gmra.mxu0 %v2379
        %v6434 = vpop.f32.mrf.mxu0
        %v6435 = vadd.f32 %v6386, %v6434
        %v6436 = vpop.f32.mrf.mxu0
        %v6437 = vadd.f32 %v6388, %v6436
        %6438 = vmatmul.bf16.gmra.mxu0 %v2383
        %v6439 = vpop.f32.mrf.mxu0
        %v6440 = vadd.f32 %v6391, %v6439
        %v6441 = vpop.f32.mrf.mxu0
        %v6442 = vadd.f32 %v6393, %v6441
        %6443 = vmatmul.bf16.gmra.mxu0 %v2387
        %v6444 = vpop.f32.mrf.mxu0
        %v6445 = vadd.f32 %v6396, %v6444
        %v6446 = vpop.f32.mrf.mxu0
        %v6447 = vadd.f32 %v6398, %v6446
        %6448 = vmatmul.bf16.gmra.mxu0 %v2391
        %v6449 = vpop.f32.mrf.mxu0
        %v6450 = vadd.f32 %v6401, %v6449
        %v6451 = vpop.f32.mrf.mxu0
        %v6452 = vadd.f32 %v6403, %v6451
        %6453 = vmatmul.bf16.gmra.mxu0 %v2395
        %v6454 = vpop.f32.mrf.mxu0
        %v6455 = vadd.f32 %v6406, %v6454
        %v6456 = vpop.f32.mrf.mxu0
        %v6457 = vadd.f32 %v6408, %v6456
        %6458 = vmatmul.bf16.gmra.mxu0 %v2399
        %v6459 = vpop.f32.mrf.mxu0
        %v6460 = vadd.f32 %v6411, %v6459
        %v6461 = vpop.f32.mrf.mxu0
        %v6462 = vadd.f32 %v6413, %v6461
        %6463 = vdwg.mxu0
        %6464 = vmatpush.bf16.msra.mxu0 %v4345
        %6465 = vmatpush.bf16.msra.mxu0 %v4329
        %6466 = vmatpush.bf16.msra.mxu0 %v4313
        %6467 = vmatpush.bf16.msra.mxu0 %v4297
        %6468 = vmatpush.bf16.msra.mxu0 %v4281
        %6469 = vmatpush.bf16.msra.mxu0 %v4265
        %6470 = vmatpush.bf16.msra.mxu0 %v4249
        %6471 = vmatpush.bf16.msra.mxu0 %v4233
        %6472 = vmatmul.bf16.gmra.mxu0 %v2372
        %v6473 = vpop.f32.mrf.mxu0
        %v6474 = vadd.f32 %v6425, %v6473
        %v6475 = vpop.f32.mrf.mxu0
        %v6476 = vadd.f32 %v6427, %v6475
        %6477 = vmatmul.bf16.gmra.mxu0 %v2376
        %v6478 = vpop.f32.mrf.mxu0
        %v6479 = vadd.f32 %v6430, %v6478
        %v6480 = vpop.f32.mrf.mxu0
        %v6481 = vadd.f32 %v6432, %v6480
        %6482 = vmatmul.bf16.gmra.mxu0 %v2380
        %v6483 = vpop.f32.mrf.mxu0
        %v6484 = vadd.f32 %v6435, %v6483
        %v6485 = vpop.f32.mrf.mxu0
        %v6486 = vadd.f32 %v6437, %v6485
        %6487 = vmatmul.bf16.gmra.mxu0 %v2384
        %v6488 = vpop.f32.mrf.mxu0
        %v6489 = vadd.f32 %v6440, %v6488
        %v6490 = vpop.f32.mrf.mxu0
        %v6491 = vadd.f32 %v6442, %v6490
        %6492 = vmatmul.bf16.gmra.mxu0 %v2388
        %v6493 = vpop.f32.mrf.mxu0
        %v6494 = vadd.f32 %v6445, %v6493
        %v6495 = vpop.f32.mrf.mxu0
        %v6496 = vadd.f32 %v6447, %v6495
        %6497 = vmatmul.bf16.gmra.mxu0 %v2392
        %v6498 = vpop.f32.mrf.mxu0
        %v6499 = vadd.f32 %v6450, %v6498
        %v6500 = vpop.f32.mrf.mxu0
        %v6501 = vadd.f32 %v6452, %v6500
        %6502 = vmatmul.bf16.gmra.mxu0 %v2396
        %v6503 = vpop.f32.mrf.mxu0
        %v6504 = vadd.f32 %v6455, %v6503
        %v6505 = vpop.f32.mrf.mxu0
        %v6506 = vadd.f32 %v6457, %v6505
        %6507 = vmatmul.bf16.gmra.mxu0 %v2400
        %v6508 = vpop.f32.mrf.mxu0
        %v6509 = vadd.f32 %v6460, %v6508
        %v6510 = vpop.f32.mrf.mxu0
        %v6511 = vadd.f32 %v6462, %v6510
        %6512 = vdwg.mxu0
        %6513 = vmatpush.bf16.msra.mxu0 %v4473
        %6514 = vmatpush.bf16.msra.mxu0 %v4457
        %6515 = vmatpush.bf16.msra.mxu0 %v4441
        %6516 = vmatpush.bf16.msra.mxu0 %v4425
        %6517 = vmatpush.bf16.msra.mxu0 %v4409
        %6518 = vmatpush.bf16.msra.mxu0 %v4393
        %6519 = vmatpush.bf16.msra.mxu0 %v4377
        %6520 = vmatpush.bf16.msra.mxu0 %v4361
        %6521 = vmatmul.bf16.gmra.mxu0 %v2373
        %v6522 = vpop.f32.mrf.mxu0
        %v6523 = vadd.f32 %v6474, %v6522
        %v6524 = vpop.f32.mrf.mxu0
        %v6525 = vadd.f32 %v6476, %v6524
        %6526 = vmatmul.bf16.gmra.mxu0 %v2377
        %v6527 = vpop.f32.mrf.mxu0
        %v6528 = vadd.f32 %v6479, %v6527
        %v6529 = vpop.f32.mrf.mxu0
        %v6530 = vadd.f32 %v6481, %v6529
        %6531 = vmatmul.bf16.gmra.mxu0 %v2381
        %v6532 = vpop.f32.mrf.mxu0
        %v6533 = vadd.f32 %v6484, %v6532
        %v6534 = vpop.f32.mrf.mxu0
        %v6535 = vadd.f32 %v6486, %v6534
        %6536 = vmatmul.bf16.gmra.mxu0 %v2385
        %v6537 = vpop.f32.mrf.mxu0
        %v6538 = vadd.f32 %v6489, %v6537
        %v6539 = vpop.f32.mrf.mxu0
        %v6540 = vadd.f32 %v6491, %v6539
        %6541 = vmatmul.bf16.gmra.mxu0 %v2389
        %v6542 = vpop.f32.mrf.mxu0
        %v6543 = vadd.f32 %v6494, %v6542
        %v6544 = vpop.f32.mrf.mxu0
        %v6545 = vadd.f32 %v6496, %v6544
        %6546 = vmatmul.bf16.gmra.mxu0 %v2393
        %v6547 = vpop.f32.mrf.mxu0
        %v6548 = vadd.f32 %v6499, %v6547
        %v6549 = vpop.f32.mrf.mxu0
        %v6550 = vadd.f32 %v6501, %v6549
        %6551 = vmatmul.bf16.gmra.mxu0 %v2397
        %v6552 = vpop.f32.mrf.mxu0
        %v6553 = vadd.f32 %v6504, %v6552
        %v6554 = vpop.f32.mrf.mxu0
        %v6555 = vadd.f32 %v6506, %v6554
        %6556 = vmatmul.bf16.gmra.mxu0 %v2401
        %v6557 = vpop.f32.mrf.mxu0
        %v6558 = vadd.f32 %v6509, %v6557
        %v6559 = vpop.f32.mrf.mxu0
        %v6560 = vadd.f32 %v6511, %v6559
        %6561 = vdwg.mxu0
        %6562 = vmatpush.bf16.msra.mxu0 %v4090
        %6563 = vmatpush.bf16.msra.mxu0 %v4074
        %6564 = vmatpush.bf16.msra.mxu0 %v4058
        %6565 = vmatpush.bf16.msra.mxu0 %v4042
        %6566 = vmatpush.bf16.msra.mxu0 %v4026
        %6567 = vmatpush.bf16.msra.mxu0 %v4010
        %6568 = vmatpush.bf16.msra.mxu0 %v3994
        %6569 = vmatpush.bf16.msra.mxu0 %v3978
        %6570 = vmatmul.bf16.gmra.mxu0 %v2370
        %v6571 = vpop.f32.mrf.mxu0
        %v6572 = vadd.f32 %v2250, %v6571
        %v6573 = vpop.f32.mrf.mxu0
        %v6574 = vadd.f32 %v2250, %v6573
        %6575 = vmatmul.bf16.gmra.mxu0 %v2374
        %v6576 = vpop.f32.mrf.mxu0
        %v6577 = vadd.f32 %v2250, %v6576
        %v6578 = vpop.f32.mrf.mxu0
        %v6579 = vadd.f32 %v2250, %v6578
        %6580 = vmatmul.bf16.gmra.mxu0 %v2378
        %v6581 = vpop.f32.mrf.mxu0
        %v6582 = vadd.f32 %v2250, %v6581
        %v6583 = vpop.f32.mrf.mxu0
        %v6584 = vadd.f32 %v2250, %v6583
        %6585 = vmatmul.bf16.gmra.mxu0 %v2382
        %v6586 = vpop.f32.mrf.mxu0
        %v6587 = vadd.f32 %v2250, %v6586
        %v6588 = vpop.f32.mrf.mxu0
        %v6589 = vadd.f32 %v2250, %v6588
        %6590 = vmatmul.bf16.gmra.mxu0 %v2386
        %v6591 = vpop.f32.mrf.mxu0
        %v6592 = vadd.f32 %v2250, %v6591
        %v6593 = vpop.f32.mrf.mxu0
        %v6594 = vadd.f32 %v2250, %v6593
        %6595 = vmatmul.bf16.gmra.mxu0 %v2390
        %v6596 = vpop.f32.mrf.mxu0
        %v6597 = vadd.f32 %v2250, %v6596
        %v6598 = vpop.f32.mrf.mxu0
        %v6599 = vadd.f32 %v2250, %v6598
        %6600 = vmatmul.bf16.gmra.mxu0 %v2394
        %v6601 = vpop.f32.mrf.mxu0
        %v6602 = vadd.f32 %v2250, %v6601
        %v6603 = vpop.f32.mrf.mxu0
        %v6604 = vadd.f32 %v2250, %v6603
        %6605 = vmatmul.bf16.gmra.mxu0 %v2398
        %v6606 = vpop.f32.mrf.mxu0
        %v6607 = vadd.f32 %v2250, %v6606
        %v6608 = vpop.f32.mrf.mxu0
        %v6609 = vadd.f32 %v2250, %v6608
        %6610 = vdwg.mxu0
        %6611 = vmatpush.bf16.msra.mxu0 %v4218
        %6612 = vmatpush.bf16.msra.mxu0 %v4202
        %6613 = vmatpush.bf16.msra.mxu0 %v4186
        %6614 = vmatpush.bf16.msra.mxu0 %v4170
        %6615 = vmatpush.bf16.msra.mxu0 %v4154
        %6616 = vmatpush.bf16.msra.mxu0 %v4138
        %6617 = vmatpush.bf16.msra.mxu0 %v4122
        %6618 = vmatpush.bf16.msra.mxu0 %v4106
        %6619 = vmatmul.bf16.gmra.mxu0 %v2371
        %v6620 = vpop.f32.mrf.mxu0
        %v6621 = vadd.f32 %v6572, %v6620
        %v6622 = vpop.f32.mrf.mxu0
        %v6623 = vadd.f32 %v6574, %v6622
        %6624 = vmatmul.bf16.gmra.mxu0 %v2375
        %v6625 = vpop.f32.mrf.mxu0
        %v6626 = vadd.f32 %v6577, %v6625
        %v6627 = vpop.f32.mrf.mxu0
        %v6628 = vadd.f32 %v6579, %v6627
        %6629 = vmatmul.bf16.gmra.mxu0 %v2379
        %v6630 = vpop.f32.mrf.mxu0
        %v6631 = vadd.f32 %v6582, %v6630
        %v6632 = vpop.f32.mrf.mxu0
        %v6633 = vadd.f32 %v6584, %v6632
        %6634 = vmatmul.bf16.gmra.mxu0 %v2383
        %v6635 = vpop.f32.mrf.mxu0
        %v6636 = vadd.f32 %v6587, %v6635
        %v6637 = vpop.f32.mrf.mxu0
        %v6638 = vadd.f32 %v6589, %v6637
        %6639 = vmatmul.bf16.gmra.mxu0 %v2387
        %v6640 = vpop.f32.mrf.mxu0
        %v6641 = vadd.f32 %v6592, %v6640
        %v6642 = vpop.f32.mrf.mxu0
        %v6643 = vadd.f32 %v6594, %v6642
        %6644 = vmatmul.bf16.gmra.mxu0 %v2391
        %v6645 = vpop.f32.mrf.mxu0
        %v6646 = vadd.f32 %v6597, %v6645
        %v6647 = vpop.f32.mrf.mxu0
        %v6648 = vadd.f32 %v6599, %v6647
        %6649 = vmatmul.bf16.gmra.mxu0 %v2395
        %v6650 = vpop.f32.mrf.mxu0
        %v6651 = vadd.f32 %v6602, %v6650
        %v6652 = vpop.f32.mrf.mxu0
        %v6653 = vadd.f32 %v6604, %v6652
        %6654 = vmatmul.bf16.gmra.mxu0 %v2399
        %v6655 = vpop.f32.mrf.mxu0
        %v6656 = vadd.f32 %v6607, %v6655
        %v6657 = vpop.f32.mrf.mxu0
        %v6658 = vadd.f32 %v6609, %v6657
        %6659 = vdwg.mxu0
        %6660 = vmatpush.bf16.msra.mxu0 %v4346
        %6661 = vmatpush.bf16.msra.mxu0 %v4330
        %6662 = vmatpush.bf16.msra.mxu0 %v4314
        %6663 = vmatpush.bf16.msra.mxu0 %v4298
        %6664 = vmatpush.bf16.msra.mxu0 %v4282
        %6665 = vmatpush.bf16.msra.mxu0 %v4266
        %6666 = vmatpush.bf16.msra.mxu0 %v4250
        %6667 = vmatpush.bf16.msra.mxu0 %v4234
        %6668 = vmatmul.bf16.gmra.mxu0 %v2372
        %v6669 = vpop.f32.mrf.mxu0
        %v6670 = vadd.f32 %v6621, %v6669
        %v6671 = vpop.f32.mrf.mxu0
        %v6672 = vadd.f32 %v6623, %v6671
        %6673 = vmatmul.bf16.gmra.mxu0 %v2376
        %v6674 = vpop.f32.mrf.mxu0
        %v6675 = vadd.f32 %v6626, %v6674
        %v6676 = vpop.f32.mrf.mxu0
        %v6677 = vadd.f32 %v6628, %v6676
        %6678 = vmatmul.bf16.gmra.mxu0 %v2380
        %v6679 = vpop.f32.mrf.mxu0
        %v6680 = vadd.f32 %v6631, %v6679
        %v6681 = vpop.f32.mrf.mxu0
        %v6682 = vadd.f32 %v6633, %v6681
        %6683 = vmatmul.bf16.gmra.mxu0 %v2384
        %v6684 = vpop.f32.mrf.mxu0
        %v6685 = vadd.f32 %v6636, %v6684
        %v6686 = vpop.f32.mrf.mxu0
        %v6687 = vadd.f32 %v6638, %v6686
        %6688 = vmatmul.bf16.gmra.mxu0 %v2388
        %v6689 = vpop.f32.mrf.mxu0
        %v6690 = vadd.f32 %v6641, %v6689
        %v6691 = vpop.f32.mrf.mxu0
        %v6692 = vadd.f32 %v6643, %v6691
        %6693 = vmatmul.bf16.gmra.mxu0 %v2392
        %v6694 = vpop.f32.mrf.mxu0
        %v6695 = vadd.f32 %v6646, %v6694
        %v6696 = vpop.f32.mrf.mxu0
        %v6697 = vadd.f32 %v6648, %v6696
        %6698 = vmatmul.bf16.gmra.mxu0 %v2396
        %v6699 = vpop.f32.mrf.mxu0
        %v6700 = vadd.f32 %v6651, %v6699
        %v6701 = vpop.f32.mrf.mxu0
        %v6702 = vadd.f32 %v6653, %v6701
        %6703 = vmatmul.bf16.gmra.mxu0 %v2400
        %v6704 = vpop.f32.mrf.mxu0
        %v6705 = vadd.f32 %v6656, %v6704
        %v6706 = vpop.f32.mrf.mxu0
        %v6707 = vadd.f32 %v6658, %v6706
        %6708 = vdwg.mxu0
        %6709 = vmatpush.bf16.msra.mxu0 %v4474
        %6710 = vmatpush.bf16.msra.mxu0 %v4458
        %6711 = vmatpush.bf16.msra.mxu0 %v4442
        %6712 = vmatpush.bf16.msra.mxu0 %v4426
        %6713 = vmatpush.bf16.msra.mxu0 %v4410
        %6714 = vmatpush.bf16.msra.mxu0 %v4394
        %6715 = vmatpush.bf16.msra.mxu0 %v4378
        %6716 = vmatpush.bf16.msra.mxu0 %v4362
        %6717 = vmatmul.bf16.gmra.mxu0 %v2373
        %v6718 = vpop.f32.mrf.mxu0
        %v6719 = vadd.f32 %v6670, %v6718
        %v6720 = vpop.f32.mrf.mxu0
        %v6721 = vadd.f32 %v6672, %v6720
        %6722 = vmatmul.bf16.gmra.mxu0 %v2377
        %v6723 = vpop.f32.mrf.mxu0
        %v6724 = vadd.f32 %v6675, %v6723
        %v6725 = vpop.f32.mrf.mxu0
        %v6726 = vadd.f32 %v6677, %v6725
        %6727 = vmatmul.bf16.gmra.mxu0 %v2381
        %v6728 = vpop.f32.mrf.mxu0
        %v6729 = vadd.f32 %v6680, %v6728
        %v6730 = vpop.f32.mrf.mxu0
        %v6731 = vadd.f32 %v6682, %v6730
        %6732 = vmatmul.bf16.gmra.mxu0 %v2385
        %v6733 = vpop.f32.mrf.mxu0
        %v6734 = vadd.f32 %v6685, %v6733
        %v6735 = vpop.f32.mrf.mxu0
        %v6736 = vadd.f32 %v6687, %v6735
        %6737 = vmatmul.bf16.gmra.mxu0 %v2389
        %v6738 = vpop.f32.mrf.mxu0
        %v6739 = vadd.f32 %v6690, %v6738
        %v6740 = vpop.f32.mrf.mxu0
        %v6741 = vadd.f32 %v6692, %v6740
        %6742 = vmatmul.bf16.gmra.mxu0 %v2393
        %v6743 = vpop.f32.mrf.mxu0
        %v6744 = vadd.f32 %v6695, %v6743
        %v6745 = vpop.f32.mrf.mxu0
        %v6746 = vadd.f32 %v6697, %v6745
        %6747 = vmatmul.bf16.gmra.mxu0 %v2397
        %v6748 = vpop.f32.mrf.mxu0
        %v6749 = vadd.f32 %v6700, %v6748
        %v6750 = vpop.f32.mrf.mxu0
        %v6751 = vadd.f32 %v6702, %v6750
        %6752 = vmatmul.bf16.gmra.mxu0 %v2401
        %v6753 = vpop.f32.mrf.mxu0
        %v6754 = vadd.f32 %v6705, %v6753
        %v6755 = vpop.f32.mrf.mxu0
        %v6756 = vadd.f32 %v6707, %v6755
        %6757 = vdwg.mxu0
        %6758 = vmatpush.bf16.msra.mxu0 %v4091
        %6759 = vmatpush.bf16.msra.mxu0 %v4075
        %6760 = vmatpush.bf16.msra.mxu0 %v4059
        %6761 = vmatpush.bf16.msra.mxu0 %v4043
        %6762 = vmatpush.bf16.msra.mxu0 %v4027
        %6763 = vmatpush.bf16.msra.mxu0 %v4011
        %6764 = vmatpush.bf16.msra.mxu0 %v3995
        %6765 = vmatpush.bf16.msra.mxu0 %v3979
        %6766 = vmatmul.bf16.gmra.mxu0 %v2370
        %v6767 = vpop.f32.mrf.mxu0
        %v6768 = vadd.f32 %v2251, %v6767
        %v6769 = vpop.f32.mrf.mxu0
        %v6770 = vadd.f32 %v2251, %v6769
        %6771 = vmatmul.bf16.gmra.mxu0 %v2374
        %v6772 = vpop.f32.mrf.mxu0
        %v6773 = vadd.f32 %v2251, %v6772
        %v6774 = vpop.f32.mrf.mxu0
        %v6775 = vadd.f32 %v2251, %v6774
        %6776 = vmatmul.bf16.gmra.mxu0 %v2378
        %v6777 = vpop.f32.mrf.mxu0
        %v6778 = vadd.f32 %v2251, %v6777
        %v6779 = vpop.f32.mrf.mxu0
        %v6780 = vadd.f32 %v2251, %v6779
        %6781 = vmatmul.bf16.gmra.mxu0 %v2382
        %v6782 = vpop.f32.mrf.mxu0
        %v6783 = vadd.f32 %v2251, %v6782
        %v6784 = vpop.f32.mrf.mxu0
        %v6785 = vadd.f32 %v2251, %v6784
        %6786 = vmatmul.bf16.gmra.mxu0 %v2386
        %v6787 = vpop.f32.mrf.mxu0
        %v6788 = vadd.f32 %v2251, %v6787
        %v6789 = vpop.f32.mrf.mxu0
        %v6790 = vadd.f32 %v2251, %v6789
        %6791 = vmatmul.bf16.gmra.mxu0 %v2390
        %v6792 = vpop.f32.mrf.mxu0
        %v6793 = vadd.f32 %v2251, %v6792
        %v6794 = vpop.f32.mrf.mxu0
        %v6795 = vadd.f32 %v2251, %v6794
        %6796 = vmatmul.bf16.gmra.mxu0 %v2394
        %v6797 = vpop.f32.mrf.mxu0
        %v6798 = vadd.f32 %v2251, %v6797
        %v6799 = vpop.f32.mrf.mxu0
        %v6800 = vadd.f32 %v2251, %v6799
        %6801 = vmatmul.bf16.gmra.mxu0 %v2398
        %v6802 = vpop.f32.mrf.mxu0
        %v6803 = vadd.f32 %v2251, %v6802
        %v6804 = vpop.f32.mrf.mxu0
        %v6805 = vadd.f32 %v2251, %v6804
        %6806 = vdwg.mxu0
        %6807 = vmatpush.bf16.msra.mxu0 %v4219
        %6808 = vmatpush.bf16.msra.mxu0 %v4203
        %6809 = vmatpush.bf16.msra.mxu0 %v4187
        %6810 = vmatpush.bf16.msra.mxu0 %v4171
        %6811 = vmatpush.bf16.msra.mxu0 %v4155
        %6812 = vmatpush.bf16.msra.mxu0 %v4139
        %6813 = vmatpush.bf16.msra.mxu0 %v4123
        %6814 = vmatpush.bf16.msra.mxu0 %v4107
        %6815 = vmatmul.bf16.gmra.mxu0 %v2371
        %v6816 = vpop.f32.mrf.mxu0
        %v6817 = vadd.f32 %v6768, %v6816
        %v6818 = vpop.f32.mrf.mxu0
        %v6819 = vadd.f32 %v6770, %v6818
        %6820 = vmatmul.bf16.gmra.mxu0 %v2375
        %v6821 = vpop.f32.mrf.mxu0
        %v6822 = vadd.f32 %v6773, %v6821
        %v6823 = vpop.f32.mrf.mxu0
        %v6824 = vadd.f32 %v6775, %v6823
        %6825 = vmatmul.bf16.gmra.mxu0 %v2379
        %v6826 = vpop.f32.mrf.mxu0
        %v6827 = vadd.f32 %v6778, %v6826
        %v6828 = vpop.f32.mrf.mxu0
        %v6829 = vadd.f32 %v6780, %v6828
        %6830 = vmatmul.bf16.gmra.mxu0 %v2383
        %v6831 = vpop.f32.mrf.mxu0
        %v6832 = vadd.f32 %v6783, %v6831
        %v6833 = vpop.f32.mrf.mxu0
        %v6834 = vadd.f32 %v6785, %v6833
        %6835 = vmatmul.bf16.gmra.mxu0 %v2387
        %v6836 = vpop.f32.mrf.mxu0
        %v6837 = vadd.f32 %v6788, %v6836
        %v6838 = vpop.f32.mrf.mxu0
        %v6839 = vadd.f32 %v6790, %v6838
        %6840 = vmatmul.bf16.gmra.mxu0 %v2391
        %v6841 = vpop.f32.mrf.mxu0
        %v6842 = vadd.f32 %v6793, %v6841
        %v6843 = vpop.f32.mrf.mxu0
        %v6844 = vadd.f32 %v6795, %v6843
        %6845 = vmatmul.bf16.gmra.mxu0 %v2395
        %v6846 = vpop.f32.mrf.mxu0
        %v6847 = vadd.f32 %v6798, %v6846
        %v6848 = vpop.f32.mrf.mxu0
        %v6849 = vadd.f32 %v6800, %v6848
        %6850 = vmatmul.bf16.gmra.mxu0 %v2399
        %v6851 = vpop.f32.mrf.mxu0
        %v6852 = vadd.f32 %v6803, %v6851
        %v6853 = vpop.f32.mrf.mxu0
        %v6854 = vadd.f32 %v6805, %v6853
        %6855 = vdwg.mxu0
        %6856 = vmatpush.bf16.msra.mxu0 %v4347
        %6857 = vmatpush.bf16.msra.mxu0 %v4331
        %6858 = vmatpush.bf16.msra.mxu0 %v4315
        %6859 = vmatpush.bf16.msra.mxu0 %v4299
        %6860 = vmatpush.bf16.msra.mxu0 %v4283
        %6861 = vmatpush.bf16.msra.mxu0 %v4267
        %6862 = vmatpush.bf16.msra.mxu0 %v4251
        %6863 = vmatpush.bf16.msra.mxu0 %v4235
        %6864 = vmatmul.bf16.gmra.mxu0 %v2372
        %v6865 = vpop.f32.mrf.mxu0
        %v6866 = vadd.f32 %v6817, %v6865
        %v6867 = vpop.f32.mrf.mxu0
        %v6868 = vadd.f32 %v6819, %v6867
        %6869 = vmatmul.bf16.gmra.mxu0 %v2376
        %v6870 = vpop.f32.mrf.mxu0
        %v6871 = vadd.f32 %v6822, %v6870
        %v6872 = vpop.f32.mrf.mxu0
        %v6873 = vadd.f32 %v6824, %v6872
        %6874 = vmatmul.bf16.gmra.mxu0 %v2380
        %v6875 = vpop.f32.mrf.mxu0
        %v6876 = vadd.f32 %v6827, %v6875
        %v6877 = vpop.f32.mrf.mxu0
        %v6878 = vadd.f32 %v6829, %v6877
        %6879 = vmatmul.bf16.gmra.mxu0 %v2384
        %v6880 = vpop.f32.mrf.mxu0
        %v6881 = vadd.f32 %v6832, %v6880
        %v6882 = vpop.f32.mrf.mxu0
        %v6883 = vadd.f32 %v6834, %v6882
        %6884 = vmatmul.bf16.gmra.mxu0 %v2388
        %v6885 = vpop.f32.mrf.mxu0
        %v6886 = vadd.f32 %v6837, %v6885
        %v6887 = vpop.f32.mrf.mxu0
        %v6888 = vadd.f32 %v6839, %v6887
        %6889 = vmatmul.bf16.gmra.mxu0 %v2392
        %v6890 = vpop.f32.mrf.mxu0
        %v6891 = vadd.f32 %v6842, %v6890
        %v6892 = vpop.f32.mrf.mxu0
        %v6893 = vadd.f32 %v6844, %v6892
        %6894 = vmatmul.bf16.gmra.mxu0 %v2396
        %v6895 = vpop.f32.mrf.mxu0
        %v6896 = vadd.f32 %v6847, %v6895
        %v6897 = vpop.f32.mrf.mxu0
        %v6898 = vadd.f32 %v6849, %v6897
        %6899 = vmatmul.bf16.gmra.mxu0 %v2400
        %v6900 = vpop.f32.mrf.mxu0
        %v6901 = vadd.f32 %v6852, %v6900
        %v6902 = vpop.f32.mrf.mxu0
        %v6903 = vadd.f32 %v6854, %v6902
        %6904 = vdwg.mxu0
        %6905 = vmatpush.bf16.msra.mxu0 %v4475
        %6906 = vmatpush.bf16.msra.mxu0 %v4459
        %6907 = vmatpush.bf16.msra.mxu0 %v4443
        %6908 = vmatpush.bf16.msra.mxu0 %v4427
        %6909 = vmatpush.bf16.msra.mxu0 %v4411
        %6910 = vmatpush.bf16.msra.mxu0 %v4395
        %6911 = vmatpush.bf16.msra.mxu0 %v4379
        %6912 = vmatpush.bf16.msra.mxu0 %v4363
        %6913 = vmatmul.bf16.gmra.mxu0 %v2373
        %v6914 = vpop.f32.mrf.mxu0
        %v6915 = vadd.f32 %v6866, %v6914
        %v6916 = vpop.f32.mrf.mxu0
        %v6917 = vadd.f32 %v6868, %v6916
        %6918 = vmatmul.bf16.gmra.mxu0 %v2377
        %v6919 = vpop.f32.mrf.mxu0
        %v6920 = vadd.f32 %v6871, %v6919
        %v6921 = vpop.f32.mrf.mxu0
        %v6922 = vadd.f32 %v6873, %v6921
        %6923 = vmatmul.bf16.gmra.mxu0 %v2381
        %v6924 = vpop.f32.mrf.mxu0
        %v6925 = vadd.f32 %v6876, %v6924
        %v6926 = vpop.f32.mrf.mxu0
        %v6927 = vadd.f32 %v6878, %v6926
        %6928 = vmatmul.bf16.gmra.mxu0 %v2385
        %v6929 = vpop.f32.mrf.mxu0
        %v6930 = vadd.f32 %v6881, %v6929
        %v6931 = vpop.f32.mrf.mxu0
        %v6932 = vadd.f32 %v6883, %v6931
        %6933 = vmatmul.bf16.gmra.mxu0 %v2389
        %v6934 = vpop.f32.mrf.mxu0
        %v6935 = vadd.f32 %v6886, %v6934
        %v6936 = vpop.f32.mrf.mxu0
        %v6937 = vadd.f32 %v6888, %v6936
        %6938 = vmatmul.bf16.gmra.mxu0 %v2393
        %v6939 = vpop.f32.mrf.mxu0
        %v6940 = vadd.f32 %v6891, %v6939
        %v6941 = vpop.f32.mrf.mxu0
        %v6942 = vadd.f32 %v6893, %v6941
        %6943 = vmatmul.bf16.gmra.mxu0 %v2397
        %v6944 = vpop.f32.mrf.mxu0
        %v6945 = vadd.f32 %v6896, %v6944
        %v6946 = vpop.f32.mrf.mxu0
        %v6947 = vadd.f32 %v6898, %v6946
        %6948 = vmatmul.bf16.gmra.mxu0 %v2401
        %v6949 = vpop.f32.mrf.mxu0
        %v6950 = vadd.f32 %v6901, %v6949
        %v6951 = vpop.f32.mrf.mxu0
        %v6952 = vadd.f32 %v6903, %v6951
        %6953 = vdwg.mxu0
        %6954 = vmatpush.bf16.msra.mxu0 %v4092
        %6955 = vmatpush.bf16.msra.mxu0 %v4076
        %6956 = vmatpush.bf16.msra.mxu0 %v4060
        %6957 = vmatpush.bf16.msra.mxu0 %v4044
        %6958 = vmatpush.bf16.msra.mxu0 %v4028
        %6959 = vmatpush.bf16.msra.mxu0 %v4012
        %6960 = vmatpush.bf16.msra.mxu0 %v3996
        %6961 = vmatpush.bf16.msra.mxu0 %v3980
        %6962 = vmatmul.bf16.gmra.mxu0 %v2370
        %v6963 = vpop.f32.mrf.mxu0
        %v6964 = vadd.f32 %v2252, %v6963
        %v6965 = vpop.f32.mrf.mxu0
        %v6966 = vadd.f32 %v2252, %v6965
        %6967 = vmatmul.bf16.gmra.mxu0 %v2374
        %v6968 = vpop.f32.mrf.mxu0
        %v6969 = vadd.f32 %v2252, %v6968
        %v6970 = vpop.f32.mrf.mxu0
        %v6971 = vadd.f32 %v2252, %v6970
        %6972 = vmatmul.bf16.gmra.mxu0 %v2378
        %v6973 = vpop.f32.mrf.mxu0
        %v6974 = vadd.f32 %v2252, %v6973
        %v6975 = vpop.f32.mrf.mxu0
        %v6976 = vadd.f32 %v2252, %v6975
        %6977 = vmatmul.bf16.gmra.mxu0 %v2382
        %v6978 = vpop.f32.mrf.mxu0
        %v6979 = vadd.f32 %v2252, %v6978
        %v6980 = vpop.f32.mrf.mxu0
        %v6981 = vadd.f32 %v2252, %v6980
        %6982 = vmatmul.bf16.gmra.mxu0 %v2386
        %v6983 = vpop.f32.mrf.mxu0
        %v6984 = vadd.f32 %v2252, %v6983
        %v6985 = vpop.f32.mrf.mxu0
        %v6986 = vadd.f32 %v2252, %v6985
        %6987 = vmatmul.bf16.gmra.mxu0 %v2390
        %v6988 = vpop.f32.mrf.mxu0
        %v6989 = vadd.f32 %v2252, %v6988
        %v6990 = vpop.f32.mrf.mxu0
        %v6991 = vadd.f32 %v2252, %v6990
        %6992 = vmatmul.bf16.gmra.mxu0 %v2394
        %v6993 = vpop.f32.mrf.mxu0
        %v6994 = vadd.f32 %v2252, %v6993
        %v6995 = vpop.f32.mrf.mxu0
        %v6996 = vadd.f32 %v2252, %v6995
        %6997 = vmatmul.bf16.gmra.mxu0 %v2398
        %v6998 = vpop.f32.mrf.mxu0
        %v6999 = vadd.f32 %v2252, %v6998
        %v7000 = vpop.f32.mrf.mxu0
        %v7001 = vadd.f32 %v2252, %v7000
        %7002 = vdwg.mxu0
        %7003 = vmatpush.bf16.msra.mxu0 %v4220
        %7004 = vmatpush.bf16.msra.mxu0 %v4204
        %7005 = vmatpush.bf16.msra.mxu0 %v4188
        %7006 = vmatpush.bf16.msra.mxu0 %v4172
        %7007 = vmatpush.bf16.msra.mxu0 %v4156
        %7008 = vmatpush.bf16.msra.mxu0 %v4140
        %7009 = vmatpush.bf16.msra.mxu0 %v4124
        %7010 = vmatpush.bf16.msra.mxu0 %v4108
        %7011 = vmatmul.bf16.gmra.mxu0 %v2371
        %v7012 = vpop.f32.mrf.mxu0
        %v7013 = vadd.f32 %v6964, %v7012
        %v7014 = vpop.f32.mrf.mxu0
        %v7015 = vadd.f32 %v6966, %v7014
        %7016 = vmatmul.bf16.gmra.mxu0 %v2375
        %v7017 = vpop.f32.mrf.mxu0
        %v7018 = vadd.f32 %v6969, %v7017
        %v7019 = vpop.f32.mrf.mxu0
        %v7020 = vadd.f32 %v6971, %v7019
        %7021 = vmatmul.bf16.gmra.mxu0 %v2379
        %v7022 = vpop.f32.mrf.mxu0
        %v7023 = vadd.f32 %v6974, %v7022
        %v7024 = vpop.f32.mrf.mxu0
        %v7025 = vadd.f32 %v6976, %v7024
        %7026 = vmatmul.bf16.gmra.mxu0 %v2383
        %v7027 = vpop.f32.mrf.mxu0
        %v7028 = vadd.f32 %v6979, %v7027
        %v7029 = vpop.f32.mrf.mxu0
        %v7030 = vadd.f32 %v6981, %v7029
        %7031 = vmatmul.bf16.gmra.mxu0 %v2387
        %v7032 = vpop.f32.mrf.mxu0
        %v7033 = vadd.f32 %v6984, %v7032
        %v7034 = vpop.f32.mrf.mxu0
        %v7035 = vadd.f32 %v6986, %v7034
        %7036 = vmatmul.bf16.gmra.mxu0 %v2391
        %v7037 = vpop.f32.mrf.mxu0
        %v7038 = vadd.f32 %v6989, %v7037
        %v7039 = vpop.f32.mrf.mxu0
        %v7040 = vadd.f32 %v6991, %v7039
        %7041 = vmatmul.bf16.gmra.mxu0 %v2395
        %v7042 = vpop.f32.mrf.mxu0
        %v7043 = vadd.f32 %v6994, %v7042
        %v7044 = vpop.f32.mrf.mxu0
        %v7045 = vadd.f32 %v6996, %v7044
        %7046 = vmatmul.bf16.gmra.mxu0 %v2399
        %v7047 = vpop.f32.mrf.mxu0
        %v7048 = vadd.f32 %v6999, %v7047
        %v7049 = vpop.f32.mrf.mxu0
        %v7050 = vadd.f32 %v7001, %v7049
        %7051 = vdwg.mxu0
        %7052 = vmatpush.bf16.msra.mxu0 %v4348
        %7053 = vmatpush.bf16.msra.mxu0 %v4332
        %7054 = vmatpush.bf16.msra.mxu0 %v4316
        %7055 = vmatpush.bf16.msra.mxu0 %v4300
        %7056 = vmatpush.bf16.msra.mxu0 %v4284
        %7057 = vmatpush.bf16.msra.mxu0 %v4268
        %7058 = vmatpush.bf16.msra.mxu0 %v4252
        %7059 = vmatpush.bf16.msra.mxu0 %v4236
        %7060 = vmatmul.bf16.gmra.mxu0 %v2372
        %v7061 = vpop.f32.mrf.mxu0
        %v7062 = vadd.f32 %v7013, %v7061
        %v7063 = vpop.f32.mrf.mxu0
        %v7064 = vadd.f32 %v7015, %v7063
        %7065 = vmatmul.bf16.gmra.mxu0 %v2376
        %v7066 = vpop.f32.mrf.mxu0
        %v7067 = vadd.f32 %v7018, %v7066
        %v7068 = vpop.f32.mrf.mxu0
        %v7069 = vadd.f32 %v7020, %v7068
        %7070 = vmatmul.bf16.gmra.mxu0 %v2380
        %v7071 = vpop.f32.mrf.mxu0
        %v7072 = vadd.f32 %v7023, %v7071
        %v7073 = vpop.f32.mrf.mxu0
        %v7074 = vadd.f32 %v7025, %v7073
        %7075 = vmatmul.bf16.gmra.mxu0 %v2384
        %v7076 = vpop.f32.mrf.mxu0
        %v7077 = vadd.f32 %v7028, %v7076
        %v7078 = vpop.f32.mrf.mxu0
        %v7079 = vadd.f32 %v7030, %v7078
        %7080 = vmatmul.bf16.gmra.mxu0 %v2388
        %v7081 = vpop.f32.mrf.mxu0
        %v7082 = vadd.f32 %v7033, %v7081
        %v7083 = vpop.f32.mrf.mxu0
        %v7084 = vadd.f32 %v7035, %v7083
        %7085 = vmatmul.bf16.gmra.mxu0 %v2392
        %v7086 = vpop.f32.mrf.mxu0
        %v7087 = vadd.f32 %v7038, %v7086
        %v7088 = vpop.f32.mrf.mxu0
        %v7089 = vadd.f32 %v7040, %v7088
        %7090 = vmatmul.bf16.gmra.mxu0 %v2396
        %v7091 = vpop.f32.mrf.mxu0
        %v7092 = vadd.f32 %v7043, %v7091
        %v7093 = vpop.f32.mrf.mxu0
        %v7094 = vadd.f32 %v7045, %v7093
        %7095 = vmatmul.bf16.gmra.mxu0 %v2400
        %v7096 = vpop.f32.mrf.mxu0
        %v7097 = vadd.f32 %v7048, %v7096
        %v7098 = vpop.f32.mrf.mxu0
        %v7099 = vadd.f32 %v7050, %v7098
        %7100 = vdwg.mxu0
        %7101 = vmatpush.bf16.msra.mxu0 %v4476
        %7102 = vmatpush.bf16.msra.mxu0 %v4460
        %7103 = vmatpush.bf16.msra.mxu0 %v4444
        %7104 = vmatpush.bf16.msra.mxu0 %v4428
        %7105 = vmatpush.bf16.msra.mxu0 %v4412
        %7106 = vmatpush.bf16.msra.mxu0 %v4396
        %7107 = vmatpush.bf16.msra.mxu0 %v4380
        %7108 = vmatpush.bf16.msra.mxu0 %v4364
        %7109 = vmatmul.bf16.gmra.mxu0 %v2373
        %v7110 = vpop.f32.mrf.mxu0
        %v7111 = vadd.f32 %v7062, %v7110
        %v7112 = vpop.f32.mrf.mxu0
        %v7113 = vadd.f32 %v7064, %v7112
        %7114 = vmatmul.bf16.gmra.mxu0 %v2377
        %v7115 = vpop.f32.mrf.mxu0
        %v7116 = vadd.f32 %v7067, %v7115
        %v7117 = vpop.f32.mrf.mxu0
        %v7118 = vadd.f32 %v7069, %v7117
        %7119 = vmatmul.bf16.gmra.mxu0 %v2381
        %v7120 = vpop.f32.mrf.mxu0
        %v7121 = vadd.f32 %v7072, %v7120
        %v7122 = vpop.f32.mrf.mxu0
        %v7123 = vadd.f32 %v7074, %v7122
        %7124 = vmatmul.bf16.gmra.mxu0 %v2385
        %v7125 = vpop.f32.mrf.mxu0
        %v7126 = vadd.f32 %v7077, %v7125
        %v7127 = vpop.f32.mrf.mxu0
        %v7128 = vadd.f32 %v7079, %v7127
        %7129 = vmatmul.bf16.gmra.mxu0 %v2389
        %v7130 = vpop.f32.mrf.mxu0
        %v7131 = vadd.f32 %v7082, %v7130
        %v7132 = vpop.f32.mrf.mxu0
        %v7133 = vadd.f32 %v7084, %v7132
        %7134 = vmatmul.bf16.gmra.mxu0 %v2393
        %v7135 = vpop.f32.mrf.mxu0
        %v7136 = vadd.f32 %v7087, %v7135
        %v7137 = vpop.f32.mrf.mxu0
        %v7138 = vadd.f32 %v7089, %v7137
        %7139 = vmatmul.bf16.gmra.mxu0 %v2397
        %v7140 = vpop.f32.mrf.mxu0
        %v7141 = vadd.f32 %v7092, %v7140
        %v7142 = vpop.f32.mrf.mxu0
        %v7143 = vadd.f32 %v7094, %v7142
        %7144 = vmatmul.bf16.gmra.mxu0 %v2401
        %v7145 = vpop.f32.mrf.mxu0
        %v7146 = vadd.f32 %v7097, %v7145
        %v7147 = vpop.f32.mrf.mxu0
        %v7148 = vadd.f32 %v7099, %v7147
        %7149 = vdwg.mxu0
        %7150 = vmatpush.bf16.msra.mxu0 %v4093
        %7151 = vmatpush.bf16.msra.mxu0 %v4077
        %7152 = vmatpush.bf16.msra.mxu0 %v4061
        %7153 = vmatpush.bf16.msra.mxu0 %v4045
        %7154 = vmatpush.bf16.msra.mxu0 %v4029
        %7155 = vmatpush.bf16.msra.mxu0 %v4013
        %7156 = vmatpush.bf16.msra.mxu0 %v3997
        %7157 = vmatpush.bf16.msra.mxu0 %v3981
        %7158 = vmatmul.bf16.gmra.mxu0 %v2370
        %v7159 = vpop.f32.mrf.mxu0
        %v7160 = vadd.f32 %v2253, %v7159
        %v7161 = vpop.f32.mrf.mxu0
        %v7162 = vadd.f32 %v2253, %v7161
        %7163 = vmatmul.bf16.gmra.mxu0 %v2374
        %v7164 = vpop.f32.mrf.mxu0
        %v7165 = vadd.f32 %v2253, %v7164
        %v7166 = vpop.f32.mrf.mxu0
        %v7167 = vadd.f32 %v2253, %v7166
        %7168 = vmatmul.bf16.gmra.mxu0 %v2378
        %v7169 = vpop.f32.mrf.mxu0
        %v7170 = vadd.f32 %v2253, %v7169
        %v7171 = vpop.f32.mrf.mxu0
        %v7172 = vadd.f32 %v2253, %v7171
        %7173 = vmatmul.bf16.gmra.mxu0 %v2382
        %v7174 = vpop.f32.mrf.mxu0
        %v7175 = vadd.f32 %v2253, %v7174
        %v7176 = vpop.f32.mrf.mxu0
        %v7177 = vadd.f32 %v2253, %v7176
        %7178 = vmatmul.bf16.gmra.mxu0 %v2386
        %v7179 = vpop.f32.mrf.mxu0
        %v7180 = vadd.f32 %v2253, %v7179
        %v7181 = vpop.f32.mrf.mxu0
        %v7182 = vadd.f32 %v2253, %v7181
        %7183 = vmatmul.bf16.gmra.mxu0 %v2390
        %v7184 = vpop.f32.mrf.mxu0
        %v7185 = vadd.f32 %v2253, %v7184
        %v7186 = vpop.f32.mrf.mxu0
        %v7187 = vadd.f32 %v2253, %v7186
        %7188 = vmatmul.bf16.gmra.mxu0 %v2394
        %v7189 = vpop.f32.mrf.mxu0
        %v7190 = vadd.f32 %v2253, %v7189
        %v7191 = vpop.f32.mrf.mxu0
        %v7192 = vadd.f32 %v2253, %v7191
        %7193 = vmatmul.bf16.gmra.mxu0 %v2398
        %v7194 = vpop.f32.mrf.mxu0
        %v7195 = vadd.f32 %v2253, %v7194
        %v7196 = vpop.f32.mrf.mxu0
        %v7197 = vadd.f32 %v2253, %v7196
        %7198 = vdwg.mxu0
        %7199 = vmatpush.bf16.msra.mxu0 %v4221
        %7200 = vmatpush.bf16.msra.mxu0 %v4205
        %7201 = vmatpush.bf16.msra.mxu0 %v4189
        %7202 = vmatpush.bf16.msra.mxu0 %v4173
        %7203 = vmatpush.bf16.msra.mxu0 %v4157
        %7204 = vmatpush.bf16.msra.mxu0 %v4141
        %7205 = vmatpush.bf16.msra.mxu0 %v4125
        %7206 = vmatpush.bf16.msra.mxu0 %v4109
        %7207 = vmatmul.bf16.gmra.mxu0 %v2371
        %v7208 = vpop.f32.mrf.mxu0
        %v7209 = vadd.f32 %v7160, %v7208
        %v7210 = vpop.f32.mrf.mxu0
        %v7211 = vadd.f32 %v7162, %v7210
        %7212 = vmatmul.bf16.gmra.mxu0 %v2375
        %v7213 = vpop.f32.mrf.mxu0
        %v7214 = vadd.f32 %v7165, %v7213
        %v7215 = vpop.f32.mrf.mxu0
        %v7216 = vadd.f32 %v7167, %v7215
        %7217 = vmatmul.bf16.gmra.mxu0 %v2379
        %v7218 = vpop.f32.mrf.mxu0
        %v7219 = vadd.f32 %v7170, %v7218
        %v7220 = vpop.f32.mrf.mxu0
        %v7221 = vadd.f32 %v7172, %v7220
        %7222 = vmatmul.bf16.gmra.mxu0 %v2383
        %v7223 = vpop.f32.mrf.mxu0
        %v7224 = vadd.f32 %v7175, %v7223
        %v7225 = vpop.f32.mrf.mxu0
        %v7226 = vadd.f32 %v7177, %v7225
        %7227 = vmatmul.bf16.gmra.mxu0 %v2387
        %v7228 = vpop.f32.mrf.mxu0
        %v7229 = vadd.f32 %v7180, %v7228
        %v7230 = vpop.f32.mrf.mxu0
        %v7231 = vadd.f32 %v7182, %v7230
        %7232 = vmatmul.bf16.gmra.mxu0 %v2391
        %v7233 = vpop.f32.mrf.mxu0
        %v7234 = vadd.f32 %v7185, %v7233
        %v7235 = vpop.f32.mrf.mxu0
        %v7236 = vadd.f32 %v7187, %v7235
        %7237 = vmatmul.bf16.gmra.mxu0 %v2395
        %v7238 = vpop.f32.mrf.mxu0
        %v7239 = vadd.f32 %v7190, %v7238
        %v7240 = vpop.f32.mrf.mxu0
        %v7241 = vadd.f32 %v7192, %v7240
        %7242 = vmatmul.bf16.gmra.mxu0 %v2399
        %v7243 = vpop.f32.mrf.mxu0
        %v7244 = vadd.f32 %v7195, %v7243
        %v7245 = vpop.f32.mrf.mxu0
        %v7246 = vadd.f32 %v7197, %v7245
        %7247 = vdwg.mxu0
        %7248 = vmatpush.bf16.msra.mxu0 %v4349
        %7249 = vmatpush.bf16.msra.mxu0 %v4333
        %7250 = vmatpush.bf16.msra.mxu0 %v4317
        %7251 = vmatpush.bf16.msra.mxu0 %v4301
        %7252 = vmatpush.bf16.msra.mxu0 %v4285
        %7253 = vmatpush.bf16.msra.mxu0 %v4269
        %7254 = vmatpush.bf16.msra.mxu0 %v4253
        %7255 = vmatpush.bf16.msra.mxu0 %v4237
        %7256 = vmatmul.bf16.gmra.mxu0 %v2372
        %v7257 = vpop.f32.mrf.mxu0
        %v7258 = vadd.f32 %v7209, %v7257
        %v7259 = vpop.f32.mrf.mxu0
        %v7260 = vadd.f32 %v7211, %v7259
        %7261 = vmatmul.bf16.gmra.mxu0 %v2376
        %v7262 = vpop.f32.mrf.mxu0
        %v7263 = vadd.f32 %v7214, %v7262
        %v7264 = vpop.f32.mrf.mxu0
        %v7265 = vadd.f32 %v7216, %v7264
        %7266 = vmatmul.bf16.gmra.mxu0 %v2380
        %v7267 = vpop.f32.mrf.mxu0
        %v7268 = vadd.f32 %v7219, %v7267
        %v7269 = vpop.f32.mrf.mxu0
        %v7270 = vadd.f32 %v7221, %v7269
        %7271 = vmatmul.bf16.gmra.mxu0 %v2384
        %v7272 = vpop.f32.mrf.mxu0
        %v7273 = vadd.f32 %v7224, %v7272
        %v7274 = vpop.f32.mrf.mxu0
        %v7275 = vadd.f32 %v7226, %v7274
        %7276 = vmatmul.bf16.gmra.mxu0 %v2388
        %v7277 = vpop.f32.mrf.mxu0
        %v7278 = vadd.f32 %v7229, %v7277
        %v7279 = vpop.f32.mrf.mxu0
        %v7280 = vadd.f32 %v7231, %v7279
        %7281 = vmatmul.bf16.gmra.mxu0 %v2392
        %v7282 = vpop.f32.mrf.mxu0
        %v7283 = vadd.f32 %v7234, %v7282
        %v7284 = vpop.f32.mrf.mxu0
        %v7285 = vadd.f32 %v7236, %v7284
        %7286 = vmatmul.bf16.gmra.mxu0 %v2396
        %v7287 = vpop.f32.mrf.mxu0
        %v7288 = vadd.f32 %v7239, %v7287
        %v7289 = vpop.f32.mrf.mxu0
        %v7290 = vadd.f32 %v7241, %v7289
        %7291 = vmatmul.bf16.gmra.mxu0 %v2400
        %v7292 = vpop.f32.mrf.mxu0
        %v7293 = vadd.f32 %v7244, %v7292
        %v7294 = vpop.f32.mrf.mxu0
        %v7295 = vadd.f32 %v7246, %v7294
        %7296 = vdwg.mxu0
        %7297 = vmatpush.bf16.msra.mxu0 %v4477
        %7298 = vmatpush.bf16.msra.mxu0 %v4461
        %7299 = vmatpush.bf16.msra.mxu0 %v4445
        %7300 = vmatpush.bf16.msra.mxu0 %v4429
        %7301 = vmatpush.bf16.msra.mxu0 %v4413
        %7302 = vmatpush.bf16.msra.mxu0 %v4397
        %7303 = vmatpush.bf16.msra.mxu0 %v4381
        %7304 = vmatpush.bf16.msra.mxu0 %v4365
        %7305 = vmatmul.bf16.gmra.mxu0 %v2373
        %v7306 = vpop.f32.mrf.mxu0
        %v7307 = vadd.f32 %v7258, %v7306
        %v7308 = vpop.f32.mrf.mxu0
        %v7309 = vadd.f32 %v7260, %v7308
        %7310 = vmatmul.bf16.gmra.mxu0 %v2377
        %v7311 = vpop.f32.mrf.mxu0
        %v7312 = vadd.f32 %v7263, %v7311
        %v7313 = vpop.f32.mrf.mxu0
        %v7314 = vadd.f32 %v7265, %v7313
        %7315 = vmatmul.bf16.gmra.mxu0 %v2381
        %v7316 = vpop.f32.mrf.mxu0
        %v7317 = vadd.f32 %v7268, %v7316
        %v7318 = vpop.f32.mrf.mxu0
        %v7319 = vadd.f32 %v7270, %v7318
        %7320 = vmatmul.bf16.gmra.mxu0 %v2385
        %v7321 = vpop.f32.mrf.mxu0
        %v7322 = vadd.f32 %v7273, %v7321
        %v7323 = vpop.f32.mrf.mxu0
        %v7324 = vadd.f32 %v7275, %v7323
        %7325 = vmatmul.bf16.gmra.mxu0 %v2389
        %v7326 = vpop.f32.mrf.mxu0
        %v7327 = vadd.f32 %v7278, %v7326
        %v7328 = vpop.f32.mrf.mxu0
        %v7329 = vadd.f32 %v7280, %v7328
        %7330 = vmatmul.bf16.gmra.mxu0 %v2393
        %v7331 = vpop.f32.mrf.mxu0
        %v7332 = vadd.f32 %v7283, %v7331
        %v7333 = vpop.f32.mrf.mxu0
        %v7334 = vadd.f32 %v7285, %v7333
        %7335 = vmatmul.bf16.gmra.mxu0 %v2397
        %v7336 = vpop.f32.mrf.mxu0
        %v7337 = vadd.f32 %v7288, %v7336
        %v7338 = vpop.f32.mrf.mxu0
        %v7339 = vadd.f32 %v7290, %v7338
        %7340 = vmatmul.bf16.gmra.mxu0 %v2401
        %v7341 = vpop.f32.mrf.mxu0
        %v7342 = vadd.f32 %v7293, %v7341
        %v7343 = vpop.f32.mrf.mxu0
        %v7344 = vadd.f32 %v7295, %v7343
        %7345 = vdwg.mxu0
        %7346 = vmatpush.bf16.msra.mxu0 %v4094
        %7347 = vmatpush.bf16.msra.mxu0 %v4078
        %7348 = vmatpush.bf16.msra.mxu0 %v4062
        %7349 = vmatpush.bf16.msra.mxu0 %v4046
        %7350 = vmatpush.bf16.msra.mxu0 %v4030
        %7351 = vmatpush.bf16.msra.mxu0 %v4014
        %7352 = vmatpush.bf16.msra.mxu0 %v3998
        %7353 = vmatpush.bf16.msra.mxu0 %v3982
        %7354 = vmatmul.bf16.gmra.mxu0 %v2370
        %v7355 = vpop.f32.mrf.mxu0
        %v7356 = vadd.f32 %v2254, %v7355
        %v7357 = vpop.f32.mrf.mxu0
        %v7358 = vadd.f32 %v2254, %v7357
        %7359 = vmatmul.bf16.gmra.mxu0 %v2374
        %v7360 = vpop.f32.mrf.mxu0
        %v7361 = vadd.f32 %v2254, %v7360
        %v7362 = vpop.f32.mrf.mxu0
        %v7363 = vadd.f32 %v2254, %v7362
        %7364 = vmatmul.bf16.gmra.mxu0 %v2378
        %v7365 = vpop.f32.mrf.mxu0
        %v7366 = vadd.f32 %v2254, %v7365
        %v7367 = vpop.f32.mrf.mxu0
        %v7368 = vadd.f32 %v2254, %v7367
        %7369 = vmatmul.bf16.gmra.mxu0 %v2382
        %v7370 = vpop.f32.mrf.mxu0
        %v7371 = vadd.f32 %v2254, %v7370
        %v7372 = vpop.f32.mrf.mxu0
        %v7373 = vadd.f32 %v2254, %v7372
        %7374 = vmatmul.bf16.gmra.mxu0 %v2386
        %v7375 = vpop.f32.mrf.mxu0
        %v7376 = vadd.f32 %v2254, %v7375
        %v7377 = vpop.f32.mrf.mxu0
        %v7378 = vadd.f32 %v2254, %v7377
        %7379 = vmatmul.bf16.gmra.mxu0 %v2390
        %v7380 = vpop.f32.mrf.mxu0
        %v7381 = vadd.f32 %v2254, %v7380
        %v7382 = vpop.f32.mrf.mxu0
        %v7383 = vadd.f32 %v2254, %v7382
        %7384 = vmatmul.bf16.gmra.mxu0 %v2394
        %v7385 = vpop.f32.mrf.mxu0
        %v7386 = vadd.f32 %v2254, %v7385
        %v7387 = vpop.f32.mrf.mxu0
        %v7388 = vadd.f32 %v2254, %v7387
        %7389 = vmatmul.bf16.gmra.mxu0 %v2398
        %v7390 = vpop.f32.mrf.mxu0
        %v7391 = vadd.f32 %v2254, %v7390
        %v7392 = vpop.f32.mrf.mxu0
        %v7393 = vadd.f32 %v2254, %v7392
        %7394 = vdwg.mxu0
        %7395 = vmatpush.bf16.msra.mxu0 %v4222
        %7396 = vmatpush.bf16.msra.mxu0 %v4206
        %7397 = vmatpush.bf16.msra.mxu0 %v4190
        %7398 = vmatpush.bf16.msra.mxu0 %v4174
        %7399 = vmatpush.bf16.msra.mxu0 %v4158
        %7400 = vmatpush.bf16.msra.mxu0 %v4142
        %7401 = vmatpush.bf16.msra.mxu0 %v4126
        %7402 = vmatpush.bf16.msra.mxu0 %v4110
        %7403 = vmatmul.bf16.gmra.mxu0 %v2371
        %v7404 = vpop.f32.mrf.mxu0
        %v7405 = vadd.f32 %v7356, %v7404
        %v7406 = vpop.f32.mrf.mxu0
        %v7407 = vadd.f32 %v7358, %v7406
        %7408 = vmatmul.bf16.gmra.mxu0 %v2375
        %v7409 = vpop.f32.mrf.mxu0
        %v7410 = vadd.f32 %v7361, %v7409
        %v7411 = vpop.f32.mrf.mxu0
        %v7412 = vadd.f32 %v7363, %v7411
        %7413 = vmatmul.bf16.gmra.mxu0 %v2379
        %v7414 = vpop.f32.mrf.mxu0
        %v7415 = vadd.f32 %v7366, %v7414
        %v7416 = vpop.f32.mrf.mxu0
        %v7417 = vadd.f32 %v7368, %v7416
        %7418 = vmatmul.bf16.gmra.mxu0 %v2383
        %v7419 = vpop.f32.mrf.mxu0
        %v7420 = vadd.f32 %v7371, %v7419
        %v7421 = vpop.f32.mrf.mxu0
        %v7422 = vadd.f32 %v7373, %v7421
        %7423 = vmatmul.bf16.gmra.mxu0 %v2387
        %v7424 = vpop.f32.mrf.mxu0
        %v7425 = vadd.f32 %v7376, %v7424
        %v7426 = vpop.f32.mrf.mxu0
        %v7427 = vadd.f32 %v7378, %v7426
        %7428 = vmatmul.bf16.gmra.mxu0 %v2391
        %v7429 = vpop.f32.mrf.mxu0
        %v7430 = vadd.f32 %v7381, %v7429
        %v7431 = vpop.f32.mrf.mxu0
        %v7432 = vadd.f32 %v7383, %v7431
        %7433 = vmatmul.bf16.gmra.mxu0 %v2395
        %v7434 = vpop.f32.mrf.mxu0
        %v7435 = vadd.f32 %v7386, %v7434
        %v7436 = vpop.f32.mrf.mxu0
        %v7437 = vadd.f32 %v7388, %v7436
        %7438 = vmatmul.bf16.gmra.mxu0 %v2399
        %v7439 = vpop.f32.mrf.mxu0
        %v7440 = vadd.f32 %v7391, %v7439
        %v7441 = vpop.f32.mrf.mxu0
        %v7442 = vadd.f32 %v7393, %v7441
        %7443 = vdwg.mxu0
        %7444 = vmatpush.bf16.msra.mxu0 %v4350
        %7445 = vmatpush.bf16.msra.mxu0 %v4334
        %7446 = vmatpush.bf16.msra.mxu0 %v4318
        %7447 = vmatpush.bf16.msra.mxu0 %v4302
        %7448 = vmatpush.bf16.msra.mxu0 %v4286
        %7449 = vmatpush.bf16.msra.mxu0 %v4270
        %7450 = vmatpush.bf16.msra.mxu0 %v4254
        %7451 = vmatpush.bf16.msra.mxu0 %v4238
        %7452 = vmatmul.bf16.gmra.mxu0 %v2372
        %v7453 = vpop.f32.mrf.mxu0
        %v7454 = vadd.f32 %v7405, %v7453
        %v7455 = vpop.f32.mrf.mxu0
        %v7456 = vadd.f32 %v7407, %v7455
        %7457 = vmatmul.bf16.gmra.mxu0 %v2376
        %v7458 = vpop.f32.mrf.mxu0
        %v7459 = vadd.f32 %v7410, %v7458
        %v7460 = vpop.f32.mrf.mxu0
        %v7461 = vadd.f32 %v7412, %v7460
        %7462 = vmatmul.bf16.gmra.mxu0 %v2380
        %v7463 = vpop.f32.mrf.mxu0
        %v7464 = vadd.f32 %v7415, %v7463
        %v7465 = vpop.f32.mrf.mxu0
        %v7466 = vadd.f32 %v7417, %v7465
        %7467 = vmatmul.bf16.gmra.mxu0 %v2384
        %v7468 = vpop.f32.mrf.mxu0
        %v7469 = vadd.f32 %v7420, %v7468
        %v7470 = vpop.f32.mrf.mxu0
        %v7471 = vadd.f32 %v7422, %v7470
        %7472 = vmatmul.bf16.gmra.mxu0 %v2388
        %v7473 = vpop.f32.mrf.mxu0
        %v7474 = vadd.f32 %v7425, %v7473
        %v7475 = vpop.f32.mrf.mxu0
        %v7476 = vadd.f32 %v7427, %v7475
        %7477 = vmatmul.bf16.gmra.mxu0 %v2392
        %v7478 = vpop.f32.mrf.mxu0
        %v7479 = vadd.f32 %v7430, %v7478
        %v7480 = vpop.f32.mrf.mxu0
        %v7481 = vadd.f32 %v7432, %v7480
        %7482 = vmatmul.bf16.gmra.mxu0 %v2396
        %v7483 = vpop.f32.mrf.mxu0
        %v7484 = vadd.f32 %v7435, %v7483
        %v7485 = vpop.f32.mrf.mxu0
        %v7486 = vadd.f32 %v7437, %v7485
        %7487 = vmatmul.bf16.gmra.mxu0 %v2400
        %v7488 = vpop.f32.mrf.mxu0
        %v7489 = vadd.f32 %v7440, %v7488
        %v7490 = vpop.f32.mrf.mxu0
        %v7491 = vadd.f32 %v7442, %v7490
        %7492 = vdwg.mxu0
        %7493 = vmatpush.bf16.msra.mxu0 %v4478
        %7494 = vmatpush.bf16.msra.mxu0 %v4462
        %7495 = vmatpush.bf16.msra.mxu0 %v4446
        %7496 = vmatpush.bf16.msra.mxu0 %v4430
        %7497 = vmatpush.bf16.msra.mxu0 %v4414
        %7498 = vmatpush.bf16.msra.mxu0 %v4398
        %7499 = vmatpush.bf16.msra.mxu0 %v4382
        %7500 = vmatpush.bf16.msra.mxu0 %v4366
        %7501 = vmatmul.bf16.gmra.mxu0 %v2373
        %v7502 = vpop.f32.mrf.mxu0
        %v7503 = vadd.f32 %v7454, %v7502
        %v7504 = vpop.f32.mrf.mxu0
        %v7505 = vadd.f32 %v7456, %v7504
        %7506 = vmatmul.bf16.gmra.mxu0 %v2377
        %v7507 = vpop.f32.mrf.mxu0
        %v7508 = vadd.f32 %v7459, %v7507
        %v7509 = vpop.f32.mrf.mxu0
        %v7510 = vadd.f32 %v7461, %v7509
        %7511 = vmatmul.bf16.gmra.mxu0 %v2381
        %v7512 = vpop.f32.mrf.mxu0
        %v7513 = vadd.f32 %v7464, %v7512
        %v7514 = vpop.f32.mrf.mxu0
        %v7515 = vadd.f32 %v7466, %v7514
        %7516 = vmatmul.bf16.gmra.mxu0 %v2385
        %v7517 = vpop.f32.mrf.mxu0
        %v7518 = vadd.f32 %v7469, %v7517
        %v7519 = vpop.f32.mrf.mxu0
        %v7520 = vadd.f32 %v7471, %v7519
        %7521 = vmatmul.bf16.gmra.mxu0 %v2389
        %v7522 = vpop.f32.mrf.mxu0
        %v7523 = vadd.f32 %v7474, %v7522
        %v7524 = vpop.f32.mrf.mxu0
        %v7525 = vadd.f32 %v7476, %v7524
        %7526 = vmatmul.bf16.gmra.mxu0 %v2393
        %v7527 = vpop.f32.mrf.mxu0
        %v7528 = vadd.f32 %v7479, %v7527
        %v7529 = vpop.f32.mrf.mxu0
        %v7530 = vadd.f32 %v7481, %v7529
        %7531 = vmatmul.bf16.gmra.mxu0 %v2397
        %v7532 = vpop.f32.mrf.mxu0
        %v7533 = vadd.f32 %v7484, %v7532
        %v7534 = vpop.f32.mrf.mxu0
        %v7535 = vadd.f32 %v7486, %v7534
        %7536 = vmatmul.bf16.gmra.mxu0 %v2401
        %v7537 = vpop.f32.mrf.mxu0
        %v7538 = vadd.f32 %v7489, %v7537
        %v7539 = vpop.f32.mrf.mxu0
        %v7540 = vadd.f32 %v7491, %v7539
        %7541 = vdwg.mxu0
        %7542 = vmatpush.bf16.msra.mxu0 %v4095
        %7543 = vmatpush.bf16.msra.mxu0 %v4079
        %7544 = vmatpush.bf16.msra.mxu0 %v4063
        %7545 = vmatpush.bf16.msra.mxu0 %v4047
        %7546 = vmatpush.bf16.msra.mxu0 %v4031
        %7547 = vmatpush.bf16.msra.mxu0 %v4015
        %7548 = vmatpush.bf16.msra.mxu0 %v3999
        %7549 = vmatpush.bf16.msra.mxu0 %v3983
        %7550 = vmatmul.bf16.gmra.mxu0 %v2370
        %v7551 = vpop.f32.mrf.mxu0
        %v7552 = vadd.f32 %v2255, %v7551
        %v7553 = vpop.f32.mrf.mxu0
        %v7554 = vadd.f32 %v2255, %v7553
        %7555 = vmatmul.bf16.gmra.mxu0 %v2374
        %v7556 = vpop.f32.mrf.mxu0
        %v7557 = vadd.f32 %v2255, %v7556
        %v7558 = vpop.f32.mrf.mxu0
        %v7559 = vadd.f32 %v2255, %v7558
        %7560 = vmatmul.bf16.gmra.mxu0 %v2378
        %v7561 = vpop.f32.mrf.mxu0
        %v7562 = vadd.f32 %v2255, %v7561
        %v7563 = vpop.f32.mrf.mxu0
        %v7564 = vadd.f32 %v2255, %v7563
        %7565 = vmatmul.bf16.gmra.mxu0 %v2382
        %v7566 = vpop.f32.mrf.mxu0
        %v7567 = vadd.f32 %v2255, %v7566
        %v7568 = vpop.f32.mrf.mxu0
        %v7569 = vadd.f32 %v2255, %v7568
        %7570 = vmatmul.bf16.gmra.mxu0 %v2386
        %v7571 = vpop.f32.mrf.mxu0
        %v7572 = vadd.f32 %v2255, %v7571
        %v7573 = vpop.f32.mrf.mxu0
        %v7574 = vadd.f32 %v2255, %v7573
        %7575 = vmatmul.bf16.gmra.mxu0 %v2390
        %v7576 = vpop.f32.mrf.mxu0
        %v7577 = vadd.f32 %v2255, %v7576
        %v7578 = vpop.f32.mrf.mxu0
        %v7579 = vadd.f32 %v2255, %v7578
        %7580 = vmatmul.bf16.gmra.mxu0 %v2394
        %v7581 = vpop.f32.mrf.mxu0
        %v7582 = vadd.f32 %v2255, %v7581
        %v7583 = vpop.f32.mrf.mxu0
        %v7584 = vadd.f32 %v2255, %v7583
        %7585 = vmatmul.bf16.gmra.mxu0 %v2398
        %v7586 = vpop.f32.mrf.mxu0
        %v7587 = vadd.f32 %v2255, %v7586
        %v7588 = vpop.f32.mrf.mxu0
        %v7589 = vadd.f32 %v2255, %v7588
        %7590 = vdwg.mxu0
        %7591 = vmatpush.bf16.msra.mxu0 %v4223
        %7592 = vmatpush.bf16.msra.mxu0 %v4207
        %7593 = vmatpush.bf16.msra.mxu0 %v4191
        %7594 = vmatpush.bf16.msra.mxu0 %v4175
        %7595 = vmatpush.bf16.msra.mxu0 %v4159
        %7596 = vmatpush.bf16.msra.mxu0 %v4143
        %7597 = vmatpush.bf16.msra.mxu0 %v4127
        %7598 = vmatpush.bf16.msra.mxu0 %v4111
        %7599 = vmatmul.bf16.gmra.mxu0 %v2371
        %v7600 = vpop.f32.mrf.mxu0
        %v7601 = vadd.f32 %v7552, %v7600
        %v7602 = vpop.f32.mrf.mxu0
        %v7603 = vadd.f32 %v7554, %v7602
        %7604 = vmatmul.bf16.gmra.mxu0 %v2375
        %v7605 = vpop.f32.mrf.mxu0
        %v7606 = vadd.f32 %v7557, %v7605
        %v7607 = vpop.f32.mrf.mxu0
        %v7608 = vadd.f32 %v7559, %v7607
        %7609 = vmatmul.bf16.gmra.mxu0 %v2379
        %v7610 = vpop.f32.mrf.mxu0
        %v7611 = vadd.f32 %v7562, %v7610
        %v7612 = vpop.f32.mrf.mxu0
        %v7613 = vadd.f32 %v7564, %v7612
        %7614 = vmatmul.bf16.gmra.mxu0 %v2383
        %v7615 = vpop.f32.mrf.mxu0
        %v7616 = vadd.f32 %v7567, %v7615
        %v7617 = vpop.f32.mrf.mxu0
        %v7618 = vadd.f32 %v7569, %v7617
        %7619 = vmatmul.bf16.gmra.mxu0 %v2387
        %v7620 = vpop.f32.mrf.mxu0
        %v7621 = vadd.f32 %v7572, %v7620
        %v7622 = vpop.f32.mrf.mxu0
        %v7623 = vadd.f32 %v7574, %v7622
        %7624 = vmatmul.bf16.gmra.mxu0 %v2391
        %v7625 = vpop.f32.mrf.mxu0
        %v7626 = vadd.f32 %v7577, %v7625
        %v7627 = vpop.f32.mrf.mxu0
        %v7628 = vadd.f32 %v7579, %v7627
        %7629 = vmatmul.bf16.gmra.mxu0 %v2395
        %v7630 = vpop.f32.mrf.mxu0
        %v7631 = vadd.f32 %v7582, %v7630
        %v7632 = vpop.f32.mrf.mxu0
        %v7633 = vadd.f32 %v7584, %v7632
        %7634 = vmatmul.bf16.gmra.mxu0 %v2399
        %v7635 = vpop.f32.mrf.mxu0
        %v7636 = vadd.f32 %v7587, %v7635
        %v7637 = vpop.f32.mrf.mxu0
        %v7638 = vadd.f32 %v7589, %v7637
        %7639 = vdwg.mxu0
        %7640 = vmatpush.bf16.msra.mxu0 %v4351
        %7641 = vmatpush.bf16.msra.mxu0 %v4335
        %7642 = vmatpush.bf16.msra.mxu0 %v4319
        %7643 = vmatpush.bf16.msra.mxu0 %v4303
        %7644 = vmatpush.bf16.msra.mxu0 %v4287
        %7645 = vmatpush.bf16.msra.mxu0 %v4271
        %7646 = vmatpush.bf16.msra.mxu0 %v4255
        %7647 = vmatpush.bf16.msra.mxu0 %v4239
        %7648 = vmatmul.bf16.gmra.mxu0 %v2372
        %v7649 = vpop.f32.mrf.mxu0
        %v7650 = vadd.f32 %v7601, %v7649
        %v7651 = vpop.f32.mrf.mxu0
        %v7652 = vadd.f32 %v7603, %v7651
        %7653 = vmatmul.bf16.gmra.mxu0 %v2376
        %v7654 = vpop.f32.mrf.mxu0
        %v7655 = vadd.f32 %v7606, %v7654
        %v7656 = vpop.f32.mrf.mxu0
        %v7657 = vadd.f32 %v7608, %v7656
        %7658 = vmatmul.bf16.gmra.mxu0 %v2380
        %v7659 = vpop.f32.mrf.mxu0
        %v7660 = vadd.f32 %v7611, %v7659
        %v7661 = vpop.f32.mrf.mxu0
        %v7662 = vadd.f32 %v7613, %v7661
        %7663 = vmatmul.bf16.gmra.mxu0 %v2384
        %v7664 = vpop.f32.mrf.mxu0
        %v7665 = vadd.f32 %v7616, %v7664
        %v7666 = vpop.f32.mrf.mxu0
        %v7667 = vadd.f32 %v7618, %v7666
        %7668 = vmatmul.bf16.gmra.mxu0 %v2388
        %v7669 = vpop.f32.mrf.mxu0
        %v7670 = vadd.f32 %v7621, %v7669
        %v7671 = vpop.f32.mrf.mxu0
        %v7672 = vadd.f32 %v7623, %v7671
        %7673 = vmatmul.bf16.gmra.mxu0 %v2392
        %v7674 = vpop.f32.mrf.mxu0
        %v7675 = vadd.f32 %v7626, %v7674
        %v7676 = vpop.f32.mrf.mxu0
        %v7677 = vadd.f32 %v7628, %v7676
        %7678 = vmatmul.bf16.gmra.mxu0 %v2396
        %v7679 = vpop.f32.mrf.mxu0
        %v7680 = vadd.f32 %v7631, %v7679
        %v7681 = vpop.f32.mrf.mxu0
        %v7682 = vadd.f32 %v7633, %v7681
        %7683 = vmatmul.bf16.gmra.mxu0 %v2400
        %v7684 = vpop.f32.mrf.mxu0
        %v7685 = vadd.f32 %v7636, %v7684
        %v7686 = vpop.f32.mrf.mxu0
        %v7687 = vadd.f32 %v7638, %v7686
        %7688 = vdwg.mxu0
        %7689 = vmatpush.bf16.msra.mxu0 %v4479
        %7690 = vmatpush.bf16.msra.mxu0 %v4463
        %7691 = vmatpush.bf16.msra.mxu0 %v4447
        %7692 = vmatpush.bf16.msra.mxu0 %v4431
        %7693 = vmatpush.bf16.msra.mxu0 %v4415
        %7694 = vmatpush.bf16.msra.mxu0 %v4399
        %7695 = vmatpush.bf16.msra.mxu0 %v4383
        %7696 = vmatpush.bf16.msra.mxu0 %v4367
        %7697 = vmatmul.bf16.gmra.mxu0 %v2373
        %v7698 = vpop.f32.mrf.mxu0
        %v7699 = vadd.f32 %v7650, %v7698
        %v7700 = vpop.f32.mrf.mxu0
        %v7701 = vadd.f32 %v7652, %v7700
        %7702 = vmatmul.bf16.gmra.mxu0 %v2377
        %v7703 = vpop.f32.mrf.mxu0
        %v7704 = vadd.f32 %v7655, %v7703
        %v7705 = vpop.f32.mrf.mxu0
        %v7706 = vadd.f32 %v7657, %v7705
        %7707 = vmatmul.bf16.gmra.mxu0 %v2381
        %v7708 = vpop.f32.mrf.mxu0
        %v7709 = vadd.f32 %v7660, %v7708
        %v7710 = vpop.f32.mrf.mxu0
        %v7711 = vadd.f32 %v7662, %v7710
        %7712 = vmatmul.bf16.gmra.mxu0 %v2385
        %v7713 = vpop.f32.mrf.mxu0
        %v7714 = vadd.f32 %v7665, %v7713
        %v7715 = vpop.f32.mrf.mxu0
        %v7716 = vadd.f32 %v7667, %v7715
        %7717 = vmatmul.bf16.gmra.mxu0 %v2389
        %v7718 = vpop.f32.mrf.mxu0
        %v7719 = vadd.f32 %v7670, %v7718
        %v7720 = vpop.f32.mrf.mxu0
        %v7721 = vadd.f32 %v7672, %v7720
        %7722 = vmatmul.bf16.gmra.mxu0 %v2393
        %v7723 = vpop.f32.mrf.mxu0
        %v7724 = vadd.f32 %v7675, %v7723
        %v7725 = vpop.f32.mrf.mxu0
        %v7726 = vadd.f32 %v7677, %v7725
        %7727 = vmatmul.bf16.gmra.mxu0 %v2397
        %v7728 = vpop.f32.mrf.mxu0
        %v7729 = vadd.f32 %v7680, %v7728
        %v7730 = vpop.f32.mrf.mxu0
        %v7731 = vadd.f32 %v7682, %v7730
        %7732 = vmatmul.bf16.gmra.mxu0 %v2401
        %v7733 = vpop.f32.mrf.mxu0
        %v7734 = vadd.f32 %v7685, %v7733
        %v7735 = vpop.f32.mrf.mxu0
        %v7736 = vadd.f32 %v7687, %v7735
        %7737 = vdwg.mxu0
        %7738 = vmatpush.bf16.msra.mxu0 %v4096
        %7739 = vmatpush.bf16.msra.mxu0 %v4080
        %7740 = vmatpush.bf16.msra.mxu0 %v4064
        %7741 = vmatpush.bf16.msra.mxu0 %v4048
        %7742 = vmatpush.bf16.msra.mxu0 %v4032
        %7743 = vmatpush.bf16.msra.mxu0 %v4016
        %7744 = vmatpush.bf16.msra.mxu0 %v4000
        %7745 = vmatpush.bf16.msra.mxu0 %v3984
        %7746 = vmatmul.bf16.gmra.mxu0 %v2370
        %v7747 = vpop.f32.mrf.mxu0
        %v7748 = vadd.f32 %v2256, %v7747
        %v7749 = vpop.f32.mrf.mxu0
        %v7750 = vadd.f32 %v2256, %v7749
        %7751 = vmatmul.bf16.gmra.mxu0 %v2374
        %v7752 = vpop.f32.mrf.mxu0
        %v7753 = vadd.f32 %v2256, %v7752
        %v7754 = vpop.f32.mrf.mxu0
        %v7755 = vadd.f32 %v2256, %v7754
        %7756 = vmatmul.bf16.gmra.mxu0 %v2378
        %v7757 = vpop.f32.mrf.mxu0
        %v7758 = vadd.f32 %v2256, %v7757
        %v7759 = vpop.f32.mrf.mxu0
        %v7760 = vadd.f32 %v2256, %v7759
        %7761 = vmatmul.bf16.gmra.mxu0 %v2382
        %v7762 = vpop.f32.mrf.mxu0
        %v7763 = vadd.f32 %v2256, %v7762
        %v7764 = vpop.f32.mrf.mxu0
        %v7765 = vadd.f32 %v2256, %v7764
        %7766 = vmatmul.bf16.gmra.mxu0 %v2386
        %v7767 = vpop.f32.mrf.mxu0
        %v7768 = vadd.f32 %v2256, %v7767
        %v7769 = vpop.f32.mrf.mxu0
        %v7770 = vadd.f32 %v2256, %v7769
        %7771 = vmatmul.bf16.gmra.mxu0 %v2390
        %v7772 = vpop.f32.mrf.mxu0
        %v7773 = vadd.f32 %v2256, %v7772
        %v7774 = vpop.f32.mrf.mxu0
        %v7775 = vadd.f32 %v2256, %v7774
        %7776 = vmatmul.bf16.gmra.mxu0 %v2394
        %v7777 = vpop.f32.mrf.mxu0
        %v7778 = vadd.f32 %v2256, %v7777
        %v7779 = vpop.f32.mrf.mxu0
        %v7780 = vadd.f32 %v2256, %v7779
        %7781 = vmatmul.bf16.gmra.mxu0 %v2398
        %v7782 = vpop.f32.mrf.mxu0
        %v7783 = vadd.f32 %v2256, %v7782
        %v7784 = vpop.f32.mrf.mxu0
        %v7785 = vadd.f32 %v2256, %v7784
        %7786 = vdwg.mxu0
        %7787 = vmatpush.bf16.msra.mxu0 %v4224
        %7788 = vmatpush.bf16.msra.mxu0 %v4208
        %7789 = vmatpush.bf16.msra.mxu0 %v4192
        %7790 = vmatpush.bf16.msra.mxu0 %v4176
        %7791 = vmatpush.bf16.msra.mxu0 %v4160
        %7792 = vmatpush.bf16.msra.mxu0 %v4144
        %7793 = vmatpush.bf16.msra.mxu0 %v4128
        %7794 = vmatpush.bf16.msra.mxu0 %v4112
        %7795 = vmatmul.bf16.gmra.mxu0 %v2371
        %v7796 = vpop.f32.mrf.mxu0
        %v7797 = vadd.f32 %v7748, %v7796
        %v7798 = vpop.f32.mrf.mxu0
        %v7799 = vadd.f32 %v7750, %v7798
        %7800 = vmatmul.bf16.gmra.mxu0 %v2375
        %v7801 = vpop.f32.mrf.mxu0
        %v7802 = vadd.f32 %v7753, %v7801
        %v7803 = vpop.f32.mrf.mxu0
        %v7804 = vadd.f32 %v7755, %v7803
        %7805 = vmatmul.bf16.gmra.mxu0 %v2379
        %v7806 = vpop.f32.mrf.mxu0
        %v7807 = vadd.f32 %v7758, %v7806
        %v7808 = vpop.f32.mrf.mxu0
        %v7809 = vadd.f32 %v7760, %v7808
        %7810 = vmatmul.bf16.gmra.mxu0 %v2383
        %v7811 = vpop.f32.mrf.mxu0
        %v7812 = vadd.f32 %v7763, %v7811
        %v7813 = vpop.f32.mrf.mxu0
        %v7814 = vadd.f32 %v7765, %v7813
        %7815 = vmatmul.bf16.gmra.mxu0 %v2387
        %v7816 = vpop.f32.mrf.mxu0
        %v7817 = vadd.f32 %v7768, %v7816
        %v7818 = vpop.f32.mrf.mxu0
        %v7819 = vadd.f32 %v7770, %v7818
        %7820 = vmatmul.bf16.gmra.mxu0 %v2391
        %v7821 = vpop.f32.mrf.mxu0
        %v7822 = vadd.f32 %v7773, %v7821
        %v7823 = vpop.f32.mrf.mxu0
        %v7824 = vadd.f32 %v7775, %v7823
        %7825 = vmatmul.bf16.gmra.mxu0 %v2395
        %v7826 = vpop.f32.mrf.mxu0
        %v7827 = vadd.f32 %v7778, %v7826
        %v7828 = vpop.f32.mrf.mxu0
        %v7829 = vadd.f32 %v7780, %v7828
        %7830 = vmatmul.bf16.gmra.mxu0 %v2399
        %v7831 = vpop.f32.mrf.mxu0
        %v7832 = vadd.f32 %v7783, %v7831
        %v7833 = vpop.f32.mrf.mxu0
        %v7834 = vadd.f32 %v7785, %v7833
        %7835 = vdwg.mxu0
        %7836 = vmatpush.bf16.msra.mxu0 %v4352
        %7837 = vmatpush.bf16.msra.mxu0 %v4336
        %7838 = vmatpush.bf16.msra.mxu0 %v4320
        %7839 = vmatpush.bf16.msra.mxu0 %v4304
        %7840 = vmatpush.bf16.msra.mxu0 %v4288
        %7841 = vmatpush.bf16.msra.mxu0 %v4272
        %7842 = vmatpush.bf16.msra.mxu0 %v4256
        %7843 = vmatpush.bf16.msra.mxu0 %v4240
        %7844 = vmatmul.bf16.gmra.mxu0 %v2372
        %v7845 = vpop.f32.mrf.mxu0
        %v7846 = vadd.f32 %v7797, %v7845
        %v7847 = vpop.f32.mrf.mxu0
        %v7848 = vadd.f32 %v7799, %v7847
        %7849 = vmatmul.bf16.gmra.mxu0 %v2376
        %v7850 = vpop.f32.mrf.mxu0
        %v7851 = vadd.f32 %v7802, %v7850
        %v7852 = vpop.f32.mrf.mxu0
        %v7853 = vadd.f32 %v7804, %v7852
        %7854 = vmatmul.bf16.gmra.mxu0 %v2380
        %v7855 = vpop.f32.mrf.mxu0
        %v7856 = vadd.f32 %v7807, %v7855
        %v7857 = vpop.f32.mrf.mxu0
        %v7858 = vadd.f32 %v7809, %v7857
        %7859 = vmatmul.bf16.gmra.mxu0 %v2384
        %v7860 = vpop.f32.mrf.mxu0
        %v7861 = vadd.f32 %v7812, %v7860
        %v7862 = vpop.f32.mrf.mxu0
        %v7863 = vadd.f32 %v7814, %v7862
        %7864 = vmatmul.bf16.gmra.mxu0 %v2388
        %v7865 = vpop.f32.mrf.mxu0
        %v7866 = vadd.f32 %v7817, %v7865
        %v7867 = vpop.f32.mrf.mxu0
        %v7868 = vadd.f32 %v7819, %v7867
        %7869 = vmatmul.bf16.gmra.mxu0 %v2392
        %v7870 = vpop.f32.mrf.mxu0
        %v7871 = vadd.f32 %v7822, %v7870
        %v7872 = vpop.f32.mrf.mxu0
        %v7873 = vadd.f32 %v7824, %v7872
        %7874 = vmatmul.bf16.gmra.mxu0 %v2396
        %v7875 = vpop.f32.mrf.mxu0
        %v7876 = vadd.f32 %v7827, %v7875
        %v7877 = vpop.f32.mrf.mxu0
        %v7878 = vadd.f32 %v7829, %v7877
        %7879 = vmatmul.bf16.gmra.mxu0 %v2400
        %v7880 = vpop.f32.mrf.mxu0
        %v7881 = vadd.f32 %v7832, %v7880
        %v7882 = vpop.f32.mrf.mxu0
        %v7883 = vadd.f32 %v7834, %v7882
        %7884 = vdwg.mxu0
        %7885 = vmatpush.bf16.msra.mxu0 %v4480
        %7886 = vmatpush.bf16.msra.mxu0 %v4464
        %7887 = vmatpush.bf16.msra.mxu0 %v4448
        %7888 = vmatpush.bf16.msra.mxu0 %v4432
        %7889 = vmatpush.bf16.msra.mxu0 %v4416
        %7890 = vmatpush.bf16.msra.mxu0 %v4400
        %7891 = vmatpush.bf16.msra.mxu0 %v4384
        %7892 = vmatpush.bf16.msra.mxu0 %v4368
        %7893 = vmatmul.bf16.gmra.mxu0 %v2373
        %v7894 = vpop.f32.mrf.mxu0
        %v7895 = vadd.f32 %v7846, %v7894
        %v7896 = vpop.f32.mrf.mxu0
        %v7897 = vadd.f32 %v7848, %v7896
        %7898 = vmatmul.bf16.gmra.mxu0 %v2377
        %v7899 = vpop.f32.mrf.mxu0
        %v7900 = vadd.f32 %v7851, %v7899
        %v7901 = vpop.f32.mrf.mxu0
        %v7902 = vadd.f32 %v7853, %v7901
        %7903 = vmatmul.bf16.gmra.mxu0 %v2381
        %v7904 = vpop.f32.mrf.mxu0
        %v7905 = vadd.f32 %v7856, %v7904
        %v7906 = vpop.f32.mrf.mxu0
        %v7907 = vadd.f32 %v7858, %v7906
        %7908 = vmatmul.bf16.gmra.mxu0 %v2385
        %v7909 = vpop.f32.mrf.mxu0
        %v7910 = vadd.f32 %v7861, %v7909
        %v7911 = vpop.f32.mrf.mxu0
        %v7912 = vadd.f32 %v7863, %v7911
        %7913 = vmatmul.bf16.gmra.mxu0 %v2389
        %v7914 = vpop.f32.mrf.mxu0
        %v7915 = vadd.f32 %v7866, %v7914
        %v7916 = vpop.f32.mrf.mxu0
        %v7917 = vadd.f32 %v7868, %v7916
        %7918 = vmatmul.bf16.gmra.mxu0 %v2393
        %v7919 = vpop.f32.mrf.mxu0
        %v7920 = vadd.f32 %v7871, %v7919
        %v7921 = vpop.f32.mrf.mxu0
        %v7922 = vadd.f32 %v7873, %v7921
        %7923 = vmatmul.bf16.gmra.mxu0 %v2397
        %v7924 = vpop.f32.mrf.mxu0
        %v7925 = vadd.f32 %v7876, %v7924
        %v7926 = vpop.f32.mrf.mxu0
        %v7927 = vadd.f32 %v7878, %v7926
        %7928 = vmatmul.bf16.gmra.mxu0 %v2401
        %v7929 = vpop.f32.mrf.mxu0
        %v7930 = vadd.f32 %v7881, %v7929
        %v7931 = vpop.f32.mrf.mxu0
        %v7932 = vadd.f32 %v7883, %v7931
        %7933 = vdwg.mxu0
        %7934 = vmatpush.bf16.msra.mxu0 %v4097
        %7935 = vmatpush.bf16.msra.mxu0 %v4081
        %7936 = vmatpush.bf16.msra.mxu0 %v4065
        %7937 = vmatpush.bf16.msra.mxu0 %v4049
        %7938 = vmatpush.bf16.msra.mxu0 %v4033
        %7939 = vmatpush.bf16.msra.mxu0 %v4017
        %7940 = vmatpush.bf16.msra.mxu0 %v4001
        %7941 = vmatpush.bf16.msra.mxu0 %v3985
        %7942 = vmatmul.bf16.gmra.mxu0 %v2370
        %v7943 = vpop.f32.mrf.mxu0
        %v7944 = vadd.f32 %v2257, %v7943
        %v7945 = vpop.f32.mrf.mxu0
        %v7946 = vadd.f32 %v2257, %v7945
        %7947 = vmatmul.bf16.gmra.mxu0 %v2374
        %v7948 = vpop.f32.mrf.mxu0
        %v7949 = vadd.f32 %v2257, %v7948
        %v7950 = vpop.f32.mrf.mxu0
        %v7951 = vadd.f32 %v2257, %v7950
        %7952 = vmatmul.bf16.gmra.mxu0 %v2378
        %v7953 = vpop.f32.mrf.mxu0
        %v7954 = vadd.f32 %v2257, %v7953
        %v7955 = vpop.f32.mrf.mxu0
        %v7956 = vadd.f32 %v2257, %v7955
        %7957 = vmatmul.bf16.gmra.mxu0 %v2382
        %v7958 = vpop.f32.mrf.mxu0
        %v7959 = vadd.f32 %v2257, %v7958
        %v7960 = vpop.f32.mrf.mxu0
        %v7961 = vadd.f32 %v2257, %v7960
        %7962 = vmatmul.bf16.gmra.mxu0 %v2386
        %v7963 = vpop.f32.mrf.mxu0
        %v7964 = vadd.f32 %v2257, %v7963
        %v7965 = vpop.f32.mrf.mxu0
        %v7966 = vadd.f32 %v2257, %v7965
        %7967 = vmatmul.bf16.gmra.mxu0 %v2390
        %v7968 = vpop.f32.mrf.mxu0
        %v7969 = vadd.f32 %v2257, %v7968
        %v7970 = vpop.f32.mrf.mxu0
        %v7971 = vadd.f32 %v2257, %v7970
        %7972 = vmatmul.bf16.gmra.mxu0 %v2394
        %v7973 = vpop.f32.mrf.mxu0
        %v7974 = vadd.f32 %v2257, %v7973
        %v7975 = vpop.f32.mrf.mxu0
        %v7976 = vadd.f32 %v2257, %v7975
        %7977 = vmatmul.bf16.gmra.mxu0 %v2398
        %v7978 = vpop.f32.mrf.mxu0
        %v7979 = vadd.f32 %v2257, %v7978
        %v7980 = vpop.f32.mrf.mxu0
        %v7981 = vadd.f32 %v2257, %v7980
        %7982 = vdwg.mxu0
        %7983 = vmatpush.bf16.msra.mxu0 %v4225
        %7984 = vmatpush.bf16.msra.mxu0 %v4209
        %7985 = vmatpush.bf16.msra.mxu0 %v4193
        %7986 = vmatpush.bf16.msra.mxu0 %v4177
        %7987 = vmatpush.bf16.msra.mxu0 %v4161
        %7988 = vmatpush.bf16.msra.mxu0 %v4145
        %7989 = vmatpush.bf16.msra.mxu0 %v4129
        %7990 = vmatpush.bf16.msra.mxu0 %v4113
        %7991 = vmatmul.bf16.gmra.mxu0 %v2371
        %v7992 = vpop.f32.mrf.mxu0
        %v7993 = vadd.f32 %v7944, %v7992
        %v7994 = vpop.f32.mrf.mxu0
        %v7995 = vadd.f32 %v7946, %v7994
        %7996 = vmatmul.bf16.gmra.mxu0 %v2375
        %v7997 = vpop.f32.mrf.mxu0
        %v7998 = vadd.f32 %v7949, %v7997
        %v7999 = vpop.f32.mrf.mxu0
        %v8000 = vadd.f32 %v7951, %v7999
        %8001 = vmatmul.bf16.gmra.mxu0 %v2379
        %v8002 = vpop.f32.mrf.mxu0
        %v8003 = vadd.f32 %v7954, %v8002
        %v8004 = vpop.f32.mrf.mxu0
        %v8005 = vadd.f32 %v7956, %v8004
        %8006 = vmatmul.bf16.gmra.mxu0 %v2383
        %v8007 = vpop.f32.mrf.mxu0
        %v8008 = vadd.f32 %v7959, %v8007
        %v8009 = vpop.f32.mrf.mxu0
        %v8010 = vadd.f32 %v7961, %v8009
        %8011 = vmatmul.bf16.gmra.mxu0 %v2387
        %v8012 = vpop.f32.mrf.mxu0
        %v8013 = vadd.f32 %v7964, %v8012
        %v8014 = vpop.f32.mrf.mxu0
        %v8015 = vadd.f32 %v7966, %v8014
        %8016 = vmatmul.bf16.gmra.mxu0 %v2391
        %v8017 = vpop.f32.mrf.mxu0
        %v8018 = vadd.f32 %v7969, %v8017
        %v8019 = vpop.f32.mrf.mxu0
        %v8020 = vadd.f32 %v7971, %v8019
        %8021 = vmatmul.bf16.gmra.mxu0 %v2395
        %v8022 = vpop.f32.mrf.mxu0
        %v8023 = vadd.f32 %v7974, %v8022
        %v8024 = vpop.f32.mrf.mxu0
        %v8025 = vadd.f32 %v7976, %v8024
        %8026 = vmatmul.bf16.gmra.mxu0 %v2399
        %v8027 = vpop.f32.mrf.mxu0
        %v8028 = vadd.f32 %v7979, %v8027
        %v8029 = vpop.f32.mrf.mxu0
        %v8030 = vadd.f32 %v7981, %v8029
        %8031 = vdwg.mxu0
        %8032 = vmatpush.bf16.msra.mxu0 %v4353
        %8033 = vmatpush.bf16.msra.mxu0 %v4337
        %8034 = vmatpush.bf16.msra.mxu0 %v4321
        %8035 = vmatpush.bf16.msra.mxu0 %v4305
        %8036 = vmatpush.bf16.msra.mxu0 %v4289
        %8037 = vmatpush.bf16.msra.mxu0 %v4273
        %8038 = vmatpush.bf16.msra.mxu0 %v4257
        %8039 = vmatpush.bf16.msra.mxu0 %v4241
        %8040 = vmatmul.bf16.gmra.mxu0 %v2372
        %v8041 = vpop.f32.mrf.mxu0
        %v8042 = vadd.f32 %v7993, %v8041
        %v8043 = vpop.f32.mrf.mxu0
        %v8044 = vadd.f32 %v7995, %v8043
        %8045 = vmatmul.bf16.gmra.mxu0 %v2376
        %v8046 = vpop.f32.mrf.mxu0
        %v8047 = vadd.f32 %v7998, %v8046
        %v8048 = vpop.f32.mrf.mxu0
        %v8049 = vadd.f32 %v8000, %v8048
        %8050 = vmatmul.bf16.gmra.mxu0 %v2380
        %v8051 = vpop.f32.mrf.mxu0
        %v8052 = vadd.f32 %v8003, %v8051
        %v8053 = vpop.f32.mrf.mxu0
        %v8054 = vadd.f32 %v8005, %v8053
        %8055 = vmatmul.bf16.gmra.mxu0 %v2384
        %v8056 = vpop.f32.mrf.mxu0
        %v8057 = vadd.f32 %v8008, %v8056
        %v8058 = vpop.f32.mrf.mxu0
        %v8059 = vadd.f32 %v8010, %v8058
        %8060 = vmatmul.bf16.gmra.mxu0 %v2388
        %v8061 = vpop.f32.mrf.mxu0
        %v8062 = vadd.f32 %v8013, %v8061
        %v8063 = vpop.f32.mrf.mxu0
        %v8064 = vadd.f32 %v8015, %v8063
        %8065 = vmatmul.bf16.gmra.mxu0 %v2392
        %v8066 = vpop.f32.mrf.mxu0
        %v8067 = vadd.f32 %v8018, %v8066
        %v8068 = vpop.f32.mrf.mxu0
        %v8069 = vadd.f32 %v8020, %v8068
        %8070 = vmatmul.bf16.gmra.mxu0 %v2396
        %v8071 = vpop.f32.mrf.mxu0
        %v8072 = vadd.f32 %v8023, %v8071
        %v8073 = vpop.f32.mrf.mxu0
        %v8074 = vadd.f32 %v8025, %v8073
        %8075 = vmatmul.bf16.gmra.mxu0 %v2400
        %v8076 = vpop.f32.mrf.mxu0
        %v8077 = vadd.f32 %v8028, %v8076
        %v8078 = vpop.f32.mrf.mxu0
        %v8079 = vadd.f32 %v8030, %v8078
        %8080 = vdwg.mxu0
        %8081 = vmatpush.bf16.msra.mxu0 %v4481
        %8082 = vmatpush.bf16.msra.mxu0 %v4465
        %8083 = vmatpush.bf16.msra.mxu0 %v4449
        %8084 = vmatpush.bf16.msra.mxu0 %v4433
        %8085 = vmatpush.bf16.msra.mxu0 %v4417
        %8086 = vmatpush.bf16.msra.mxu0 %v4401
        %8087 = vmatpush.bf16.msra.mxu0 %v4385
        %8088 = vmatpush.bf16.msra.mxu0 %v4369
        %8089 = vmatmul.bf16.gmra.mxu0 %v2373
        %v8090 = vpop.f32.mrf.mxu0
        %v8091 = vadd.f32 %v8042, %v8090
        %v8092 = vpop.f32.mrf.mxu0
        %v8093 = vadd.f32 %v8044, %v8092
        %8094 = vmatmul.bf16.gmra.mxu0 %v2377
        %v8095 = vpop.f32.mrf.mxu0
        %v8096 = vadd.f32 %v8047, %v8095
        %v8097 = vpop.f32.mrf.mxu0
        %v8098 = vadd.f32 %v8049, %v8097
        %8099 = vmatmul.bf16.gmra.mxu0 %v2381
        %v8100 = vpop.f32.mrf.mxu0
        %v8101 = vadd.f32 %v8052, %v8100
        %v8102 = vpop.f32.mrf.mxu0
        %v8103 = vadd.f32 %v8054, %v8102
        %8104 = vmatmul.bf16.gmra.mxu0 %v2385
        %v8105 = vpop.f32.mrf.mxu0
        %v8106 = vadd.f32 %v8057, %v8105
        %v8107 = vpop.f32.mrf.mxu0
        %v8108 = vadd.f32 %v8059, %v8107
        %8109 = vmatmul.bf16.gmra.mxu0 %v2389
        %v8110 = vpop.f32.mrf.mxu0
        %v8111 = vadd.f32 %v8062, %v8110
        %v8112 = vpop.f32.mrf.mxu0
        %v8113 = vadd.f32 %v8064, %v8112
        %8114 = vmatmul.bf16.gmra.mxu0 %v2393
        %v8115 = vpop.f32.mrf.mxu0
        %v8116 = vadd.f32 %v8067, %v8115
        %v8117 = vpop.f32.mrf.mxu0
        %v8118 = vadd.f32 %v8069, %v8117
        %8119 = vmatmul.bf16.gmra.mxu0 %v2397
        %v8120 = vpop.f32.mrf.mxu0
        %v8121 = vadd.f32 %v8072, %v8120
        %v8122 = vpop.f32.mrf.mxu0
        %v8123 = vadd.f32 %v8074, %v8122
        %8124 = vmatmul.bf16.gmra.mxu0 %v2401
        %v8125 = vpop.f32.mrf.mxu0
        %v8126 = vadd.f32 %v8077, %v8125
        %v8127 = vpop.f32.mrf.mxu0
        %v8128 = vadd.f32 %v8079, %v8127
        %8129 = vdwg.mxu0
        %v8130 = vmul.f32 %v1598, %v5151
        %v8131 = vmul.f32 %v1599, %v5347
        %v8132 = vmul.f32 %v1600, %v5543
        %v8133 = vmul.f32 %v1601, %v5739
        %v8134 = vmul.f32 %v1602, %v5935
        %v8135 = vmul.f32 %v1603, %v6131
        %v8136 = vmul.f32 %v1604, %v6327
        %v8137 = vmul.f32 %v1605, %v6523
        %v8138 = vmul.f32 %v1606, %v5153
        %v8139 = vmul.f32 %v1607, %v5349
        %v8140 = vmul.f32 %v1608, %v5545
        %v8141 = vmul.f32 %v1609, %v5741
        %v8142 = vmul.f32 %v1610, %v5937
        %v8143 = vmul.f32 %v1611, %v6133
        %v8144 = vmul.f32 %v1612, %v6329
        %v8145 = vmul.f32 %v1613, %v6525
        %v8146 = vmul.f32 %v1614, %v5156
        %v8147 = vmul.f32 %v1615, %v5352
        %v8148 = vmul.f32 %v1616, %v5548
        %v8149 = vmul.f32 %v1617, %v5744
        %v8150 = vmul.f32 %v1618, %v5940
        %v8151 = vmul.f32 %v1619, %v6136
        %v8152 = vmul.f32 %v1620, %v6332
        %v8153 = vmul.f32 %v1621, %v6528
        %v8154 = vmul.f32 %v1622, %v5158
        %v8155 = vmul.f32 %v1623, %v5354
        %v8156 = vmul.f32 %v1624, %v5550
        %v8157 = vmul.f32 %v1625, %v5746
        %v8158 = vmul.f32 %v1626, %v5942
        %v8159 = vmul.f32 %v1627, %v6138
        %v8160 = vmul.f32 %v1628, %v6334
        %v8161 = vmul.f32 %v1629, %v6530
        %v8162 = vmul.f32 %v1630, %v5161
        %v8163 = vmul.f32 %v1631, %v5357
        %v8164 = vmul.f32 %v1632, %v5553
        %v8165 = vmul.f32 %v1633, %v5749
        %v8166 = vmul.f32 %v1634, %v5945
        %v8167 = vmul.f32 %v1635, %v6141
        %v8168 = vmul.f32 %v1636, %v6337
        %v8169 = vmul.f32 %v1637, %v6533
        %v8170 = vmul.f32 %v1638, %v5163
        %v8171 = vmul.f32 %v1639, %v5359
        %v8172 = vmul.f32 %v1640, %v5555
        %v8173 = vmul.f32 %v1641, %v5751
        %v8174 = vmul.f32 %v1642, %v5947
        %v8175 = vmul.f32 %v1643, %v6143
        %v8176 = vmul.f32 %v1644, %v6339
        %v8177 = vmul.f32 %v1645, %v6535
        %v8178 = vmul.f32 %v1646, %v5166
        %v8179 = vmul.f32 %v1647, %v5362
        %v8180 = vmul.f32 %v1648, %v5558
        %v8181 = vmul.f32 %v1649, %v5754
        %v8182 = vmul.f32 %v1650, %v5950
        %v8183 = vmul.f32 %v1651, %v6146
        %v8184 = vmul.f32 %v1652, %v6342
        %v8185 = vmul.f32 %v1653, %v6538
        %v8186 = vmul.f32 %v1654, %v5168
        %v8187 = vmul.f32 %v1655, %v5364
        %v8188 = vmul.f32 %v1656, %v5560
        %v8189 = vmul.f32 %v1657, %v5756
        %v8190 = vmul.f32 %v1658, %v5952
        %v8191 = vmul.f32 %v1659, %v6148
        %v8192 = vmul.f32 %v1660, %v6344
        %v8193 = vmul.f32 %v1661, %v6540
        %v8194 = vmul.f32 %v1662, %v5171
        %v8195 = vmul.f32 %v1663, %v5367
        %v8196 = vmul.f32 %v1664, %v5563
        %v8197 = vmul.f32 %v1665, %v5759
        %v8198 = vmul.f32 %v1666, %v5955
        %v8199 = vmul.f32 %v1667, %v6151
        %v8200 = vmul.f32 %v1668, %v6347
        %v8201 = vmul.f32 %v1669, %v6543
        %v8202 = vmul.f32 %v1670, %v5173
        %v8203 = vmul.f32 %v1671, %v5369
        %v8204 = vmul.f32 %v1672, %v5565
        %v8205 = vmul.f32 %v1673, %v5761
        %v8206 = vmul.f32 %v1674, %v5957
        %v8207 = vmul.f32 %v1675, %v6153
        %v8208 = vmul.f32 %v1676, %v6349
        %v8209 = vmul.f32 %v1677, %v6545
        %v8210 = vmul.f32 %v1678, %v5176
        %v8211 = vmul.f32 %v1679, %v5372
        %v8212 = vmul.f32 %v1680, %v5568
        %v8213 = vmul.f32 %v1681, %v5764
        %v8214 = vmul.f32 %v1682, %v5960
        %v8215 = vmul.f32 %v1683, %v6156
        %v8216 = vmul.f32 %v1684, %v6352
        %v8217 = vmul.f32 %v1685, %v6548
        %v8218 = vmul.f32 %v1686, %v5178
        %v8219 = vmul.f32 %v1687, %v5374
        %v8220 = vmul.f32 %v1688, %v5570
        %v8221 = vmul.f32 %v1689, %v5766
        %v8222 = vmul.f32 %v1690, %v5962
        %v8223 = vmul.f32 %v1691, %v6158
        %v8224 = vmul.f32 %v1692, %v6354
        %v8225 = vmul.f32 %v1693, %v6550
        %v8226 = vmul.f32 %v1694, %v5181
        %v8227 = vmul.f32 %v1695, %v5377
        %v8228 = vmul.f32 %v1696, %v5573
        %v8229 = vmul.f32 %v1697, %v5769
        %v8230 = vmul.f32 %v1698, %v5965
        %v8231 = vmul.f32 %v1699, %v6161
        %v8232 = vmul.f32 %v1700, %v6357
        %v8233 = vmul.f32 %v1701, %v6553
        %v8234 = vmul.f32 %v1702, %v5183
        %v8235 = vmul.f32 %v1703, %v5379
        %v8236 = vmul.f32 %v1704, %v5575
        %v8237 = vmul.f32 %v1705, %v5771
        %v8238 = vmul.f32 %v1706, %v5967
        %v8239 = vmul.f32 %v1707, %v6163
        %v8240 = vmul.f32 %v1708, %v6359
        %v8241 = vmul.f32 %v1709, %v6555
        %v8242 = vmul.f32 %v1710, %v5186
        %v8243 = vmul.f32 %v1711, %v5382
        %v8244 = vmul.f32 %v1712, %v5578
        %v8245 = vmul.f32 %v1713, %v5774
        %v8246 = vmul.f32 %v1714, %v5970
        %v8247 = vmul.f32 %v1715, %v6166
        %v8248 = vmul.f32 %v1716, %v6362
        %v8249 = vmul.f32 %v1717, %v6558
        %v8250 = vmul.f32 %v1718, %v5188
        %v8251 = vmul.f32 %v1719, %v5384
        %v8252 = vmul.f32 %v1720, %v5580
        %v8253 = vmul.f32 %v1721, %v5776
        %v8254 = vmul.f32 %v1722, %v5972
        %v8255 = vmul.f32 %v1723, %v6168
        %v8256 = vmul.f32 %v1724, %v6364
        %v8257 = vmul.f32 %v1725, %v6560
        %v8258 = vpack.c.bf16 %v8138, %v8130
        %v8259 = vpack.c.bf16 %v8139, %v8131
        %v8260 = vpack.c.bf16 %v8140, %v8132
        %v8261 = vpack.c.bf16 %v8141, %v8133
        %v8262 = vpack.c.bf16 %v8142, %v8134
        %v8263 = vpack.c.bf16 %v8143, %v8135
        %v8264 = vpack.c.bf16 %v8144, %v8136
        %v8265 = vpack.c.bf16 %v8145, %v8137
        %v8266 = vpack.c.bf16 %v8154, %v8146
        %v8267 = vpack.c.bf16 %v8155, %v8147
        %v8268 = vpack.c.bf16 %v8156, %v8148
        %v8269 = vpack.c.bf16 %v8157, %v8149
        %v8270 = vpack.c.bf16 %v8158, %v8150
        %v8271 = vpack.c.bf16 %v8159, %v8151
        %v8272 = vpack.c.bf16 %v8160, %v8152
        %v8273 = vpack.c.bf16 %v8161, %v8153
        %v8274 = vpack.c.bf16 %v8170, %v8162
        %v8275 = vpack.c.bf16 %v8171, %v8163
        %v8276 = vpack.c.bf16 %v8172, %v8164
        %v8277 = vpack.c.bf16 %v8173, %v8165
        %v8278 = vpack.c.bf16 %v8174, %v8166
        %v8279 = vpack.c.bf16 %v8175, %v8167
        %v8280 = vpack.c.bf16 %v8176, %v8168
        %v8281 = vpack.c.bf16 %v8177, %v8169
        %v8282 = vpack.c.bf16 %v8186, %v8178
        %v8283 = vpack.c.bf16 %v8187, %v8179
        %v8284 = vpack.c.bf16 %v8188, %v8180
        %v8285 = vpack.c.bf16 %v8189, %v8181
        %v8286 = vpack.c.bf16 %v8190, %v8182
        %v8287 = vpack.c.bf16 %v8191, %v8183
        %v8288 = vpack.c.bf16 %v8192, %v8184
        %v8289 = vpack.c.bf16 %v8193, %v8185
        %v8290 = vpack.c.bf16 %v8202, %v8194
        %v8291 = vpack.c.bf16 %v8203, %v8195
        %v8292 = vpack.c.bf16 %v8204, %v8196
        %v8293 = vpack.c.bf16 %v8205, %v8197
        %v8294 = vpack.c.bf16 %v8206, %v8198
        %v8295 = vpack.c.bf16 %v8207, %v8199
        %v8296 = vpack.c.bf16 %v8208, %v8200
        %v8297 = vpack.c.bf16 %v8209, %v8201
        %v8298 = vpack.c.bf16 %v8218, %v8210
        %v8299 = vpack.c.bf16 %v8219, %v8211
        %v8300 = vpack.c.bf16 %v8220, %v8212
        %v8301 = vpack.c.bf16 %v8221, %v8213
        %v8302 = vpack.c.bf16 %v8222, %v8214
        %v8303 = vpack.c.bf16 %v8223, %v8215
        %v8304 = vpack.c.bf16 %v8224, %v8216
        %v8305 = vpack.c.bf16 %v8225, %v8217
        %v8306 = vpack.c.bf16 %v8234, %v8226
        %v8307 = vpack.c.bf16 %v8235, %v8227
        %v8308 = vpack.c.bf16 %v8236, %v8228
        %v8309 = vpack.c.bf16 %v8237, %v8229
        %v8310 = vpack.c.bf16 %v8238, %v8230
        %v8311 = vpack.c.bf16 %v8239, %v8231
        %v8312 = vpack.c.bf16 %v8240, %v8232
        %v8313 = vpack.c.bf16 %v8241, %v8233
        %v8314 = vpack.c.bf16 %v8250, %v8242
        %v8315 = vpack.c.bf16 %v8251, %v8243
        %v8316 = vpack.c.bf16 %v8252, %v8244
        %v8317 = vpack.c.bf16 %v8253, %v8245
        %v8318 = vpack.c.bf16 %v8254, %v8246
        %v8319 = vpack.c.bf16 %v8255, %v8247
        %v8320 = vpack.c.bf16 %v8256, %v8248
        %v8321 = vpack.c.bf16 %v8257, %v8249
        %v8322 = vld [vmem:[#allocation13] sm:$0xf]
        %v8323 = vld [vmem:[#allocation13 + $0x4] sm:$0xf]
        %v8324 = vld [vmem:[#allocation13 + $0x8] sm:$0xf]
        %v8325 = vld [vmem:[#allocation13 + $0xc] sm:$0xf]
        %v8326 = vld [vmem:[#allocation13 + $0x10] sm:$0xf]
        %v8327 = vld [vmem:[#allocation13 + $0x14] sm:$0xf]
        %v8328 = vld [vmem:[#allocation13 + $0x18] sm:$0xf]
        %v8329 = vld [vmem:[#allocation13 + $0x1c] sm:$0xf]
        %v8330 = vld [vmem:[#allocation13 + $0x20] sm:$0xf]
        %v8331 = vld [vmem:[#allocation13 + $0x24] sm:$0xf]
        %v8332 = vld [vmem:[#allocation13 + $0x28] sm:$0xf]
        %v8333 = vld [vmem:[#allocation13 + $0x2c] sm:$0xf]
        %v8334 = vld [vmem:[#allocation13 + $0x30] sm:$0xf]
        %v8335 = vld [vmem:[#allocation13 + $0x34] sm:$0xf]
        %v8336 = vld [vmem:[#allocation13 + $0x38] sm:$0xf]
        %v8337 = vld [vmem:[#allocation13 + $0x3c] sm:$0xf]
        %v8338 = vld [vmem:[#allocation13 + $0x40] sm:$0xf]
        %v8339 = vld [vmem:[#allocation13 + $0x44] sm:$0xf]
        %v8340 = vld [vmem:[#allocation13 + $0x48] sm:$0xf]
        %v8341 = vld [vmem:[#allocation13 + $0x4c] sm:$0xf]
        %v8342 = vld [vmem:[#allocation13 + $0x50] sm:$0xf]
        %v8343 = vld [vmem:[#allocation13 + $0x54] sm:$0xf]
        %v8344 = vld [vmem:[#allocation13 + $0x58] sm:$0xf]
        %v8345 = vld [vmem:[#allocation13 + $0x5c] sm:$0xf]
        %v8346 = vld [vmem:[#allocation13 + $0x60] sm:$0xf]
        %v8347 = vld [vmem:[#allocation13 + $0x64] sm:$0xf]
        %v8348 = vld [vmem:[#allocation13 + $0x68] sm:$0xf]
        %v8349 = vld [vmem:[#allocation13 + $0x6c] sm:$0xf]
        %v8350 = vld [vmem:[#allocation13 + $0x70] sm:$0xf]
        %v8351 = vld [vmem:[#allocation13 + $0x74] sm:$0xf]
        %v8352 = vld [vmem:[#allocation13 + $0x78] sm:$0xf]
        %v8353 = vld [vmem:[#allocation13 + $0x7c] sm:$0xf]
        %v8354 = vld [vmem:[#allocation13 + $0x80] sm:$0xf]
        %v8355 = vld [vmem:[#allocation13 + $0x84] sm:$0xf]
        %v8356 = vld [vmem:[#allocation13 + $0x88] sm:$0xf]
        %v8357 = vld [vmem:[#allocation13 + $0x8c] sm:$0xf]
        %v8358 = vld [vmem:[#allocation13 + $0x90] sm:$0xf]
        %v8359 = vld [vmem:[#allocation13 + $0x94] sm:$0xf]
        %v8360 = vld [vmem:[#allocation13 + $0x98] sm:$0xf]
        %v8361 = vld [vmem:[#allocation13 + $0x9c] sm:$0xf]
        %v8362 = vld [vmem:[#allocation13 + $0xa0] sm:$0xf]
        %v8363 = vld [vmem:[#allocation13 + $0xa4] sm:$0xf]
        %v8364 = vld [vmem:[#allocation13 + $0xa8] sm:$0xf]
        %v8365 = vld [vmem:[#allocation13 + $0xac] sm:$0xf]
        %v8366 = vld [vmem:[#allocation13 + $0xb0] sm:$0xf]
        %v8367 = vld [vmem:[#allocation13 + $0xb4] sm:$0xf]
        %v8368 = vld [vmem:[#allocation13 + $0xb8] sm:$0xf]
        %v8369 = vld [vmem:[#allocation13 + $0xbc] sm:$0xf]
        %v8370 = vld [vmem:[#allocation13 + $0xc0] sm:$0xf]
        %v8371 = vld [vmem:[#allocation13 + $0xc4] sm:$0xf]
        %v8372 = vld [vmem:[#allocation13 + $0xc8] sm:$0xf]
        %v8373 = vld [vmem:[#allocation13 + $0xcc] sm:$0xf]
        %v8374 = vld [vmem:[#allocation13 + $0xd0] sm:$0xf]
        %v8375 = vld [vmem:[#allocation13 + $0xd4] sm:$0xf]
        %v8376 = vld [vmem:[#allocation13 + $0xd8] sm:$0xf]
        %v8377 = vld [vmem:[#allocation13 + $0xdc] sm:$0xf]
        %v8378 = vld [vmem:[#allocation13 + $0xe0] sm:$0xf]
        %v8379 = vld [vmem:[#allocation13 + $0xe4] sm:$0xf]
        %v8380 = vld [vmem:[#allocation13 + $0xe8] sm:$0xf]
        %v8381 = vld [vmem:[#allocation13 + $0xec] sm:$0xf]
        %v8382 = vld [vmem:[#allocation13 + $0xf0] sm:$0xf]
        %v8383 = vld [vmem:[#allocation13 + $0xf4] sm:$0xf]
        %v8384 = vld [vmem:[#allocation13 + $0xf8] sm:$0xf]
        %v8385 = vld [vmem:[#allocation13 + $0xfc] sm:$0xf]
        %v8386 = vld [vmem:[#allocation13 + $0x100] sm:$0xf]
        %v8387 = vld [vmem:[#allocation13 + $0x104] sm:$0xf]
        %v8388 = vld [vmem:[#allocation13 + $0x108] sm:$0xf]
        %v8389 = vld [vmem:[#allocation13 + $0x10c] sm:$0xf]
        %v8390 = vld [vmem:[#allocation13 + $0x110] sm:$0xf]
        %v8391 = vld [vmem:[#allocation13 + $0x114] sm:$0xf]
        %v8392 = vld [vmem:[#allocation13 + $0x118] sm:$0xf]
        %v8393 = vld [vmem:[#allocation13 + $0x11c] sm:$0xf]
        %v8394 = vld [vmem:[#allocation13 + $0x120] sm:$0xf]
        %v8395 = vld [vmem:[#allocation13 + $0x124] sm:$0xf]
        %v8396 = vld [vmem:[#allocation13 + $0x128] sm:$0xf]
        %v8397 = vld [vmem:[#allocation13 + $0x12c] sm:$0xf]
        %v8398 = vld [vmem:[#allocation13 + $0x130] sm:$0xf]
        %v8399 = vld [vmem:[#allocation13 + $0x134] sm:$0xf]
        %v8400 = vld [vmem:[#allocation13 + $0x138] sm:$0xf]
        %v8401 = vld [vmem:[#allocation13 + $0x13c] sm:$0xf]
        %v8402 = vld [vmem:[#allocation13 + $0x140] sm:$0xf]
        %v8403 = vld [vmem:[#allocation13 + $0x144] sm:$0xf]
        %v8404 = vld [vmem:[#allocation13 + $0x148] sm:$0xf]
        %v8405 = vld [vmem:[#allocation13 + $0x14c] sm:$0xf]
        %v8406 = vld [vmem:[#allocation13 + $0x150] sm:$0xf]
        %v8407 = vld [vmem:[#allocation13 + $0x154] sm:$0xf]
        %v8408 = vld [vmem:[#allocation13 + $0x158] sm:$0xf]
        %v8409 = vld [vmem:[#allocation13 + $0x15c] sm:$0xf]
        %v8410 = vld [vmem:[#allocation13 + $0x160] sm:$0xf]
        %v8411 = vld [vmem:[#allocation13 + $0x164] sm:$0xf]
        %v8412 = vld [vmem:[#allocation13 + $0x168] sm:$0xf]
        %v8413 = vld [vmem:[#allocation13 + $0x16c] sm:$0xf]
        %v8414 = vld [vmem:[#allocation13 + $0x170] sm:$0xf]
        %v8415 = vld [vmem:[#allocation13 + $0x174] sm:$0xf]
        %v8416 = vld [vmem:[#allocation13 + $0x178] sm:$0xf]
        %v8417 = vld [vmem:[#allocation13 + $0x17c] sm:$0xf]
        %v8418 = vld [vmem:[#allocation13 + $0x180] sm:$0xf]
        %v8419 = vld [vmem:[#allocation13 + $0x184] sm:$0xf]
        %v8420 = vld [vmem:[#allocation13 + $0x188] sm:$0xf]
        %v8421 = vld [vmem:[#allocation13 + $0x18c] sm:$0xf]
        %v8422 = vld [vmem:[#allocation13 + $0x190] sm:$0xf]
        %v8423 = vld [vmem:[#allocation13 + $0x194] sm:$0xf]
        %v8424 = vld [vmem:[#allocation13 + $0x198] sm:$0xf]
        %v8425 = vld [vmem:[#allocation13 + $0x19c] sm:$0xf]
        %v8426 = vld [vmem:[#allocation13 + $0x1a0] sm:$0xf]
        %v8427 = vld [vmem:[#allocation13 + $0x1a4] sm:$0xf]
        %v8428 = vld [vmem:[#allocation13 + $0x1a8] sm:$0xf]
        %v8429 = vld [vmem:[#allocation13 + $0x1ac] sm:$0xf]
        %v8430 = vld [vmem:[#allocation13 + $0x1b0] sm:$0xf]
        %v8431 = vld [vmem:[#allocation13 + $0x1b4] sm:$0xf]
        %v8432 = vld [vmem:[#allocation13 + $0x1b8] sm:$0xf]
        %v8433 = vld [vmem:[#allocation13 + $0x1bc] sm:$0xf]
        %v8434 = vld [vmem:[#allocation13 + $0x1c0] sm:$0xf]
        %v8435 = vld [vmem:[#allocation13 + $0x1c4] sm:$0xf]
        %v8436 = vld [vmem:[#allocation13 + $0x1c8] sm:$0xf]
        %v8437 = vld [vmem:[#allocation13 + $0x1cc] sm:$0xf]
        %v8438 = vld [vmem:[#allocation13 + $0x1d0] sm:$0xf]
        %v8439 = vld [vmem:[#allocation13 + $0x1d4] sm:$0xf]
        %v8440 = vld [vmem:[#allocation13 + $0x1d8] sm:$0xf]
        %v8441 = vld [vmem:[#allocation13 + $0x1dc] sm:$0xf]
        %v8442 = vld [vmem:[#allocation13 + $0x1e0] sm:$0xf]
        %v8443 = vld [vmem:[#allocation13 + $0x1e4] sm:$0xf]
        %v8444 = vld [vmem:[#allocation13 + $0x1e8] sm:$0xf]
        %v8445 = vld [vmem:[#allocation13 + $0x1ec] sm:$0xf]
        %v8446 = vld [vmem:[#allocation13 + $0x1f0] sm:$0xf]
        %v8447 = vld [vmem:[#allocation13 + $0x1f4] sm:$0xf]
        %v8448 = vld [vmem:[#allocation13 + $0x1f8] sm:$0xf]
        %v8449 = vld [vmem:[#allocation13 + $0x1fc] sm:$0xf]
        %v8578 = vunpack.c.l.b16 %v8322
        %v8579 = vunpack.c.l.b16 %v8323
        %v8580 = vunpack.c.l.b16 %v8324
        %v8581 = vunpack.c.l.b16 %v8325
        %v8582 = vunpack.c.l.b16 %v8326
        %v8583 = vunpack.c.l.b16 %v8327
        %v8584 = vunpack.c.l.b16 %v8328
        %v8585 = vunpack.c.l.b16 %v8329
        %v8586 = vunpack.c.l.b16 %v8330
        %v8587 = vunpack.c.l.b16 %v8331
        %v8588 = vunpack.c.l.b16 %v8332
        %v8589 = vunpack.c.l.b16 %v8333
        %v8590 = vunpack.c.l.b16 %v8334
        %v8591 = vunpack.c.l.b16 %v8335
        %v8592 = vunpack.c.l.b16 %v8336
        %v8593 = vunpack.c.l.b16 %v8337
        %v8594 = vunpack.c.l.b16 %v8338
        %v8595 = vunpack.c.l.b16 %v8339
        %v8596 = vunpack.c.l.b16 %v8340
        %v8597 = vunpack.c.l.b16 %v8341
        %v8598 = vunpack.c.l.b16 %v8342
        %v8599 = vunpack.c.l.b16 %v8343
        %v8600 = vunpack.c.l.b16 %v8344
        %v8601 = vunpack.c.l.b16 %v8345
        %v8602 = vunpack.c.l.b16 %v8346
        %v8603 = vunpack.c.l.b16 %v8347
        %v8604 = vunpack.c.l.b16 %v8348
        %v8605 = vunpack.c.l.b16 %v8349
        %v8606 = vunpack.c.l.b16 %v8350
        %v8607 = vunpack.c.l.b16 %v8351
        %v8608 = vunpack.c.l.b16 %v8352
        %v8609 = vunpack.c.l.b16 %v8353
        %v8610 = vunpack.c.l.b16 %v8354
        %v8611 = vunpack.c.l.b16 %v8355
        %v8612 = vunpack.c.l.b16 %v8356
        %v8613 = vunpack.c.l.b16 %v8357
        %v8614 = vunpack.c.l.b16 %v8358
        %v8615 = vunpack.c.l.b16 %v8359
        %v8616 = vunpack.c.l.b16 %v8360
        %v8617 = vunpack.c.l.b16 %v8361
        %v8618 = vunpack.c.l.b16 %v8362
        %v8619 = vunpack.c.l.b16 %v8363
        %v8620 = vunpack.c.l.b16 %v8364
        %v8621 = vunpack.c.l.b16 %v8365
        %v8622 = vunpack.c.l.b16 %v8366
        %v8623 = vunpack.c.l.b16 %v8367
        %v8624 = vunpack.c.l.b16 %v8368
        %v8625 = vunpack.c.l.b16 %v8369
        %v8626 = vunpack.c.l.b16 %v8370
        %v8627 = vunpack.c.l.b16 %v8371
        %v8628 = vunpack.c.l.b16 %v8372
        %v8629 = vunpack.c.l.b16 %v8373
        %v8630 = vunpack.c.l.b16 %v8374
        %v8631 = vunpack.c.l.b16 %v8375
        %v8632 = vunpack.c.l.b16 %v8376
        %v8633 = vunpack.c.l.b16 %v8377
        %v8634 = vunpack.c.l.b16 %v8378
        %v8635 = vunpack.c.l.b16 %v8379
        %v8636 = vunpack.c.l.b16 %v8380
        %v8637 = vunpack.c.l.b16 %v8381
        %v8638 = vunpack.c.l.b16 %v8382
        %v8639 = vunpack.c.l.b16 %v8383
        %v8640 = vunpack.c.l.b16 %v8384
        %v8641 = vunpack.c.l.b16 %v8385
        %v8642 = vunpack.c.l.b16 %v8386
        %v8643 = vunpack.c.l.b16 %v8387
        %v8644 = vunpack.c.l.b16 %v8388
        %v8645 = vunpack.c.l.b16 %v8389
        %v8646 = vunpack.c.l.b16 %v8390
        %v8647 = vunpack.c.l.b16 %v8391
        %v8648 = vunpack.c.l.b16 %v8392
        %v8649 = vunpack.c.l.b16 %v8393
        %v8650 = vunpack.c.l.b16 %v8394
        %v8651 = vunpack.c.l.b16 %v8395
        %v8652 = vunpack.c.l.b16 %v8396
        %v8653 = vunpack.c.l.b16 %v8397
        %v8654 = vunpack.c.l.b16 %v8398
        %v8655 = vunpack.c.l.b16 %v8399
        %v8656 = vunpack.c.l.b16 %v8400
        %v8657 = vunpack.c.l.b16 %v8401
        %v8658 = vunpack.c.l.b16 %v8402
        %v8659 = vunpack.c.l.b16 %v8403
        %v8660 = vunpack.c.l.b16 %v8404
        %v8661 = vunpack.c.l.b16 %v8405
        %v8662 = vunpack.c.l.b16 %v8406
        %v8663 = vunpack.c.l.b16 %v8407
        %v8664 = vunpack.c.l.b16 %v8408
        %v8665 = vunpack.c.l.b16 %v8409
        %v8666 = vunpack.c.l.b16 %v8410
        %v8667 = vunpack.c.l.b16 %v8411
        %v8668 = vunpack.c.l.b16 %v8412
        %v8669 = vunpack.c.l.b16 %v8413
        %v8670 = vunpack.c.l.b16 %v8414
        %v8671 = vunpack.c.l.b16 %v8415
        %v8672 = vunpack.c.l.b16 %v8416
        %v8673 = vunpack.c.l.b16 %v8417
        %v8674 = vunpack.c.l.b16 %v8418
        %v8675 = vunpack.c.l.b16 %v8419
        %v8676 = vunpack.c.l.b16 %v8420
        %v8677 = vunpack.c.l.b16 %v8421
        %v8678 = vunpack.c.l.b16 %v8422
        %v8679 = vunpack.c.l.b16 %v8423
        %v8680 = vunpack.c.l.b16 %v8424
        %v8681 = vunpack.c.l.b16 %v8425
        %v8682 = vunpack.c.l.b16 %v8426
        %v8683 = vunpack.c.l.b16 %v8427
        %v8684 = vunpack.c.l.b16 %v8428
        %v8685 = vunpack.c.l.b16 %v8429
        %v8686 = vunpack.c.l.b16 %v8430
        %v8687 = vunpack.c.l.b16 %v8431
        %v8688 = vunpack.c.l.b16 %v8432
        %v8689 = vunpack.c.l.b16 %v8433
        %v8690 = vunpack.c.l.b16 %v8434
        %v8691 = vunpack.c.l.b16 %v8435
        %v8692 = vunpack.c.l.b16 %v8436
        %v8693 = vunpack.c.l.b16 %v8437
        %v8694 = vunpack.c.l.b16 %v8438
        %v8695 = vunpack.c.l.b16 %v8439
        %v8696 = vunpack.c.l.b16 %v8440
        %v8697 = vunpack.c.l.b16 %v8441
        %v8698 = vunpack.c.l.b16 %v8442
        %v8699 = vunpack.c.l.b16 %v8443
        %v8700 = vunpack.c.l.b16 %v8444
        %v8701 = vunpack.c.l.b16 %v8445
        %v8702 = vunpack.c.l.b16 %v8446
        %v8703 = vunpack.c.l.b16 %v8447
        %v8704 = vunpack.c.l.b16 %v8448
        %v8705 = vunpack.c.l.b16 %v8449
        %v8706 = vpack.c.b16 %v8579, %v8578
        %v8707 = vpack.c.b16 %v8581, %v8580
        %v8708 = vpack.c.b16 %v8583, %v8582
        %v8709 = vpack.c.b16 %v8585, %v8584
        %v8710 = vpack.c.b16 %v8587, %v8586
        %v8711 = vpack.c.b16 %v8589, %v8588
        %v8712 = vpack.c.b16 %v8591, %v8590
        %v8713 = vpack.c.b16 %v8593, %v8592
        %v8714 = vpack.c.b16 %v8595, %v8594
        %v8715 = vpack.c.b16 %v8597, %v8596
        %v8716 = vpack.c.b16 %v8599, %v8598
        %v8717 = vpack.c.b16 %v8601, %v8600
        %v8718 = vpack.c.b16 %v8603, %v8602
        %v8719 = vpack.c.b16 %v8605, %v8604
        %v8720 = vpack.c.b16 %v8607, %v8606
        %v8721 = vpack.c.b16 %v8609, %v8608
        %v8722 = vpack.c.b16 %v8611, %v8610
        %v8723 = vpack.c.b16 %v8613, %v8612
        %v8724 = vpack.c.b16 %v8615, %v8614
        %v8725 = vpack.c.b16 %v8617, %v8616
        %v8726 = vpack.c.b16 %v8619, %v8618
        %v8727 = vpack.c.b16 %v8621, %v8620
        %v8728 = vpack.c.b16 %v8623, %v8622
        %v8729 = vpack.c.b16 %v8625, %v8624
        %v8730 = vpack.c.b16 %v8627, %v8626
        %v8731 = vpack.c.b16 %v8629, %v8628
        %v8732 = vpack.c.b16 %v8631, %v8630
        %v8733 = vpack.c.b16 %v8633, %v8632
        %v8734 = vpack.c.b16 %v8635, %v8634
        %v8735 = vpack.c.b16 %v8637, %v8636
        %v8736 = vpack.c.b16 %v8639, %v8638
        %v8737 = vpack.c.b16 %v8641, %v8640
        %v8738 = vpack.c.b16 %v8643, %v8642
        %v8739 = vpack.c.b16 %v8645, %v8644
        %v8740 = vpack.c.b16 %v8647, %v8646
        %v8741 = vpack.c.b16 %v8649, %v8648
        %v8742 = vpack.c.b16 %v8651, %v8650
        %v8743 = vpack.c.b16 %v8653, %v8652
        %v8744 = vpack.c.b16 %v8655, %v8654
        %v8745 = vpack.c.b16 %v8657, %v8656
        %v8746 = vpack.c.b16 %v8659, %v8658
        %v8747 = vpack.c.b16 %v8661, %v8660
        %v8748 = vpack.c.b16 %v8663, %v8662
        %v8749 = vpack.c.b16 %v8665, %v8664
        %v8750 = vpack.c.b16 %v8667, %v8666
        %v8751 = vpack.c.b16 %v8669, %v8668
        %v8752 = vpack.c.b16 %v8671, %v8670
        %v8753 = vpack.c.b16 %v8673, %v8672
        %v8754 = vpack.c.b16 %v8675, %v8674
        %v8755 = vpack.c.b16 %v8677, %v8676
        %v8756 = vpack.c.b16 %v8679, %v8678
        %v8757 = vpack.c.b16 %v8681, %v8680
        %v8758 = vpack.c.b16 %v8683, %v8682
        %v8759 = vpack.c.b16 %v8685, %v8684
        %v8760 = vpack.c.b16 %v8687, %v8686
        %v8761 = vpack.c.b16 %v8689, %v8688
        %v8762 = vpack.c.b16 %v8691, %v8690
        %v8763 = vpack.c.b16 %v8693, %v8692
        %v8764 = vpack.c.b16 %v8695, %v8694
        %v8765 = vpack.c.b16 %v8697, %v8696
        %v8766 = vpack.c.b16 %v8699, %v8698
        %v8767 = vpack.c.b16 %v8701, %v8700
        %v8768 = vpack.c.b16 %v8703, %v8702
        %v8769 = vpack.c.b16 %v8705, %v8704
        %8834 = vmatpush.bf16.msra.mxu0 %v8713
        %8835 = vmatpush.bf16.msra.mxu0 %v8712
        %8836 = vmatpush.bf16.msra.mxu0 %v8711
        %8837 = vmatpush.bf16.msra.mxu0 %v8710
        %8838 = vmatpush.bf16.msra.mxu0 %v8709
        %8839 = vmatpush.bf16.msra.mxu0 %v8708
        %8840 = vmatpush.bf16.msra.mxu0 %v8707
        %8841 = vmatpush.bf16.msra.mxu0 %v8706
        %8842 = vmatmul.bf16.gmra.mxu0 %v8258
        %v8843 = vpop.f32.mrf.mxu0
        %v8844 = vadd.f32 0.0, %v8843
        %v8845 = vpop.f32.mrf.mxu0
        %v8846 = vadd.f32 0.0, %v8845
        %8847 = vmatmul.bf16.gmra.mxu0 %v8266
        %v8848 = vpop.f32.mrf.mxu0
        %v8849 = vadd.f32 0.0, %v8848
        %v8850 = vpop.f32.mrf.mxu0
        %v8851 = vadd.f32 0.0, %v8850
        %8852 = vmatmul.bf16.gmra.mxu0 %v8274
        %v8853 = vpop.f32.mrf.mxu0
        %v8854 = vadd.f32 0.0, %v8853
        %v8855 = vpop.f32.mrf.mxu0
        %v8856 = vadd.f32 0.0, %v8855
        %8857 = vmatmul.bf16.gmra.mxu0 %v8282
        %v8858 = vpop.f32.mrf.mxu0
        %v8859 = vadd.f32 0.0, %v8858
        %v8860 = vpop.f32.mrf.mxu0
        %v8861 = vadd.f32 0.0, %v8860
        %8862 = vmatmul.bf16.gmra.mxu0 %v8290
        %v8863 = vpop.f32.mrf.mxu0
        %v8864 = vadd.f32 0.0, %v8863
        %v8865 = vpop.f32.mrf.mxu0
        %v8866 = vadd.f32 0.0, %v8865
        %8867 = vmatmul.bf16.gmra.mxu0 %v8298
        %v8868 = vpop.f32.mrf.mxu0
        %v8869 = vadd.f32 0.0, %v8868
        %v8870 = vpop.f32.mrf.mxu0
        %v8871 = vadd.f32 0.0, %v8870
        %8872 = vmatmul.bf16.gmra.mxu0 %v8306
        %v8873 = vpop.f32.mrf.mxu0
        %v8874 = vadd.f32 0.0, %v8873
        %v8875 = vpop.f32.mrf.mxu0
        %v8876 = vadd.f32 0.0, %v8875
        %8877 = vmatmul.bf16.gmra.mxu0 %v8314
        %v8878 = vpop.f32.mrf.mxu0
        %v8879 = vadd.f32 0.0, %v8878
        %v8880 = vpop.f32.mrf.mxu0
        %v8881 = vadd.f32 0.0, %v8880
        %8882 = vdwg.mxu0
        %8883 = vmatpush.bf16.msra.mxu0 %v8721
        %8884 = vmatpush.bf16.msra.mxu0 %v8720
        %8885 = vmatpush.bf16.msra.mxu0 %v8719
        %8886 = vmatpush.bf16.msra.mxu0 %v8718
        %8887 = vmatpush.bf16.msra.mxu0 %v8717
        %8888 = vmatpush.bf16.msra.mxu0 %v8716
        %8889 = vmatpush.bf16.msra.mxu0 %v8715
        %8890 = vmatpush.bf16.msra.mxu0 %v8714
        %8891 = vmatmul.bf16.gmra.mxu0 %v8259
        %v8892 = vpop.f32.mrf.mxu0
        %v8893 = vadd.f32 %v8844, %v8892
        %v8894 = vpop.f32.mrf.mxu0
        %v8895 = vadd.f32 %v8846, %v8894
        %8896 = vmatmul.bf16.gmra.mxu0 %v8267
        %v8897 = vpop.f32.mrf.mxu0
        %v8898 = vadd.f32 %v8849, %v8897
        %v8899 = vpop.f32.mrf.mxu0
        %v8900 = vadd.f32 %v8851, %v8899
        %8901 = vmatmul.bf16.gmra.mxu0 %v8275
        %v8902 = vpop.f32.mrf.mxu0
        %v8903 = vadd.f32 %v8854, %v8902
        %v8904 = vpop.f32.mrf.mxu0
        %v8905 = vadd.f32 %v8856, %v8904
        %8906 = vmatmul.bf16.gmra.mxu0 %v8283
        %v8907 = vpop.f32.mrf.mxu0
        %v8908 = vadd.f32 %v8859, %v8907
        %v8909 = vpop.f32.mrf.mxu0
        %v8910 = vadd.f32 %v8861, %v8909
        %8911 = vmatmul.bf16.gmra.mxu0 %v8291
        %v8912 = vpop.f32.mrf.mxu0
        %v8913 = vadd.f32 %v8864, %v8912
        %v8914 = vpop.f32.mrf.mxu0
        %v8915 = vadd.f32 %v8866, %v8914
        %8916 = vmatmul.bf16.gmra.mxu0 %v8299
        %v8917 = vpop.f32.mrf.mxu0
        %v8918 = vadd.f32 %v8869, %v8917
        %v8919 = vpop.f32.mrf.mxu0
        %v8920 = vadd.f32 %v8871, %v8919
        %8921 = vmatmul.bf16.gmra.mxu0 %v8307
        %v8922 = vpop.f32.mrf.mxu0
        %v8923 = vadd.f32 %v8874, %v8922
        %v8924 = vpop.f32.mrf.mxu0
        %v8925 = vadd.f32 %v8876, %v8924
        %8926 = vmatmul.bf16.gmra.mxu0 %v8315
        %v8927 = vpop.f32.mrf.mxu0
        %v8928 = vadd.f32 %v8879, %v8927
        %v8929 = vpop.f32.mrf.mxu0
        %v8930 = vadd.f32 %v8881, %v8929
        %8931 = vdwg.mxu0
        %8932 = vmatpush.bf16.msra.mxu0 %v8729
        %8933 = vmatpush.bf16.msra.mxu0 %v8728
        %8934 = vmatpush.bf16.msra.mxu0 %v8727
        %8935 = vmatpush.bf16.msra.mxu0 %v8726
        %8936 = vmatpush.bf16.msra.mxu0 %v8725
        %8937 = vmatpush.bf16.msra.mxu0 %v8724
        %8938 = vmatpush.bf16.msra.mxu0 %v8723
        %8939 = vmatpush.bf16.msra.mxu0 %v8722
        %8940 = vmatmul.bf16.gmra.mxu0 %v8260
        %v8941 = vpop.f32.mrf.mxu0
        %v8942 = vadd.f32 %v8893, %v8941
        %v8943 = vpop.f32.mrf.mxu0
        %v8944 = vadd.f32 %v8895, %v8943
        %8945 = vmatmul.bf16.gmra.mxu0 %v8268
        %v8946 = vpop.f32.mrf.mxu0
        %v8947 = vadd.f32 %v8898, %v8946
        %v8948 = vpop.f32.mrf.mxu0
        %v8949 = vadd.f32 %v8900, %v8948
        %8950 = vmatmul.bf16.gmra.mxu0 %v8276
        %v8951 = vpop.f32.mrf.mxu0
        %v8952 = vadd.f32 %v8903, %v8951
        %v8953 = vpop.f32.mrf.mxu0
        %v8954 = vadd.f32 %v8905, %v8953
        %8955 = vmatmul.bf16.gmra.mxu0 %v8284
        %v8956 = vpop.f32.mrf.mxu0
        %v8957 = vadd.f32 %v8908, %v8956
        %v8958 = vpop.f32.mrf.mxu0
        %v8959 = vadd.f32 %v8910, %v8958
        %8960 = vmatmul.bf16.gmra.mxu0 %v8292
        %v8961 = vpop.f32.mrf.mxu0
        %v8962 = vadd.f32 %v8913, %v8961
        %v8963 = vpop.f32.mrf.mxu0
        %v8964 = vadd.f32 %v8915, %v8963
        %8965 = vmatmul.bf16.gmra.mxu0 %v8300
        %v8966 = vpop.f32.mrf.mxu0
        %v8967 = vadd.f32 %v8918, %v8966
        %v8968 = vpop.f32.mrf.mxu0
        %v8969 = vadd.f32 %v8920, %v8968
        %8970 = vmatmul.bf16.gmra.mxu0 %v8308
        %v8971 = vpop.f32.mrf.mxu0
        %v8972 = vadd.f32 %v8923, %v8971
        %v8973 = vpop.f32.mrf.mxu0
        %v8974 = vadd.f32 %v8925, %v8973
        %8975 = vmatmul.bf16.gmra.mxu0 %v8316
        %v8976 = vpop.f32.mrf.mxu0
        %v8977 = vadd.f32 %v8928, %v8976
        %v8978 = vpop.f32.mrf.mxu0
        %v8979 = vadd.f32 %v8930, %v8978
        %8980 = vdwg.mxu0
        %8981 = vmatpush.bf16.msra.mxu0 %v8737
        %8982 = vmatpush.bf16.msra.mxu0 %v8736
        %8983 = vmatpush.bf16.msra.mxu0 %v8735
        %8984 = vmatpush.bf16.msra.mxu0 %v8734
        %8985 = vmatpush.bf16.msra.mxu0 %v8733
        %8986 = vmatpush.bf16.msra.mxu0 %v8732
        %8987 = vmatpush.bf16.msra.mxu0 %v8731
        %8988 = vmatpush.bf16.msra.mxu0 %v8730
        %8989 = vmatmul.bf16.gmra.mxu0 %v8261
        %v8990 = vpop.f32.mrf.mxu0
        %v8991 = vadd.f32 %v8942, %v8990
        %v8992 = vpop.f32.mrf.mxu0
        %v8993 = vadd.f32 %v8944, %v8992
        %8994 = vmatmul.bf16.gmra.mxu0 %v8269
        %v8995 = vpop.f32.mrf.mxu0
        %v8996 = vadd.f32 %v8947, %v8995
        %v8997 = vpop.f32.mrf.mxu0
        %v8998 = vadd.f32 %v8949, %v8997
        %8999 = vmatmul.bf16.gmra.mxu0 %v8277
        %v9000 = vpop.f32.mrf.mxu0
        %v9001 = vadd.f32 %v8952, %v9000
        %v9002 = vpop.f32.mrf.mxu0
        %v9003 = vadd.f32 %v8954, %v9002
        %9004 = vmatmul.bf16.gmra.mxu0 %v8285
        %v9005 = vpop.f32.mrf.mxu0
        %v9006 = vadd.f32 %v8957, %v9005
        %v9007 = vpop.f32.mrf.mxu0
        %v9008 = vadd.f32 %v8959, %v9007
        %9009 = vmatmul.bf16.gmra.mxu0 %v8293
        %v9010 = vpop.f32.mrf.mxu0
        %v9011 = vadd.f32 %v8962, %v9010
        %v9012 = vpop.f32.mrf.mxu0
        %v9013 = vadd.f32 %v8964, %v9012
        %9014 = vmatmul.bf16.gmra.mxu0 %v8301
        %v9015 = vpop.f32.mrf.mxu0
        %v9016 = vadd.f32 %v8967, %v9015
        %v9017 = vpop.f32.mrf.mxu0
        %v9018 = vadd.f32 %v8969, %v9017
        %9019 = vmatmul.bf16.gmra.mxu0 %v8309
        %v9020 = vpop.f32.mrf.mxu0
        %v9021 = vadd.f32 %v8972, %v9020
        %v9022 = vpop.f32.mrf.mxu0
        %v9023 = vadd.f32 %v8974, %v9022
        %9024 = vmatmul.bf16.gmra.mxu0 %v8317
        %v9025 = vpop.f32.mrf.mxu0
        %v9026 = vadd.f32 %v8977, %v9025
        %v9027 = vpop.f32.mrf.mxu0
        %v9028 = vadd.f32 %v8979, %v9027
        %9029 = vdwg.mxu0
        %9030 = vmatpush.bf16.msra.mxu0 %v8745
        %9031 = vmatpush.bf16.msra.mxu0 %v8744
        %9032 = vmatpush.bf16.msra.mxu0 %v8743
        %9033 = vmatpush.bf16.msra.mxu0 %v8742
        %9034 = vmatpush.bf16.msra.mxu0 %v8741
        %9035 = vmatpush.bf16.msra.mxu0 %v8740
        %9036 = vmatpush.bf16.msra.mxu0 %v8739
        %9037 = vmatpush.bf16.msra.mxu0 %v8738
        %9038 = vmatmul.bf16.gmra.mxu0 %v8262
        %v9039 = vpop.f32.mrf.mxu0
        %v9040 = vadd.f32 %v8991, %v9039
        %v9041 = vpop.f32.mrf.mxu0
        %v9042 = vadd.f32 %v8993, %v9041
        %9043 = vmatmul.bf16.gmra.mxu0 %v8270
        %v9044 = vpop.f32.mrf.mxu0
        %v9045 = vadd.f32 %v8996, %v9044
        %v9046 = vpop.f32.mrf.mxu0
        %v9047 = vadd.f32 %v8998, %v9046
        %9048 = vmatmul.bf16.gmra.mxu0 %v8278
        %v9049 = vpop.f32.mrf.mxu0
        %v9050 = vadd.f32 %v9001, %v9049
        %v9051 = vpop.f32.mrf.mxu0
        %v9052 = vadd.f32 %v9003, %v9051
        %9053 = vmatmul.bf16.gmra.mxu0 %v8286
        %v9054 = vpop.f32.mrf.mxu0
        %v9055 = vadd.f32 %v9006, %v9054
        %v9056 = vpop.f32.mrf.mxu0
        %v9057 = vadd.f32 %v9008, %v9056
        %9058 = vmatmul.bf16.gmra.mxu0 %v8294
        %v9059 = vpop.f32.mrf.mxu0
        %v9060 = vadd.f32 %v9011, %v9059
        %v9061 = vpop.f32.mrf.mxu0
        %v9062 = vadd.f32 %v9013, %v9061
        %9063 = vmatmul.bf16.gmra.mxu0 %v8302
        %v9064 = vpop.f32.mrf.mxu0
        %v9065 = vadd.f32 %v9016, %v9064
        %v9066 = vpop.f32.mrf.mxu0
        %v9067 = vadd.f32 %v9018, %v9066
        %9068 = vmatmul.bf16.gmra.mxu0 %v8310
        %v9069 = vpop.f32.mrf.mxu0
        %v9070 = vadd.f32 %v9021, %v9069
        %v9071 = vpop.f32.mrf.mxu0
        %v9072 = vadd.f32 %v9023, %v9071
        %9073 = vmatmul.bf16.gmra.mxu0 %v8318
        %v9074 = vpop.f32.mrf.mxu0
        %v9075 = vadd.f32 %v9026, %v9074
        %v9076 = vpop.f32.mrf.mxu0
        %v9077 = vadd.f32 %v9028, %v9076
        %9078 = vdwg.mxu0
        %9079 = vmatpush.bf16.msra.mxu0 %v8753
        %9080 = vmatpush.bf16.msra.mxu0 %v8752
        %9081 = vmatpush.bf16.msra.mxu0 %v8751
        %9082 = vmatpush.bf16.msra.mxu0 %v8750
        %9083 = vmatpush.bf16.msra.mxu0 %v8749
        %9084 = vmatpush.bf16.msra.mxu0 %v8748
        %9085 = vmatpush.bf16.msra.mxu0 %v8747
        %9086 = vmatpush.bf16.msra.mxu0 %v8746
        %9087 = vmatmul.bf16.gmra.mxu0 %v8263
        %v9088 = vpop.f32.mrf.mxu0
        %v9089 = vadd.f32 %v9040, %v9088
        %v9090 = vpop.f32.mrf.mxu0
        %v9091 = vadd.f32 %v9042, %v9090
        %9092 = vmatmul.bf16.gmra.mxu0 %v8271
        %v9093 = vpop.f32.mrf.mxu0
        %v9094 = vadd.f32 %v9045, %v9093
        %v9095 = vpop.f32.mrf.mxu0
        %v9096 = vadd.f32 %v9047, %v9095
        %9097 = vmatmul.bf16.gmra.mxu0 %v8279
        %v9098 = vpop.f32.mrf.mxu0
        %v9099 = vadd.f32 %v9050, %v9098
        %v9100 = vpop.f32.mrf.mxu0
        %v9101 = vadd.f32 %v9052, %v9100
        %9102 = vmatmul.bf16.gmra.mxu0 %v8287
        %v9103 = vpop.f32.mrf.mxu0
        %v9104 = vadd.f32 %v9055, %v9103
        %v9105 = vpop.f32.mrf.mxu0
        %v9106 = vadd.f32 %v9057, %v9105
        %9107 = vmatmul.bf16.gmra.mxu0 %v8295
        %v9108 = vpop.f32.mrf.mxu0
        %v9109 = vadd.f32 %v9060, %v9108
        %v9110 = vpop.f32.mrf.mxu0
        %v9111 = vadd.f32 %v9062, %v9110
        %9112 = vmatmul.bf16.gmra.mxu0 %v8303
        %v9113 = vpop.f32.mrf.mxu0
        %v9114 = vadd.f32 %v9065, %v9113
        %v9115 = vpop.f32.mrf.mxu0
        %v9116 = vadd.f32 %v9067, %v9115
        %9117 = vmatmul.bf16.gmra.mxu0 %v8311
        %v9118 = vpop.f32.mrf.mxu0
        %v9119 = vadd.f32 %v9070, %v9118
        %v9120 = vpop.f32.mrf.mxu0
        %v9121 = vadd.f32 %v9072, %v9120
        %9122 = vmatmul.bf16.gmra.mxu0 %v8319
        %v9123 = vpop.f32.mrf.mxu0
        %v9124 = vadd.f32 %v9075, %v9123
        %v9125 = vpop.f32.mrf.mxu0
        %v9126 = vadd.f32 %v9077, %v9125
        %9127 = vdwg.mxu0
        %9128 = vmatpush.bf16.msra.mxu0 %v8761
        %9129 = vmatpush.bf16.msra.mxu0 %v8760
        %9130 = vmatpush.bf16.msra.mxu0 %v8759
        %9131 = vmatpush.bf16.msra.mxu0 %v8758
        %9132 = vmatpush.bf16.msra.mxu0 %v8757
        %9133 = vmatpush.bf16.msra.mxu0 %v8756
        %9134 = vmatpush.bf16.msra.mxu0 %v8755
        %9135 = vmatpush.bf16.msra.mxu0 %v8754
        %9136 = vmatmul.bf16.gmra.mxu0 %v8264
        %v9137 = vpop.f32.mrf.mxu0
        %v9138 = vadd.f32 %v9089, %v9137
        %v9139 = vpop.f32.mrf.mxu0
        %v9140 = vadd.f32 %v9091, %v9139
        %9141 = vmatmul.bf16.gmra.mxu0 %v8272
        %v9142 = vpop.f32.mrf.mxu0
        %v9143 = vadd.f32 %v9094, %v9142
        %v9144 = vpop.f32.mrf.mxu0
        %v9145 = vadd.f32 %v9096, %v9144
        %9146 = vmatmul.bf16.gmra.mxu0 %v8280
        %v9147 = vpop.f32.mrf.mxu0
        %v9148 = vadd.f32 %v9099, %v9147
        %v9149 = vpop.f32.mrf.mxu0
        %v9150 = vadd.f32 %v9101, %v9149
        %9151 = vmatmul.bf16.gmra.mxu0 %v8288
        %v9152 = vpop.f32.mrf.mxu0
        %v9153 = vadd.f32 %v9104, %v9152
        %v9154 = vpop.f32.mrf.mxu0
        %v9155 = vadd.f32 %v9106, %v9154
        %9156 = vmatmul.bf16.gmra.mxu0 %v8296
        %v9157 = vpop.f32.mrf.mxu0
        %v9158 = vadd.f32 %v9109, %v9157
        %v9159 = vpop.f32.mrf.mxu0
        %v9160 = vadd.f32 %v9111, %v9159
        %9161 = vmatmul.bf16.gmra.mxu0 %v8304
        %v9162 = vpop.f32.mrf.mxu0
        %v9163 = vadd.f32 %v9114, %v9162
        %v9164 = vpop.f32.mrf.mxu0
        %v9165 = vadd.f32 %v9116, %v9164
        %9166 = vmatmul.bf16.gmra.mxu0 %v8312
        %v9167 = vpop.f32.mrf.mxu0
        %v9168 = vadd.f32 %v9119, %v9167
        %v9169 = vpop.f32.mrf.mxu0
        %v9170 = vadd.f32 %v9121, %v9169
        %9171 = vmatmul.bf16.gmra.mxu0 %v8320
        %v9172 = vpop.f32.mrf.mxu0
        %v9173 = vadd.f32 %v9124, %v9172
        %v9174 = vpop.f32.mrf.mxu0
        %v9175 = vadd.f32 %v9126, %v9174
        %9176 = vdwg.mxu0
        %9177 = vmatpush.bf16.msra.mxu0 %v8769
        %9178 = vmatpush.bf16.msra.mxu0 %v8768
        %9179 = vmatpush.bf16.msra.mxu0 %v8767
        %9180 = vmatpush.bf16.msra.mxu0 %v8766
        %9181 = vmatpush.bf16.msra.mxu0 %v8765
        %9182 = vmatpush.bf16.msra.mxu0 %v8764
        %9183 = vmatpush.bf16.msra.mxu0 %v8763
        %9184 = vmatpush.bf16.msra.mxu0 %v8762
        %9185 = vmatmul.bf16.gmra.mxu0 %v8265
        %v9186 = vpop.f32.mrf.mxu0
        %v9187 = vadd.f32 %v9138, %v9186
        %v9188 = vpop.f32.mrf.mxu0
        %v9189 = vadd.f32 %v9140, %v9188
        %9190 = vmatmul.bf16.gmra.mxu0 %v8273
        %v9191 = vpop.f32.mrf.mxu0
        %v9192 = vadd.f32 %v9143, %v9191
        %v9193 = vpop.f32.mrf.mxu0
        %v9194 = vadd.f32 %v9145, %v9193
        %9195 = vmatmul.bf16.gmra.mxu0 %v8281
        %v9196 = vpop.f32.mrf.mxu0
        %v9197 = vadd.f32 %v9148, %v9196
        %v9198 = vpop.f32.mrf.mxu0
        %v9199 = vadd.f32 %v9150, %v9198
        %9200 = vmatmul.bf16.gmra.mxu0 %v8289
        %v9201 = vpop.f32.mrf.mxu0
        %v9202 = vadd.f32 %v9153, %v9201
        %v9203 = vpop.f32.mrf.mxu0
        %v9204 = vadd.f32 %v9155, %v9203
        %9205 = vmatmul.bf16.gmra.mxu0 %v8297
        %v9206 = vpop.f32.mrf.mxu0
        %v9207 = vadd.f32 %v9158, %v9206
        %v9208 = vpop.f32.mrf.mxu0
        %v9209 = vadd.f32 %v9160, %v9208
        %9210 = vmatmul.bf16.gmra.mxu0 %v8305
        %v9211 = vpop.f32.mrf.mxu0
        %v9212 = vadd.f32 %v9163, %v9211
        %v9213 = vpop.f32.mrf.mxu0
        %v9214 = vadd.f32 %v9165, %v9213
        %9215 = vmatmul.bf16.gmra.mxu0 %v8313
        %v9216 = vpop.f32.mrf.mxu0
        %v9217 = vadd.f32 %v9168, %v9216
        %v9218 = vpop.f32.mrf.mxu0
        %v9219 = vadd.f32 %v9170, %v9218
        %9220 = vmatmul.bf16.gmra.mxu0 %v8321
        %v9221 = vpop.f32.mrf.mxu0
        %v9222 = vadd.f32 %v9173, %v9221
        %v9223 = vpop.f32.mrf.mxu0
        %v9224 = vadd.f32 %v9175, %v9223
        %9225 = vdwg.mxu0
        %9226 = vmax.xlane.f32.xlu0 %v9187
        %v9227 = vpop.xlane.xlu0 %9226
        %9228 = vmax.xlane.f32.xlu0 %v9189
        %v9229 = vpop.xlane.xlu0 %9228
        %9230 = vmax.xlane.f32.xlu0 %v9192
        %v9231 = vpop.xlane.xlu0 %9230
        %9232 = vmax.xlane.f32.xlu0 %v9194
        %v9233 = vpop.xlane.xlu0 %9232
        %9234 = vmax.xlane.f32.xlu0 %v9197
        %v9235 = vpop.xlane.xlu0 %9234
        %9236 = vmax.xlane.f32.xlu0 %v9199
        %v9237 = vpop.xlane.xlu0 %9236
        %9238 = vmax.xlane.f32.xlu0 %v9202
        %v9239 = vpop.xlane.xlu0 %9238
        %9240 = vmax.xlane.f32.xlu0 %v9204
        %v9241 = vpop.xlane.xlu0 %9240
        %9242 = vmax.xlane.f32.xlu0 %v9207
        %v9243 = vpop.xlane.xlu0 %9242
        %9244 = vmax.xlane.f32.xlu0 %v9209
        %v9245 = vpop.xlane.xlu0 %9244
        %9246 = vmax.xlane.f32.xlu0 %v9212
        %v9247 = vpop.xlane.xlu0 %9246
        %9248 = vmax.xlane.f32.xlu0 %v9214
        %v9249 = vpop.xlane.xlu0 %9248
        %9250 = vmax.xlane.f32.xlu0 %v9217
        %v9251 = vpop.xlane.xlu0 %9250
        %9252 = vmax.xlane.f32.xlu0 %v9219
        %v9253 = vpop.xlane.xlu0 %9252
        %9254 = vmax.xlane.f32.xlu0 %v9222
        %v9255 = vpop.xlane.xlu0 %9254
        %9256 = vmax.xlane.f32.xlu0 %v9224
        %v9257 = vpop.xlane.xlu0 %9256
        %v9258 = vsub.f32 %v9187, %v9227
        %v9259 = vsub.f32 %v9189, %v9229
        %v9260 = vsub.f32 %v9192, %v9231
        %v9261 = vsub.f32 %v9194, %v9233
        %v9262 = vsub.f32 %v9197, %v9235
        %v9263 = vsub.f32 %v9199, %v9237
        %v9264 = vsub.f32 %v9202, %v9239
        %v9265 = vsub.f32 %v9204, %v9241
        %v9266 = vsub.f32 %v9207, %v9243
        %v9267 = vsub.f32 %v9209, %v9245
        %v9268 = vsub.f32 %v9212, %v9247
        %v9269 = vsub.f32 %v9214, %v9249
        %v9270 = vsub.f32 %v9217, %v9251
        %v9271 = vsub.f32 %v9219, %v9253
        %v9272 = vsub.f32 %v9222, %v9255
        %v9273 = vsub.f32 %v9224, %v9257
        %v9274 = vmul.f32 %v9258, 1.442695
        %v9275 = vpow.pop %v9274
        %v9276 = vmul.f32 %v9259, 1.442695
        %v9277 = vpow.pop %v9276
        %v9278 = vmul.f32 %v9260, 1.442695
        %v9279 = vpow.pop %v9278
        %v9280 = vmul.f32 %v9261, 1.442695
        %v9281 = vpow.pop %v9280
        %v9282 = vmul.f32 %v9262, 1.442695
        %v9283 = vpow.pop %v9282
        %v9284 = vmul.f32 %v9263, 1.442695
        %v9285 = vpow.pop %v9284
        %v9286 = vmul.f32 %v9264, 1.442695
        %v9287 = vpow.pop %v9286
        %v9288 = vmul.f32 %v9265, 1.442695
        %v9289 = vpow.pop %v9288
        %v9290 = vmul.f32 %v9266, 1.442695
        %v9291 = vpow.pop %v9290
        %v9292 = vmul.f32 %v9267, 1.442695
        %v9293 = vpow.pop %v9292
        %v9294 = vmul.f32 %v9268, 1.442695
        %v9295 = vpow.pop %v9294
        %v9296 = vmul.f32 %v9269, 1.442695
        %v9297 = vpow.pop %v9296
        %v9298 = vmul.f32 %v9270, 1.442695
        %v9299 = vpow.pop %v9298
        %v9300 = vmul.f32 %v9271, 1.442695
        %v9301 = vpow.pop %v9300
        %v9302 = vmul.f32 %v9272, 1.442695
        %v9303 = vpow.pop %v9302
        %v9304 = vmul.f32 %v9273, 1.442695
        %v9305 = vpow.pop %v9304
        %v9306 = vpack.c.bf16 %v9277, %v9275
        %v9307 = vpack.c.bf16 %v9281, %v9279
        %v9308 = vpack.c.bf16 %v9285, %v9283
        %v9309 = vpack.c.bf16 %v9289, %v9287
        %v9310 = vpack.c.bf16 %v9293, %v9291
        %v9311 = vpack.c.bf16 %v9297, %v9295
        %v9312 = vpack.c.bf16 %v9301, %v9299
        %v9313 = vpack.c.bf16 %v9305, %v9303
        %v9314 = vld [vmem:[#allocation14] sm:$0xf]
        %v9315 = vld [vmem:[#allocation14 + $0x4] sm:$0xf]
        %v9316 = vld [vmem:[#allocation14 + $0x8] sm:$0xf]
        %v9317 = vld [vmem:[#allocation14 + $0xc] sm:$0xf]
        %v9318 = vld [vmem:[#allocation14 + $0x10] sm:$0xf]
        %v9319 = vld [vmem:[#allocation14 + $0x14] sm:$0xf]
        %v9320 = vld [vmem:[#allocation14 + $0x18] sm:$0xf]
        %v9321 = vld [vmem:[#allocation14 + $0x1c] sm:$0xf]
        %v9322 = vld [vmem:[#allocation14 + $0x20] sm:$0xf]
        %v9323 = vld [vmem:[#allocation14 + $0x24] sm:$0xf]
        %v9324 = vld [vmem:[#allocation14 + $0x28] sm:$0xf]
        %v9325 = vld [vmem:[#allocation14 + $0x2c] sm:$0xf]
        %v9326 = vld [vmem:[#allocation14 + $0x30] sm:$0xf]
        %v9327 = vld [vmem:[#allocation14 + $0x34] sm:$0xf]
        %v9328 = vld [vmem:[#allocation14 + $0x38] sm:$0xf]
        %v9329 = vld [vmem:[#allocation14 + $0x3c] sm:$0xf]
        %v9346 = vunpack.c.l.b16 %v9314
        %v9347 = vunpack.c.l.b16 %v9315
        %v9348 = vunpack.c.l.b16 %v9316
        %v9349 = vunpack.c.l.b16 %v9317
        %v9350 = vunpack.c.l.b16 %v9318
        %v9351 = vunpack.c.l.b16 %v9319
        %v9352 = vunpack.c.l.b16 %v9320
        %v9353 = vunpack.c.l.b16 %v9321
        %v9354 = vunpack.c.l.b16 %v9322
        %v9355 = vunpack.c.l.b16 %v9323
        %v9356 = vunpack.c.l.b16 %v9324
        %v9357 = vunpack.c.l.b16 %v9325
        %v9358 = vunpack.c.l.b16 %v9326
        %v9359 = vunpack.c.l.b16 %v9327
        %v9360 = vunpack.c.l.b16 %v9328
        %v9361 = vunpack.c.l.b16 %v9329
        %v9362 = vpack.c.b16 %v9347, %v9346
        %v9363 = vpack.c.b16 %v9349, %v9348
        %v9364 = vpack.c.b16 %v9351, %v9350
        %v9365 = vpack.c.b16 %v9353, %v9352
        %v9366 = vpack.c.b16 %v9355, %v9354
        %v9367 = vpack.c.b16 %v9357, %v9356
        %v9368 = vpack.c.b16 %v9359, %v9358
        %v9369 = vpack.c.b16 %v9361, %v9360
        %9378 = vmatpush.bf16.msra.mxu0 %v9369
        %9379 = vmatpush.bf16.msra.mxu0 %v9368
        %9380 = vmatpush.bf16.msra.mxu0 %v9367
        %9381 = vmatpush.bf16.msra.mxu0 %v9366
        %9382 = vmatpush.bf16.msra.mxu0 %v9365
        %9383 = vmatpush.bf16.msra.mxu0 %v9364
        %9384 = vmatpush.bf16.msra.mxu0 %v9363
        %9385 = vmatpush.bf16.msra.mxu0 %v9362
        %9386 = vmatmul.bf16.gmra.mxu0 %v9306
        %v9387 = vpop.f32.mrf.mxu0
        %v9388 = vadd.f32 0.0, %v9387
        %v9389 = vpop.f32.mrf.mxu0
        %v9390 = vadd.f32 0.0, %v9389
        %9391 = vmatmul.bf16.gmra.mxu0 %v9307
        %v9392 = vpop.f32.mrf.mxu0
        %v9393 = vadd.f32 0.0, %v9392
        %v9394 = vpop.f32.mrf.mxu0
        %v9395 = vadd.f32 0.0, %v9394
        %9396 = vmatmul.bf16.gmra.mxu0 %v9308
        %v9397 = vpop.f32.mrf.mxu0
        %v9398 = vadd.f32 0.0, %v9397
        %v9399 = vpop.f32.mrf.mxu0
        %v9400 = vadd.f32 0.0, %v9399
        %9401 = vmatmul.bf16.gmra.mxu0 %v9309
        %v9402 = vpop.f32.mrf.mxu0
        %v9403 = vadd.f32 0.0, %v9402
        %v9404 = vpop.f32.mrf.mxu0
        %v9405 = vadd.f32 0.0, %v9404
        %9406 = vmatmul.bf16.gmra.mxu0 %v9310
        %v9407 = vpop.f32.mrf.mxu0
        %v9408 = vadd.f32 0.0, %v9407
        %v9409 = vpop.f32.mrf.mxu0
        %v9410 = vadd.f32 0.0, %v9409
        %9411 = vmatmul.bf16.gmra.mxu0 %v9311
        %v9412 = vpop.f32.mrf.mxu0
        %v9413 = vadd.f32 0.0, %v9412
        %v9414 = vpop.f32.mrf.mxu0
        %v9415 = vadd.f32 0.0, %v9414
        %9416 = vmatmul.bf16.gmra.mxu0 %v9312
        %v9417 = vpop.f32.mrf.mxu0
        %v9418 = vadd.f32 0.0, %v9417
        %v9419 = vpop.f32.mrf.mxu0
        %v9420 = vadd.f32 0.0, %v9419
        %9421 = vmatmul.bf16.gmra.mxu0 %v9313
        %v9422 = vpop.f32.mrf.mxu0
        %v9423 = vadd.f32 0.0, %v9422
        %v9424 = vpop.f32.mrf.mxu0
        %v9425 = vadd.f32 0.0, %v9424
        %9426 = vdwg.mxu0
        %v9427 = vrcp.pop %v9388
        %v9428 = vmul.f32 %v9388, %v9427
        %v9429 = vsub.f32 1.0, %v9428
        %v9430 = vmul.f32 %v9427, %v9429
        %v9431 = vadd.f32 %v9427, %v9430
        %vm9432 = vweird.f32 %v9388
        %vm9433 = vweird.f32 %v9427
        %vm9434 = vmor %vm9432, %vm9433
        %v9435 = vsel %vm9434, %v9427, %v9431
        %v9436 = vand.u32 2147483647, %v9388
        %vm9437 = vcmp.eq.f32.partialorder %v9436, 8.507059e+37
        %v9438 = vand.u32 %v9388, 2147483648
        %v9439 = vor.u32 1.1754944e-38, %v9438
        %v9440 = vsel %vm9437, %v9439, %v9435
        %v9441 = vrcp.pop %v9390
        %v9442 = vmul.f32 %v9390, %v9441
        %v9443 = vsub.f32 1.0, %v9442
        %v9444 = vmul.f32 %v9441, %v9443
        %v9445 = vadd.f32 %v9441, %v9444
        %vm9446 = vweird.f32 %v9390
        %vm9447 = vweird.f32 %v9441
        %vm9448 = vmor %vm9446, %vm9447
        %v9449 = vsel %vm9448, %v9441, %v9445
        %v9450 = vand.u32 2147483647, %v9390
        %vm9451 = vcmp.eq.f32.partialorder %v9450, 8.507059e+37
        %v9452 = vand.u32 %v9390, 2147483648
        %v9453 = vor.u32 1.1754944e-38, %v9452
        %v9454 = vsel %vm9451, %v9453, %v9449
        %v9455 = vrcp.pop %v9393
        %v9456 = vmul.f32 %v9393, %v9455
        %v9457 = vsub.f32 1.0, %v9456
        %v9458 = vmul.f32 %v9455, %v9457
        %v9459 = vadd.f32 %v9455, %v9458
        %vm9460 = vweird.f32 %v9393
        %vm9461 = vweird.f32 %v9455
        %vm9462 = vmor %vm9460, %vm9461
        %v9463 = vsel %vm9462, %v9455, %v9459
        %v9464 = vand.u32 2147483647, %v9393
        %vm9465 = vcmp.eq.f32.partialorder %v9464, 8.507059e+37
        %v9466 = vand.u32 %v9393, 2147483648
        %v9467 = vor.u32 1.1754944e-38, %v9466
        %v9468 = vsel %vm9465, %v9467, %v9463
        %v9469 = vrcp.pop %v9395
        %v9470 = vmul.f32 %v9395, %v9469
        %v9471 = vsub.f32 1.0, %v9470
        %v9472 = vmul.f32 %v9469, %v9471
        %v9473 = vadd.f32 %v9469, %v9472
        %vm9474 = vweird.f32 %v9395
        %vm9475 = vweird.f32 %v9469
        %vm9476 = vmor %vm9474, %vm9475
        %v9477 = vsel %vm9476, %v9469, %v9473
        %v9478 = vand.u32 2147483647, %v9395
        %vm9479 = vcmp.eq.f32.partialorder %v9478, 8.507059e+37
        %v9480 = vand.u32 %v9395, 2147483648
        %v9481 = vor.u32 1.1754944e-38, %v9480
        %v9482 = vsel %vm9479, %v9481, %v9477
        %v9483 = vrcp.pop %v9398
        %v9484 = vmul.f32 %v9398, %v9483
        %v9485 = vsub.f32 1.0, %v9484
        %v9486 = vmul.f32 %v9483, %v9485
        %v9487 = vadd.f32 %v9483, %v9486
        %vm9488 = vweird.f32 %v9398
        %vm9489 = vweird.f32 %v9483
        %vm9490 = vmor %vm9488, %vm9489
        %v9491 = vsel %vm9490, %v9483, %v9487
        %v9492 = vand.u32 2147483647, %v9398
        %vm9493 = vcmp.eq.f32.partialorder %v9492, 8.507059e+37
        %v9494 = vand.u32 %v9398, 2147483648
        %v9495 = vor.u32 1.1754944e-38, %v9494
        %v9496 = vsel %vm9493, %v9495, %v9491
        %v9497 = vrcp.pop %v9400
        %v9498 = vmul.f32 %v9400, %v9497
        %v9499 = vsub.f32 1.0, %v9498
        %v9500 = vmul.f32 %v9497, %v9499
        %v9501 = vadd.f32 %v9497, %v9500
        %vm9502 = vweird.f32 %v9400
        %vm9503 = vweird.f32 %v9497
        %vm9504 = vmor %vm9502, %vm9503
        %v9505 = vsel %vm9504, %v9497, %v9501
        %v9506 = vand.u32 2147483647, %v9400
        %vm9507 = vcmp.eq.f32.partialorder %v9506, 8.507059e+37
        %v9508 = vand.u32 %v9400, 2147483648
        %v9509 = vor.u32 1.1754944e-38, %v9508
        %v9510 = vsel %vm9507, %v9509, %v9505
        %v9511 = vrcp.pop %v9403
        %v9512 = vmul.f32 %v9403, %v9511
        %v9513 = vsub.f32 1.0, %v9512
        %v9514 = vmul.f32 %v9511, %v9513
        %v9515 = vadd.f32 %v9511, %v9514
        %vm9516 = vweird.f32 %v9403
        %vm9517 = vweird.f32 %v9511
        %vm9518 = vmor %vm9516, %vm9517
        %v9519 = vsel %vm9518, %v9511, %v9515
        %v9520 = vand.u32 2147483647, %v9403
        %vm9521 = vcmp.eq.f32.partialorder %v9520, 8.507059e+37
        %v9522 = vand.u32 %v9403, 2147483648
        %v9523 = vor.u32 1.1754944e-38, %v9522
        %v9524 = vsel %vm9521, %v9523, %v9519
        %v9525 = vrcp.pop %v9405
        %v9526 = vmul.f32 %v9405, %v9525
        %v9527 = vsub.f32 1.0, %v9526
        %v9528 = vmul.f32 %v9525, %v9527
        %v9529 = vadd.f32 %v9525, %v9528
        %vm9530 = vweird.f32 %v9405
        %vm9531 = vweird.f32 %v9525
        %vm9532 = vmor %vm9530, %vm9531
        %v9533 = vsel %vm9532, %v9525, %v9529
        %v9534 = vand.u32 2147483647, %v9405
        %vm9535 = vcmp.eq.f32.partialorder %v9534, 8.507059e+37
        %v9536 = vand.u32 %v9405, 2147483648
        %v9537 = vor.u32 1.1754944e-38, %v9536
        %v9538 = vsel %vm9535, %v9537, %v9533
        %v9539 = vrcp.pop %v9408
        %v9540 = vmul.f32 %v9408, %v9539
        %v9541 = vsub.f32 1.0, %v9540
        %v9542 = vmul.f32 %v9539, %v9541
        %v9543 = vadd.f32 %v9539, %v9542
        %vm9544 = vweird.f32 %v9408
        %vm9545 = vweird.f32 %v9539
        %vm9546 = vmor %vm9544, %vm9545
        %v9547 = vsel %vm9546, %v9539, %v9543
        %v9548 = vand.u32 2147483647, %v9408
        %vm9549 = vcmp.eq.f32.partialorder %v9548, 8.507059e+37
        %v9550 = vand.u32 %v9408, 2147483648
        %v9551 = vor.u32 1.1754944e-38, %v9550
        %v9552 = vsel %vm9549, %v9551, %v9547
        %v9553 = vrcp.pop %v9410
        %v9554 = vmul.f32 %v9410, %v9553
        %v9555 = vsub.f32 1.0, %v9554
        %v9556 = vmul.f32 %v9553, %v9555
        %v9557 = vadd.f32 %v9553, %v9556
        %vm9558 = vweird.f32 %v9410
        %vm9559 = vweird.f32 %v9553
        %vm9560 = vmor %vm9558, %vm9559
        %v9561 = vsel %vm9560, %v9553, %v9557
        %v9562 = vand.u32 2147483647, %v9410
        %vm9563 = vcmp.eq.f32.partialorder %v9562, 8.507059e+37
        %v9564 = vand.u32 %v9410, 2147483648
        %v9565 = vor.u32 1.1754944e-38, %v9564
        %v9566 = vsel %vm9563, %v9565, %v9561
        %v9567 = vrcp.pop %v9413
        %v9568 = vmul.f32 %v9413, %v9567
        %v9569 = vsub.f32 1.0, %v9568
        %v9570 = vmul.f32 %v9567, %v9569
        %v9571 = vadd.f32 %v9567, %v9570
        %vm9572 = vweird.f32 %v9413
        %vm9573 = vweird.f32 %v9567
        %vm9574 = vmor %vm9572, %vm9573
        %v9575 = vsel %vm9574, %v9567, %v9571
        %v9576 = vand.u32 2147483647, %v9413
        %vm9577 = vcmp.eq.f32.partialorder %v9576, 8.507059e+37
        %v9578 = vand.u32 %v9413, 2147483648
        %v9579 = vor.u32 1.1754944e-38, %v9578
        %v9580 = vsel %vm9577, %v9579, %v9575
        %v9581 = vrcp.pop %v9415
        %v9582 = vmul.f32 %v9415, %v9581
        %v9583 = vsub.f32 1.0, %v9582
        %v9584 = vmul.f32 %v9581, %v9583
        %v9585 = vadd.f32 %v9581, %v9584
        %vm9586 = vweird.f32 %v9415
        %vm9587 = vweird.f32 %v9581
        %vm9588 = vmor %vm9586, %vm9587
        %v9589 = vsel %vm9588, %v9581, %v9585
        %v9590 = vand.u32 2147483647, %v9415
        %vm9591 = vcmp.eq.f32.partialorder %v9590, 8.507059e+37
        %v9592 = vand.u32 %v9415, 2147483648
        %v9593 = vor.u32 1.1754944e-38, %v9592
        %v9594 = vsel %vm9591, %v9593, %v9589
        %v9595 = vrcp.pop %v9418
        %v9596 = vmul.f32 %v9418, %v9595
        %v9597 = vsub.f32 1.0, %v9596
        %v9598 = vmul.f32 %v9595, %v9597
        %v9599 = vadd.f32 %v9595, %v9598
        %vm9600 = vweird.f32 %v9418
        %vm9601 = vweird.f32 %v9595
        %vm9602 = vmor %vm9600, %vm9601
        %v9603 = vsel %vm9602, %v9595, %v9599
        %v9604 = vand.u32 2147483647, %v9418
        %vm9605 = vcmp.eq.f32.partialorder %v9604, 8.507059e+37
        %v9606 = vand.u32 %v9418, 2147483648
        %v9607 = vor.u32 1.1754944e-38, %v9606
        %v9608 = vsel %vm9605, %v9607, %v9603
        %v9609 = vrcp.pop %v9420
        %v9610 = vmul.f32 %v9420, %v9609
        %v9611 = vsub.f32 1.0, %v9610
        %v9612 = vmul.f32 %v9609, %v9611
        %v9613 = vadd.f32 %v9609, %v9612
        %vm9614 = vweird.f32 %v9420
        %vm9615 = vweird.f32 %v9609
        %vm9616 = vmor %vm9614, %vm9615
        %v9617 = vsel %vm9616, %v9609, %v9613
        %v9618 = vand.u32 2147483647, %v9420
        %vm9619 = vcmp.eq.f32.partialorder %v9618, 8.507059e+37
        %v9620 = vand.u32 %v9420, 2147483648
        %v9621 = vor.u32 1.1754944e-38, %v9620
        %v9622 = vsel %vm9619, %v9621, %v9617
        %v9623 = vrcp.pop %v9423
        %v9624 = vmul.f32 %v9423, %v9623
        %v9625 = vsub.f32 1.0, %v9624
        %v9626 = vmul.f32 %v9623, %v9625
        %v9627 = vadd.f32 %v9623, %v9626
        %vm9628 = vweird.f32 %v9423
        %vm9629 = vweird.f32 %v9623
        %vm9630 = vmor %vm9628, %vm9629
        %v9631 = vsel %vm9630, %v9623, %v9627
        %v9632 = vand.u32 2147483647, %v9423
        %vm9633 = vcmp.eq.f32.partialorder %v9632, 8.507059e+37
        %v9634 = vand.u32 %v9423, 2147483648
        %v9635 = vor.u32 1.1754944e-38, %v9634
        %v9636 = vsel %vm9633, %v9635, %v9631
        %v9637 = vrcp.pop %v9425
        %v9638 = vmul.f32 %v9425, %v9637
        %v9639 = vsub.f32 1.0, %v9638
        %v9640 = vmul.f32 %v9637, %v9639
        %v9641 = vadd.f32 %v9637, %v9640
        %vm9642 = vweird.f32 %v9425
        %vm9643 = vweird.f32 %v9637
        %vm9644 = vmor %vm9642, %vm9643
        %v9645 = vsel %vm9644, %v9637, %v9641
        %v9646 = vand.u32 2147483647, %v9425
        %vm9647 = vcmp.eq.f32.partialorder %v9646, 8.507059e+37
        %v9648 = vand.u32 %v9425, 2147483648
        %v9649 = vor.u32 1.1754944e-38, %v9648
        %v9650 = vsel %vm9647, %v9649, %v9645
        %v9651 = vmul.f32 %v9275, %v9440
        %v9652 = vmul.f32 %v9277, %v9454
        %v9653 = vmul.f32 %v9279, %v9468
        %v9654 = vmul.f32 %v9281, %v9482
        %v9655 = vmul.f32 %v9283, %v9496
        %v9656 = vmul.f32 %v9285, %v9510
        %v9657 = vmul.f32 %v9287, %v9524
        %v9658 = vmul.f32 %v9289, %v9538
        %v9659 = vmul.f32 %v9291, %v9552
        %v9660 = vmul.f32 %v9293, %v9566
        %v9661 = vmul.f32 %v9295, %v9580
        %v9662 = vmul.f32 %v9297, %v9594
        %v9663 = vmul.f32 %v9299, %v9608
        %v9664 = vmul.f32 %v9301, %v9622
        %v9665 = vmul.f32 %v9303, %v9636
        %v9666 = vmul.f32 %v9305, %v9650
        %v9667 = vpack.c.bf16 %v9652, %v9651
        %v9668 = vpack.c.bf16 %v9654, %v9653
        %v9669 = vpack.c.bf16 %v9656, %v9655
        %v9670 = vpack.c.bf16 %v9658, %v9657
        %v9671 = vpack.c.bf16 %v9660, %v9659
        %v9672 = vpack.c.bf16 %v9662, %v9661
        %v9673 = vpack.c.bf16 %v9664, %v9663
        %v9674 = vpack.c.bf16 %v9666, %v9665
        %v9675 = vld [vmem:[#allocation16] sm:$0xff]
        %v9676 = vld [vmem:[#allocation16 + $0x8] sm:$0xff]
        %v9677 = vld [vmem:[#allocation16 + $0x10] sm:$0xff]
        %v9678 = vld [vmem:[#allocation16 + $0x18] sm:$0xff]
        %v9679 = vld [vmem:[#allocation16 + $0x20] sm:$0xff]
        %v9680 = vld [vmem:[#allocation16 + $0x28] sm:$0xff]
        %v9681 = vld [vmem:[#allocation16 + $0x30] sm:$0xff]
        %v9682 = vld [vmem:[#allocation16 + $0x38] sm:$0xff]
        %v9683 = vld [vmem:[#allocation16 + $0x40] sm:$0xff]
        %v9684 = vld [vmem:[#allocation16 + $0x48] sm:$0xff]
        %v9685 = vld [vmem:[#allocation16 + $0x50] sm:$0xff]
        %v9686 = vld [vmem:[#allocation16 + $0x58] sm:$0xff]
        %v9687 = vld [vmem:[#allocation16 + $0x60] sm:$0xff]
        %v9688 = vld [vmem:[#allocation16 + $0x68] sm:$0xff]
        %v9689 = vld [vmem:[#allocation16 + $0x70] sm:$0xff]
        %v9690 = vld [vmem:[#allocation16 + $0x78] sm:$0xff]
        %v9691 = vld [vmem:[#allocation16 + $0x80] sm:$0xff]
        %v9692 = vld [vmem:[#allocation16 + $0x88] sm:$0xff]
        %v9693 = vld [vmem:[#allocation16 + $0x90] sm:$0xff]
        %v9694 = vld [vmem:[#allocation16 + $0x98] sm:$0xff]
        %v9695 = vld [vmem:[#allocation16 + $0xa0] sm:$0xff]
        %v9696 = vld [vmem:[#allocation16 + $0xa8] sm:$0xff]
        %v9697 = vld [vmem:[#allocation16 + $0xb0] sm:$0xff]
        %v9698 = vld [vmem:[#allocation16 + $0xb8] sm:$0xff]
        %v9699 = vld [vmem:[#allocation16 + $0xc0] sm:$0xff]
        %v9700 = vld [vmem:[#allocation16 + $0xc8] sm:$0xff]
        %v9701 = vld [vmem:[#allocation16 + $0xd0] sm:$0xff]
        %v9702 = vld [vmem:[#allocation16 + $0xd8] sm:$0xff]
        %v9703 = vld [vmem:[#allocation16 + $0xe0] sm:$0xff]
        %v9704 = vld [vmem:[#allocation16 + $0xe8] sm:$0xff]
        %v9705 = vld [vmem:[#allocation16 + $0xf0] sm:$0xff]
        %v9706 = vld [vmem:[#allocation16 + $0xf8] sm:$0xff]
        %v9707 = vld [vmem:[#allocation16 + $0x100] sm:$0xff]
        %v9708 = vld [vmem:[#allocation16 + $0x108] sm:$0xff]
        %v9709 = vld [vmem:[#allocation16 + $0x110] sm:$0xff]
        %v9710 = vld [vmem:[#allocation16 + $0x118] sm:$0xff]
        %v9711 = vld [vmem:[#allocation16 + $0x120] sm:$0xff]
        %v9712 = vld [vmem:[#allocation16 + $0x128] sm:$0xff]
        %v9713 = vld [vmem:[#allocation16 + $0x130] sm:$0xff]
        %v9714 = vld [vmem:[#allocation16 + $0x138] sm:$0xff]
        %v9715 = vld [vmem:[#allocation16 + $0x140] sm:$0xff]
        %v9716 = vld [vmem:[#allocation16 + $0x148] sm:$0xff]
        %v9717 = vld [vmem:[#allocation16 + $0x150] sm:$0xff]
        %v9718 = vld [vmem:[#allocation16 + $0x158] sm:$0xff]
        %v9719 = vld [vmem:[#allocation16 + $0x160] sm:$0xff]
        %v9720 = vld [vmem:[#allocation16 + $0x168] sm:$0xff]
        %v9721 = vld [vmem:[#allocation16 + $0x170] sm:$0xff]
        %v9722 = vld [vmem:[#allocation16 + $0x178] sm:$0xff]
        %v9723 = vld [vmem:[#allocation16 + $0x180] sm:$0xff]
        %v9724 = vld [vmem:[#allocation16 + $0x188] sm:$0xff]
        %v9725 = vld [vmem:[#allocation16 + $0x190] sm:$0xff]
        %v9726 = vld [vmem:[#allocation16 + $0x198] sm:$0xff]
        %v9727 = vld [vmem:[#allocation16 + $0x1a0] sm:$0xff]
        %v9728 = vld [vmem:[#allocation16 + $0x1a8] sm:$0xff]
        %v9729 = vld [vmem:[#allocation16 + $0x1b0] sm:$0xff]
        %v9730 = vld [vmem:[#allocation16 + $0x1b8] sm:$0xff]
        %v9731 = vld [vmem:[#allocation16 + $0x1c0] sm:$0xff]
        %v9732 = vld [vmem:[#allocation16 + $0x1c8] sm:$0xff]
        %v9733 = vld [vmem:[#allocation16 + $0x1d0] sm:$0xff]
        %v9734 = vld [vmem:[#allocation16 + $0x1d8] sm:$0xff]
        %v9735 = vld [vmem:[#allocation16 + $0x1e0] sm:$0xff]
        %v9736 = vld [vmem:[#allocation16 + $0x1e8] sm:$0xff]
        %v9737 = vld [vmem:[#allocation16 + $0x1f0] sm:$0xff]
        %v9738 = vld [vmem:[#allocation16 + $0x1f8] sm:$0xff]
        %v9803 = vunpack.c.l.b16 %v9675
        %v9804 = vunpack.c.h.b16 %v9675
        %v9805 = vunpack.c.l.b16 %v9676
        %v9806 = vunpack.c.h.b16 %v9676
        %v9807 = vunpack.c.l.b16 %v9677
        %v9808 = vunpack.c.h.b16 %v9677
        %v9809 = vunpack.c.l.b16 %v9678
        %v9810 = vunpack.c.h.b16 %v9678
        %v9811 = vunpack.c.l.b16 %v9679
        %v9812 = vunpack.c.h.b16 %v9679
        %v9813 = vunpack.c.l.b16 %v9680
        %v9814 = vunpack.c.h.b16 %v9680
        %v9815 = vunpack.c.l.b16 %v9681
        %v9816 = vunpack.c.h.b16 %v9681
        %v9817 = vunpack.c.l.b16 %v9682
        %v9818 = vunpack.c.h.b16 %v9682
        %v9819 = vunpack.c.l.b16 %v9683
        %v9820 = vunpack.c.h.b16 %v9683
        %v9821 = vunpack.c.l.b16 %v9684
        %v9822 = vunpack.c.h.b16 %v9684
        %v9823 = vunpack.c.l.b16 %v9685
        %v9824 = vunpack.c.h.b16 %v9685
        %v9825 = vunpack.c.l.b16 %v9686
        %v9826 = vunpack.c.h.b16 %v9686
        %v9827 = vunpack.c.l.b16 %v9687
        %v9828 = vunpack.c.h.b16 %v9687
        %v9829 = vunpack.c.l.b16 %v9688
        %v9830 = vunpack.c.h.b16 %v9688
        %v9831 = vunpack.c.l.b16 %v9689
        %v9832 = vunpack.c.h.b16 %v9689
        %v9833 = vunpack.c.l.b16 %v9690
        %v9834 = vunpack.c.h.b16 %v9690
        %v9835 = vunpack.c.l.b16 %v9691
        %v9836 = vunpack.c.h.b16 %v9691
        %v9837 = vunpack.c.l.b16 %v9692
        %v9838 = vunpack.c.h.b16 %v9692
        %v9839 = vunpack.c.l.b16 %v9693
        %v9840 = vunpack.c.h.b16 %v9693
        %v9841 = vunpack.c.l.b16 %v9694
        %v9842 = vunpack.c.h.b16 %v9694
        %v9843 = vunpack.c.l.b16 %v9695
        %v9844 = vunpack.c.h.b16 %v9695
        %v9845 = vunpack.c.l.b16 %v9696
        %v9846 = vunpack.c.h.b16 %v9696
        %v9847 = vunpack.c.l.b16 %v9697
        %v9848 = vunpack.c.h.b16 %v9697
        %v9849 = vunpack.c.l.b16 %v9698
        %v9850 = vunpack.c.h.b16 %v9698
        %v9851 = vunpack.c.l.b16 %v9699
        %v9852 = vunpack.c.h.b16 %v9699
        %v9853 = vunpack.c.l.b16 %v9700
        %v9854 = vunpack.c.h.b16 %v9700
        %v9855 = vunpack.c.l.b16 %v9701
        %v9856 = vunpack.c.h.b16 %v9701
        %v9857 = vunpack.c.l.b16 %v9702
        %v9858 = vunpack.c.h.b16 %v9702
        %v9859 = vunpack.c.l.b16 %v9703
        %v9860 = vunpack.c.h.b16 %v9703
        %v9861 = vunpack.c.l.b16 %v9704
        %v9862 = vunpack.c.h.b16 %v9704
        %v9863 = vunpack.c.l.b16 %v9705
        %v9864 = vunpack.c.h.b16 %v9705
        %v9865 = vunpack.c.l.b16 %v9706
        %v9866 = vunpack.c.h.b16 %v9706
        %v9867 = vunpack.c.l.b16 %v9707
        %v9868 = vunpack.c.h.b16 %v9707
        %v9869 = vunpack.c.l.b16 %v9708
        %v9870 = vunpack.c.h.b16 %v9708
        %v9871 = vunpack.c.l.b16 %v9709
        %v9872 = vunpack.c.h.b16 %v9709
        %v9873 = vunpack.c.l.b16 %v9710
        %v9874 = vunpack.c.h.b16 %v9710
        %v9875 = vunpack.c.l.b16 %v9711
        %v9876 = vunpack.c.h.b16 %v9711
        %v9877 = vunpack.c.l.b16 %v9712
        %v9878 = vunpack.c.h.b16 %v9712
        %v9879 = vunpack.c.l.b16 %v9713
        %v9880 = vunpack.c.h.b16 %v9713
        %v9881 = vunpack.c.l.b16 %v9714
        %v9882 = vunpack.c.h.b16 %v9714
        %v9883 = vunpack.c.l.b16 %v9715
        %v9884 = vunpack.c.h.b16 %v9715
        %v9885 = vunpack.c.l.b16 %v9716
        %v9886 = vunpack.c.h.b16 %v9716
        %v9887 = vunpack.c.l.b16 %v9717
        %v9888 = vunpack.c.h.b16 %v9717
        %v9889 = vunpack.c.l.b16 %v9718
        %v9890 = vunpack.c.h.b16 %v9718
        %v9891 = vunpack.c.l.b16 %v9719
        %v9892 = vunpack.c.h.b16 %v9719
        %v9893 = vunpack.c.l.b16 %v9720
        %v9894 = vunpack.c.h.b16 %v9720
        %v9895 = vunpack.c.l.b16 %v9721
        %v9896 = vunpack.c.h.b16 %v9721
        %v9897 = vunpack.c.l.b16 %v9722
        %v9898 = vunpack.c.h.b16 %v9722
        %v9899 = vunpack.c.l.b16 %v9723
        %v9900 = vunpack.c.h.b16 %v9723
        %v9901 = vunpack.c.l.b16 %v9724
        %v9902 = vunpack.c.h.b16 %v9724
        %v9903 = vunpack.c.l.b16 %v9725
        %v9904 = vunpack.c.h.b16 %v9725
        %v9905 = vunpack.c.l.b16 %v9726
        %v9906 = vunpack.c.h.b16 %v9726
        %v9907 = vunpack.c.l.b16 %v9727
        %v9908 = vunpack.c.h.b16 %v9727
        %v9909 = vunpack.c.l.b16 %v9728
        %v9910 = vunpack.c.h.b16 %v9728
        %v9911 = vunpack.c.l.b16 %v9729
        %v9912 = vunpack.c.h.b16 %v9729
        %v9913 = vunpack.c.l.b16 %v9730
        %v9914 = vunpack.c.h.b16 %v9730
        %v9915 = vunpack.c.l.b16 %v9731
        %v9916 = vunpack.c.h.b16 %v9731
        %v9917 = vunpack.c.l.b16 %v9732
        %v9918 = vunpack.c.h.b16 %v9732
        %v9919 = vunpack.c.l.b16 %v9733
        %v9920 = vunpack.c.h.b16 %v9733
        %v9921 = vunpack.c.l.b16 %v9734
        %v9922 = vunpack.c.h.b16 %v9734
        %v9923 = vunpack.c.l.b16 %v9735
        %v9924 = vunpack.c.h.b16 %v9735
        %v9925 = vunpack.c.l.b16 %v9736
        %v9926 = vunpack.c.h.b16 %v9736
        %v9927 = vunpack.c.l.b16 %v9737
        %v9928 = vunpack.c.h.b16 %v9737
        %v9929 = vunpack.c.l.b16 %v9738
        %v9930 = vunpack.c.h.b16 %v9738
        %v9931 = vpack.c.b16 %v9811, %v9803
        %v9932 = vpack.c.b16 %v9812, %v9804
        %v9933 = vpack.c.b16 %v9813, %v9805
        %v9934 = vpack.c.b16 %v9814, %v9806
        %v9935 = vpack.c.b16 %v9815, %v9807
        %v9936 = vpack.c.b16 %v9816, %v9808
        %v9937 = vpack.c.b16 %v9817, %v9809
        %v9938 = vpack.c.b16 %v9818, %v9810
        %v9939 = vpack.c.b16 %v9827, %v9819
        %v9940 = vpack.c.b16 %v9828, %v9820
        %v9941 = vpack.c.b16 %v9829, %v9821
        %v9942 = vpack.c.b16 %v9830, %v9822
        %v9943 = vpack.c.b16 %v9831, %v9823
        %v9944 = vpack.c.b16 %v9832, %v9824
        %v9945 = vpack.c.b16 %v9833, %v9825
        %v9946 = vpack.c.b16 %v9834, %v9826
        %v9947 = vpack.c.b16 %v9843, %v9835
        %v9948 = vpack.c.b16 %v9844, %v9836
        %v9949 = vpack.c.b16 %v9845, %v9837
        %v9950 = vpack.c.b16 %v9846, %v9838
        %v9951 = vpack.c.b16 %v9847, %v9839
        %v9952 = vpack.c.b16 %v9848, %v9840
        %v9953 = vpack.c.b16 %v9849, %v9841
        %v9954 = vpack.c.b16 %v9850, %v9842
        %v9955 = vpack.c.b16 %v9859, %v9851
        %v9956 = vpack.c.b16 %v9860, %v9852
        %v9957 = vpack.c.b16 %v9861, %v9853
        %v9958 = vpack.c.b16 %v9862, %v9854
        %v9959 = vpack.c.b16 %v9863, %v9855
        %v9960 = vpack.c.b16 %v9864, %v9856
        %v9961 = vpack.c.b16 %v9865, %v9857
        %v9962 = vpack.c.b16 %v9866, %v9858
        %v9963 = vpack.c.b16 %v9875, %v9867
        %v9964 = vpack.c.b16 %v9876, %v9868
        %v9965 = vpack.c.b16 %v9877, %v9869
        %v9966 = vpack.c.b16 %v9878, %v9870
        %v9967 = vpack.c.b16 %v9879, %v9871
        %v9968 = vpack.c.b16 %v9880, %v9872
        %v9969 = vpack.c.b16 %v9881, %v9873
        %v9970 = vpack.c.b16 %v9882, %v9874
        %v9971 = vpack.c.b16 %v9891, %v9883
        %v9972 = vpack.c.b16 %v9892, %v9884
        %v9973 = vpack.c.b16 %v9893, %v9885
        %v9974 = vpack.c.b16 %v9894, %v9886
        %v9975 = vpack.c.b16 %v9895, %v9887
        %v9976 = vpack.c.b16 %v9896, %v9888
        %v9977 = vpack.c.b16 %v9897, %v9889
        %v9978 = vpack.c.b16 %v9898, %v9890
        %v9979 = vpack.c.b16 %v9907, %v9899
        %v9980 = vpack.c.b16 %v9908, %v9900
        %v9981 = vpack.c.b16 %v9909, %v9901
        %v9982 = vpack.c.b16 %v9910, %v9902
        %v9983 = vpack.c.b16 %v9911, %v9903
        %v9984 = vpack.c.b16 %v9912, %v9904
        %v9985 = vpack.c.b16 %v9913, %v9905
        %v9986 = vpack.c.b16 %v9914, %v9906
        %v9987 = vpack.c.b16 %v9923, %v9915
        %v9988 = vpack.c.b16 %v9924, %v9916
        %v9989 = vpack.c.b16 %v9925, %v9917
        %v9990 = vpack.c.b16 %v9926, %v9918
        %v9991 = vpack.c.b16 %v9927, %v9919
        %v9992 = vpack.c.b16 %v9928, %v9920
        %v9993 = vpack.c.b16 %v9929, %v9921
        %v9994 = vpack.c.b16 %v9930, %v9922
        %10059 = vmatpush.bf16.msra.mxu0 %v9987
        %10060 = vmatpush.bf16.msra.mxu0 %v9979
        %10061 = vmatpush.bf16.msra.mxu0 %v9971
        %10062 = vmatpush.bf16.msra.mxu0 %v9963
        %10063 = vmatpush.bf16.msra.mxu0 %v9955
        %10064 = vmatpush.bf16.msra.mxu0 %v9947
        %10065 = vmatpush.bf16.msra.mxu0 %v9939
        %10066 = vmatpush.bf16.msra.mxu0 %v9931
        %10067 = vmatmul.bf16.gmra.mxu0 %v9667
        %v10068 = vpop.f32.mrf.mxu0
        %v10069 = vadd.f32 0.0, %v10068
        %v10070 = vpop.f32.mrf.mxu0
        %v10071 = vadd.f32 0.0, %v10070
        %10072 = vmatmul.bf16.gmra.mxu0 %v9668
        %v10073 = vpop.f32.mrf.mxu0
        %v10074 = vadd.f32 0.0, %v10073
        %v10075 = vpop.f32.mrf.mxu0
        %v10076 = vadd.f32 0.0, %v10075
        %10077 = vmatmul.bf16.gmra.mxu0 %v9669
        %v10078 = vpop.f32.mrf.mxu0
        %v10079 = vadd.f32 0.0, %v10078
        %v10080 = vpop.f32.mrf.mxu0
        %v10081 = vadd.f32 0.0, %v10080
        %10082 = vmatmul.bf16.gmra.mxu0 %v9670
        %v10083 = vpop.f32.mrf.mxu0
        %v10084 = vadd.f32 0.0, %v10083
        %v10085 = vpop.f32.mrf.mxu0
        %v10086 = vadd.f32 0.0, %v10085
        %10087 = vmatmul.bf16.gmra.mxu0 %v9671
        %v10088 = vpop.f32.mrf.mxu0
        %v10089 = vadd.f32 0.0, %v10088
        %v10090 = vpop.f32.mrf.mxu0
        %v10091 = vadd.f32 0.0, %v10090
        %10092 = vmatmul.bf16.gmra.mxu0 %v9672
        %v10093 = vpop.f32.mrf.mxu0
        %v10094 = vadd.f32 0.0, %v10093
        %v10095 = vpop.f32.mrf.mxu0
        %v10096 = vadd.f32 0.0, %v10095
        %10097 = vmatmul.bf16.gmra.mxu0 %v9673
        %v10098 = vpop.f32.mrf.mxu0
        %v10099 = vadd.f32 0.0, %v10098
        %v10100 = vpop.f32.mrf.mxu0
        %v10101 = vadd.f32 0.0, %v10100
        %10102 = vmatmul.bf16.gmra.mxu0 %v9674
        %v10103 = vpop.f32.mrf.mxu0
        %v10104 = vadd.f32 0.0, %v10103
        %v10105 = vpop.f32.mrf.mxu0
        %v10106 = vadd.f32 0.0, %v10105
        %10107 = vdwg.mxu0
        %10108 = vmatpush.bf16.msra.mxu0 %v9988
        %10109 = vmatpush.bf16.msra.mxu0 %v9980
        %10110 = vmatpush.bf16.msra.mxu0 %v9972
        %10111 = vmatpush.bf16.msra.mxu0 %v9964
        %10112 = vmatpush.bf16.msra.mxu0 %v9956
        %10113 = vmatpush.bf16.msra.mxu0 %v9948
        %10114 = vmatpush.bf16.msra.mxu0 %v9940
        %10115 = vmatpush.bf16.msra.mxu0 %v9932
        %10116 = vmatmul.bf16.gmra.mxu0 %v9667
        %v10117 = vpop.f32.mrf.mxu0
        %v10118 = vadd.f32 0.0, %v10117
        %v10119 = vpop.f32.mrf.mxu0
        %v10120 = vadd.f32 0.0, %v10119
        %10121 = vmatmul.bf16.gmra.mxu0 %v9668
        %v10122 = vpop.f32.mrf.mxu0
        %v10123 = vadd.f32 0.0, %v10122
        %v10124 = vpop.f32.mrf.mxu0
        %v10125 = vadd.f32 0.0, %v10124
        %10126 = vmatmul.bf16.gmra.mxu0 %v9669
        %v10127 = vpop.f32.mrf.mxu0
        %v10128 = vadd.f32 0.0, %v10127
        %v10129 = vpop.f32.mrf.mxu0
        %v10130 = vadd.f32 0.0, %v10129
        %10131 = vmatmul.bf16.gmra.mxu0 %v9670
        %v10132 = vpop.f32.mrf.mxu0
        %v10133 = vadd.f32 0.0, %v10132
        %v10134 = vpop.f32.mrf.mxu0
        %v10135 = vadd.f32 0.0, %v10134
        %10136 = vmatmul.bf16.gmra.mxu0 %v9671
        %v10137 = vpop.f32.mrf.mxu0
        %v10138 = vadd.f32 0.0, %v10137
        %v10139 = vpop.f32.mrf.mxu0
        %v10140 = vadd.f32 0.0, %v10139
        %10141 = vmatmul.bf16.gmra.mxu0 %v9672
        %v10142 = vpop.f32.mrf.mxu0
        %v10143 = vadd.f32 0.0, %v10142
        %v10144 = vpop.f32.mrf.mxu0
        %v10145 = vadd.f32 0.0, %v10144
        %10146 = vmatmul.bf16.gmra.mxu0 %v9673
        %v10147 = vpop.f32.mrf.mxu0
        %v10148 = vadd.f32 0.0, %v10147
        %v10149 = vpop.f32.mrf.mxu0
        %v10150 = vadd.f32 0.0, %v10149
        %10151 = vmatmul.bf16.gmra.mxu0 %v9674
        %v10152 = vpop.f32.mrf.mxu0
        %v10153 = vadd.f32 0.0, %v10152
        %v10154 = vpop.f32.mrf.mxu0
        %v10155 = vadd.f32 0.0, %v10154
        %10156 = vdwg.mxu0
        %10157 = vmatpush.bf16.msra.mxu0 %v9989
        %10158 = vmatpush.bf16.msra.mxu0 %v9981
        %10159 = vmatpush.bf16.msra.mxu0 %v9973
        %10160 = vmatpush.bf16.msra.mxu0 %v9965
        %10161 = vmatpush.bf16.msra.mxu0 %v9957
        %10162 = vmatpush.bf16.msra.mxu0 %v9949
        %10163 = vmatpush.bf16.msra.mxu0 %v9941
        %10164 = vmatpush.bf16.msra.mxu0 %v9933
        %10165 = vmatmul.bf16.gmra.mxu0 %v9667
        %v10166 = vpop.f32.mrf.mxu0
        %v10167 = vadd.f32 0.0, %v10166
        %v10168 = vpop.f32.mrf.mxu0
        %v10169 = vadd.f32 0.0, %v10168
        %10170 = vmatmul.bf16.gmra.mxu0 %v9668
        %v10171 = vpop.f32.mrf.mxu0
        %v10172 = vadd.f32 0.0, %v10171
        %v10173 = vpop.f32.mrf.mxu0
        %v10174 = vadd.f32 0.0, %v10173
        %10175 = vmatmul.bf16.gmra.mxu0 %v9669
        %v10176 = vpop.f32.mrf.mxu0
        %v10177 = vadd.f32 0.0, %v10176
        %v10178 = vpop.f32.mrf.mxu0
        %v10179 = vadd.f32 0.0, %v10178
        %10180 = vmatmul.bf16.gmra.mxu0 %v9670
        %v10181 = vpop.f32.mrf.mxu0
        %v10182 = vadd.f32 0.0, %v10181
        %v10183 = vpop.f32.mrf.mxu0
        %v10184 = vadd.f32 0.0, %v10183
        %10185 = vmatmul.bf16.gmra.mxu0 %v9671
        %v10186 = vpop.f32.mrf.mxu0
        %v10187 = vadd.f32 0.0, %v10186
        %v10188 = vpop.f32.mrf.mxu0
        %v10189 = vadd.f32 0.0, %v10188
        %10190 = vmatmul.bf16.gmra.mxu0 %v9672
        %v10191 = vpop.f32.mrf.mxu0
        %v10192 = vadd.f32 0.0, %v10191
        %v10193 = vpop.f32.mrf.mxu0
        %v10194 = vadd.f32 0.0, %v10193
        %10195 = vmatmul.bf16.gmra.mxu0 %v9673
        %v10196 = vpop.f32.mrf.mxu0
        %v10197 = vadd.f32 0.0, %v10196
        %v10198 = vpop.f32.mrf.mxu0
        %v10199 = vadd.f32 0.0, %v10198
        %10200 = vmatmul.bf16.gmra.mxu0 %v9674
        %v10201 = vpop.f32.mrf.mxu0
        %v10202 = vadd.f32 0.0, %v10201
        %v10203 = vpop.f32.mrf.mxu0
        %v10204 = vadd.f32 0.0, %v10203
        %10205 = vdwg.mxu0
        %10206 = vmatpush.bf16.msra.mxu0 %v9990
        %10207 = vmatpush.bf16.msra.mxu0 %v9982
        %10208 = vmatpush.bf16.msra.mxu0 %v9974
        %10209 = vmatpush.bf16.msra.mxu0 %v9966
        %10210 = vmatpush.bf16.msra.mxu0 %v9958
        %10211 = vmatpush.bf16.msra.mxu0 %v9950
        %10212 = vmatpush.bf16.msra.mxu0 %v9942
        %10213 = vmatpush.bf16.msra.mxu0 %v9934
        %10214 = vmatmul.bf16.gmra.mxu0 %v9667
        %v10215 = vpop.f32.mrf.mxu0
        %v10216 = vadd.f32 0.0, %v10215
        %v10217 = vpop.f32.mrf.mxu0
        %v10218 = vadd.f32 0.0, %v10217
        %10219 = vmatmul.bf16.gmra.mxu0 %v9668
        %v10220 = vpop.f32.mrf.mxu0
        %v10221 = vadd.f32 0.0, %v10220
        %v10222 = vpop.f32.mrf.mxu0
        %v10223 = vadd.f32 0.0, %v10222
        %10224 = vmatmul.bf16.gmra.mxu0 %v9669
        %v10225 = vpop.f32.mrf.mxu0
        %v10226 = vadd.f32 0.0, %v10225
        %v10227 = vpop.f32.mrf.mxu0
        %v10228 = vadd.f32 0.0, %v10227
        %10229 = vmatmul.bf16.gmra.mxu0 %v9670
        %v10230 = vpop.f32.mrf.mxu0
        %v10231 = vadd.f32 0.0, %v10230
        %v10232 = vpop.f32.mrf.mxu0
        %v10233 = vadd.f32 0.0, %v10232
        %10234 = vmatmul.bf16.gmra.mxu0 %v9671
        %v10235 = vpop.f32.mrf.mxu0
        %v10236 = vadd.f32 0.0, %v10235
        %v10237 = vpop.f32.mrf.mxu0
        %v10238 = vadd.f32 0.0, %v10237
        %10239 = vmatmul.bf16.gmra.mxu0 %v9672
        %v10240 = vpop.f32.mrf.mxu0
        %v10241 = vadd.f32 0.0, %v10240
        %v10242 = vpop.f32.mrf.mxu0
        %v10243 = vadd.f32 0.0, %v10242
        %10244 = vmatmul.bf16.gmra.mxu0 %v9673
        %v10245 = vpop.f32.mrf.mxu0
        %v10246 = vadd.f32 0.0, %v10245
        %v10247 = vpop.f32.mrf.mxu0
        %v10248 = vadd.f32 0.0, %v10247
        %10249 = vmatmul.bf16.gmra.mxu0 %v9674
        %v10250 = vpop.f32.mrf.mxu0
        %v10251 = vadd.f32 0.0, %v10250
        %v10252 = vpop.f32.mrf.mxu0
        %v10253 = vadd.f32 0.0, %v10252
        %10254 = vdwg.mxu0
        %10255 = vmatpush.bf16.msra.mxu0 %v9991
        %10256 = vmatpush.bf16.msra.mxu0 %v9983
        %10257 = vmatpush.bf16.msra.mxu0 %v9975
        %10258 = vmatpush.bf16.msra.mxu0 %v9967
        %10259 = vmatpush.bf16.msra.mxu0 %v9959
        %10260 = vmatpush.bf16.msra.mxu0 %v9951
        %10261 = vmatpush.bf16.msra.mxu0 %v9943
        %10262 = vmatpush.bf16.msra.mxu0 %v9935
        %10263 = vmatmul.bf16.gmra.mxu0 %v9667
        %v10264 = vpop.f32.mrf.mxu0
        %v10265 = vadd.f32 0.0, %v10264
        %v10266 = vpop.f32.mrf.mxu0
        %v10267 = vadd.f32 0.0, %v10266
        %10268 = vmatmul.bf16.gmra.mxu0 %v9668
        %v10269 = vpop.f32.mrf.mxu0
        %v10270 = vadd.f32 0.0, %v10269
        %v10271 = vpop.f32.mrf.mxu0
        %v10272 = vadd.f32 0.0, %v10271
        %10273 = vmatmul.bf16.gmra.mxu0 %v9669
        %v10274 = vpop.f32.mrf.mxu0
        %v10275 = vadd.f32 0.0, %v10274
        %v10276 = vpop.f32.mrf.mxu0
        %v10277 = vadd.f32 0.0, %v10276
        %10278 = vmatmul.bf16.gmra.mxu0 %v9670
        %v10279 = vpop.f32.mrf.mxu0
        %v10280 = vadd.f32 0.0, %v10279
        %v10281 = vpop.f32.mrf.mxu0
        %v10282 = vadd.f32 0.0, %v10281
        %10283 = vmatmul.bf16.gmra.mxu0 %v9671
        %v10284 = vpop.f32.mrf.mxu0
        %v10285 = vadd.f32 0.0, %v10284
        %v10286 = vpop.f32.mrf.mxu0
        %v10287 = vadd.f32 0.0, %v10286
        %10288 = vmatmul.bf16.gmra.mxu0 %v9672
        %v10289 = vpop.f32.mrf.mxu0
        %v10290 = vadd.f32 0.0, %v10289
        %v10291 = vpop.f32.mrf.mxu0
        %v10292 = vadd.f32 0.0, %v10291
        %10293 = vmatmul.bf16.gmra.mxu0 %v9673
        %v10294 = vpop.f32.mrf.mxu0
        %v10295 = vadd.f32 0.0, %v10294
        %v10296 = vpop.f32.mrf.mxu0
        %v10297 = vadd.f32 0.0, %v10296
        %10298 = vmatmul.bf16.gmra.mxu0 %v9674
        %v10299 = vpop.f32.mrf.mxu0
        %v10300 = vadd.f32 0.0, %v10299
        %v10301 = vpop.f32.mrf.mxu0
        %v10302 = vadd.f32 0.0, %v10301
        %10303 = vdwg.mxu0
        %10304 = vmatpush.bf16.msra.mxu0 %v9992
        %10305 = vmatpush.bf16.msra.mxu0 %v9984
        %10306 = vmatpush.bf16.msra.mxu0 %v9976
        %10307 = vmatpush.bf16.msra.mxu0 %v9968
        %10308 = vmatpush.bf16.msra.mxu0 %v9960
        %10309 = vmatpush.bf16.msra.mxu0 %v9952
        %10310 = vmatpush.bf16.msra.mxu0 %v9944
        %10311 = vmatpush.bf16.msra.mxu0 %v9936
        %10312 = vmatmul.bf16.gmra.mxu0 %v9667
        %v10313 = vpop.f32.mrf.mxu0
        %v10314 = vadd.f32 0.0, %v10313
        %v10315 = vpop.f32.mrf.mxu0
        %v10316 = vadd.f32 0.0, %v10315
        %10317 = vmatmul.bf16.gmra.mxu0 %v9668
        %v10318 = vpop.f32.mrf.mxu0
        %v10319 = vadd.f32 0.0, %v10318
        %v10320 = vpop.f32.mrf.mxu0
        %v10321 = vadd.f32 0.0, %v10320
        %10322 = vmatmul.bf16.gmra.mxu0 %v9669
        %v10323 = vpop.f32.mrf.mxu0
        %v10324 = vadd.f32 0.0, %v10323
        %v10325 = vpop.f32.mrf.mxu0
        %v10326 = vadd.f32 0.0, %v10325
        %10327 = vmatmul.bf16.gmra.mxu0 %v9670
        %v10328 = vpop.f32.mrf.mxu0
        %v10329 = vadd.f32 0.0, %v10328
        %v10330 = vpop.f32.mrf.mxu0
        %v10331 = vadd.f32 0.0, %v10330
        %10332 = vmatmul.bf16.gmra.mxu0 %v9671
        %v10333 = vpop.f32.mrf.mxu0
        %v10334 = vadd.f32 0.0, %v10333
        %v10335 = vpop.f32.mrf.mxu0
        %v10336 = vadd.f32 0.0, %v10335
        %10337 = vmatmul.bf16.gmra.mxu0 %v9672
        %v10338 = vpop.f32.mrf.mxu0
        %v10339 = vadd.f32 0.0, %v10338
        %v10340 = vpop.f32.mrf.mxu0
        %v10341 = vadd.f32 0.0, %v10340
        %10342 = vmatmul.bf16.gmra.mxu0 %v9673
        %v10343 = vpop.f32.mrf.mxu0
        %v10344 = vadd.f32 0.0, %v10343
        %v10345 = vpop.f32.mrf.mxu0
        %v10346 = vadd.f32 0.0, %v10345
        %10347 = vmatmul.bf16.gmra.mxu0 %v9674
        %v10348 = vpop.f32.mrf.mxu0
        %v10349 = vadd.f32 0.0, %v10348
        %v10350 = vpop.f32.mrf.mxu0
        %v10351 = vadd.f32 0.0, %v10350
        %10352 = vdwg.mxu0
        %10353 = vmatpush.bf16.msra.mxu0 %v9993
        %10354 = vmatpush.bf16.msra.mxu0 %v9985
        %10355 = vmatpush.bf16.msra.mxu0 %v9977
        %10356 = vmatpush.bf16.msra.mxu0 %v9969
        %10357 = vmatpush.bf16.msra.mxu0 %v9961
        %10358 = vmatpush.bf16.msra.mxu0 %v9953
        %10359 = vmatpush.bf16.msra.mxu0 %v9945
        %10360 = vmatpush.bf16.msra.mxu0 %v9937
        %10361 = vmatmul.bf16.gmra.mxu0 %v9667
        %v10362 = vpop.f32.mrf.mxu0
        %v10363 = vadd.f32 0.0, %v10362
        %v10364 = vpop.f32.mrf.mxu0
        %v10365 = vadd.f32 0.0, %v10364
        %10366 = vmatmul.bf16.gmra.mxu0 %v9668
        %v10367 = vpop.f32.mrf.mxu0
        %v10368 = vadd.f32 0.0, %v10367
        %v10369 = vpop.f32.mrf.mxu0
        %v10370 = vadd.f32 0.0, %v10369
        %10371 = vmatmul.bf16.gmra.mxu0 %v9669
        %v10372 = vpop.f32.mrf.mxu0
        %v10373 = vadd.f32 0.0, %v10372
        %v10374 = vpop.f32.mrf.mxu0
        %v10375 = vadd.f32 0.0, %v10374
        %10376 = vmatmul.bf16.gmra.mxu0 %v9670
        %v10377 = vpop.f32.mrf.mxu0
        %v10378 = vadd.f32 0.0, %v10377
        %v10379 = vpop.f32.mrf.mxu0
        %v10380 = vadd.f32 0.0, %v10379
        %10381 = vmatmul.bf16.gmra.mxu0 %v9671
        %v10382 = vpop.f32.mrf.mxu0
        %v10383 = vadd.f32 0.0, %v10382
        %v10384 = vpop.f32.mrf.mxu0
        %v10385 = vadd.f32 0.0, %v10384
        %10386 = vmatmul.bf16.gmra.mxu0 %v9672
        %v10387 = vpop.f32.mrf.mxu0
        %v10388 = vadd.f32 0.0, %v10387
        %v10389 = vpop.f32.mrf.mxu0
        %v10390 = vadd.f32 0.0, %v10389
        %10391 = vmatmul.bf16.gmra.mxu0 %v9673
        %v10392 = vpop.f32.mrf.mxu0
        %v10393 = vadd.f32 0.0, %v10392
        %v10394 = vpop.f32.mrf.mxu0
        %v10395 = vadd.f32 0.0, %v10394
        %10396 = vmatmul.bf16.gmra.mxu0 %v9674
        %v10397 = vpop.f32.mrf.mxu0
        %v10398 = vadd.f32 0.0, %v10397
        %v10399 = vpop.f32.mrf.mxu0
        %v10400 = vadd.f32 0.0, %v10399
        %10401 = vdwg.mxu0
        %10402 = vmatpush.bf16.msra.mxu0 %v9994
        %10403 = vmatpush.bf16.msra.mxu0 %v9986
        %10404 = vmatpush.bf16.msra.mxu0 %v9978
        %10405 = vmatpush.bf16.msra.mxu0 %v9970
        %10406 = vmatpush.bf16.msra.mxu0 %v9962
        %10407 = vmatpush.bf16.msra.mxu0 %v9954
        %10408 = vmatpush.bf16.msra.mxu0 %v9946
        %10409 = vmatpush.bf16.msra.mxu0 %v9938
        %10410 = vmatmul.bf16.gmra.mxu0 %v9667
        %v10411 = vpop.f32.mrf.mxu0
        %v10412 = vadd.f32 0.0, %v10411
        %v10413 = vpop.f32.mrf.mxu0
        %v10414 = vadd.f32 0.0, %v10413
        %10415 = vmatmul.bf16.gmra.mxu0 %v9668
        %v10416 = vpop.f32.mrf.mxu0
        %v10417 = vadd.f32 0.0, %v10416
        %v10418 = vpop.f32.mrf.mxu0
        %v10419 = vadd.f32 0.0, %v10418
        %10420 = vmatmul.bf16.gmra.mxu0 %v9669
        %v10421 = vpop.f32.mrf.mxu0
        %v10422 = vadd.f32 0.0, %v10421
        %v10423 = vpop.f32.mrf.mxu0
        %v10424 = vadd.f32 0.0, %v10423
        %10425 = vmatmul.bf16.gmra.mxu0 %v9670
        %v10426 = vpop.f32.mrf.mxu0
        %v10427 = vadd.f32 0.0, %v10426
        %v10428 = vpop.f32.mrf.mxu0
        %v10429 = vadd.f32 0.0, %v10428
        %10430 = vmatmul.bf16.gmra.mxu0 %v9671
        %v10431 = vpop.f32.mrf.mxu0
        %v10432 = vadd.f32 0.0, %v10431
        %v10433 = vpop.f32.mrf.mxu0
        %v10434 = vadd.f32 0.0, %v10433
        %10435 = vmatmul.bf16.gmra.mxu0 %v9672
        %v10436 = vpop.f32.mrf.mxu0
        %v10437 = vadd.f32 0.0, %v10436
        %v10438 = vpop.f32.mrf.mxu0
        %v10439 = vadd.f32 0.0, %v10438
        %10440 = vmatmul.bf16.gmra.mxu0 %v9673
        %v10441 = vpop.f32.mrf.mxu0
        %v10442 = vadd.f32 0.0, %v10441
        %v10443 = vpop.f32.mrf.mxu0
        %v10444 = vadd.f32 0.0, %v10443
        %10445 = vmatmul.bf16.gmra.mxu0 %v9674
        %v10446 = vpop.f32.mrf.mxu0
        %v10447 = vadd.f32 0.0, %v10446
        %v10448 = vpop.f32.mrf.mxu0
        %v10449 = vadd.f32 0.0, %v10448
        %10450 = vdwg.mxu0
        %v10451 = vmul.f32 %v10069, %v6719
        %v10452 = vmul.f32 %v10118, %v6915
        %v10453 = vmul.f32 %v10167, %v7111
        %v10454 = vmul.f32 %v10216, %v7307
        %v10455 = vmul.f32 %v10265, %v7503
        %v10456 = vmul.f32 %v10314, %v7699
        %v10457 = vmul.f32 %v10363, %v7895
        %v10458 = vmul.f32 %v10412, %v8091
        %v10459 = vmul.f32 %v10071, %v6721
        %v10460 = vmul.f32 %v10120, %v6917
        %v10461 = vmul.f32 %v10169, %v7113
        %v10462 = vmul.f32 %v10218, %v7309
        %v10463 = vmul.f32 %v10267, %v7505
        %v10464 = vmul.f32 %v10316, %v7701
        %v10465 = vmul.f32 %v10365, %v7897
        %v10466 = vmul.f32 %v10414, %v8093
        %v10467 = vmul.f32 %v10074, %v6724
        %v10468 = vmul.f32 %v10123, %v6920
        %v10469 = vmul.f32 %v10172, %v7116
        %v10470 = vmul.f32 %v10221, %v7312
        %v10471 = vmul.f32 %v10270, %v7508
        %v10472 = vmul.f32 %v10319, %v7704
        %v10473 = vmul.f32 %v10368, %v7900
        %v10474 = vmul.f32 %v10417, %v8096
        %v10475 = vmul.f32 %v10076, %v6726
        %v10476 = vmul.f32 %v10125, %v6922
        %v10477 = vmul.f32 %v10174, %v7118
        %v10478 = vmul.f32 %v10223, %v7314
        %v10479 = vmul.f32 %v10272, %v7510
        %v10480 = vmul.f32 %v10321, %v7706
        %v10481 = vmul.f32 %v10370, %v7902
        %v10482 = vmul.f32 %v10419, %v8098
        %v10483 = vmul.f32 %v10079, %v6729
        %v10484 = vmul.f32 %v10128, %v6925
        %v10485 = vmul.f32 %v10177, %v7121
        %v10486 = vmul.f32 %v10226, %v7317
        %v10487 = vmul.f32 %v10275, %v7513
        %v10488 = vmul.f32 %v10324, %v7709
        %v10489 = vmul.f32 %v10373, %v7905
        %v10490 = vmul.f32 %v10422, %v8101
        %v10491 = vmul.f32 %v10081, %v6731
        %v10492 = vmul.f32 %v10130, %v6927
        %v10493 = vmul.f32 %v10179, %v7123
        %v10494 = vmul.f32 %v10228, %v7319
        %v10495 = vmul.f32 %v10277, %v7515
        %v10496 = vmul.f32 %v10326, %v7711
        %v10497 = vmul.f32 %v10375, %v7907
        %v10498 = vmul.f32 %v10424, %v8103
        %v10499 = vmul.f32 %v10084, %v6734
        %v10500 = vmul.f32 %v10133, %v6930
        %v10501 = vmul.f32 %v10182, %v7126
        %v10502 = vmul.f32 %v10231, %v7322
        %v10503 = vmul.f32 %v10280, %v7518
        %v10504 = vmul.f32 %v10329, %v7714
        %v10505 = vmul.f32 %v10378, %v7910
        %v10506 = vmul.f32 %v10427, %v8106
        %v10507 = vmul.f32 %v10086, %v6736
        %v10508 = vmul.f32 %v10135, %v6932
        %v10509 = vmul.f32 %v10184, %v7128
        %v10510 = vmul.f32 %v10233, %v7324
        %v10511 = vmul.f32 %v10282, %v7520
        %v10512 = vmul.f32 %v10331, %v7716
        %v10513 = vmul.f32 %v10380, %v7912
        %v10514 = vmul.f32 %v10429, %v8108
        %v10515 = vmul.f32 %v10089, %v6739
        %v10516 = vmul.f32 %v10138, %v6935
        %v10517 = vmul.f32 %v10187, %v7131
        %v10518 = vmul.f32 %v10236, %v7327
        %v10519 = vmul.f32 %v10285, %v7523
        %v10520 = vmul.f32 %v10334, %v7719
        %v10521 = vmul.f32 %v10383, %v7915
        %v10522 = vmul.f32 %v10432, %v8111
        %v10523 = vmul.f32 %v10091, %v6741
        %v10524 = vmul.f32 %v10140, %v6937
        %v10525 = vmul.f32 %v10189, %v7133
        %v10526 = vmul.f32 %v10238, %v7329
        %v10527 = vmul.f32 %v10287, %v7525
        %v10528 = vmul.f32 %v10336, %v7721
        %v10529 = vmul.f32 %v10385, %v7917
        %v10530 = vmul.f32 %v10434, %v8113
        %v10531 = vmul.f32 %v10094, %v6744
        %v10532 = vmul.f32 %v10143, %v6940
        %v10533 = vmul.f32 %v10192, %v7136
        %v10534 = vmul.f32 %v10241, %v7332
        %v10535 = vmul.f32 %v10290, %v7528
        %v10536 = vmul.f32 %v10339, %v7724
        %v10537 = vmul.f32 %v10388, %v7920
        %v10538 = vmul.f32 %v10437, %v8116
        %v10539 = vmul.f32 %v10096, %v6746
        %v10540 = vmul.f32 %v10145, %v6942
        %v10541 = vmul.f32 %v10194, %v7138
        %v10542 = vmul.f32 %v10243, %v7334
        %v10543 = vmul.f32 %v10292, %v7530
        %v10544 = vmul.f32 %v10341, %v7726
        %v10545 = vmul.f32 %v10390, %v7922
        %v10546 = vmul.f32 %v10439, %v8118
        %v10547 = vmul.f32 %v10099, %v6749
        %v10548 = vmul.f32 %v10148, %v6945
        %v10549 = vmul.f32 %v10197, %v7141
        %v10550 = vmul.f32 %v10246, %v7337
        %v10551 = vmul.f32 %v10295, %v7533
        %v10552 = vmul.f32 %v10344, %v7729
        %v10553 = vmul.f32 %v10393, %v7925
        %v10554 = vmul.f32 %v10442, %v8121
        %v10555 = vmul.f32 %v10101, %v6751
        %v10556 = vmul.f32 %v10150, %v6947
        %v10557 = vmul.f32 %v10199, %v7143
        %v10558 = vmul.f32 %v10248, %v7339
        %v10559 = vmul.f32 %v10297, %v7535
        %v10560 = vmul.f32 %v10346, %v7731
        %v10561 = vmul.f32 %v10395, %v7927
        %v10562 = vmul.f32 %v10444, %v8123
        %v10563 = vmul.f32 %v10104, %v6754
        %v10564 = vmul.f32 %v10153, %v6950
        %v10565 = vmul.f32 %v10202, %v7146
        %v10566 = vmul.f32 %v10251, %v7342
        %v10567 = vmul.f32 %v10300, %v7538
        %v10568 = vmul.f32 %v10349, %v7734
        %v10569 = vmul.f32 %v10398, %v7930
        %v10570 = vmul.f32 %v10447, %v8126
        %v10571 = vmul.f32 %v10106, %v6756
        %v10572 = vmul.f32 %v10155, %v6952
        %v10573 = vmul.f32 %v10204, %v7148
        %v10574 = vmul.f32 %v10253, %v7344
        %v10575 = vmul.f32 %v10302, %v7540
        %v10576 = vmul.f32 %v10351, %v7736
        %v10577 = vmul.f32 %v10400, %v7932
        %v10578 = vmul.f32 %v10449, %v8128
        %v10579 = vpack.c.bf16 %v10459, %v10451
        %v10580 = vpack.c.bf16 %v10460, %v10452
        %v10581 = vpack.c.bf16 %v10461, %v10453
        %v10582 = vpack.c.bf16 %v10462, %v10454
        %v10583 = vpack.c.bf16 %v10463, %v10455
        %v10584 = vpack.c.bf16 %v10464, %v10456
        %v10585 = vpack.c.bf16 %v10465, %v10457
        %v10586 = vpack.c.bf16 %v10466, %v10458
        %v10587 = vpack.c.bf16 %v10475, %v10467
        %v10588 = vpack.c.bf16 %v10476, %v10468
        %v10589 = vpack.c.bf16 %v10477, %v10469
        %v10590 = vpack.c.bf16 %v10478, %v10470
        %v10591 = vpack.c.bf16 %v10479, %v10471
        %v10592 = vpack.c.bf16 %v10480, %v10472
        %v10593 = vpack.c.bf16 %v10481, %v10473
        %v10594 = vpack.c.bf16 %v10482, %v10474
        %v10595 = vpack.c.bf16 %v10491, %v10483
        %v10596 = vpack.c.bf16 %v10492, %v10484
        %v10597 = vpack.c.bf16 %v10493, %v10485
        %v10598 = vpack.c.bf16 %v10494, %v10486
        %v10599 = vpack.c.bf16 %v10495, %v10487
        %v10600 = vpack.c.bf16 %v10496, %v10488
        %v10601 = vpack.c.bf16 %v10497, %v10489
        %v10602 = vpack.c.bf16 %v10498, %v10490
        %v10603 = vpack.c.bf16 %v10507, %v10499
        %v10604 = vpack.c.bf16 %v10508, %v10500
        %v10605 = vpack.c.bf16 %v10509, %v10501
        %v10606 = vpack.c.bf16 %v10510, %v10502
        %v10607 = vpack.c.bf16 %v10511, %v10503
        %v10608 = vpack.c.bf16 %v10512, %v10504
        %v10609 = vpack.c.bf16 %v10513, %v10505
        %v10610 = vpack.c.bf16 %v10514, %v10506
        %v10611 = vpack.c.bf16 %v10523, %v10515
        %v10612 = vpack.c.bf16 %v10524, %v10516
        %v10613 = vpack.c.bf16 %v10525, %v10517
        %v10614 = vpack.c.bf16 %v10526, %v10518
        %v10615 = vpack.c.bf16 %v10527, %v10519
        %v10616 = vpack.c.bf16 %v10528, %v10520
        %v10617 = vpack.c.bf16 %v10529, %v10521
        %v10618 = vpack.c.bf16 %v10530, %v10522
        %v10619 = vpack.c.bf16 %v10539, %v10531
        %v10620 = vpack.c.bf16 %v10540, %v10532
        %v10621 = vpack.c.bf16 %v10541, %v10533
        %v10622 = vpack.c.bf16 %v10542, %v10534
        %v10623 = vpack.c.bf16 %v10543, %v10535
        %v10624 = vpack.c.bf16 %v10544, %v10536
        %v10625 = vpack.c.bf16 %v10545, %v10537
        %v10626 = vpack.c.bf16 %v10546, %v10538
        %v10627 = vpack.c.bf16 %v10555, %v10547
        %v10628 = vpack.c.bf16 %v10556, %v10548
        %v10629 = vpack.c.bf16 %v10557, %v10549
        %v10630 = vpack.c.bf16 %v10558, %v10550
        %v10631 = vpack.c.bf16 %v10559, %v10551
        %v10632 = vpack.c.bf16 %v10560, %v10552
        %v10633 = vpack.c.bf16 %v10561, %v10553
        %v10634 = vpack.c.bf16 %v10562, %v10554
        %v10635 = vpack.c.bf16 %v10571, %v10563
        %v10636 = vpack.c.bf16 %v10572, %v10564
        %v10637 = vpack.c.bf16 %v10573, %v10565
        %v10638 = vpack.c.bf16 %v10574, %v10566
        %v10639 = vpack.c.bf16 %v10575, %v10567
        %v10640 = vpack.c.bf16 %v10576, %v10568
        %v10641 = vpack.c.bf16 %v10577, %v10569
        %v10642 = vpack.c.bf16 %v10578, %v10570
        %v10643 = vld [vmem:[#allocation17] sm:$0xf]
        %v10644 = vld [vmem:[#allocation17 + $0x4] sm:$0xf]
        %v10645 = vld [vmem:[#allocation17 + $0x8] sm:$0xf]
        %v10646 = vld [vmem:[#allocation17 + $0xc] sm:$0xf]
        %v10647 = vld [vmem:[#allocation17 + $0x10] sm:$0xf]
        %v10648 = vld [vmem:[#allocation17 + $0x14] sm:$0xf]
        %v10649 = vld [vmem:[#allocation17 + $0x18] sm:$0xf]
        %v10650 = vld [vmem:[#allocation17 + $0x1c] sm:$0xf]
        %v10651 = vld [vmem:[#allocation17 + $0x20] sm:$0xf]
        %v10652 = vld [vmem:[#allocation17 + $0x24] sm:$0xf]
        %v10653 = vld [vmem:[#allocation17 + $0x28] sm:$0xf]
        %v10654 = vld [vmem:[#allocation17 + $0x2c] sm:$0xf]
        %v10655 = vld [vmem:[#allocation17 + $0x30] sm:$0xf]
        %v10656 = vld [vmem:[#allocation17 + $0x34] sm:$0xf]
        %v10657 = vld [vmem:[#allocation17 + $0x38] sm:$0xf]
        %v10658 = vld [vmem:[#allocation17 + $0x3c] sm:$0xf]
        %v10659 = vld [vmem:[#allocation17 + $0x40] sm:$0xf]
        %v10660 = vld [vmem:[#allocation17 + $0x44] sm:$0xf]
        %v10661 = vld [vmem:[#allocation17 + $0x48] sm:$0xf]
        %v10662 = vld [vmem:[#allocation17 + $0x4c] sm:$0xf]
        %v10663 = vld [vmem:[#allocation17 + $0x50] sm:$0xf]
        %v10664 = vld [vmem:[#allocation17 + $0x54] sm:$0xf]
        %v10665 = vld [vmem:[#allocation17 + $0x58] sm:$0xf]
        %v10666 = vld [vmem:[#allocation17 + $0x5c] sm:$0xf]
        %v10667 = vld [vmem:[#allocation17 + $0x60] sm:$0xf]
        %v10668 = vld [vmem:[#allocation17 + $0x64] sm:$0xf]
        %v10669 = vld [vmem:[#allocation17 + $0x68] sm:$0xf]
        %v10670 = vld [vmem:[#allocation17 + $0x6c] sm:$0xf]
        %v10671 = vld [vmem:[#allocation17 + $0x70] sm:$0xf]
        %v10672 = vld [vmem:[#allocation17 + $0x74] sm:$0xf]
        %v10673 = vld [vmem:[#allocation17 + $0x78] sm:$0xf]
        %v10674 = vld [vmem:[#allocation17 + $0x7c] sm:$0xf]
        %v10675 = vld [vmem:[#allocation17 + $0x80] sm:$0xf]
        %v10676 = vld [vmem:[#allocation17 + $0x84] sm:$0xf]
        %v10677 = vld [vmem:[#allocation17 + $0x88] sm:$0xf]
        %v10678 = vld [vmem:[#allocation17 + $0x8c] sm:$0xf]
        %v10679 = vld [vmem:[#allocation17 + $0x90] sm:$0xf]
        %v10680 = vld [vmem:[#allocation17 + $0x94] sm:$0xf]
        %v10681 = vld [vmem:[#allocation17 + $0x98] sm:$0xf]
        %v10682 = vld [vmem:[#allocation17 + $0x9c] sm:$0xf]
        %v10683 = vld [vmem:[#allocation17 + $0xa0] sm:$0xf]
        %v10684 = vld [vmem:[#allocation17 + $0xa4] sm:$0xf]
        %v10685 = vld [vmem:[#allocation17 + $0xa8] sm:$0xf]
        %v10686 = vld [vmem:[#allocation17 + $0xac] sm:$0xf]
        %v10687 = vld [vmem:[#allocation17 + $0xb0] sm:$0xf]
        %v10688 = vld [vmem:[#allocation17 + $0xb4] sm:$0xf]
        %v10689 = vld [vmem:[#allocation17 + $0xb8] sm:$0xf]
        %v10690 = vld [vmem:[#allocation17 + $0xbc] sm:$0xf]
        %v10691 = vld [vmem:[#allocation17 + $0xc0] sm:$0xf]
        %v10692 = vld [vmem:[#allocation17 + $0xc4] sm:$0xf]
        %v10693 = vld [vmem:[#allocation17 + $0xc8] sm:$0xf]
        %v10694 = vld [vmem:[#allocation17 + $0xcc] sm:$0xf]
        %v10695 = vld [vmem:[#allocation17 + $0xd0] sm:$0xf]
        %v10696 = vld [vmem:[#allocation17 + $0xd4] sm:$0xf]
        %v10697 = vld [vmem:[#allocation17 + $0xd8] sm:$0xf]
        %v10698 = vld [vmem:[#allocation17 + $0xdc] sm:$0xf]
        %v10699 = vld [vmem:[#allocation17 + $0xe0] sm:$0xf]
        %v10700 = vld [vmem:[#allocation17 + $0xe4] sm:$0xf]
        %v10701 = vld [vmem:[#allocation17 + $0xe8] sm:$0xf]
        %v10702 = vld [vmem:[#allocation17 + $0xec] sm:$0xf]
        %v10703 = vld [vmem:[#allocation17 + $0xf0] sm:$0xf]
        %v10704 = vld [vmem:[#allocation17 + $0xf4] sm:$0xf]
        %v10705 = vld [vmem:[#allocation17 + $0xf8] sm:$0xf]
        %v10706 = vld [vmem:[#allocation17 + $0xfc] sm:$0xf]
        %v10707 = vld [vmem:[#allocation17 + $0x100] sm:$0xf]
        %v10708 = vld [vmem:[#allocation17 + $0x104] sm:$0xf]
        %v10709 = vld [vmem:[#allocation17 + $0x108] sm:$0xf]
        %v10710 = vld [vmem:[#allocation17 + $0x10c] sm:$0xf]
        %v10711 = vld [vmem:[#allocation17 + $0x110] sm:$0xf]
        %v10712 = vld [vmem:[#allocation17 + $0x114] sm:$0xf]
        %v10713 = vld [vmem:[#allocation17 + $0x118] sm:$0xf]
        %v10714 = vld [vmem:[#allocation17 + $0x11c] sm:$0xf]
        %v10715 = vld [vmem:[#allocation17 + $0x120] sm:$0xf]
        %v10716 = vld [vmem:[#allocation17 + $0x124] sm:$0xf]
        %v10717 = vld [vmem:[#allocation17 + $0x128] sm:$0xf]
        %v10718 = vld [vmem:[#allocation17 + $0x12c] sm:$0xf]
        %v10719 = vld [vmem:[#allocation17 + $0x130] sm:$0xf]
        %v10720 = vld [vmem:[#allocation17 + $0x134] sm:$0xf]
        %v10721 = vld [vmem:[#allocation17 + $0x138] sm:$0xf]
        %v10722 = vld [vmem:[#allocation17 + $0x13c] sm:$0xf]
        %v10723 = vld [vmem:[#allocation17 + $0x140] sm:$0xf]
        %v10724 = vld [vmem:[#allocation17 + $0x144] sm:$0xf]
        %v10725 = vld [vmem:[#allocation17 + $0x148] sm:$0xf]
        %v10726 = vld [vmem:[#allocation17 + $0x14c] sm:$0xf]
        %v10727 = vld [vmem:[#allocation17 + $0x150] sm:$0xf]
        %v10728 = vld [vmem:[#allocation17 + $0x154] sm:$0xf]
        %v10729 = vld [vmem:[#allocation17 + $0x158] sm:$0xf]
        %v10730 = vld [vmem:[#allocation17 + $0x15c] sm:$0xf]
        %v10731 = vld [vmem:[#allocation17 + $0x160] sm:$0xf]
        %v10732 = vld [vmem:[#allocation17 + $0x164] sm:$0xf]
        %v10733 = vld [vmem:[#allocation17 + $0x168] sm:$0xf]
        %v10734 = vld [vmem:[#allocation17 + $0x16c] sm:$0xf]
        %v10735 = vld [vmem:[#allocation17 + $0x170] sm:$0xf]
        %v10736 = vld [vmem:[#allocation17 + $0x174] sm:$0xf]
        %v10737 = vld [vmem:[#allocation17 + $0x178] sm:$0xf]
        %v10738 = vld [vmem:[#allocation17 + $0x17c] sm:$0xf]
        %v10739 = vld [vmem:[#allocation17 + $0x180] sm:$0xf]
        %v10740 = vld [vmem:[#allocation17 + $0x184] sm:$0xf]
        %v10741 = vld [vmem:[#allocation17 + $0x188] sm:$0xf]
        %v10742 = vld [vmem:[#allocation17 + $0x18c] sm:$0xf]
        %v10743 = vld [vmem:[#allocation17 + $0x190] sm:$0xf]
        %v10744 = vld [vmem:[#allocation17 + $0x194] sm:$0xf]
        %v10745 = vld [vmem:[#allocation17 + $0x198] sm:$0xf]
        %v10746 = vld [vmem:[#allocation17 + $0x19c] sm:$0xf]
        %v10747 = vld [vmem:[#allocation17 + $0x1a0] sm:$0xf]
        %v10748 = vld [vmem:[#allocation17 + $0x1a4] sm:$0xf]
        %v10749 = vld [vmem:[#allocation17 + $0x1a8] sm:$0xf]
        %v10750 = vld [vmem:[#allocation17 + $0x1ac] sm:$0xf]
        %v10751 = vld [vmem:[#allocation17 + $0x1b0] sm:$0xf]
        %v10752 = vld [vmem:[#allocation17 + $0x1b4] sm:$0xf]
        %v10753 = vld [vmem:[#allocation17 + $0x1b8] sm:$0xf]
        %v10754 = vld [vmem:[#allocation17 + $0x1bc] sm:$0xf]
        %v10755 = vld [vmem:[#allocation17 + $0x1c0] sm:$0xf]
        %v10756 = vld [vmem:[#allocation17 + $0x1c4] sm:$0xf]
        %v10757 = vld [vmem:[#allocation17 + $0x1c8] sm:$0xf]
        %v10758 = vld [vmem:[#allocation17 + $0x1cc] sm:$0xf]
        %v10759 = vld [vmem:[#allocation17 + $0x1d0] sm:$0xf]
        %v10760 = vld [vmem:[#allocation17 + $0x1d4] sm:$0xf]
        %v10761 = vld [vmem:[#allocation17 + $0x1d8] sm:$0xf]
        %v10762 = vld [vmem:[#allocation17 + $0x1dc] sm:$0xf]
        %v10763 = vld [vmem:[#allocation17 + $0x1e0] sm:$0xf]
        %v10764 = vld [vmem:[#allocation17 + $0x1e4] sm:$0xf]
        %v10765 = vld [vmem:[#allocation17 + $0x1e8] sm:$0xf]
        %v10766 = vld [vmem:[#allocation17 + $0x1ec] sm:$0xf]
        %v10767 = vld [vmem:[#allocation17 + $0x1f0] sm:$0xf]
        %v10768 = vld [vmem:[#allocation17 + $0x1f4] sm:$0xf]
        %v10769 = vld [vmem:[#allocation17 + $0x1f8] sm:$0xf]
        %v10770 = vld [vmem:[#allocation17 + $0x1fc] sm:$0xf]
        %v10899 = vunpack.c.l.b16 %v10643
        %v10900 = vunpack.c.l.b16 %v10644
        %v10901 = vunpack.c.l.b16 %v10645
        %v10902 = vunpack.c.l.b16 %v10646
        %v10903 = vunpack.c.l.b16 %v10647
        %v10904 = vunpack.c.l.b16 %v10648
        %v10905 = vunpack.c.l.b16 %v10649
        %v10906 = vunpack.c.l.b16 %v10650
        %v10907 = vunpack.c.l.b16 %v10651
        %v10908 = vunpack.c.l.b16 %v10652
        %v10909 = vunpack.c.l.b16 %v10653
        %v10910 = vunpack.c.l.b16 %v10654
        %v10911 = vunpack.c.l.b16 %v10655
        %v10912 = vunpack.c.l.b16 %v10656
        %v10913 = vunpack.c.l.b16 %v10657
        %v10914 = vunpack.c.l.b16 %v10658
        %v10915 = vunpack.c.l.b16 %v10659
        %v10916 = vunpack.c.l.b16 %v10660
        %v10917 = vunpack.c.l.b16 %v10661
        %v10918 = vunpack.c.l.b16 %v10662
        %v10919 = vunpack.c.l.b16 %v10663
        %v10920 = vunpack.c.l.b16 %v10664
        %v10921 = vunpack.c.l.b16 %v10665
        %v10922 = vunpack.c.l.b16 %v10666
        %v10923 = vunpack.c.l.b16 %v10667
        %v10924 = vunpack.c.l.b16 %v10668
        %v10925 = vunpack.c.l.b16 %v10669
        %v10926 = vunpack.c.l.b16 %v10670
        %v10927 = vunpack.c.l.b16 %v10671
        %v10928 = vunpack.c.l.b16 %v10672
        %v10929 = vunpack.c.l.b16 %v10673
        %v10930 = vunpack.c.l.b16 %v10674
        %v10931 = vunpack.c.l.b16 %v10675
        %v10932 = vunpack.c.l.b16 %v10676
        %v10933 = vunpack.c.l.b16 %v10677
        %v10934 = vunpack.c.l.b16 %v10678
        %v10935 = vunpack.c.l.b16 %v10679
        %v10936 = vunpack.c.l.b16 %v10680
        %v10937 = vunpack.c.l.b16 %v10681
        %v10938 = vunpack.c.l.b16 %v10682
        %v10939 = vunpack.c.l.b16 %v10683
        %v10940 = vunpack.c.l.b16 %v10684
        %v10941 = vunpack.c.l.b16 %v10685
        %v10942 = vunpack.c.l.b16 %v10686
        %v10943 = vunpack.c.l.b16 %v10687
        %v10944 = vunpack.c.l.b16 %v10688
        %v10945 = vunpack.c.l.b16 %v10689
        %v10946 = vunpack.c.l.b16 %v10690
        %v10947 = vunpack.c.l.b16 %v10691
        %v10948 = vunpack.c.l.b16 %v10692
        %v10949 = vunpack.c.l.b16 %v10693
        %v10950 = vunpack.c.l.b16 %v10694
        %v10951 = vunpack.c.l.b16 %v10695
        %v10952 = vunpack.c.l.b16 %v10696
        %v10953 = vunpack.c.l.b16 %v10697
        %v10954 = vunpack.c.l.b16 %v10698
        %v10955 = vunpack.c.l.b16 %v10699
        %v10956 = vunpack.c.l.b16 %v10700
        %v10957 = vunpack.c.l.b16 %v10701
        %v10958 = vunpack.c.l.b16 %v10702
        %v10959 = vunpack.c.l.b16 %v10703
        %v10960 = vunpack.c.l.b16 %v10704
        %v10961 = vunpack.c.l.b16 %v10705
        %v10962 = vunpack.c.l.b16 %v10706
        %v10963 = vunpack.c.l.b16 %v10707
        %v10964 = vunpack.c.l.b16 %v10708
        %v10965 = vunpack.c.l.b16 %v10709
        %v10966 = vunpack.c.l.b16 %v10710
        %v10967 = vunpack.c.l.b16 %v10711
        %v10968 = vunpack.c.l.b16 %v10712
        %v10969 = vunpack.c.l.b16 %v10713
        %v10970 = vunpack.c.l.b16 %v10714
        %v10971 = vunpack.c.l.b16 %v10715
        %v10972 = vunpack.c.l.b16 %v10716
        %v10973 = vunpack.c.l.b16 %v10717
        %v10974 = vunpack.c.l.b16 %v10718
        %v10975 = vunpack.c.l.b16 %v10719
        %v10976 = vunpack.c.l.b16 %v10720
        %v10977 = vunpack.c.l.b16 %v10721
        %v10978 = vunpack.c.l.b16 %v10722
        %v10979 = vunpack.c.l.b16 %v10723
        %v10980 = vunpack.c.l.b16 %v10724
        %v10981 = vunpack.c.l.b16 %v10725
        %v10982 = vunpack.c.l.b16 %v10726
        %v10983 = vunpack.c.l.b16 %v10727
        %v10984 = vunpack.c.l.b16 %v10728
        %v10985 = vunpack.c.l.b16 %v10729
        %v10986 = vunpack.c.l.b16 %v10730
        %v10987 = vunpack.c.l.b16 %v10731
        %v10988 = vunpack.c.l.b16 %v10732
        %v10989 = vunpack.c.l.b16 %v10733
        %v10990 = vunpack.c.l.b16 %v10734
        %v10991 = vunpack.c.l.b16 %v10735
        %v10992 = vunpack.c.l.b16 %v10736
        %v10993 = vunpack.c.l.b16 %v10737
        %v10994 = vunpack.c.l.b16 %v10738
        %v10995 = vunpack.c.l.b16 %v10739
        %v10996 = vunpack.c.l.b16 %v10740
        %v10997 = vunpack.c.l.b16 %v10741
        %v10998 = vunpack.c.l.b16 %v10742
        %v10999 = vunpack.c.l.b16 %v10743
        %v11000 = vunpack.c.l.b16 %v10744
        %v11001 = vunpack.c.l.b16 %v10745
        %v11002 = vunpack.c.l.b16 %v10746
        %v11003 = vunpack.c.l.b16 %v10747
        %v11004 = vunpack.c.l.b16 %v10748
        %v11005 = vunpack.c.l.b16 %v10749
        %v11006 = vunpack.c.l.b16 %v10750
        %v11007 = vunpack.c.l.b16 %v10751
        %v11008 = vunpack.c.l.b16 %v10752
        %v11009 = vunpack.c.l.b16 %v10753
        %v11010 = vunpack.c.l.b16 %v10754
        %v11011 = vunpack.c.l.b16 %v10755
        %v11012 = vunpack.c.l.b16 %v10756
        %v11013 = vunpack.c.l.b16 %v10757
        %v11014 = vunpack.c.l.b16 %v10758
        %v11015 = vunpack.c.l.b16 %v10759
        %v11016 = vunpack.c.l.b16 %v10760
        %v11017 = vunpack.c.l.b16 %v10761
        %v11018 = vunpack.c.l.b16 %v10762
        %v11019 = vunpack.c.l.b16 %v10763
        %v11020 = vunpack.c.l.b16 %v10764
        %v11021 = vunpack.c.l.b16 %v10765
        %v11022 = vunpack.c.l.b16 %v10766
        %v11023 = vunpack.c.l.b16 %v10767
        %v11024 = vunpack.c.l.b16 %v10768
        %v11025 = vunpack.c.l.b16 %v10769
        %v11026 = vunpack.c.l.b16 %v10770
        %v11027 = vpack.c.b16 %v10900, %v10899
        %v11028 = vpack.c.b16 %v10902, %v10901
        %v11029 = vpack.c.b16 %v10904, %v10903
        %v11030 = vpack.c.b16 %v10906, %v10905
        %v11031 = vpack.c.b16 %v10908, %v10907
        %v11032 = vpack.c.b16 %v10910, %v10909
        %v11033 = vpack.c.b16 %v10912, %v10911
        %v11034 = vpack.c.b16 %v10914, %v10913
        %v11035 = vpack.c.b16 %v10916, %v10915
        %v11036 = vpack.c.b16 %v10918, %v10917
        %v11037 = vpack.c.b16 %v10920, %v10919
        %v11038 = vpack.c.b16 %v10922, %v10921
        %v11039 = vpack.c.b16 %v10924, %v10923
        %v11040 = vpack.c.b16 %v10926, %v10925
        %v11041 = vpack.c.b16 %v10928, %v10927
        %v11042 = vpack.c.b16 %v10930, %v10929
        %v11043 = vpack.c.b16 %v10932, %v10931
        %v11044 = vpack.c.b16 %v10934, %v10933
        %v11045 = vpack.c.b16 %v10936, %v10935
        %v11046 = vpack.c.b16 %v10938, %v10937
        %v11047 = vpack.c.b16 %v10940, %v10939
        %v11048 = vpack.c.b16 %v10942, %v10941
        %v11049 = vpack.c.b16 %v10944, %v10943
        %v11050 = vpack.c.b16 %v10946, %v10945
        %v11051 = vpack.c.b16 %v10948, %v10947
        %v11052 = vpack.c.b16 %v10950, %v10949
        %v11053 = vpack.c.b16 %v10952, %v10951
        %v11054 = vpack.c.b16 %v10954, %v10953
        %v11055 = vpack.c.b16 %v10956, %v10955
        %v11056 = vpack.c.b16 %v10958, %v10957
        %v11057 = vpack.c.b16 %v10960, %v10959
        %v11058 = vpack.c.b16 %v10962, %v10961
        %v11059 = vpack.c.b16 %v10964, %v10963
        %v11060 = vpack.c.b16 %v10966, %v10965
        %v11061 = vpack.c.b16 %v10968, %v10967
        %v11062 = vpack.c.b16 %v10970, %v10969
        %v11063 = vpack.c.b16 %v10972, %v10971
        %v11064 = vpack.c.b16 %v10974, %v10973
        %v11065 = vpack.c.b16 %v10976, %v10975
        %v11066 = vpack.c.b16 %v10978, %v10977
        %v11067 = vpack.c.b16 %v10980, %v10979
        %v11068 = vpack.c.b16 %v10982, %v10981
        %v11069 = vpack.c.b16 %v10984, %v10983
        %v11070 = vpack.c.b16 %v10986, %v10985
        %v11071 = vpack.c.b16 %v10988, %v10987
        %v11072 = vpack.c.b16 %v10990, %v10989
        %v11073 = vpack.c.b16 %v10992, %v10991
        %v11074 = vpack.c.b16 %v10994, %v10993
        %v11075 = vpack.c.b16 %v10996, %v10995
        %v11076 = vpack.c.b16 %v10998, %v10997
        %v11077 = vpack.c.b16 %v11000, %v10999
        %v11078 = vpack.c.b16 %v11002, %v11001
        %v11079 = vpack.c.b16 %v11004, %v11003
        %v11080 = vpack.c.b16 %v11006, %v11005
        %v11081 = vpack.c.b16 %v11008, %v11007
        %v11082 = vpack.c.b16 %v11010, %v11009
        %v11083 = vpack.c.b16 %v11012, %v11011
        %v11084 = vpack.c.b16 %v11014, %v11013
        %v11085 = vpack.c.b16 %v11016, %v11015
        %v11086 = vpack.c.b16 %v11018, %v11017
        %v11087 = vpack.c.b16 %v11020, %v11019
        %v11088 = vpack.c.b16 %v11022, %v11021
        %v11089 = vpack.c.b16 %v11024, %v11023
        %v11090 = vpack.c.b16 %v11026, %v11025
        %11155 = vmatpush.bf16.msra.mxu0 %v11034
        %11156 = vmatpush.bf16.msra.mxu0 %v11033
        %11157 = vmatpush.bf16.msra.mxu0 %v11032
        %11158 = vmatpush.bf16.msra.mxu0 %v11031
        %11159 = vmatpush.bf16.msra.mxu0 %v11030
        %11160 = vmatpush.bf16.msra.mxu0 %v11029
        %11161 = vmatpush.bf16.msra.mxu0 %v11028
        %11162 = vmatpush.bf16.msra.mxu0 %v11027
        %11163 = vmatmul.bf16.gmra.mxu0 %v10579
        %v11164 = vpop.f32.mrf.mxu0
        %v11165 = vadd.f32 0.0, %v11164
        %v11166 = vpop.f32.mrf.mxu0
        %v11167 = vadd.f32 0.0, %v11166
        %11168 = vmatmul.bf16.gmra.mxu0 %v10587
        %v11169 = vpop.f32.mrf.mxu0
        %v11170 = vadd.f32 0.0, %v11169
        %v11171 = vpop.f32.mrf.mxu0
        %v11172 = vadd.f32 0.0, %v11171
        %11173 = vmatmul.bf16.gmra.mxu0 %v10595
        %v11174 = vpop.f32.mrf.mxu0
        %v11175 = vadd.f32 0.0, %v11174
        %v11176 = vpop.f32.mrf.mxu0
        %v11177 = vadd.f32 0.0, %v11176
        %11178 = vmatmul.bf16.gmra.mxu0 %v10603
        %v11179 = vpop.f32.mrf.mxu0
        %v11180 = vadd.f32 0.0, %v11179
        %v11181 = vpop.f32.mrf.mxu0
        %v11182 = vadd.f32 0.0, %v11181
        %11183 = vmatmul.bf16.gmra.mxu0 %v10611
        %v11184 = vpop.f32.mrf.mxu0
        %v11185 = vadd.f32 0.0, %v11184
        %v11186 = vpop.f32.mrf.mxu0
        %v11187 = vadd.f32 0.0, %v11186
        %11188 = vmatmul.bf16.gmra.mxu0 %v10619
        %v11189 = vpop.f32.mrf.mxu0
        %v11190 = vadd.f32 0.0, %v11189
        %v11191 = vpop.f32.mrf.mxu0
        %v11192 = vadd.f32 0.0, %v11191
        %11193 = vmatmul.bf16.gmra.mxu0 %v10627
        %v11194 = vpop.f32.mrf.mxu0
        %v11195 = vadd.f32 0.0, %v11194
        %v11196 = vpop.f32.mrf.mxu0
        %v11197 = vadd.f32 0.0, %v11196
        %11198 = vmatmul.bf16.gmra.mxu0 %v10635
        %v11199 = vpop.f32.mrf.mxu0
        %v11200 = vadd.f32 0.0, %v11199
        %v11201 = vpop.f32.mrf.mxu0
        %v11202 = vadd.f32 0.0, %v11201
        %11203 = vdwg.mxu0
        %11204 = vmatpush.bf16.msra.mxu0 %v11042
        %11205 = vmatpush.bf16.msra.mxu0 %v11041
        %11206 = vmatpush.bf16.msra.mxu0 %v11040
        %11207 = vmatpush.bf16.msra.mxu0 %v11039
        %11208 = vmatpush.bf16.msra.mxu0 %v11038
        %11209 = vmatpush.bf16.msra.mxu0 %v11037
        %11210 = vmatpush.bf16.msra.mxu0 %v11036
        %11211 = vmatpush.bf16.msra.mxu0 %v11035
        %11212 = vmatmul.bf16.gmra.mxu0 %v10580
        %v11213 = vpop.f32.mrf.mxu0
        %v11214 = vadd.f32 %v11165, %v11213
        %v11215 = vpop.f32.mrf.mxu0
        %v11216 = vadd.f32 %v11167, %v11215
        %11217 = vmatmul.bf16.gmra.mxu0 %v10588
        %v11218 = vpop.f32.mrf.mxu0
        %v11219 = vadd.f32 %v11170, %v11218
        %v11220 = vpop.f32.mrf.mxu0
        %v11221 = vadd.f32 %v11172, %v11220
        %11222 = vmatmul.bf16.gmra.mxu0 %v10596
        %v11223 = vpop.f32.mrf.mxu0
        %v11224 = vadd.f32 %v11175, %v11223
        %v11225 = vpop.f32.mrf.mxu0
        %v11226 = vadd.f32 %v11177, %v11225
        %11227 = vmatmul.bf16.gmra.mxu0 %v10604
        %v11228 = vpop.f32.mrf.mxu0
        %v11229 = vadd.f32 %v11180, %v11228
        %v11230 = vpop.f32.mrf.mxu0
        %v11231 = vadd.f32 %v11182, %v11230
        %11232 = vmatmul.bf16.gmra.mxu0 %v10612
        %v11233 = vpop.f32.mrf.mxu0
        %v11234 = vadd.f32 %v11185, %v11233
        %v11235 = vpop.f32.mrf.mxu0
        %v11236 = vadd.f32 %v11187, %v11235
        %11237 = vmatmul.bf16.gmra.mxu0 %v10620
        %v11238 = vpop.f32.mrf.mxu0
        %v11239 = vadd.f32 %v11190, %v11238
        %v11240 = vpop.f32.mrf.mxu0
        %v11241 = vadd.f32 %v11192, %v11240
        %11242 = vmatmul.bf16.gmra.mxu0 %v10628
        %v11243 = vpop.f32.mrf.mxu0
        %v11244 = vadd.f32 %v11195, %v11243
        %v11245 = vpop.f32.mrf.mxu0
        %v11246 = vadd.f32 %v11197, %v11245
        %11247 = vmatmul.bf16.gmra.mxu0 %v10636
        %v11248 = vpop.f32.mrf.mxu0
        %v11249 = vadd.f32 %v11200, %v11248
        %v11250 = vpop.f32.mrf.mxu0
        %v11251 = vadd.f32 %v11202, %v11250
        %11252 = vdwg.mxu0
        %11253 = vmatpush.bf16.msra.mxu0 %v11050
        %11254 = vmatpush.bf16.msra.mxu0 %v11049
        %11255 = vmatpush.bf16.msra.mxu0 %v11048
        %11256 = vmatpush.bf16.msra.mxu0 %v11047
        %11257 = vmatpush.bf16.msra.mxu0 %v11046
        %11258 = vmatpush.bf16.msra.mxu0 %v11045
        %11259 = vmatpush.bf16.msra.mxu0 %v11044
        %11260 = vmatpush.bf16.msra.mxu0 %v11043
        %11261 = vmatmul.bf16.gmra.mxu0 %v10581
        %v11262 = vpop.f32.mrf.mxu0
        %v11263 = vadd.f32 %v11214, %v11262
        %v11264 = vpop.f32.mrf.mxu0
        %v11265 = vadd.f32 %v11216, %v11264
        %11266 = vmatmul.bf16.gmra.mxu0 %v10589
        %v11267 = vpop.f32.mrf.mxu0
        %v11268 = vadd.f32 %v11219, %v11267
        %v11269 = vpop.f32.mrf.mxu0
        %v11270 = vadd.f32 %v11221, %v11269
        %11271 = vmatmul.bf16.gmra.mxu0 %v10597
        %v11272 = vpop.f32.mrf.mxu0
        %v11273 = vadd.f32 %v11224, %v11272
        %v11274 = vpop.f32.mrf.mxu0
        %v11275 = vadd.f32 %v11226, %v11274
        %11276 = vmatmul.bf16.gmra.mxu0 %v10605
        %v11277 = vpop.f32.mrf.mxu0
        %v11278 = vadd.f32 %v11229, %v11277
        %v11279 = vpop.f32.mrf.mxu0
        %v11280 = vadd.f32 %v11231, %v11279
        %11281 = vmatmul.bf16.gmra.mxu0 %v10613
        %v11282 = vpop.f32.mrf.mxu0
        %v11283 = vadd.f32 %v11234, %v11282
        %v11284 = vpop.f32.mrf.mxu0
        %v11285 = vadd.f32 %v11236, %v11284
        %11286 = vmatmul.bf16.gmra.mxu0 %v10621
        %v11287 = vpop.f32.mrf.mxu0
        %v11288 = vadd.f32 %v11239, %v11287
        %v11289 = vpop.f32.mrf.mxu0
        %v11290 = vadd.f32 %v11241, %v11289
        %11291 = vmatmul.bf16.gmra.mxu0 %v10629
        %v11292 = vpop.f32.mrf.mxu0
        %v11293 = vadd.f32 %v11244, %v11292
        %v11294 = vpop.f32.mrf.mxu0
        %v11295 = vadd.f32 %v11246, %v11294
        %11296 = vmatmul.bf16.gmra.mxu0 %v10637
        %v11297 = vpop.f32.mrf.mxu0
        %v11298 = vadd.f32 %v11249, %v11297
        %v11299 = vpop.f32.mrf.mxu0
        %v11300 = vadd.f32 %v11251, %v11299
        %11301 = vdwg.mxu0
        %11302 = vmatpush.bf16.msra.mxu0 %v11058
        %11303 = vmatpush.bf16.msra.mxu0 %v11057
        %11304 = vmatpush.bf16.msra.mxu0 %v11056
        %11305 = vmatpush.bf16.msra.mxu0 %v11055
        %11306 = vmatpush.bf16.msra.mxu0 %v11054
        %11307 = vmatpush.bf16.msra.mxu0 %v11053
        %11308 = vmatpush.bf16.msra.mxu0 %v11052
        %11309 = vmatpush.bf16.msra.mxu0 %v11051
        %11310 = vmatmul.bf16.gmra.mxu0 %v10582
        %v11311 = vpop.f32.mrf.mxu0
        %v11312 = vadd.f32 %v11263, %v11311
        %v11313 = vpop.f32.mrf.mxu0
        %v11314 = vadd.f32 %v11265, %v11313
        %11315 = vmatmul.bf16.gmra.mxu0 %v10590
        %v11316 = vpop.f32.mrf.mxu0
        %v11317 = vadd.f32 %v11268, %v11316
        %v11318 = vpop.f32.mrf.mxu0
        %v11319 = vadd.f32 %v11270, %v11318
        %11320 = vmatmul.bf16.gmra.mxu0 %v10598
        %v11321 = vpop.f32.mrf.mxu0
        %v11322 = vadd.f32 %v11273, %v11321
        %v11323 = vpop.f32.mrf.mxu0
        %v11324 = vadd.f32 %v11275, %v11323
        %11325 = vmatmul.bf16.gmra.mxu0 %v10606
        %v11326 = vpop.f32.mrf.mxu0
        %v11327 = vadd.f32 %v11278, %v11326
        %v11328 = vpop.f32.mrf.mxu0
        %v11329 = vadd.f32 %v11280, %v11328
        %11330 = vmatmul.bf16.gmra.mxu0 %v10614
        %v11331 = vpop.f32.mrf.mxu0
        %v11332 = vadd.f32 %v11283, %v11331
        %v11333 = vpop.f32.mrf.mxu0
        %v11334 = vadd.f32 %v11285, %v11333
        %11335 = vmatmul.bf16.gmra.mxu0 %v10622
        %v11336 = vpop.f32.mrf.mxu0
        %v11337 = vadd.f32 %v11288, %v11336
        %v11338 = vpop.f32.mrf.mxu0
        %v11339 = vadd.f32 %v11290, %v11338
        %11340 = vmatmul.bf16.gmra.mxu0 %v10630
        %v11341 = vpop.f32.mrf.mxu0
        %v11342 = vadd.f32 %v11293, %v11341
        %v11343 = vpop.f32.mrf.mxu0
        %v11344 = vadd.f32 %v11295, %v11343
        %11345 = vmatmul.bf16.gmra.mxu0 %v10638
        %v11346 = vpop.f32.mrf.mxu0
        %v11347 = vadd.f32 %v11298, %v11346
        %v11348 = vpop.f32.mrf.mxu0
        %v11349 = vadd.f32 %v11300, %v11348
        %11350 = vdwg.mxu0
        %11351 = vmatpush.bf16.msra.mxu0 %v11066
        %11352 = vmatpush.bf16.msra.mxu0 %v11065
        %11353 = vmatpush.bf16.msra.mxu0 %v11064
        %11354 = vmatpush.bf16.msra.mxu0 %v11063
        %11355 = vmatpush.bf16.msra.mxu0 %v11062
        %11356 = vmatpush.bf16.msra.mxu0 %v11061
        %11357 = vmatpush.bf16.msra.mxu0 %v11060
        %11358 = vmatpush.bf16.msra.mxu0 %v11059
        %11359 = vmatmul.bf16.gmra.mxu0 %v10583
        %v11360 = vpop.f32.mrf.mxu0
        %v11361 = vadd.f32 %v11312, %v11360
        %v11362 = vpop.f32.mrf.mxu0
        %v11363 = vadd.f32 %v11314, %v11362
        %11364 = vmatmul.bf16.gmra.mxu0 %v10591
        %v11365 = vpop.f32.mrf.mxu0
        %v11366 = vadd.f32 %v11317, %v11365
        %v11367 = vpop.f32.mrf.mxu0
        %v11368 = vadd.f32 %v11319, %v11367
        %11369 = vmatmul.bf16.gmra.mxu0 %v10599
        %v11370 = vpop.f32.mrf.mxu0
        %v11371 = vadd.f32 %v11322, %v11370
        %v11372 = vpop.f32.mrf.mxu0
        %v11373 = vadd.f32 %v11324, %v11372
        %11374 = vmatmul.bf16.gmra.mxu0 %v10607
        %v11375 = vpop.f32.mrf.mxu0
        %v11376 = vadd.f32 %v11327, %v11375
        %v11377 = vpop.f32.mrf.mxu0
        %v11378 = vadd.f32 %v11329, %v11377
        %11379 = vmatmul.bf16.gmra.mxu0 %v10615
        %v11380 = vpop.f32.mrf.mxu0
        %v11381 = vadd.f32 %v11332, %v11380
        %v11382 = vpop.f32.mrf.mxu0
        %v11383 = vadd.f32 %v11334, %v11382
        %11384 = vmatmul.bf16.gmra.mxu0 %v10623
        %v11385 = vpop.f32.mrf.mxu0
        %v11386 = vadd.f32 %v11337, %v11385
        %v11387 = vpop.f32.mrf.mxu0
        %v11388 = vadd.f32 %v11339, %v11387
        %11389 = vmatmul.bf16.gmra.mxu0 %v10631
        %v11390 = vpop.f32.mrf.mxu0
        %v11391 = vadd.f32 %v11342, %v11390
        %v11392 = vpop.f32.mrf.mxu0
        %v11393 = vadd.f32 %v11344, %v11392
        %11394 = vmatmul.bf16.gmra.mxu0 %v10639
        %v11395 = vpop.f32.mrf.mxu0
        %v11396 = vadd.f32 %v11347, %v11395
        %v11397 = vpop.f32.mrf.mxu0
        %v11398 = vadd.f32 %v11349, %v11397
        %11399 = vdwg.mxu0
        %11400 = vmatpush.bf16.msra.mxu0 %v11074
        %11401 = vmatpush.bf16.msra.mxu0 %v11073
        %11402 = vmatpush.bf16.msra.mxu0 %v11072
        %11403 = vmatpush.bf16.msra.mxu0 %v11071
        %11404 = vmatpush.bf16.msra.mxu0 %v11070
        %11405 = vmatpush.bf16.msra.mxu0 %v11069
        %11406 = vmatpush.bf16.msra.mxu0 %v11068
        %11407 = vmatpush.bf16.msra.mxu0 %v11067
        %11408 = vmatmul.bf16.gmra.mxu0 %v10584
        %v11409 = vpop.f32.mrf.mxu0
        %v11410 = vadd.f32 %v11361, %v11409
        %v11411 = vpop.f32.mrf.mxu0
        %v11412 = vadd.f32 %v11363, %v11411
        %11413 = vmatmul.bf16.gmra.mxu0 %v10592
        %v11414 = vpop.f32.mrf.mxu0
        %v11415 = vadd.f32 %v11366, %v11414
        %v11416 = vpop.f32.mrf.mxu0
        %v11417 = vadd.f32 %v11368, %v11416
        %11418 = vmatmul.bf16.gmra.mxu0 %v10600
        %v11419 = vpop.f32.mrf.mxu0
        %v11420 = vadd.f32 %v11371, %v11419
        %v11421 = vpop.f32.mrf.mxu0
        %v11422 = vadd.f32 %v11373, %v11421
        %11423 = vmatmul.bf16.gmra.mxu0 %v10608
        %v11424 = vpop.f32.mrf.mxu0
        %v11425 = vadd.f32 %v11376, %v11424
        %v11426 = vpop.f32.mrf.mxu0
        %v11427 = vadd.f32 %v11378, %v11426
        %11428 = vmatmul.bf16.gmra.mxu0 %v10616
        %v11429 = vpop.f32.mrf.mxu0
        %v11430 = vadd.f32 %v11381, %v11429
        %v11431 = vpop.f32.mrf.mxu0
        %v11432 = vadd.f32 %v11383, %v11431
        %11433 = vmatmul.bf16.gmra.mxu0 %v10624
        %v11434 = vpop.f32.mrf.mxu0
        %v11435 = vadd.f32 %v11386, %v11434
        %v11436 = vpop.f32.mrf.mxu0
        %v11437 = vadd.f32 %v11388, %v11436
        %11438 = vmatmul.bf16.gmra.mxu0 %v10632
        %v11439 = vpop.f32.mrf.mxu0
        %v11440 = vadd.f32 %v11391, %v11439
        %v11441 = vpop.f32.mrf.mxu0
        %v11442 = vadd.f32 %v11393, %v11441
        %11443 = vmatmul.bf16.gmra.mxu0 %v10640
        %v11444 = vpop.f32.mrf.mxu0
        %v11445 = vadd.f32 %v11396, %v11444
        %v11446 = vpop.f32.mrf.mxu0
        %v11447 = vadd.f32 %v11398, %v11446
        %11448 = vdwg.mxu0
        %11449 = vmatpush.bf16.msra.mxu0 %v11082
        %11450 = vmatpush.bf16.msra.mxu0 %v11081
        %11451 = vmatpush.bf16.msra.mxu0 %v11080
        %11452 = vmatpush.bf16.msra.mxu0 %v11079
        %11453 = vmatpush.bf16.msra.mxu0 %v11078
        %11454 = vmatpush.bf16.msra.mxu0 %v11077
        %11455 = vmatpush.bf16.msra.mxu0 %v11076
        %11456 = vmatpush.bf16.msra.mxu0 %v11075
        %11457 = vmatmul.bf16.gmra.mxu0 %v10585
        %v11458 = vpop.f32.mrf.mxu0
        %v11459 = vadd.f32 %v11410, %v11458
        %v11460 = vpop.f32.mrf.mxu0
        %v11461 = vadd.f32 %v11412, %v11460
        %11462 = vmatmul.bf16.gmra.mxu0 %v10593
        %v11463 = vpop.f32.mrf.mxu0
        %v11464 = vadd.f32 %v11415, %v11463
        %v11465 = vpop.f32.mrf.mxu0
        %v11466 = vadd.f32 %v11417, %v11465
        %11467 = vmatmul.bf16.gmra.mxu0 %v10601
        %v11468 = vpop.f32.mrf.mxu0
        %v11469 = vadd.f32 %v11420, %v11468
        %v11470 = vpop.f32.mrf.mxu0
        %v11471 = vadd.f32 %v11422, %v11470
        %11472 = vmatmul.bf16.gmra.mxu0 %v10609
        %v11473 = vpop.f32.mrf.mxu0
        %v11474 = vadd.f32 %v11425, %v11473
        %v11475 = vpop.f32.mrf.mxu0
        %v11476 = vadd.f32 %v11427, %v11475
        %11477 = vmatmul.bf16.gmra.mxu0 %v10617
        %v11478 = vpop.f32.mrf.mxu0
        %v11479 = vadd.f32 %v11430, %v11478
        %v11480 = vpop.f32.mrf.mxu0
        %v11481 = vadd.f32 %v11432, %v11480
        %11482 = vmatmul.bf16.gmra.mxu0 %v10625
        %v11483 = vpop.f32.mrf.mxu0
        %v11484 = vadd.f32 %v11435, %v11483
        %v11485 = vpop.f32.mrf.mxu0
        %v11486 = vadd.f32 %v11437, %v11485
        %11487 = vmatmul.bf16.gmra.mxu0 %v10633
        %v11488 = vpop.f32.mrf.mxu0
        %v11489 = vadd.f32 %v11440, %v11488
        %v11490 = vpop.f32.mrf.mxu0
        %v11491 = vadd.f32 %v11442, %v11490
        %11492 = vmatmul.bf16.gmra.mxu0 %v10641
        %v11493 = vpop.f32.mrf.mxu0
        %v11494 = vadd.f32 %v11445, %v11493
        %v11495 = vpop.f32.mrf.mxu0
        %v11496 = vadd.f32 %v11447, %v11495
        %11497 = vdwg.mxu0
        %11498 = vmatpush.bf16.msra.mxu0 %v11090
        %11499 = vmatpush.bf16.msra.mxu0 %v11089
        %11500 = vmatpush.bf16.msra.mxu0 %v11088
        %11501 = vmatpush.bf16.msra.mxu0 %v11087
        %11502 = vmatpush.bf16.msra.mxu0 %v11086
        %11503 = vmatpush.bf16.msra.mxu0 %v11085
        %11504 = vmatpush.bf16.msra.mxu0 %v11084
        %11505 = vmatpush.bf16.msra.mxu0 %v11083
        %11506 = vmatmul.bf16.gmra.mxu0 %v10586
        %v11507 = vpop.f32.mrf.mxu0
        %v11508 = vadd.f32 %v11459, %v11507
        %v11509 = vpop.f32.mrf.mxu0
        %v11510 = vadd.f32 %v11461, %v11509
        %11511 = vmatmul.bf16.gmra.mxu0 %v10594
        %v11512 = vpop.f32.mrf.mxu0
        %v11513 = vadd.f32 %v11464, %v11512
        %v11514 = vpop.f32.mrf.mxu0
        %v11515 = vadd.f32 %v11466, %v11514
        %11516 = vmatmul.bf16.gmra.mxu0 %v10602
        %v11517 = vpop.f32.mrf.mxu0
        %v11518 = vadd.f32 %v11469, %v11517
        %v11519 = vpop.f32.mrf.mxu0
        %v11520 = vadd.f32 %v11471, %v11519
        %11521 = vmatmul.bf16.gmra.mxu0 %v10610
        %v11522 = vpop.f32.mrf.mxu0
        %v11523 = vadd.f32 %v11474, %v11522
        %v11524 = vpop.f32.mrf.mxu0
        %v11525 = vadd.f32 %v11476, %v11524
        %11526 = vmatmul.bf16.gmra.mxu0 %v10618
        %v11527 = vpop.f32.mrf.mxu0
        %v11528 = vadd.f32 %v11479, %v11527
        %v11529 = vpop.f32.mrf.mxu0
        %v11530 = vadd.f32 %v11481, %v11529
        %11531 = vmatmul.bf16.gmra.mxu0 %v10626
        %v11532 = vpop.f32.mrf.mxu0
        %v11533 = vadd.f32 %v11484, %v11532
        %v11534 = vpop.f32.mrf.mxu0
        %v11535 = vadd.f32 %v11486, %v11534
        %11536 = vmatmul.bf16.gmra.mxu0 %v10634
        %v11537 = vpop.f32.mrf.mxu0
        %v11538 = vadd.f32 %v11489, %v11537
        %v11539 = vpop.f32.mrf.mxu0
        %v11540 = vadd.f32 %v11491, %v11539
        %11541 = vmatmul.bf16.gmra.mxu0 %v10642
        %v11542 = vpop.f32.mrf.mxu0
        %v11543 = vadd.f32 %v11494, %v11542
        %v11544 = vpop.f32.mrf.mxu0
        %v11545 = vadd.f32 %v11496, %v11544
        %11546 = vdwg.mxu0
        %v11547 = vadd.f32 %v1541, %v11508
        %v11548 = vadd.f32 %v1543, %v11510
        %v11549 = vadd.f32 %v1546, %v11513
        %v11550 = vadd.f32 %v1548, %v11515
        %v11551 = vadd.f32 %v1551, %v11518
        %v11552 = vadd.f32 %v1553, %v11520
        %v11553 = vadd.f32 %v1556, %v11523
        %v11554 = vadd.f32 %v1558, %v11525
        %v11555 = vadd.f32 %v1561, %v11528
        %v11556 = vadd.f32 %v1563, %v11530
        %v11557 = vadd.f32 %v1566, %v11533
        %v11558 = vadd.f32 %v1568, %v11535
        %v11559 = vadd.f32 %v1571, %v11538
        %v11560 = vadd.f32 %v1573, %v11540
        %v11561 = vadd.f32 %v1576, %v11543
        %v11562 = vadd.f32 %v1578, %v11545
        %v11563 = vld [vmem:[#allocation19] sm:$0x1]
        %v11565 = vperm.slane %v11563, 0
        %v11567 = vadd.f32 %v11547, %v11565
        %v11568 = vadd.f32 %v11548, %v11565
        %v11569 = vadd.f32 %v11549, %v11565
        %v11570 = vadd.f32 %v11550, %v11565
        %v11571 = vadd.f32 %v11551, %v11565
        %v11572 = vadd.f32 %v11552, %v11565
        %v11573 = vadd.f32 %v11553, %v11565
        %v11574 = vadd.f32 %v11554, %v11565
        %v11575 = vadd.f32 %v11555, %v11565
        %v11576 = vadd.f32 %v11556, %v11565
        %v11577 = vadd.f32 %v11557, %v11565
        %v11578 = vadd.f32 %v11558, %v11565
        %v11579 = vadd.f32 %v11559, %v11565
        %v11580 = vadd.f32 %v11560, %v11565
        %v11581 = vadd.f32 %v11561, %v11565
        %v11582 = vadd.f32 %v11562, %v11565
        %11583 = vst [vmem:[%s591] sm:$0xff] %v11567
        %11584 = vst [vmem:[%s591 + $0x8] sm:$0xff] %v11568
        %11585 = vst [vmem:[%s591 + $0x10] sm:$0xff] %v11569
        %11586 = vst [vmem:[%s591 + $0x18] sm:$0xff] %v11570
        %11587 = vst [vmem:[%s591 + $0x20] sm:$0xff] %v11571
        %11588 = vst [vmem:[%s591 + $0x28] sm:$0xff] %v11572
        %11589 = vst [vmem:[%s591 + $0x30] sm:$0xff] %v11573
        %11590 = vst [vmem:[%s591 + $0x38] sm:$0xff] %v11574
        %11591 = vst [vmem:[%s591 + $0x40] sm:$0xff] %v11575
        %11592 = vst [vmem:[%s591 + $0x48] sm:$0xff] %v11576
        %11593 = vst [vmem:[%s591 + $0x50] sm:$0xff] %v11577
        %11594 = vst [vmem:[%s591 + $0x58] sm:$0xff] %v11578
        %11595 = vst [vmem:[%s591 + $0x60] sm:$0xff] %v11579
        %11596 = vst [vmem:[%s591 + $0x68] sm:$0xff] %v11580
        %11597 = vst [vmem:[%s591 + $0x70] sm:$0xff] %v11581
        %11598 = vst [vmem:[%s591 + $0x78] sm:$0xff] %v11582
        %s11599 = sand.u32 %s284, 1
        %s11600 = scalar_lea.sflag [#allocation4], %s11599
        %s11601 = sand.u32 %s284, 1
        %s11602 = smul.addr %s11601, 128
        %s11603 = scalar_lea.vmem [#allocation20], %s11602
        // Predicated region
        $region109: #{tpu_custom_call.1} parent=63 // pred_check
          %p11604 = pneg %p294
        $region110: #{tpu_custom_call.1} parent=63 // pred_check_branch
          %11606 = sbr.rel (%p11604) target = $region112
        $region111: #{tpu_custom_call.1} parent=63 // pred_region
          %s11607 = smul.u32 16, %s35
          %11609 = vsyncadd %s11600, 0
          %s11610 = smul.addr %s11607, 8
          %s11611 = scalar_lea.hbm %s11, %s11610
          %s11612 = sshll.u32 %s11603, 4
          %s11613 = int_to_ptr.vmem [resolvable:$true] %s11612
          %s11614 = sshll.u32 %s11611, 4
          %s11615 = int_to_ptr.hbm [resolvable:$true] %s11614
          %11620 = dma.vmem_to_hbm [thread:$0]  %s11613, 2048, %s11615, %s11600, 128, 128, 8
        $region112: #{tpu_custom_call.1} parent=63 // pred_fallthru
          _
      $region64: #{tpu_custom_call.1} parent=5 // pred_fallthru
        _
      %p11621 = scmp.le.s32.totalorder 2, %s30
      // Predicated region
      $region113: #{tpu_custom_call.1} parent=5 // pred_check
        %p11622 = pneg %p11621
      $region114: #{tpu_custom_call.1} parent=5 // pred_check_branch
        %11624 = sbr.rel (%p11622) target = $region116
      $region115: #{tpu_custom_call.1} parent=5 // pred_region
        %s11625 = ssub.s32 %s30, 2
        // Predicated region
        $region117: #{tpu_custom_call.1} parent=115 // pred_check
          %p11626 = pneg %p300
        $region118: #{tpu_custom_call.1} parent=115 // pred_check_branch
          %11628 = sbr.rel (%p11626) target = $region120
        $region119: #{tpu_custom_call.1} parent=115 // pred_region
          %s11629 = sand.u32 %s285, 1
          %s11630 = scalar_lea.sflag [#allocation4], %s11629
          %s11631 = sand.u32 %s285, 1
          %s11632 = smul.addr %s11631, 128
          %s11633 = scalar_lea.vmem [#allocation20], %s11632
          %11635 = dma.done %s11630, 2048
        $region120: #{tpu_custom_call.1} parent=115 // pred_fallthru
          _
      $region116: #{tpu_custom_call.1} parent=5 // pred_fallthru
        _
    $region6: #{tpu_custom_call.1} parent=1 // loop_footer
      %s34 = sadd.s32 1, %s30
    $region7: #{tpu_custom_call.1} parent=1 // loop_footer_branch
      %29 = sbr.rel target = $region3
    $region8: #{tpu_custom_call.1} parent=1 // loop_exit
      _
    %11636 = vsyncpa [#allocation3], 1
    %s11637 = scalar_lea.sflag [#allocation3], 1
    %11638 = vsyncpa %s11637, 1
    %11639 = vsyncpa [#allocation6], 1
    %s11640 = scalar_lea.sflag [#allocation6], 1
    %11641 = vsyncpa %s11640, 1
    %11642 = vsyncpa [#allocation9], 1
    %11643 = vsyncpa [#allocation12], 1
    %11644 = vsyncpa [#allocation15], 1
    %11645 = vsyncpa [#allocation18], 1
    %11646 = vsyncpa [#allocation4], 1
    %s11647 = scalar_lea.sflag [#allocation4], 1
    %11648 = vsyncpa %s11647, 1

</llo_original>
